<compile_context>
chip_gen: v7x
topology: tpu7x:2x2x1
jax: 0.10.0
libtpu: 0.0.40
codegen_flags: <defaults>
</compile_context>

<pallas_src>
import functools

import jax
import jax.numpy as jnp
from jax import lax
from jax.experimental import pallas as pl
from jax.experimental.pallas import tpu as pltpu

NEG_INF = -1e30


# ----------------------------------------------------------------------------
# Matmul helpers: explicit bf16 MXU passes, f32 accumulation.
# ----------------------------------------------------------------------------
def _bf16_split(v):
    """f32 value -> (hi, lo) bf16 pair with v ~= hi + lo (rel err ~2^-16)."""
    hi = v.astype(jnp.bfloat16)
    lo = (v - hi.astype(jnp.float32)).astype(jnp.bfloat16)
    return hi, lo


def _dot1(a, b, dims=None):
    """One native bf16 MXU pass, f32 accumulate.  Explicit DEFAULT precision so
    the dot never inherits jax_default_matmul_precision='highest'."""
    if dims is None:
        dims = (((a.ndim - 1,), (0,)), ((), ())),
        dims = dims[0]
    return lax.dot_general(a, b, dims, precision=lax.Precision.DEFAULT,
                           preferred_element_type=jnp.float32)


def _dot3(a, b, dims=None):
    """~lax.Precision.HIGH for f32 operands: 3 bf16 passes (hi*hi+hi*lo+lo*hi).
    ~2x fewer MXU passes than the f32 HIGHEST (6-pass) emulation."""
    ah, al = _bf16_split(a)
    bh, bl = _bf16_split(b)
    return _dot1(ah, bh, dims) + _dot1(ah, bl, dims) + _dot1(al, bh, dims)


# ----------------------------------------------------------------------------
# Pallas kernel
# ----------------------------------------------------------------------------
def _gat_kernel(x_ref, mask_ref, w1_ref, asrc1_ref, b1_ref,
                w2_ref, asrc2_ref, b2_ref, o_ref,
                p_hi_scr, p_lo_scr, bd_hi_scr, bd_lo_scr,
                *, heads1, hid, heads2, num_classes, c_pad, slope):
    f32 = jnp.float32
    n = x_ref.shape[0]
    d1 = heads1 * hid
    dn_t = (((1,), (1,)), ((), ()))        # A @ B^T contraction, no transpose op

    def att_probs(s_dst_col, s_src_row):
        """Masked, row-softmax-normalised attention weights [n, n]."""
        e = s_dst_col + s_src_row                       # broadcast to [n, n]
        e = jnp.where(e > 0, e, slope * e)              # LeakyReLU(0.2)
        e = e + mask_ref[...]                           # additive -1e30 off-edge
        m = jnp.max(e, axis=-1, keepdims=True)
        p = jnp.exp(e - m)
        denom = jnp.sum(p, axis=-1, keepdims=True)
        r = pl.reciprocal(denom, approx=True)           # EUP slot, not VPU divide
        r = r * (2.0 - denom * r)                       # 1 Newton step (1 vreg)
        return p * r

    # ------------------------------ Layer 1 ---------------------------------
    # Projection; trailing `heads1` columns are the host-folded dst scores.
    proj1 = _dot3(x_ref[...], w1_ref[...])              # [n, d1 + heads1]
    s_src1 = _dot3(asrc1_ref[...], proj1, dn_t)         # [>=heads1, n]

    # Block-diagonal RHS (zero off-diagonal) for the fused aggregation matmul.
    bd_hi_scr[...] = jnp.zeros_like(bd_hi_scr)
    bd_lo_scr[...] = jnp.zeros_like(bd_lo_scr)

    for hd in range(heads1):                            # static -> unrolled;
        # everything produced here is stored inside the loop (bounded live ranges)
        p = att_probs(proj1[:, d1 + hd:d1 + hd + 1], s_src1[hd:hd + 1, :])
        ph, plo = _bf16_split(p)
        p_hi_scr[:, hd * n:(hd + 1) * n] = ph           # 128-lane-aligned stores
        p_lo_scr[:, hd * n:(hd + 1) * n] = plo
        hh, hl = _bf16_split(proj1[:, hd * hid:(hd + 1) * hid])
        bd_hi_scr[hd * n:(hd + 1) * n, hd * hid:(hd + 1) * hid] = hh
        bd_lo_scr[hd * n:(hd + 1) * n, hd * hid:(hd + 1) * hid] = hl

    # Fused, lane-dense aggregation: x1 = concat_h(p_h @ h_h) as one
    # [n, heads1*n] @ blockdiag(h_h) matmul, walked in K-chunks of two heads
    # (K = 2n = 256 -> one full MXU K-tile, small operand live ranges).
    x1 = None
    for h0 in range(0, heads1, 2):
        h1 = min(h0 + 2, heads1)
        c0, c1 = h0 * n, h1 * n
        part = (_dot1(p_hi_scr[:, c0:c1], bd_hi_scr[c0:c1, :])
                + _dot1(p_hi_scr[:, c0:c1], bd_lo_scr[c0:c1, :])
                + _dot1(p_lo_scr[:, c0:c1], bd_hi_scr[c0:c1, :]))
        x1 = part if x1 is None else x1 + part
    x1 = x1 + b1_ref[...]                               # [n, d1], lane-dense
    # ELU.  TODO(synk): expm1 not exposed by Mosaic; exp(x)-1 is within 1e-3.
    x1 = jnp.where(x1 > 0, x1, jnp.exp(x1) - 1.0)

    # ------------------- Layer 2 (concat=False -> head mean) ----------------
    proj2 = _dot3(x1, w2_ref[...])                      # [n, heads2*c_pad]
    s_src2 = _dot3(asrc2_ref[...], proj2, dn_t)         # [>=heads2, n]
    z = None
    for hd in range(heads2):
        dcol = hd * c_pad + c_pad - 1                   # folded dst-score lane
        p = att_probs(proj2[:, dcol:dcol + 1], s_src2[hd:hd + 1, :])
        ph, plo = _bf16_split(p)
        h2h, h2l = _bf16_split(proj2[:, hd * c_pad:(hd + 1) * c_pad])
        part = _dot1(ph, h2h) + _dot1(ph, h2l) + _dot1(plo, h2h)
        z = part if z is None else z + part
    if heads2 > 1:
        z = z * (1.0 / heads2)
    z = z + b2_ref[...]                                 # [n, c_pad]

    # log_softmax over the real class lanes (pad lanes + dst-score lane masked).
    col = lax.broadcasted_iota(jnp.int32, z.shape, 1)
    valid = col < num_classes
    zm = jnp.where(valid, z, NEG_INF)
    m = jnp.max(zm, axis=-1, keepdims=True)
    s = jnp.sum(jnp.exp(zm - m), axis=-1, keepdims=True)
    lse = jnp.log(s) + m
    o_ref[...] = jnp.where(valid, z - lse, 0.0).astype(o_ref.dtype)


# ----------------------------------------------------------------------------
# Wrapper
# ----------------------------------------------------------------------------
def gat_net_forward(x, mask_bias, w1_aug, asrc1_aug, b1, w2_aug, asrc2_aug,
                    b2_pad, *, heads1, hid, heads2, num_classes, c_pad=128,
                    slope=0.2):
    """Returns log_softmax logits [N, num_classes] (padding sliced off)."""
    n = x.shape[0]
    d1 = heads1 * hid
    assert c_pad > num_classes
    kernel = functools.partial(
        _gat_kernel, heads1=heads1, hid=hid, heads2=heads2,
        num_classes=num_classes, c_pad=c_pad, slope=float(slope))

    full = lambda shape: pl.BlockSpec(shape, lambda: (0,) * len(shape))

    out_padded = pl.pallas_call(
        kernel,
        out_shape=jax.ShapeDtypeStruct((n, c_pad), jnp.float32),
        grid=(),
        in_specs=[
            full(x.shape),             # node features
            full(mask_bias.shape),     # additive attention mask [N, N]
            full(w1_aug.shape),        # W1 (+ folded dst-score columns)
            full(asrc1_aug.shape),     # block-expanded att_src1
            full(b1.shape),            # [1, heads1*hid]
            full(w2_aug.shape),        # W2 padded (+ folded dst-score lanes)
            full(asrc2_aug.shape),     # block-expanded att_src2
            full(b2_pad.shape),        # [1, c_pad]
        ],
        out_specs=full((n, c_pad)),    # lane-dense output store
        scratch_shapes=[
            pltpu.VMEM((n, heads1 * n), jnp.bfloat16),    # attention probs (hi)
            pltpu.VMEM((n, heads1 * n), jnp.bfloat16),    # attention probs (lo)
            pltpu.VMEM((heads1 * n, d1), jnp.bfloat16),   # block-diag h (hi)
            pltpu.VMEM((heads1 * n, d1), jnp.bfloat16),   # block-diag h (lo)
        ],
    )(x, mask_bias, w1_aug, asrc1_aug, b1, w2_aug, asrc2_aug, b2_pad)
    return out_padded[:, :num_classes]


# ----------------------------------------------------------------------------
# Plain-JAX glue: mask construction and parameter layout helpers (not hot path)
# ----------------------------------------------------------------------------
def build_attention_mask(edge_index, num_nodes):
    """Additive mask [N, N]: 0 where edge j->i exists (incl. self-loops),
    -1e30 elsewhere.  Row = target node, column = source node (PyG flow)."""
    src, dst = edge_index[0], edge_index[1]
    adj = jnp.zeros((num_nodes, num_nodes), jnp.float32)
    adj = adj.at[dst, src].set(1.0)                       # message src -> dst
    adj = jnp.maximum(adj, jnp.eye(num_nodes, dtype=jnp.float32))  # self-loops
    return jnp.where(adj > 0, 0.0, NEG_INF).astype(jnp.float32)


def prepare_layer1_params(w1, att_src1, att_dst1, heads, hid):
    """W1 augmented with folded dst-score columns + block-expanded att_src."""
    d1 = heads * hid
    adst_cols = jnp.zeros((d1, heads), w1.dtype)
    for h in range(heads):
        adst_cols = adst_cols.at[h * hid:(h + 1) * hid, h].set(att_dst1[h])
    w1_aug = jnp.concatenate([w1, w1 @ adst_cols], axis=1)   # [in, d1+heads]
    rows = max(heads, 8)                                     # sublane-friendly
    asrc_aug = jnp.zeros((rows, d1 + heads), w1.dtype)
    for h in range(heads):
        asrc_aug = asrc_aug.at[h, h * hid:(h + 1) * hid].set(att_src1[h])
    return w1_aug, asrc_aug


def prepare_layer2_params(w2, att_src2, att_dst2, b2, heads, num_classes,
                          c_pad):
    """W2 padded per head to c_pad lanes, with the folded dst score in the last
    lane of each head block; block-expanded att_src; padded bias."""
    d_in = w2.shape[0]
    w2_aug = jnp.zeros((d_in, heads * c_pad), w2.dtype)
    rows = max(heads, 8)
    asrc_aug = jnp.zeros((rows, heads * c_pad), w2.dtype)
    for h in range(heads):
        blk = w2[:, h * num_classes:(h + 1) * num_classes]
        w2_aug = w2_aug.at[:, h * c_pad:h * c_pad + num_classes].set(blk)
        w2_aug = w2_aug.at[:, h * c_pad + c_pad - 1].set(blk @ att_dst2[h])
        asrc_aug = asrc_aug.at[h, h * c_pad:h * c_pad + num_classes].set(
            att_src2[h])
    b2_pad = jnp.zeros((1, c_pad), w2.dtype).at[0, :num_classes].set(b2)
    return w2_aug, asrc_aug, b2_pad


# ----------------------------------------------------------------------------
# Pure-JAX reference (unpadded, un-augmented params) for the correctness check
# ----------------------------------------------------------------------------
def reference_gat(x, mask_bias, w1, att_src1, att_dst1, b1,
                  w2, att_src2, att_dst2, b2, *, heads1, hid, heads2,
                  num_classes, slope=0.2):
    n = x.shape[0]

    def layer(feat, w, asrc, adst, bias, heads, dim, concat):
        h = (feat @ w).reshape(n, heads, dim)
        ss = jnp.einsum("nhd,hd->nh", h, asrc)
        sd = jnp.einsum("nhd,hd->nh", h, adst)
        e = sd[:, None, :] + ss[None, :, :]                   # [dst, src, H]
        e = jnp.where(e > 0, e, slope * e)
        e = e + mask_bias[:, :, None]
        a = jax.nn.softmax(e, axis=1)
        out = jnp.einsum("nmh,mhd->nhd", a, h)
        out = out.reshape(n, heads * dim) if concat else out.mean(axis=1)
        return out + bias

    x1 = layer(x, w1, att_src1, att_dst1, b1, heads1, hid, True)
    x1 = jnp.where(x1 > 0, x1, jnp.exp(x1) - 1.0)
    z = layer(x1, w2, att_src2, att_dst2, b2, heads2, num_classes, False)
    return jax.nn.log_softmax(z, axis=1)


# ----------------------------------------------------------------------------
if __name__ == "__main__":
    # 'highest' only affects the pure-JAX reference / host-side prep; every
    # in-kernel dot carries an explicit precision and bf16 operands.
    jax.config.update("jax_default_matmul_precision", "highest")

    # Small shapes consistent with a typical GAT_Net config.
    N = 128          # nodes
    F_IN = 32        # dataset.num_features
    HID = 8          # args.hidden
    HEADS = 8        # args.heads           -> layer-1 width = 64
    C = 8            # dataset.num_classes
    OUT_HEADS = 1    # args.output_heads
    E = 512          # random edges
    CPAD = 128       # lane-dense padded class dim
    SLOPE = 0.2      # GATConv LeakyReLU negative slope
    D1 = HEADS * HID

    key = jax.random.PRNGKey(0)
    ks = jax.random.split(key, 10)

    x = jax.random.normal(ks[0], (N, F_IN), jnp.float32)
    edge_index = jax.random.randint(ks[1], (2, E), 0, N, jnp.int32)
    mask_bias = build_attention_mask(edge_index, N)

    # Parameters (stored pre-transposed as [in, out], glorot-ish scales).
    w1 = jax.random.normal(ks[2], (F_IN, D1), jnp.float32) / jnp.sqrt(F_IN)
    att_src1 = 0.3 * jax.random.normal(ks[3], (HEADS, HID), jnp.float32)
    att_dst1 = 0.3 * jax.random.normal(ks[4], (HEADS, HID), jnp.float32)
    b1 = 0.1 * jax.random.normal(ks[5], (D1,), jnp.float32)
    w2 = jax.random.normal(ks[6], (D1, OUT_HEADS * C), jnp.float32) / jnp.sqrt(D1)
    att_src2 = 0.3 * jax.random.normal(ks[7], (OUT_HEADS, C), jnp.float32)
    att_dst2 = 0.3 * jax.random.normal(ks[8], (OUT_HEADS, C), jnp.float32)
    b2 = 0.1 * jax.random.normal(ks[9], (C,), jnp.float32)

    # Kernel-friendly layouts (folded dst scores, padded class dim).
    w1_aug, asrc1_aug = prepare_layer1_params(w1, att_src1, att_dst1, HEADS, HID)
    w2_aug, asrc2_aug, b2_pad = prepare_layer2_params(
        w2, att_src2, att_dst2, b2, OUT_HEADS, C, CPAD)
    b1_k = b1.reshape(1, D1)

    out = gat_net_forward(
        x, mask_bias, w1_aug, asrc1_aug, b1_k, w2_aug, asrc2_aug, b2_pad,
        heads1=HEADS, hid=HID, heads2=OUT_HEADS,
        num_classes=C, c_pad=CPAD, slope=SLOPE)
    out = jax.block_until_ready(out)

    ref = reference_gat(
        x, mask_bias, w1, att_src1, att_dst1, b1,
        w2, att_src2, att_dst2, b2,
        heads1=HEADS, hid=HID, heads2=OUT_HEADS, num_classes=C, slope=SLOPE)

    assert out.shape == (N, C), f"bad shape {out.shape}"
    assert jnp.all(jnp.isfinite(out)), "non-finite output"
    err = jnp.max(jnp.abs(out - ref))
    assert jnp.allclose(out, ref, atol=1e-3, rtol=1e-3), f"mismatch {err}"

    print("KERNEL_OK")
</pallas_src>

<mosaic_0001>
module attributes {stable_mosaic.version = 11 : i64} {
  func.func @_gat_kernel(%arg0: memref<128x32xf32, #tpu.memory_space<vmem>>, %arg1: memref<128x128xf32, #tpu.memory_space<vmem>>, %arg2: memref<32x72xf32, #tpu.memory_space<vmem>>, %arg3: memref<8x72xf32, #tpu.memory_space<vmem>>, %arg4: memref<1x64xf32, #tpu.memory_space<vmem>>, %arg5: memref<64x128xf32, #tpu.memory_space<vmem>>, %arg6: memref<8x128xf32, #tpu.memory_space<vmem>>, %arg7: memref<1x128xf32, #tpu.memory_space<vmem>>, %arg8: memref<128x128xf32, #tpu.memory_space<vmem>>, %arg9: memref<128x1024xbf16, #tpu.memory_space<vmem>>, %arg10: memref<128x1024xbf16, #tpu.memory_space<vmem>>, %arg11: memref<1024x64xbf16, #tpu.memory_space<vmem>>, %arg12: memref<1024x64xbf16, #tpu.memory_space<vmem>>) attributes {dimension_semantics = [], scalar_prefetch = 0 : i64, scratch_operands = 4 : i64, tpu.core_type = #tpu.core_type<tc>} {
    %c0 = arith.constant 0 : index
    %c0_0 = arith.constant 0 : index
    %0 = vector.load %arg0[%c0, %c0_0] : memref<128x32xf32, #tpu.memory_space<vmem>>, vector<128x32xf32>
    %c0_1 = arith.constant 0 : index
    %c0_2 = arith.constant 0 : index
    %1 = vector.load %arg2[%c0_1, %c0_2] : memref<32x72xf32, #tpu.memory_space<vmem>>, vector<32x72xf32>
    %2 = arith.truncf %0 : vector<128x32xf32> to vector<128x32xbf16>
    %3 = arith.extf %2 : vector<128x32xbf16> to vector<128x32xf32>
    %4 = arith.subf %0, %3 : vector<128x32xf32>
    %5 = arith.truncf %4 : vector<128x32xf32> to vector<128x32xbf16>
    %6 = arith.truncf %1 : vector<32x72xf32> to vector<32x72xbf16>
    %7 = arith.extf %6 : vector<32x72xbf16> to vector<32x72xf32>
    %8 = arith.subf %1, %7 : vector<32x72xf32>
    %9 = arith.truncf %8 : vector<32x72xf32> to vector<32x72xbf16>
    %cst = arith.constant dense<0.000000e+00> : vector<128x72xf32>
    %10 = tpu.matmul %2, %6, %cst {dimension_numbers = #tpu.dot_dimension_numbers<[1], [0], [0], [1], [0, 0, 1, 1], [], []>} : vector<128x32xbf16>, vector<32x72xbf16>, vector<128x72xf32> -> vector<128x72xf32>
    %cst_3 = arith.constant dense<0.000000e+00> : vector<128x72xf32>
    %11 = tpu.matmul %2, %9, %cst_3 {dimension_numbers = #tpu.dot_dimension_numbers<[1], [0], [0], [1], [0, 0, 1, 1], [], []>} : vector<128x32xbf16>, vector<32x72xbf16>, vector<128x72xf32> -> vector<128x72xf32>
    %12 = arith.addf %10, %11 : vector<128x72xf32>
    %cst_4 = arith.constant dense<0.000000e+00> : vector<128x72xf32>
    %13 = tpu.matmul %5, %6, %cst_4 {dimension_numbers = #tpu.dot_dimension_numbers<[1], [0], [0], [1], [0, 0, 1, 1], [], []>} : vector<128x32xbf16>, vector<32x72xbf16>, vector<128x72xf32> -> vector<128x72xf32>
    %14 = arith.addf %12, %13 : vector<128x72xf32>
    %c0_5 = arith.constant 0 : index
    %c0_6 = arith.constant 0 : index
    %15 = vector.load %arg3[%c0_5, %c0_6] : memref<8x72xf32, #tpu.memory_space<vmem>>, vector<8x72xf32>
    %16 = arith.truncf %15 : vector<8x72xf32> to vector<8x72xbf16>
    %17 = arith.extf %16 : vector<8x72xbf16> to vector<8x72xf32>
    %18 = arith.subf %15, %17 : vector<8x72xf32>
    %19 = arith.truncf %18 : vector<8x72xf32> to vector<8x72xbf16>
    %20 = arith.truncf %14 : vector<128x72xf32> to vector<128x72xbf16>
    %21 = arith.extf %20 : vector<128x72xbf16> to vector<128x72xf32>
    %22 = arith.subf %14, %21 : vector<128x72xf32>
    %23 = arith.truncf %22 : vector<128x72xf32> to vector<128x72xbf16>
    %cst_7 = arith.constant dense<0.000000e+00> : vector<8x128xf32>
    %24 = tpu.matmul %16, %20, %cst_7 {dimension_numbers = #tpu.dot_dimension_numbers<[1], [1], [0], [0], [0, 0, 1, 0], [], []>} : vector<8x72xbf16>, vector<128x72xbf16>, vector<8x128xf32> -> vector<8x128xf32>
    %cst_8 = arith.constant dense<0.000000e+00> : vector<8x128xf32>
    %25 = tpu.matmul %16, %23, %cst_8 {dimension_numbers = #tpu.dot_dimension_numbers<[1], [1], [0], [0], [0, 0, 1, 0], [], []>} : vector<8x72xbf16>, vector<128x72xbf16>, vector<8x128xf32> -> vector<8x128xf32>
    %26 = arith.addf %24, %25 : vector<8x128xf32>
    %cst_9 = arith.constant dense<0.000000e+00> : vector<8x128xf32>
    %27 = tpu.matmul %19, %20, %cst_9 {dimension_numbers = #tpu.dot_dimension_numbers<[1], [1], [0], [0], [0, 0, 1, 0], [], []>} : vector<8x72xbf16>, vector<128x72xbf16>, vector<8x128xf32> -> vector<8x128xf32>
    %28 = arith.addf %26, %27 : vector<8x128xf32>
    %cst_10 = arith.constant 0.000000e+00 : bf16
    %29 = vector.broadcast %cst_10 : bf16 to vector<1024x64xbf16>
    %c0_11 = arith.constant 0 : index
    %c0_12 = arith.constant 0 : index
    %30 = vector.load %arg11[%c0_11, %c0_12] : memref<1024x64xbf16, #tpu.memory_space<vmem>>, vector<1024x64xbf16>
    tpu.vector_store %arg11[%c0_11, %c0_12], %29 {strides = array<i32>} : memref<1024x64xbf16, #tpu.memory_space<vmem>>, vector<1024x64xbf16>,
    %cst_13 = arith.constant 0.000000e+00 : bf16
    %31 = vector.broadcast %cst_13 : bf16 to vector<1024x64xbf16>
    %c0_14 = arith.constant 0 : index
    %c0_15 = arith.constant 0 : index
    %32 = vector.load %arg12[%c0_14, %c0_15] : memref<1024x64xbf16, #tpu.memory_space<vmem>>, vector<1024x64xbf16>
    tpu.vector_store %arg12[%c0_14, %c0_15], %31 {strides = array<i32>} : memref<1024x64xbf16, #tpu.memory_space<vmem>>, vector<1024x64xbf16>,
    %33 = vector.extract_strided_slice %14 {offsets = [0, 64], sizes = [128, 1], strides = [1, 1]} : vector<128x72xf32> to vector<128x1xf32>
    %34 = vector.extract_strided_slice %28 {offsets = [0, 0], sizes = [1, 128], strides = [1, 1]} : vector<8x128xf32> to vector<1x128xf32>
    %35 = vector.broadcast %33 : vector<128x1xf32> to vector<128x128xf32>
    %36 = vector.broadcast %34 : vector<1x128xf32> to vector<128x128xf32>
    %37 = arith.addf %35, %36 : vector<128x128xf32>
    %cst_16 = arith.constant 0.000000e+00 : f32
    %38 = vector.broadcast %cst_16 : f32 to vector<128x128xf32>
    %39 = arith.cmpf ogt, %37, %38 : vector<128x128xf32>
    %cst_17 = arith.constant 2.000000e-01 : f32
    %40 = vector.broadcast %cst_17 : f32 to vector<128x128xf32>
    %41 = arith.mulf %40, %37 : vector<128x128xf32>
    %42 = arith.select %39, %37, %41 : vector<128x128xi1>, vector<128x128xf32>
    %c0_18 = arith.constant 0 : index
    %c0_19 = arith.constant 0 : index
    %43 = vector.load %arg1[%c0_18, %c0_19] : memref<128x128xf32, #tpu.memory_space<vmem>>, vector<128x128xf32>
    %44 = arith.addf %42, %43 : vector<128x128xf32>
    %cst_20 = arith.constant dense<0xFF800000> : vector<128xf32>
    %45 = vector.multi_reduction <maximumf>, %44, %cst_20 [1] : vector<128x128xf32> to vector<128xf32>
    %46 = vector.shape_cast %45 : vector<128xf32> to vector<128x1xf32>
    %47 = vector.broadcast %46 : vector<128x1xf32> to vector<128x128xf32>
    %48 = arith.subf %44, %47 : vector<128x128xf32>
    %49 = math.exp %48 : vector<128x128xf32>
    %cst_21 = arith.constant dense<0.000000e+00> : vector<128xf32>
    %50 = vector.multi_reduction <add>, %49, %cst_21 [1] : vector<128x128xf32> to vector<128xf32>
    %51 = vector.shape_cast %50 : vector<128xf32> to vector<128x1xf32>
    %52 = tpu.reciprocal %51 {approx = true} : vector<128x1xf32> -> vector<128x1xf32>
    %53 = arith.mulf %51, %52 : vector<128x1xf32>
    %cst_22 = arith.constant 2.000000e+00 : f32
    %54 = vector.broadcast %cst_22 : f32 to vector<128x1xf32>
    %55 = arith.subf %54, %53 : vector<128x1xf32>
    %56 = arith.mulf %52, %55 : vector<128x1xf32>
    %57 = vector.broadcast %56 : vector<128x1xf32> to vector<128x128xf32>
    %58 = arith.mulf %49, %57 : vector<128x128xf32>
    %59 = arith.truncf %58 : vector<128x128xf32> to vector<128x128xbf16>
    %60 = arith.extf %59 : vector<128x128xbf16> to vector<128x128xf32>
    %61 = arith.subf %58, %60 : vector<128x128xf32>
    %62 = arith.truncf %61 : vector<128x128xf32> to vector<128x128xbf16>
    %c0_23 = arith.constant 0 : index
    %c0_24 = arith.constant 0 : index
    %63 = vector.load %arg9[%c0_23, %c0_24] : memref<128x1024xbf16, #tpu.memory_space<vmem>>, vector<128x128xbf16>
    tpu.vector_store %arg9[%c0_23, %c0_24], %59 {strides = array<i32>} : memref<128x1024xbf16, #tpu.memory_space<vmem>>, vector<128x128xbf16>,
    %c0_25 = arith.constant 0 : index
    %c0_26 = arith.constant 0 : index
    %64 = vector.load %arg10[%c0_25, %c0_26] : memref<128x1024xbf16, #tpu.memory_space<vmem>>, vector<128x128xbf16>
    tpu.vector_store %arg10[%c0_25, %c0_26], %62 {strides = array<i32>} : memref<128x1024xbf16, #tpu.memory_space<vmem>>, vector<128x128xbf16>,
    %65 = vector.extract_strided_slice %14 {offsets = [0, 0], sizes = [128, 8], strides = [1, 1]} : vector<128x72xf32> to vector<128x8xf32>
    %66 = arith.truncf %65 : vector<128x8xf32> to vector<128x8xbf16>
    %67 = arith.extf %66 : vector<128x8xbf16> to vector<128x8xf32>
    %68 = arith.subf %65, %67 : vector<128x8xf32>
    %69 = arith.truncf %68 : vector<128x8xf32> to vector<128x8xbf16>
    %c0_27 = arith.constant 0 : index
    %c0_28 = arith.constant 0 : index
    %70 = vector.load %arg11[%c0_27, %c0_28] : memref<1024x64xbf16, #tpu.memory_space<vmem>>, vector<128x8xbf16>
    tpu.vector_store %arg11[%c0_27, %c0_28], %66 {strides = array<i32>} : memref<1024x64xbf16, #tpu.memory_space<vmem>>, vector<128x8xbf16>,
    %c0_29 = arith.constant 0 : index
    %c0_30 = arith.constant 0 : index
    %71 = vector.load %arg12[%c0_29, %c0_30] : memref<1024x64xbf16, #tpu.memory_space<vmem>>, vector<128x8xbf16>
    tpu.vector_store %arg12[%c0_29, %c0_30], %69 {strides = array<i32>} : memref<1024x64xbf16, #tpu.memory_space<vmem>>, vector<128x8xbf16>,
    %72 = vector.extract_strided_slice %14 {offsets = [0, 65], sizes = [128, 1], strides = [1, 1]} : vector<128x72xf32> to vector<128x1xf32>
    %73 = vector.extract_strided_slice %28 {offsets = [1, 0], sizes = [1, 128], strides = [1, 1]} : vector<8x128xf32> to vector<1x128xf32>
    %74 = vector.broadcast %72 : vector<128x1xf32> to vector<128x128xf32>
    %75 = vector.broadcast %73 : vector<1x128xf32> to vector<128x128xf32>
    %76 = arith.addf %74, %75 : vector<128x128xf32>
    %cst_31 = arith.constant 0.000000e+00 : f32
    %77 = vector.broadcast %cst_31 : f32 to vector<128x128xf32>
    %78 = arith.cmpf ogt, %76, %77 : vector<128x128xf32>
    %cst_32 = arith.constant 2.000000e-01 : f32
    %79 = vector.broadcast %cst_32 : f32 to vector<128x128xf32>
    %80 = arith.mulf %79, %76 : vector<128x128xf32>
    %81 = arith.select %78, %76, %80 : vector<128x128xi1>, vector<128x128xf32>
    %c0_33 = arith.constant 0 : index
    %c0_34 = arith.constant 0 : index
    %82 = vector.load %arg1[%c0_33, %c0_34] : memref<128x128xf32, #tpu.memory_space<vmem>>, vector<128x128xf32>
    %83 = arith.addf %81, %82 : vector<128x128xf32>
    %cst_35 = arith.constant dense<0xFF800000> : vector<128xf32>
    %84 = vector.multi_reduction <maximumf>, %83, %cst_35 [1] : vector<128x128xf32> to vector<128xf32>
    %85 = vector.shape_cast %84 : vector<128xf32> to vector<128x1xf32>
    %86 = vector.broadcast %85 : vector<128x1xf32> to vector<128x128xf32>
    %87 = arith.subf %83, %86 : vector<128x128xf32>
    %88 = math.exp %87 : vector<128x128xf32>
    %cst_36 = arith.constant dense<0.000000e+00> : vector<128xf32>
    %89 = vector.multi_reduction <add>, %88, %cst_36 [1] : vector<128x128xf32> to vector<128xf32>
    %90 = vector.shape_cast %89 : vector<128xf32> to vector<128x1xf32>
    %91 = tpu.reciprocal %90 {approx = true} : vector<128x1xf32> -> vector<128x1xf32>
    %92 = arith.mulf %90, %91 : vector<128x1xf32>
    %cst_37 = arith.constant 2.000000e+00 : f32
    %93 = vector.broadcast %cst_37 : f32 to vector<128x1xf32>
    %94 = arith.subf %93, %92 : vector<128x1xf32>
    %95 = arith.mulf %91, %94 : vector<128x1xf32>
    %96 = vector.broadcast %95 : vector<128x1xf32> to vector<128x128xf32>
    %97 = arith.mulf %88, %96 : vector<128x128xf32>
    %98 = arith.truncf %97 : vector<128x128xf32> to vector<128x128xbf16>
    %99 = arith.extf %98 : vector<128x128xbf16> to vector<128x128xf32>
    %100 = arith.subf %97, %99 : vector<128x128xf32>
    %101 = arith.truncf %100 : vector<128x128xf32> to vector<128x128xbf16>
    %c0_38 = arith.constant 0 : index
    %c128 = arith.constant 128 : index
    %102 = vector.load %arg9[%c0_38, %c128] : memref<128x1024xbf16, #tpu.memory_space<vmem>>, vector<128x128xbf16>
    tpu.vector_store %arg9[%c0_38, %c128], %98 {strides = array<i32>} : memref<128x1024xbf16, #tpu.memory_space<vmem>>, vector<128x128xbf16>,
    %c0_39 = arith.constant 0 : index
    %c128_40 = arith.constant 128 : index
    %103 = vector.load %arg10[%c0_39, %c128_40] : memref<128x1024xbf16, #tpu.memory_space<vmem>>, vector<128x128xbf16>
    tpu.vector_store %arg10[%c0_39, %c128_40], %101 {strides = array<i32>} : memref<128x1024xbf16, #tpu.memory_space<vmem>>, vector<128x128xbf16>,
    %104 = vector.extract_strided_slice %14 {offsets = [0, 8], sizes = [128, 8], strides = [1, 1]} : vector<128x72xf32> to vector<128x8xf32>
    %105 = arith.truncf %104 : vector<128x8xf32> to vector<128x8xbf16>
    %106 = arith.extf %105 : vector<128x8xbf16> to vector<128x8xf32>
    %107 = arith.subf %104, %106 : vector<128x8xf32>
    %108 = arith.truncf %107 : vector<128x8xf32> to vector<128x8xbf16>
    %c128_41 = arith.constant 128 : index
    %c8 = arith.constant 8 : index
    %109 = vector.load %arg11[%c128_41, %c8] : memref<1024x64xbf16, #tpu.memory_space<vmem>>, vector<128x8xbf16>
    tpu.vector_store %arg11[%c128_41, %c8], %105 {strides = array<i32>} : memref<1024x64xbf16, #tpu.memory_space<vmem>>, vector<128x8xbf16>,
    %c128_42 = arith.constant 128 : index
    %c8_43 = arith.constant 8 : index
    %110 = vector.load %arg12[%c128_42, %c8_43] : memref<1024x64xbf16, #tpu.memory_space<vmem>>, vector<128x8xbf16>
    tpu.vector_store %arg12[%c128_42, %c8_43], %108 {strides = array<i32>} : memref<1024x64xbf16, #tpu.memory_space<vmem>>, vector<128x8xbf16>,
    %111 = vector.extract_strided_slice %14 {offsets = [0, 66], sizes = [128, 1], strides = [1, 1]} : vector<128x72xf32> to vector<128x1xf32>
    %112 = vector.extract_strided_slice %28 {offsets = [2, 0], sizes = [1, 128], strides = [1, 1]} : vector<8x128xf32> to vector<1x128xf32>
    %113 = vector.broadcast %111 : vector<128x1xf32> to vector<128x128xf32>
    %114 = vector.broadcast %112 : vector<1x128xf32> to vector<128x128xf32>
    %115 = arith.addf %113, %114 : vector<128x128xf32>
    %cst_44 = arith.constant 0.000000e+00 : f32
    %116 = vector.broadcast %cst_44 : f32 to vector<128x128xf32>
    %117 = arith.cmpf ogt, %115, %116 : vector<128x128xf32>
    %cst_45 = arith.constant 2.000000e-01 : f32
    %118 = vector.broadcast %cst_45 : f32 to vector<128x128xf32>
    %119 = arith.mulf %118, %115 : vector<128x128xf32>
    %120 = arith.select %117, %115, %119 : vector<128x128xi1>, vector<128x128xf32>
    %c0_46 = arith.constant 0 : index
    %c0_47 = arith.constant 0 : index
    %121 = vector.load %arg1[%c0_46, %c0_47] : memref<128x128xf32, #tpu.memory_space<vmem>>, vector<128x128xf32>
    %122 = arith.addf %120, %121 : vector<128x128xf32>
    %cst_48 = arith.constant dense<0xFF800000> : vector<128xf32>
    %123 = vector.multi_reduction <maximumf>, %122, %cst_48 [1] : vector<128x128xf32> to vector<128xf32>
    %124 = vector.shape_cast %123 : vector<128xf32> to vector<128x1xf32>
    %125 = vector.broadcast %124 : vector<128x1xf32> to vector<128x128xf32>
    %126 = arith.subf %122, %125 : vector<128x128xf32>
    %127 = math.exp %126 : vector<128x128xf32>
    %cst_49 = arith.constant dense<0.000000e+00> : vector<128xf32>
    %128 = vector.multi_reduction <add>, %127, %cst_49 [1] : vector<128x128xf32> to vector<128xf32>
    %129 = vector.shape_cast %128 : vector<128xf32> to vector<128x1xf32>
    %130 = tpu.reciprocal %129 {approx = true} : vector<128x1xf32> -> vector<128x1xf32>
    %131 = arith.mulf %129, %130 : vector<128x1xf32>
    %cst_50 = arith.constant 2.000000e+00 : f32
    %132 = vector.broadcast %cst_50 : f32 to vector<128x1xf32>
    %133 = arith.subf %132, %131 : vector<128x1xf32>
    %134 = arith.mulf %130, %133 : vector<128x1xf32>
    %135 = vector.broadcast %134 : vector<128x1xf32> to vector<128x128xf32>
    %136 = arith.mulf %127, %135 : vector<128x128xf32>
    %137 = arith.truncf %136 : vector<128x128xf32> to vector<128x128xbf16>
    %138 = arith.extf %137 : vector<128x128xbf16> to vector<128x128xf32>
    %139 = arith.subf %136, %138 : vector<128x128xf32>
    %140 = arith.truncf %139 : vector<128x128xf32> to vector<128x128xbf16>
    %c0_51 = arith.constant 0 : index
    %c256 = arith.constant 256 : index
    %141 = vector.load %arg9[%c0_51, %c256] : memref<128x1024xbf16, #tpu.memory_space<vmem>>, vector<128x128xbf16>
    tpu.vector_store %arg9[%c0_51, %c256], %137 {strides = array<i32>} : memref<128x1024xbf16, #tpu.memory_space<vmem>>, vector<128x128xbf16>,
    %c0_52 = arith.constant 0 : index
    %c256_53 = arith.constant 256 : index
    %142 = vector.load %arg10[%c0_52, %c256_53] : memref<128x1024xbf16, #tpu.memory_space<vmem>>, vector<128x128xbf16>
    tpu.vector_store %arg10[%c0_52, %c256_53], %140 {strides = array<i32>} : memref<128x1024xbf16, #tpu.memory_space<vmem>>, vector<128x128xbf16>,
    %143 = vector.extract_strided_slice %14 {offsets = [0, 16], sizes = [128, 8], strides = [1, 1]} : vector<128x72xf32> to vector<128x8xf32>
    %144 = arith.truncf %143 : vector<128x8xf32> to vector<128x8xbf16>
    %145 = arith.extf %144 : vector<128x8xbf16> to vector<128x8xf32>
    %146 = arith.subf %143, %145 : vector<128x8xf32>
    %147 = arith.truncf %146 : vector<128x8xf32> to vector<128x8xbf16>
    %c256_54 = arith.constant 256 : index
    %c16 = arith.constant 16 : index
    %148 = vector.load %arg11[%c256_54, %c16] : memref<1024x64xbf16, #tpu.memory_space<vmem>>, vector<128x8xbf16>
    tpu.vector_store %arg11[%c256_54, %c16], %144 {strides = array<i32>} : memref<1024x64xbf16, #tpu.memory_space<vmem>>, vector<128x8xbf16>,
    %c256_55 = arith.constant 256 : index
    %c16_56 = arith.constant 16 : index
    %149 = vector.load %arg12[%c256_55, %c16_56] : memref<1024x64xbf16, #tpu.memory_space<vmem>>, vector<128x8xbf16>
    tpu.vector_store %arg12[%c256_55, %c16_56], %147 {strides = array<i32>} : memref<1024x64xbf16, #tpu.memory_space<vmem>>, vector<128x8xbf16>,
    %150 = vector.extract_strided_slice %14 {offsets = [0, 67], sizes = [128, 1], strides = [1, 1]} : vector<128x72xf32> to vector<128x1xf32>
    %151 = vector.extract_strided_slice %28 {offsets = [3, 0], sizes = [1, 128], strides = [1, 1]} : vector<8x128xf32> to vector<1x128xf32>
    %152 = vector.broadcast %150 : vector<128x1xf32> to vector<128x128xf32>
    %153 = vector.broadcast %151 : vector<1x128xf32> to vector<128x128xf32>
    %154 = arith.addf %152, %153 : vector<128x128xf32>
    %cst_57 = arith.constant 0.000000e+00 : f32
    %155 = vector.broadcast %cst_57 : f32 to vector<128x128xf32>
    %156 = arith.cmpf ogt, %154, %155 : vector<128x128xf32>
    %cst_58 = arith.constant 2.000000e-01 : f32
    %157 = vector.broadcast %cst_58 : f32 to vector<128x128xf32>
    %158 = arith.mulf %157, %154 : vector<128x128xf32>
    %159 = arith.select %156, %154, %158 : vector<128x128xi1>, vector<128x128xf32>
    %c0_59 = arith.constant 0 : index
    %c0_60 = arith.constant 0 : index
    %160 = vector.load %arg1[%c0_59, %c0_60] : memref<128x128xf32, #tpu.memory_space<vmem>>, vector<128x128xf32>
    %161 = arith.addf %159, %160 : vector<128x128xf32>
    %cst_61 = arith.constant dense<0xFF800000> : vector<128xf32>
    %162 = vector.multi_reduction <maximumf>, %161, %cst_61 [1] : vector<128x128xf32> to vector<128xf32>
    %163 = vector.shape_cast %162 : vector<128xf32> to vector<128x1xf32>
    %164 = vector.broadcast %163 : vector<128x1xf32> to vector<128x128xf32>
    %165 = arith.subf %161, %164 : vector<128x128xf32>
    %166 = math.exp %165 : vector<128x128xf32>
    %cst_62 = arith.constant dense<0.000000e+00> : vector<128xf32>
    %167 = vector.multi_reduction <add>, %166, %cst_62 [1] : vector<128x128xf32> to vector<128xf32>
    %168 = vector.shape_cast %167 : vector<128xf32> to vector<128x1xf32>
    %169 = tpu.reciprocal %168 {approx = true} : vector<128x1xf32> -> vector<128x1xf32>
    %170 = arith.mulf %168, %169 : vector<128x1xf32>
    %cst_63 = arith.constant 2.000000e+00 : f32
    %171 = vector.broadcast %cst_63 : f32 to vector<128x1xf32>
    %172 = arith.subf %171, %170 : vector<128x1xf32>
    %173 = arith.mulf %169, %172 : vector<128x1xf32>
    %174 = vector.broadcast %173 : vector<128x1xf32> to vector<128x128xf32>
    %175 = arith.mulf %166, %174 : vector<128x128xf32>
    %176 = arith.truncf %175 : vector<128x128xf32> to vector<128x128xbf16>
    %177 = arith.extf %176 : vector<128x128xbf16> to vector<128x128xf32>
    %178 = arith.subf %175, %177 : vector<128x128xf32>
    %179 = arith.truncf %178 : vector<128x128xf32> to vector<128x128xbf16>
    %c0_64 = arith.constant 0 : index
    %c384 = arith.constant 384 : index
    %180 = vector.load %arg9[%c0_64, %c384] : memref<128x1024xbf16, #tpu.memory_space<vmem>>, vector<128x128xbf16>
    tpu.vector_store %arg9[%c0_64, %c384], %176 {strides = array<i32>} : memref<128x1024xbf16, #tpu.memory_space<vmem>>, vector<128x128xbf16>,
    %c0_65 = arith.constant 0 : index
    %c384_66 = arith.constant 384 : index
    %181 = vector.load %arg10[%c0_65, %c384_66] : memref<128x1024xbf16, #tpu.memory_space<vmem>>, vector<128x128xbf16>
    tpu.vector_store %arg10[%c0_65, %c384_66], %179 {strides = array<i32>} : memref<128x1024xbf16, #tpu.memory_space<vmem>>, vector<128x128xbf16>,
    %182 = vector.extract_strided_slice %14 {offsets = [0, 24], sizes = [128, 8], strides = [1, 1]} : vector<128x72xf32> to vector<128x8xf32>
    %183 = arith.truncf %182 : vector<128x8xf32> to vector<128x8xbf16>
    %184 = arith.extf %183 : vector<128x8xbf16> to vector<128x8xf32>
    %185 = arith.subf %182, %184 : vector<128x8xf32>
    %186 = arith.truncf %185 : vector<128x8xf32> to vector<128x8xbf16>
    %c384_67 = arith.constant 384 : index
    %c24 = arith.constant 24 : index
    %187 = vector.load %arg11[%c384_67, %c24] : memref<1024x64xbf16, #tpu.memory_space<vmem>>, vector<128x8xbf16>
    tpu.vector_store %arg11[%c384_67, %c24], %183 {strides = array<i32>} : memref<1024x64xbf16, #tpu.memory_space<vmem>>, vector<128x8xbf16>,
    %c384_68 = arith.constant 384 : index
    %c24_69 = arith.constant 24 : index
    %188 = vector.load %arg12[%c384_68, %c24_69] : memref<1024x64xbf16, #tpu.memory_space<vmem>>, vector<128x8xbf16>
    tpu.vector_store %arg12[%c384_68, %c24_69], %186 {strides = array<i32>} : memref<1024x64xbf16, #tpu.memory_space<vmem>>, vector<128x8xbf16>,
    %189 = vector.extract_strided_slice %14 {offsets = [0, 68], sizes = [128, 1], strides = [1, 1]} : vector<128x72xf32> to vector<128x1xf32>
    %190 = vector.extract_strided_slice %28 {offsets = [4, 0], sizes = [1, 128], strides = [1, 1]} : vector<8x128xf32> to vector<1x128xf32>
    %191 = vector.broadcast %189 : vector<128x1xf32> to vector<128x128xf32>
    %192 = vector.broadcast %190 : vector<1x128xf32> to vector<128x128xf32>
    %193 = arith.addf %191, %192 : vector<128x128xf32>
    %cst_70 = arith.constant 0.000000e+00 : f32
    %194 = vector.broadcast %cst_70 : f32 to vector<128x128xf32>
    %195 = arith.cmpf ogt, %193, %194 : vector<128x128xf32>
    %cst_71 = arith.constant 2.000000e-01 : f32
    %196 = vector.broadcast %cst_71 : f32 to vector<128x128xf32>
    %197 = arith.mulf %196, %193 : vector<128x128xf32>
    %198 = arith.select %195, %193, %197 : vector<128x128xi1>, vector<128x128xf32>
    %c0_72 = arith.constant 0 : index
    %c0_73 = arith.constant 0 : index
    %199 = vector.load %arg1[%c0_72, %c0_73] : memref<128x128xf32, #tpu.memory_space<vmem>>, vector<128x128xf32>
    %200 = arith.addf %198, %199 : vector<128x128xf32>
    %cst_74 = arith.constant dense<0xFF800000> : vector<128xf32>
    %201 = vector.multi_reduction <maximumf>, %200, %cst_74 [1] : vector<128x128xf32> to vector<128xf32>
    %202 = vector.shape_cast %201 : vector<128xf32> to vector<128x1xf32>
    %203 = vector.broadcast %202 : vector<128x1xf32> to vector<128x128xf32>
    %204 = arith.subf %200, %203 : vector<128x128xf32>
    %205 = math.exp %204 : vector<128x128xf32>
    %cst_75 = arith.constant dense<0.000000e+00> : vector<128xf32>
    %206 = vector.multi_reduction <add>, %205, %cst_75 [1] : vector<128x128xf32> to vector<128xf32>
    %207 = vector.shape_cast %206 : vector<128xf32> to vector<128x1xf32>
    %208 = tpu.reciprocal %207 {approx = true} : vector<128x1xf32> -> vector<128x1xf32>
    %209 = arith.mulf %207, %208 : vector<128x1xf32>
    %cst_76 = arith.constant 2.000000e+00 : f32
    %210 = vector.broadcast %cst_76 : f32 to vector<128x1xf32>
    %211 = arith.subf %210, %209 : vector<128x1xf32>
    %212 = arith.mulf %208, %211 : vector<128x1xf32>
    %213 = vector.broadcast %212 : vector<128x1xf32> to vector<128x128xf32>
    %214 = arith.mulf %205, %213 : vector<128x128xf32>
    %215 = arith.truncf %214 : vector<128x128xf32> to vector<128x128xbf16>
    %216 = arith.extf %215 : vector<128x128xbf16> to vector<128x128xf32>
    %217 = arith.subf %214, %216 : vector<128x128xf32>
    %218 = arith.truncf %217 : vector<128x128xf32> to vector<128x128xbf16>
    %c0_77 = arith.constant 0 : index
    %c512 = arith.constant 512 : index
    %219 = vector.load %arg9[%c0_77, %c512] : memref<128x1024xbf16, #tpu.memory_space<vmem>>, vector<128x128xbf16>
    tpu.vector_store %arg9[%c0_77, %c512], %215 {strides = array<i32>} : memref<128x1024xbf16, #tpu.memory_space<vmem>>, vector<128x128xbf16>,
    %c0_78 = arith.constant 0 : index
    %c512_79 = arith.constant 512 : index
    %220 = vector.load %arg10[%c0_78, %c512_79] : memref<128x1024xbf16, #tpu.memory_space<vmem>>, vector<128x128xbf16>
    tpu.vector_store %arg10[%c0_78, %c512_79], %218 {strides = array<i32>} : memref<128x1024xbf16, #tpu.memory_space<vmem>>, vector<128x128xbf16>,
    %221 = vector.extract_strided_slice %14 {offsets = [0, 32], sizes = [128, 8], strides = [1, 1]} : vector<128x72xf32> to vector<128x8xf32>
    %222 = arith.truncf %221 : vector<128x8xf32> to vector<128x8xbf16>
    %223 = arith.extf %222 : vector<128x8xbf16> to vector<128x8xf32>
    %224 = arith.subf %221, %223 : vector<128x8xf32>
    %225 = arith.truncf %224 : vector<128x8xf32> to vector<128x8xbf16>
    %c512_80 = arith.constant 512 : index
    %c32 = arith.constant 32 : index
    %226 = vector.load %arg11[%c512_80, %c32] : memref<1024x64xbf16, #tpu.memory_space<vmem>>, vector<128x8xbf16>
    tpu.vector_store %arg11[%c512_80, %c32], %222 {strides = array<i32>} : memref<1024x64xbf16, #tpu.memory_space<vmem>>, vector<128x8xbf16>,
    %c512_81 = arith.constant 512 : index
    %c32_82 = arith.constant 32 : index
    %227 = vector.load %arg12[%c512_81, %c32_82] : memref<1024x64xbf16, #tpu.memory_space<vmem>>, vector<128x8xbf16>
    tpu.vector_store %arg12[%c512_81, %c32_82], %225 {strides = array<i32>} : memref<1024x64xbf16, #tpu.memory_space<vmem>>, vector<128x8xbf16>,
    %228 = vector.extract_strided_slice %14 {offsets = [0, 69], sizes = [128, 1], strides = [1, 1]} : vector<128x72xf32> to vector<128x1xf32>
    %229 = vector.extract_strided_slice %28 {offsets = [5, 0], sizes = [1, 128], strides = [1, 1]} : vector<8x128xf32> to vector<1x128xf32>
    %230 = vector.broadcast %228 : vector<128x1xf32> to vector<128x128xf32>
    %231 = vector.broadcast %229 : vector<1x128xf32> to vector<128x128xf32>
    %232 = arith.addf %230, %231 : vector<128x128xf32>
    %cst_83 = arith.constant 0.000000e+00 : f32
    %233 = vector.broadcast %cst_83 : f32 to vector<128x128xf32>
    %234 = arith.cmpf ogt, %232, %233 : vector<128x128xf32>
    %cst_84 = arith.constant 2.000000e-01 : f32
    %235 = vector.broadcast %cst_84 : f32 to vector<128x128xf32>
    %236 = arith.mulf %235, %232 : vector<128x128xf32>
    %237 = arith.select %234, %232, %236 : vector<128x128xi1>, vector<128x128xf32>
    %c0_85 = arith.constant 0 : index
    %c0_86 = arith.constant 0 : index
    %238 = vector.load %arg1[%c0_85, %c0_86] : memref<128x128xf32, #tpu.memory_space<vmem>>, vector<128x128xf32>
    %239 = arith.addf %237, %238 : vector<128x128xf32>
    %cst_87 = arith.constant dense<0xFF800000> : vector<128xf32>
    %240 = vector.multi_reduction <maximumf>, %239, %cst_87 [1] : vector<128x128xf32> to vector<128xf32>
    %241 = vector.shape_cast %240 : vector<128xf32> to vector<128x1xf32>
    %242 = vector.broadcast %241 : vector<128x1xf32> to vector<128x128xf32>
    %243 = arith.subf %239, %242 : vector<128x128xf32>
    %244 = math.exp %243 : vector<128x128xf32>
    %cst_88 = arith.constant dense<0.000000e+00> : vector<128xf32>
    %245 = vector.multi_reduction <add>, %244, %cst_88 [1] : vector<128x128xf32> to vector<128xf32>
    %246 = vector.shape_cast %245 : vector<128xf32> to vector<128x1xf32>
    %247 = tpu.reciprocal %246 {approx = true} : vector<128x1xf32> -> vector<128x1xf32>
    %248 = arith.mulf %246, %247 : vector<128x1xf32>
    %cst_89 = arith.constant 2.000000e+00 : f32
    %249 = vector.broadcast %cst_89 : f32 to vector<128x1xf32>
    %250 = arith.subf %249, %248 : vector<128x1xf32>
    %251 = arith.mulf %247, %250 : vector<128x1xf32>
    %252 = vector.broadcast %251 : vector<128x1xf32> to vector<128x128xf32>
    %253 = arith.mulf %244, %252 : vector<128x128xf32>
    %254 = arith.truncf %253 : vector<128x128xf32> to vector<128x128xbf16>
    %255 = arith.extf %254 : vector<128x128xbf16> to vector<128x128xf32>
    %256 = arith.subf %253, %255 : vector<128x128xf32>
    %257 = arith.truncf %256 : vector<128x128xf32> to vector<128x128xbf16>
    %c0_90 = arith.constant 0 : index
    %c640 = arith.constant 640 : index
    %258 = vector.load %arg9[%c0_90, %c640] : memref<128x1024xbf16, #tpu.memory_space<vmem>>, vector<128x128xbf16>
    tpu.vector_store %arg9[%c0_90, %c640], %254 {strides = array<i32>} : memref<128x1024xbf16, #tpu.memory_space<vmem>>, vector<128x128xbf16>,
    %c0_91 = arith.constant 0 : index
    %c640_92 = arith.constant 640 : index
    %259 = vector.load %arg10[%c0_91, %c640_92] : memref<128x1024xbf16, #tpu.memory_space<vmem>>, vector<128x128xbf16>
    tpu.vector_store %arg10[%c0_91, %c640_92], %257 {strides = array<i32>} : memref<128x1024xbf16, #tpu.memory_space<vmem>>, vector<128x128xbf16>,
    %260 = vector.extract_strided_slice %14 {offsets = [0, 40], sizes = [128, 8], strides = [1, 1]} : vector<128x72xf32> to vector<128x8xf32>
    %261 = arith.truncf %260 : vector<128x8xf32> to vector<128x8xbf16>
    %262 = arith.extf %261 : vector<128x8xbf16> to vector<128x8xf32>
    %263 = arith.subf %260, %262 : vector<128x8xf32>
    %264 = arith.truncf %263 : vector<128x8xf32> to vector<128x8xbf16>
    %c640_93 = arith.constant 640 : index
    %c40 = arith.constant 40 : index
    %265 = vector.load %arg11[%c640_93, %c40] : memref<1024x64xbf16, #tpu.memory_space<vmem>>, vector<128x8xbf16>
    tpu.vector_store %arg11[%c640_93, %c40], %261 {strides = array<i32>} : memref<1024x64xbf16, #tpu.memory_space<vmem>>, vector<128x8xbf16>,
    %c640_94 = arith.constant 640 : index
    %c40_95 = arith.constant 40 : index
    %266 = vector.load %arg12[%c640_94, %c40_95] : memref<1024x64xbf16, #tpu.memory_space<vmem>>, vector<128x8xbf16>
    tpu.vector_store %arg12[%c640_94, %c40_95], %264 {strides = array<i32>} : memref<1024x64xbf16, #tpu.memory_space<vmem>>, vector<128x8xbf16>,
    %267 = vector.extract_strided_slice %14 {offsets = [0, 70], sizes = [128, 1], strides = [1, 1]} : vector<128x72xf32> to vector<128x1xf32>
    %268 = vector.extract_strided_slice %28 {offsets = [6, 0], sizes = [1, 128], strides = [1, 1]} : vector<8x128xf32> to vector<1x128xf32>
    %269 = vector.broadcast %267 : vector<128x1xf32> to vector<128x128xf32>
    %270 = vector.broadcast %268 : vector<1x128xf32> to vector<128x128xf32>
    %271 = arith.addf %269, %270 : vector<128x128xf32>
    %cst_96 = arith.constant 0.000000e+00 : f32
    %272 = vector.broadcast %cst_96 : f32 to vector<128x128xf32>
    %273 = arith.cmpf ogt, %271, %272 : vector<128x128xf32>
    %cst_97 = arith.constant 2.000000e-01 : f32
    %274 = vector.broadcast %cst_97 : f32 to vector<128x128xf32>
    %275 = arith.mulf %274, %271 : vector<128x128xf32>
    %276 = arith.select %273, %271, %275 : vector<128x128xi1>, vector<128x128xf32>
    %c0_98 = arith.constant 0 : index
    %c0_99 = arith.constant 0 : index
    %277 = vector.load %arg1[%c0_98, %c0_99] : memref<128x128xf32, #tpu.memory_space<vmem>>, vector<128x128xf32>
    %278 = arith.addf %276, %277 : vector<128x128xf32>
    %cst_100 = arith.constant dense<0xFF800000> : vector<128xf32>
    %279 = vector.multi_reduction <maximumf>, %278, %cst_100 [1] : vector<128x128xf32> to vector<128xf32>
    %280 = vector.shape_cast %279 : vector<128xf32> to vector<128x1xf32>
    %281 = vector.broadcast %280 : vector<128x1xf32> to vector<128x128xf32>
    %282 = arith.subf %278, %281 : vector<128x128xf32>
    %283 = math.exp %282 : vector<128x128xf32>
    %cst_101 = arith.constant dense<0.000000e+00> : vector<128xf32>
    %284 = vector.multi_reduction <add>, %283, %cst_101 [1] : vector<128x128xf32> to vector<128xf32>
    %285 = vector.shape_cast %284 : vector<128xf32> to vector<128x1xf32>
    %286 = tpu.reciprocal %285 {approx = true} : vector<128x1xf32> -> vector<128x1xf32>
    %287 = arith.mulf %285, %286 : vector<128x1xf32>
    %cst_102 = arith.constant 2.000000e+00 : f32
    %288 = vector.broadcast %cst_102 : f32 to vector<128x1xf32>
    %289 = arith.subf %288, %287 : vector<128x1xf32>
    %290 = arith.mulf %286, %289 : vector<128x1xf32>
    %291 = vector.broadcast %290 : vector<128x1xf32> to vector<128x128xf32>
    %292 = arith.mulf %283, %291 : vector<128x128xf32>
    %293 = arith.truncf %292 : vector<128x128xf32> to vector<128x128xbf16>
    %294 = arith.extf %293 : vector<128x128xbf16> to vector<128x128xf32>
    %295 = arith.subf %292, %294 : vector<128x128xf32>
    %296 = arith.truncf %295 : vector<128x128xf32> to vector<128x128xbf16>
    %c0_103 = arith.constant 0 : index
    %c768 = arith.constant 768 : index
    %297 = vector.load %arg9[%c0_103, %c768] : memref<128x1024xbf16, #tpu.memory_space<vmem>>, vector<128x128xbf16>
    tpu.vector_store %arg9[%c0_103, %c768], %293 {strides = array<i32>} : memref<128x1024xbf16, #tpu.memory_space<vmem>>, vector<128x128xbf16>,
    %c0_104 = arith.constant 0 : index
    %c768_105 = arith.constant 768 : index
    %298 = vector.load %arg10[%c0_104, %c768_105] : memref<128x1024xbf16, #tpu.memory_space<vmem>>, vector<128x128xbf16>
    tpu.vector_store %arg10[%c0_104, %c768_105], %296 {strides = array<i32>} : memref<128x1024xbf16, #tpu.memory_space<vmem>>, vector<128x128xbf16>,
    %299 = vector.extract_strided_slice %14 {offsets = [0, 48], sizes = [128, 8], strides = [1, 1]} : vector<128x72xf32> to vector<128x8xf32>
    %300 = arith.truncf %299 : vector<128x8xf32> to vector<128x8xbf16>
    %301 = arith.extf %300 : vector<128x8xbf16> to vector<128x8xf32>
    %302 = arith.subf %299, %301 : vector<128x8xf32>
    %303 = arith.truncf %302 : vector<128x8xf32> to vector<128x8xbf16>
    %c768_106 = arith.constant 768 : index
    %c48 = arith.constant 48 : index
    %304 = vector.load %arg11[%c768_106, %c48] : memref<1024x64xbf16, #tpu.memory_space<vmem>>, vector<128x8xbf16>
    tpu.vector_store %arg11[%c768_106, %c48], %300 {strides = array<i32>} : memref<1024x64xbf16, #tpu.memory_space<vmem>>, vector<128x8xbf16>,
    %c768_107 = arith.constant 768 : index
    %c48_108 = arith.constant 48 : index
    %305 = vector.load %arg12[%c768_107, %c48_108] : memref<1024x64xbf16, #tpu.memory_space<vmem>>, vector<128x8xbf16>
    tpu.vector_store %arg12[%c768_107, %c48_108], %303 {strides = array<i32>} : memref<1024x64xbf16, #tpu.memory_space<vmem>>, vector<128x8xbf16>,
    %306 = vector.extract_strided_slice %14 {offsets = [0, 71], sizes = [128, 1], strides = [1, 1]} : vector<128x72xf32> to vector<128x1xf32>
    %307 = vector.extract_strided_slice %28 {offsets = [7, 0], sizes = [1, 128], strides = [1, 1]} : vector<8x128xf32> to vector<1x128xf32>
    %308 = vector.broadcast %306 : vector<128x1xf32> to vector<128x128xf32>
    %309 = vector.broadcast %307 : vector<1x128xf32> to vector<128x128xf32>
    %310 = arith.addf %308, %309 : vector<128x128xf32>
    %cst_109 = arith.constant 0.000000e+00 : f32
    %311 = vector.broadcast %cst_109 : f32 to vector<128x128xf32>
    %312 = arith.cmpf ogt, %310, %311 : vector<128x128xf32>
    %cst_110 = arith.constant 2.000000e-01 : f32
    %313 = vector.broadcast %cst_110 : f32 to vector<128x128xf32>
    %314 = arith.mulf %313, %310 : vector<128x128xf32>
    %315 = arith.select %312, %310, %314 : vector<128x128xi1>, vector<128x128xf32>
    %c0_111 = arith.constant 0 : index
    %c0_112 = arith.constant 0 : index
    %316 = vector.load %arg1[%c0_111, %c0_112] : memref<128x128xf32, #tpu.memory_space<vmem>>, vector<128x128xf32>
    %317 = arith.addf %315, %316 : vector<128x128xf32>
    %cst_113 = arith.constant dense<0xFF800000> : vector<128xf32>
    %318 = vector.multi_reduction <maximumf>, %317, %cst_113 [1] : vector<128x128xf32> to vector<128xf32>
    %319 = vector.shape_cast %318 : vector<128xf32> to vector<128x1xf32>
    %320 = vector.broadcast %319 : vector<128x1xf32> to vector<128x128xf32>
    %321 = arith.subf %317, %320 : vector<128x128xf32>
    %322 = math.exp %321 : vector<128x128xf32>
    %cst_114 = arith.constant dense<0.000000e+00> : vector<128xf32>
    %323 = vector.multi_reduction <add>, %322, %cst_114 [1] : vector<128x128xf32> to vector<128xf32>
    %324 = vector.shape_cast %323 : vector<128xf32> to vector<128x1xf32>
    %325 = tpu.reciprocal %324 {approx = true} : vector<128x1xf32> -> vector<128x1xf32>
    %326 = arith.mulf %324, %325 : vector<128x1xf32>
    %cst_115 = arith.constant 2.000000e+00 : f32
    %327 = vector.broadcast %cst_115 : f32 to vector<128x1xf32>
    %328 = arith.subf %327, %326 : vector<128x1xf32>
    %329 = arith.mulf %325, %328 : vector<128x1xf32>
    %330 = vector.broadcast %329 : vector<128x1xf32> to vector<128x128xf32>
    %331 = arith.mulf %322, %330 : vector<128x128xf32>
    %332 = arith.truncf %331 : vector<128x128xf32> to vector<128x128xbf16>
    %333 = arith.extf %332 : vector<128x128xbf16> to vector<128x128xf32>
    %334 = arith.subf %331, %333 : vector<128x128xf32>
    %335 = arith.truncf %334 : vector<128x128xf32> to vector<128x128xbf16>
    %c0_116 = arith.constant 0 : index
    %c896 = arith.constant 896 : index
    %336 = vector.load %arg9[%c0_116, %c896] : memref<128x1024xbf16, #tpu.memory_space<vmem>>, vector<128x128xbf16>
    tpu.vector_store %arg9[%c0_116, %c896], %332 {strides = array<i32>} : memref<128x1024xbf16, #tpu.memory_space<vmem>>, vector<128x128xbf16>,
    %c0_117 = arith.constant 0 : index
    %c896_118 = arith.constant 896 : index
    %337 = vector.load %arg10[%c0_117, %c896_118] : memref<128x1024xbf16, #tpu.memory_space<vmem>>, vector<128x128xbf16>
    tpu.vector_store %arg10[%c0_117, %c896_118], %335 {strides = array<i32>} : memref<128x1024xbf16, #tpu.memory_space<vmem>>, vector<128x128xbf16>,
    %338 = vector.extract_strided_slice %14 {offsets = [0, 56], sizes = [128, 8], strides = [1, 1]} : vector<128x72xf32> to vector<128x8xf32>
    %339 = arith.truncf %338 : vector<128x8xf32> to vector<128x8xbf16>
    %340 = arith.extf %339 : vector<128x8xbf16> to vector<128x8xf32>
    %341 = arith.subf %338, %340 : vector<128x8xf32>
    %342 = arith.truncf %341 : vector<128x8xf32> to vector<128x8xbf16>
    %c896_119 = arith.constant 896 : index
    %c56 = arith.constant 56 : index
    %343 = vector.load %arg11[%c896_119, %c56] : memref<1024x64xbf16, #tpu.memory_space<vmem>>, vector<128x8xbf16>
    tpu.vector_store %arg11[%c896_119, %c56], %339 {strides = array<i32>} : memref<1024x64xbf16, #tpu.memory_space<vmem>>, vector<128x8xbf16>,
    %c896_120 = arith.constant 896 : index
    %c56_121 = arith.constant 56 : index
    %344 = vector.load %arg12[%c896_120, %c56_121] : memref<1024x64xbf16, #tpu.memory_space<vmem>>, vector<128x8xbf16>
    tpu.vector_store %arg12[%c896_120, %c56_121], %342 {strides = array<i32>} : memref<1024x64xbf16, #tpu.memory_space<vmem>>, vector<128x8xbf16>,
    %c0_122 = arith.constant 0 : index
    %c0_123 = arith.constant 0 : index
    %345 = vector.load %arg9[%c0_122, %c0_123] : memref<128x1024xbf16, #tpu.memory_space<vmem>>, vector<128x256xbf16>
    %c0_124 = arith.constant 0 : index
    %c0_125 = arith.constant 0 : index
    %346 = vector.load %arg11[%c0_124, %c0_125] : memref<1024x64xbf16, #tpu.memory_space<vmem>>, vector<256x64xbf16>
    %cst_126 = arith.constant dense<0.000000e+00> : vector<128x64xf32>
    %347 = tpu.matmul %345, %346, %cst_126 {dimension_numbers = #tpu.dot_dimension_numbers<[1], [0], [0], [1], [0, 0, 1, 1], [], []>} : vector<128x256xbf16>, vector<256x64xbf16>, vector<128x64xf32> -> vector<128x64xf32>
    %c0_127 = arith.constant 0 : index
    %c0_128 = arith.constant 0 : index
    %348 = vector.load %arg9[%c0_127, %c0_128] : memref<128x1024xbf16, #tpu.memory_space<vmem>>, vector<128x256xbf16>
    %c0_129 = arith.constant 0 : index
    %c0_130 = arith.constant 0 : index
    %349 = vector.load %arg12[%c0_129, %c0_130] : memref<1024x64xbf16, #tpu.memory_space<vmem>>, vector<256x64xbf16>
    %cst_131 = arith.constant dense<0.000000e+00> : vector<128x64xf32>
    %350 = tpu.matmul %348, %349, %cst_131 {dimension_numbers = #tpu.dot_dimension_numbers<[1], [0], [0], [1], [0, 0, 1, 1], [], []>} : vector<128x256xbf16>, vector<256x64xbf16>, vector<128x64xf32> -> vector<128x64xf32>
    %351 = arith.addf %347, %350 : vector<128x64xf32>
    %c0_132 = arith.constant 0 : index
    %c0_133 = arith.constant 0 : index
    %352 = vector.load %arg10[%c0_132, %c0_133] : memref<128x1024xbf16, #tpu.memory_space<vmem>>, vector<128x256xbf16>
    %c0_134 = arith.constant 0 : index
    %c0_135 = arith.constant 0 : index
    %353 = vector.load %arg11[%c0_134, %c0_135] : memref<1024x64xbf16, #tpu.memory_space<vmem>>, vector<256x64xbf16>
    %cst_136 = arith.constant dense<0.000000e+00> : vector<128x64xf32>
    %354 = tpu.matmul %352, %353, %cst_136 {dimension_numbers = #tpu.dot_dimension_numbers<[1], [0], [0], [1], [0, 0, 1, 1], [], []>} : vector<128x256xbf16>, vector<256x64xbf16>, vector<128x64xf32> -> vector<128x64xf32>
    %355 = arith.addf %351, %354 : vector<128x64xf32>
    %c0_137 = arith.constant 0 : index
    %c256_138 = arith.constant 256 : index
    %356 = vector.load %arg9[%c0_137, %c256_138] : memref<128x1024xbf16, #tpu.memory_space<vmem>>, vector<128x256xbf16>
    %c256_139 = arith.constant 256 : index
    %c0_140 = arith.constant 0 : index
    %357 = vector.load %arg11[%c256_139, %c0_140] : memref<1024x64xbf16, #tpu.memory_space<vmem>>, vector<256x64xbf16>
    %cst_141 = arith.constant dense<0.000000e+00> : vector<128x64xf32>
    %358 = tpu.matmul %356, %357, %cst_141 {dimension_numbers = #tpu.dot_dimension_numbers<[1], [0], [0], [1], [0, 0, 1, 1], [], []>} : vector<128x256xbf16>, vector<256x64xbf16>, vector<128x64xf32> -> vector<128x64xf32>
    %c0_142 = arith.constant 0 : index
    %c256_143 = arith.constant 256 : index
    %359 = vector.load %arg9[%c0_142, %c256_143] : memref<128x1024xbf16, #tpu.memory_space<vmem>>, vector<128x256xbf16>
    %c256_144 = arith.constant 256 : index
    %c0_145 = arith.constant 0 : index
    %360 = vector.load %arg12[%c256_144, %c0_145] : memref<1024x64xbf16, #tpu.memory_space<vmem>>, vector<256x64xbf16>
    %cst_146 = arith.constant dense<0.000000e+00> : vector<128x64xf32>
    %361 = tpu.matmul %359, %360, %cst_146 {dimension_numbers = #tpu.dot_dimension_numbers<[1], [0], [0], [1], [0, 0, 1, 1], [], []>} : vector<128x256xbf16>, vector<256x64xbf16>, vector<128x64xf32> -> vector<128x64xf32>
    %362 = arith.addf %358, %361 : vector<128x64xf32>
    %c0_147 = arith.constant 0 : index
    %c256_148 = arith.constant 256 : index
    %363 = vector.load %arg10[%c0_147, %c256_148] : memref<128x1024xbf16, #tpu.memory_space<vmem>>, vector<128x256xbf16>
    %c256_149 = arith.constant 256 : index
    %c0_150 = arith.constant 0 : index
    %364 = vector.load %arg11[%c256_149, %c0_150] : memref<1024x64xbf16, #tpu.memory_space<vmem>>, vector<256x64xbf16>
    %cst_151 = arith.constant dense<0.000000e+00> : vector<128x64xf32>
    %365 = tpu.matmul %363, %364, %cst_151 {dimension_numbers = #tpu.dot_dimension_numbers<[1], [0], [0], [1], [0, 0, 1, 1], [], []>} : vector<128x256xbf16>, vector<256x64xbf16>, vector<128x64xf32> -> vector<128x64xf32>
    %366 = arith.addf %362, %365 : vector<128x64xf32>
    %367 = arith.addf %355, %366 : vector<128x64xf32>
    %c0_152 = arith.constant 0 : index
    %c512_153 = arith.constant 512 : index
    %368 = vector.load %arg9[%c0_152, %c512_153] : memref<128x1024xbf16, #tpu.memory_space<vmem>>, vector<128x256xbf16>
    %c512_154 = arith.constant 512 : index
    %c0_155 = arith.constant 0 : index
    %369 = vector.load %arg11[%c512_154, %c0_155] : memref<1024x64xbf16, #tpu.memory_space<vmem>>, vector<256x64xbf16>
    %cst_156 = arith.constant dense<0.000000e+00> : vector<128x64xf32>
    %370 = tpu.matmul %368, %369, %cst_156 {dimension_numbers = #tpu.dot_dimension_numbers<[1], [0], [0], [1], [0, 0, 1, 1], [], []>} : vector<128x256xbf16>, vector<256x64xbf16>, vector<128x64xf32> -> vector<128x64xf32>
    %c0_157 = arith.constant 0 : index
    %c512_158 = arith.constant 512 : index
    %371 = vector.load %arg9[%c0_157, %c512_158] : memref<128x1024xbf16, #tpu.memory_space<vmem>>, vector<128x256xbf16>
    %c512_159 = arith.constant 512 : index
    %c0_160 = arith.constant 0 : index
    %372 = vector.load %arg12[%c512_159, %c0_160] : memref<1024x64xbf16, #tpu.memory_space<vmem>>, vector<256x64xbf16>
    %cst_161 = arith.constant dense<0.000000e+00> : vector<128x64xf32>
    %373 = tpu.matmul %371, %372, %cst_161 {dimension_numbers = #tpu.dot_dimension_numbers<[1], [0], [0], [1], [0, 0, 1, 1], [], []>} : vector<128x256xbf16>, vector<256x64xbf16>, vector<128x64xf32> -> vector<128x64xf32>
    %374 = arith.addf %370, %373 : vector<128x64xf32>
    %c0_162 = arith.constant 0 : index
    %c512_163 = arith.constant 512 : index
    %375 = vector.load %arg10[%c0_162, %c512_163] : memref<128x1024xbf16, #tpu.memory_space<vmem>>, vector<128x256xbf16>
    %c512_164 = arith.constant 512 : index
    %c0_165 = arith.constant 0 : index
    %376 = vector.load %arg11[%c512_164, %c0_165] : memref<1024x64xbf16, #tpu.memory_space<vmem>>, vector<256x64xbf16>
    %cst_166 = arith.constant dense<0.000000e+00> : vector<128x64xf32>
    %377 = tpu.matmul %375, %376, %cst_166 {dimension_numbers = #tpu.dot_dimension_numbers<[1], [0], [0], [1], [0, 0, 1, 1], [], []>} : vector<128x256xbf16>, vector<256x64xbf16>, vector<128x64xf32> -> vector<128x64xf32>
    %378 = arith.addf %374, %377 : vector<128x64xf32>
    %379 = arith.addf %367, %378 : vector<128x64xf32>
    %c0_167 = arith.constant 0 : index
    %c768_168 = arith.constant 768 : index
    %380 = vector.load %arg9[%c0_167, %c768_168] : memref<128x1024xbf16, #tpu.memory_space<vmem>>, vector<128x256xbf16>
    %c768_169 = arith.constant 768 : index
    %c0_170 = arith.constant 0 : index
    %381 = vector.load %arg11[%c768_169, %c0_170] : memref<1024x64xbf16, #tpu.memory_space<vmem>>, vector<256x64xbf16>
    %cst_171 = arith.constant dense<0.000000e+00> : vector<128x64xf32>
    %382 = tpu.matmul %380, %381, %cst_171 {dimension_numbers = #tpu.dot_dimension_numbers<[1], [0], [0], [1], [0, 0, 1, 1], [], []>} : vector<128x256xbf16>, vector<256x64xbf16>, vector<128x64xf32> -> vector<128x64xf32>
    %c0_172 = arith.constant 0 : index
    %c768_173 = arith.constant 768 : index
    %383 = vector.load %arg9[%c0_172, %c768_173] : memref<128x1024xbf16, #tpu.memory_space<vmem>>, vector<128x256xbf16>
    %c768_174 = arith.constant 768 : index
    %c0_175 = arith.constant 0 : index
    %384 = vector.load %arg12[%c768_174, %c0_175] : memref<1024x64xbf16, #tpu.memory_space<vmem>>, vector<256x64xbf16>
    %cst_176 = arith.constant dense<0.000000e+00> : vector<128x64xf32>
    %385 = tpu.matmul %383, %384, %cst_176 {dimension_numbers = #tpu.dot_dimension_numbers<[1], [0], [0], [1], [0, 0, 1, 1], [], []>} : vector<128x256xbf16>, vector<256x64xbf16>, vector<128x64xf32> -> vector<128x64xf32>
    %386 = arith.addf %382, %385 : vector<128x64xf32>
    %c0_177 = arith.constant 0 : index
    %c768_178 = arith.constant 768 : index
    %387 = vector.load %arg10[%c0_177, %c768_178] : memref<128x1024xbf16, #tpu.memory_space<vmem>>, vector<128x256xbf16>
    %c768_179 = arith.constant 768 : index
    %c0_180 = arith.constant 0 : index
    %388 = vector.load %arg11[%c768_179, %c0_180] : memref<1024x64xbf16, #tpu.memory_space<vmem>>, vector<256x64xbf16>
    %cst_181 = arith.constant dense<0.000000e+00> : vector<128x64xf32>
    %389 = tpu.matmul %387, %388, %cst_181 {dimension_numbers = #tpu.dot_dimension_numbers<[1], [0], [0], [1], [0, 0, 1, 1], [], []>} : vector<128x256xbf16>, vector<256x64xbf16>, vector<128x64xf32> -> vector<128x64xf32>
    %390 = arith.addf %386, %389 : vector<128x64xf32>
    %391 = arith.addf %379, %390 : vector<128x64xf32>
    %c0_182 = arith.constant 0 : index
    %c0_183 = arith.constant 0 : index
    %392 = vector.load %arg4[%c0_182, %c0_183] : memref<1x64xf32, #tpu.memory_space<vmem>>, vector<1x64xf32>
    %393 = vector.broadcast %392 : vector<1x64xf32> to vector<128x64xf32>
    %394 = arith.addf %391, %393 : vector<128x64xf32>
    %cst_184 = arith.constant 0.000000e+00 : f32
    %395 = vector.broadcast %cst_184 : f32 to vector<128x64xf32>
    %396 = arith.cmpf ogt, %394, %395 : vector<128x64xf32>
    %397 = math.exp %394 : vector<128x64xf32>
    %cst_185 = arith.constant 1.000000e+00 : f32
    %398 = vector.broadcast %cst_185 : f32 to vector<128x64xf32>
    %399 = arith.subf %397, %398 : vector<128x64xf32>
    %400 = arith.select %396, %394, %399 : vector<128x64xi1>, vector<128x64xf32>
    %c0_186 = arith.constant 0 : index
    %c0_187 = arith.constant 0 : index
    %401 = vector.load %arg5[%c0_186, %c0_187] : memref<64x128xf32, #tpu.memory_space<vmem>>, vector<64x128xf32>
    %402 = arith.truncf %400 : vector<128x64xf32> to vector<128x64xbf16>
    %403 = arith.extf %402 : vector<128x64xbf16> to vector<128x64xf32>
    %404 = arith.subf %400, %403 : vector<128x64xf32>
    %405 = arith.truncf %404 : vector<128x64xf32> to vector<128x64xbf16>
    %406 = arith.truncf %401 : vector<64x128xf32> to vector<64x128xbf16>
    %407 = arith.extf %406 : vector<64x128xbf16> to vector<64x128xf32>
    %408 = arith.subf %401, %407 : vector<64x128xf32>
    %409 = arith.truncf %408 : vector<64x128xf32> to vector<64x128xbf16>
    %cst_188 = arith.constant dense<0.000000e+00> : vector<128x128xf32>
    %410 = tpu.matmul %402, %406, %cst_188 {dimension_numbers = #tpu.dot_dimension_numbers<[1], [0], [0], [1], [0, 0, 1, 1], [], []>} : vector<128x64xbf16>, vector<64x128xbf16>, vector<128x128xf32> -> vector<128x128xf32>
    %cst_189 = arith.constant dense<0.000000e+00> : vector<128x128xf32>
    %411 = tpu.matmul %402, %409, %cst_189 {dimension_numbers = #tpu.dot_dimension_numbers<[1], [0], [0], [1], [0, 0, 1, 1], [], []>} : vector<128x64xbf16>, vector<64x128xbf16>, vector<128x128xf32> -> vector<128x128xf32>
    %412 = arith.addf %410, %411 : vector<128x128xf32>
    %cst_190 = arith.constant dense<0.000000e+00> : vector<128x128xf32>
    %413 = tpu.matmul %405, %406, %cst_190 {dimension_numbers = #tpu.dot_dimension_numbers<[1], [0], [0], [1], [0, 0, 1, 1], [], []>} : vector<128x64xbf16>, vector<64x128xbf16>, vector<128x128xf32> -> vector<128x128xf32>
    %414 = arith.addf %412, %413 : vector<128x128xf32>
    %c0_191 = arith.constant 0 : index
    %c0_192 = arith.constant 0 : index
    %415 = vector.load %arg6[%c0_191, %c0_192] : memref<8x128xf32, #tpu.memory_space<vmem>>, vector<8x128xf32>
    %416 = arith.truncf %415 : vector<8x128xf32> to vector<8x128xbf16>
    %417 = arith.extf %416 : vector<8x128xbf16> to vector<8x128xf32>
    %418 = arith.subf %415, %417 : vector<8x128xf32>
    %419 = arith.truncf %418 : vector<8x128xf32> to vector<8x128xbf16>
    %420 = arith.truncf %414 : vector<128x128xf32> to vector<128x128xbf16>
    %421 = arith.extf %420 : vector<128x128xbf16> to vector<128x128xf32>
    %422 = arith.subf %414, %421 : vector<128x128xf32>
    %423 = arith.truncf %422 : vector<128x128xf32> to vector<128x128xbf16>
    %cst_193 = arith.constant dense<0.000000e+00> : vector<8x128xf32>
    %424 = tpu.matmul %416, %420, %cst_193 {dimension_numbers = #tpu.dot_dimension_numbers<[1], [1], [0], [0], [0, 0, 1, 0], [], []>} : vector<8x128xbf16>, vector<128x128xbf16>, vector<8x128xf32> -> vector<8x128xf32>
    %cst_194 = arith.constant dense<0.000000e+00> : vector<8x128xf32>
    %425 = tpu.matmul %416, %423, %cst_194 {dimension_numbers = #tpu.dot_dimension_numbers<[1], [1], [0], [0], [0, 0, 1, 0], [], []>} : vector<8x128xbf16>, vector<128x128xbf16>, vector<8x128xf32> -> vector<8x128xf32>
    %426 = arith.addf %424, %425 : vector<8x128xf32>
    %cst_195 = arith.constant dense<0.000000e+00> : vector<8x128xf32>
    %427 = tpu.matmul %419, %420, %cst_195 {dimension_numbers = #tpu.dot_dimension_numbers<[1], [1], [0], [0], [0, 0, 1, 0], [], []>} : vector<8x128xbf16>, vector<128x128xbf16>, vector<8x128xf32> -> vector<8x128xf32>
    %428 = arith.addf %426, %427 : vector<8x128xf32>
    %429 = vector.extract_strided_slice %414 {offsets = [0, 127], sizes = [128, 1], strides = [1, 1]} : vector<128x128xf32> to vector<128x1xf32>
    %430 = vector.extract_strided_slice %428 {offsets = [0, 0], sizes = [1, 128], strides = [1, 1]} : vector<8x128xf32> to vector<1x128xf32>
    %431 = vector.broadcast %429 : vector<128x1xf32> to vector<128x128xf32>
    %432 = vector.broadcast %430 : vector<1x128xf32> to vector<128x128xf32>
    %433 = arith.addf %431, %432 : vector<128x128xf32>
    %cst_196 = arith.constant 0.000000e+00 : f32
    %434 = vector.broadcast %cst_196 : f32 to vector<128x128xf32>
    %435 = arith.cmpf ogt, %433, %434 : vector<128x128xf32>
    %cst_197 = arith.constant 2.000000e-01 : f32
    %436 = vector.broadcast %cst_197 : f32 to vector<128x128xf32>
    %437 = arith.mulf %436, %433 : vector<128x128xf32>
    %438 = arith.select %435, %433, %437 : vector<128x128xi1>, vector<128x128xf32>
    %c0_198 = arith.constant 0 : index
    %c0_199 = arith.constant 0 : index
    %439 = vector.load %arg1[%c0_198, %c0_199] : memref<128x128xf32, #tpu.memory_space<vmem>>, vector<128x128xf32>
    %440 = arith.addf %438, %439 : vector<128x128xf32>
    %cst_200 = arith.constant dense<0xFF800000> : vector<128xf32>
    %441 = vector.multi_reduction <maximumf>, %440, %cst_200 [1] : vector<128x128xf32> to vector<128xf32>
    %442 = vector.shape_cast %441 : vector<128xf32> to vector<128x1xf32>
    %443 = vector.broadcast %442 : vector<128x1xf32> to vector<128x128xf32>
    %444 = arith.subf %440, %443 : vector<128x128xf32>
    %445 = math.exp %444 : vector<128x128xf32>
    %cst_201 = arith.constant dense<0.000000e+00> : vector<128xf32>
    %446 = vector.multi_reduction <add>, %445, %cst_201 [1] : vector<128x128xf32> to vector<128xf32>
    %447 = vector.shape_cast %446 : vector<128xf32> to vector<128x1xf32>
    %448 = tpu.reciprocal %447 {approx = true} : vector<128x1xf32> -> vector<128x1xf32>
    %449 = arith.mulf %447, %448 : vector<128x1xf32>
    %cst_202 = arith.constant 2.000000e+00 : f32
    %450 = vector.broadcast %cst_202 : f32 to vector<128x1xf32>
    %451 = arith.subf %450, %449 : vector<128x1xf32>
    %452 = arith.mulf %448, %451 : vector<128x1xf32>
    %453 = vector.broadcast %452 : vector<128x1xf32> to vector<128x128xf32>
    %454 = arith.mulf %445, %453 : vector<128x128xf32>
    %455 = arith.truncf %454 : vector<128x128xf32> to vector<128x128xbf16>
    %456 = arith.extf %455 : vector<128x128xbf16> to vector<128x128xf32>
    %457 = arith.subf %454, %456 : vector<128x128xf32>
    %458 = arith.truncf %457 : vector<128x128xf32> to vector<128x128xbf16>
    %459 = arith.truncf %414 : vector<128x128xf32> to vector<128x128xbf16>
    %460 = arith.extf %459 : vector<128x128xbf16> to vector<128x128xf32>
    %461 = arith.subf %414, %460 : vector<128x128xf32>
    %462 = arith.truncf %461 : vector<128x128xf32> to vector<128x128xbf16>
    %cst_203 = arith.constant dense<0.000000e+00> : vector<128x128xf32>
    %463 = tpu.matmul %455, %459, %cst_203 {dimension_numbers = #tpu.dot_dimension_numbers<[1], [0], [0], [1], [0, 0, 1, 1], [], []>} : vector<128x128xbf16>, vector<128x128xbf16>, vector<128x128xf32> -> vector<128x128xf32>
    %cst_204 = arith.constant dense<0.000000e+00> : vector<128x128xf32>
    %464 = tpu.matmul %455, %462, %cst_204 {dimension_numbers = #tpu.dot_dimension_numbers<[1], [0], [0], [1], [0, 0, 1, 1], [], []>} : vector<128x128xbf16>, vector<128x128xbf16>, vector<128x128xf32> -> vector<128x128xf32>
    %465 = arith.addf %463, %464 : vector<128x128xf32>
    %cst_205 = arith.constant dense<0.000000e+00> : vector<128x128xf32>
    %466 = tpu.matmul %458, %459, %cst_205 {dimension_numbers = #tpu.dot_dimension_numbers<[1], [0], [0], [1], [0, 0, 1, 1], [], []>} : vector<128x128xbf16>, vector<128x128xbf16>, vector<128x128xf32> -> vector<128x128xf32>
    %467 = arith.addf %465, %466 : vector<128x128xf32>
    %c0_206 = arith.constant 0 : index
    %c0_207 = arith.constant 0 : index
    %468 = vector.load %arg7[%c0_206, %c0_207] : memref<1x128xf32, #tpu.memory_space<vmem>>, vector<1x128xf32>
    %469 = vector.broadcast %468 : vector<1x128xf32> to vector<128x128xf32>
    %470 = arith.addf %467, %469 : vector<128x128xf32>
    %471 = tpu.iota {dimensions = array<i32: 1>} : vector<128x128xi32>
    %c8_i32 = arith.constant 8 : i32
    %472 = vector.broadcast %c8_i32 : i32 to vector<128x128xi32>
    %473 = arith.cmpi slt, %471, %472 : vector<128x128xi32>
    %cst_208 = arith.constant -1.000000e+30 : f32
    %474 = vector.broadcast %cst_208 : f32 to vector<128x128xf32>
    %475 = arith.select %473, %470, %474 : vector<128x128xi1>, vector<128x128xf32>
    %cst_209 = arith.constant dense<0xFF800000> : vector<128xf32>
    %476 = vector.multi_reduction <maximumf>, %475, %cst_209 [1] : vector<128x128xf32> to vector<128xf32>
    %477 = vector.shape_cast %476 : vector<128xf32> to vector<128x1xf32>
    %478 = vector.broadcast %477 : vector<128x1xf32> to vector<128x128xf32>
    %479 = arith.subf %475, %478 : vector<128x128xf32>
    %480 = math.exp %479 : vector<128x128xf32>
    %cst_210 = arith.constant dense<0.000000e+00> : vector<128xf32>
    %481 = vector.multi_reduction <add>, %480, %cst_210 [1] : vector<128x128xf32> to vector<128xf32>
    %482 = vector.shape_cast %481 : vector<128xf32> to vector<128x1xf32>
    %483 = math.log %482 : vector<128x1xf32>
    %484 = arith.addf %483, %477 : vector<128x1xf32>
    %485 = vector.broadcast %484 : vector<128x1xf32> to vector<128x128xf32>
    %486 = arith.subf %470, %485 : vector<128x128xf32>
    %cst_211 = arith.constant 0.000000e+00 : f32
    %487 = vector.broadcast %cst_211 : f32 to vector<128x128xf32>
    %488 = arith.select %473, %486, %487 : vector<128x128xi1>, vector<128x128xf32>
    %c0_212 = arith.constant 0 : index
    %c0_213 = arith.constant 0 : index
    %489 = vector.load %arg8[%c0_212, %c0_213] : memref<128x128xf32, #tpu.memory_space<vmem>>, vector<128x128xf32>
    tpu.vector_store %arg8[%c0_212, %c0_213], %488 {strides = array<i32>} : memref<128x128xf32, #tpu.memory_space<vmem>>, vector<128x128xf32>,
    return
  }
}

</mosaic_0001>

<llo_original>
// kernel: tpu_custom_call.1
$region0: #{tpu_custom_call.1}
  #allocation0 [shape = 'u32[]', space=smem, size = 0x4, offset = 0x4, fixed_abs, tag = 'smem constant byte address 0x4 - core index']
  #allocation1 [shape = 'u32[144,128]{1,0:T(1,128)}', space=vmem, size = 0x12000, scoped, tag = 'internal scratch']
  #allocation2 [shape = 'bf16[128,1024]{1,0:T(16,128)(2,1)}', space=vmem, size = 0x40000, scoped, tag = 'scratch operand']
  #allocation3 [shape = 'bf16[128,1024]{1,0:T(16,128)(2,1)}', space=vmem, size = 0x40000, scoped, tag = 'scratch operand']
  #allocation4 [shape = 'bf16[1024,64]{1,0:T(16,128)(2,1)}', space=vmem, size = 0x40000, scoped, tag = 'scratch operand']
  #allocation5 [shape = 'bf16[1024,64]{1,0:T(16,128)(2,1)}', space=vmem, size = 0x40000, scoped, tag = 'scratch operand']
  %s0 = inlined_call_operand.vmem [shape: f32[128,32], index: 0, kind: input, shape index: {}]
  %s1 = inlined_call_operand.vmem [shape: f32[128,128], index: 1, kind: input, shape index: {}]
  %s2 = inlined_call_operand.vmem [shape: f32[32,72], index: 2, kind: input, shape index: {}]
  %s3 = inlined_call_operand.vmem [shape: f32[8,72], index: 3, kind: input, shape index: {}]
  %s4 = inlined_call_operand.vmem [shape: f32[1,64], index: 4, kind: input, shape index: {}]
  %s5 = inlined_call_operand.hbm [shape: f32[64,128], index: 5, kind: input, shape index: {}]
  %s6 = inlined_call_operand.vmem [shape: f32[8,128], index: 6, kind: input, shape index: {}]
  %s7 = inlined_call_operand.vmem [shape: f32[1,128], index: 7, kind: input, shape index: {}]
  %s8 = inlined_call_operand.hbm [shape: f32[128,128], index: 8, kind: output, shape index: {}]
  %s9 = sld [smem:[#allocation0]]
  $region46: #{tpu_custom_call.1} parent=0
    _
  %s11 = ssub.s32 1, %s9
  %s12 = scalar_select 0, %s11, %s9
  $region1: #{tpu_custom_call.1} parent=0
    #allocation6 [shape = 'u8[32768]{0}', space=vmem, size = 0x8000, scoped, tag = 'input window, operand 5, single buffered']
    #allocation7 [shape = 's32[1]{0}', space=sflag, size = 0x4, scoped, tag = 'scoped memory for tpu_custom_call.1']
    #allocation8 [shape = 's32[1]{0}', space=sflag, size = 0x4, scoped, tag = 'scoped memory for tpu_custom_call.1']
    #allocation9 [shape = 'u8[65536]{0}', space=vmem, size = 0x10000, scoped, tag = 'output window, operand 0, single buffered']
    %13 = vsyncpa [#allocation7], 0
    %14 = vsyncpa [#allocation8], 0
    // Predicated region
    $region2: #{tpu_custom_call.1} parent=1 // pred_check
      _
    $region3: #{tpu_custom_call.1} parent=1 // pred_check_branch
      %16 = sbr.rel (0) target = $region5
    $region4: #{tpu_custom_call.1} parent=1 // pred_region
      _
    $region5: #{tpu_custom_call.1} parent=1 // pred_fallthru
      _
    // Predicated region
    $region6: #{tpu_custom_call.1} parent=1 // pred_check
      _
    $region7: #{tpu_custom_call.1} parent=1 // pred_check_branch
      %18 = sbr.rel (0) target = $region9
    $region8: #{tpu_custom_call.1} parent=1 // pred_region
      _
    $region9: #{tpu_custom_call.1} parent=1 // pred_fallthru
      _
    // Predicated region
    $region10: #{tpu_custom_call.1} parent=1 // pred_check
      _
    $region11: #{tpu_custom_call.1} parent=1 // pred_check_branch
      %20 = sbr.rel (0) target = $region13
    $region12: #{tpu_custom_call.1} parent=1 // pred_region
      _
    $region13: #{tpu_custom_call.1} parent=1 // pred_fallthru
      _
    // Predicated region
    $region14: #{tpu_custom_call.1} parent=1 // pred_check
      _
    $region15: #{tpu_custom_call.1} parent=1 // pred_check_branch
      %22 = sbr.rel (0) target = $region17
    $region16: #{tpu_custom_call.1} parent=1 // pred_region
      _
    $region17: #{tpu_custom_call.1} parent=1 // pred_fallthru
      _
    // Predicated region
    $region18: #{tpu_custom_call.1} parent=1 // pred_check
      _
    $region19: #{tpu_custom_call.1} parent=1 // pred_check_branch
      %24 = sbr.rel (0) target = $region21
    $region20: #{tpu_custom_call.1} parent=1 // pred_region
      _
    $region21: #{tpu_custom_call.1} parent=1 // pred_fallthru
      _
    // Predicated region
    $region22: #{tpu_custom_call.1} parent=1 // pred_check
      _
    $region23: #{tpu_custom_call.1} parent=1 // pred_check_branch
      %26 = sbr.rel (0) target = $region25
    $region24: #{tpu_custom_call.1} parent=1 // pred_region
      %s28 = ssub.s32 1024, 1024
      %29 = vsyncadd [#allocation7], %s28
      %s30 = sshll.u32 [#allocation6], 4
      %s31 = int_to_ptr.vmem [resolvable:$true] %s30
      %36 = dma.hbm_to_vmem [thread:$0]  %s5, 1024, %s31, [#allocation7], 128, 128, 8
    $region25: #{tpu_custom_call.1} parent=1 // pred_fallthru
      _
    // Predicated region
    $region26: #{tpu_custom_call.1} parent=1 // pred_check
      _
    $region27: #{tpu_custom_call.1} parent=1 // pred_check_branch
      %38 = sbr.rel (0) target = $region29
    $region28: #{tpu_custom_call.1} parent=1 // pred_region
      _
    $region29: #{tpu_custom_call.1} parent=1 // pred_fallthru
      _
    // Predicated region
    $region30: #{tpu_custom_call.1} parent=1 // pred_check
      _
    $region31: #{tpu_custom_call.1} parent=1 // pred_check_branch
      %40 = sbr.rel (0) target = $region33
    $region32: #{tpu_custom_call.1} parent=1 // pred_region
      _
    $region33: #{tpu_custom_call.1} parent=1 // pred_fallthru
      _
    // Predicated region
    $region34: #{tpu_custom_call.1} parent=1 // pred_check
      _
    $region35: #{tpu_custom_call.1} parent=1 // pred_check_branch
      %42 = sbr.rel (0) target = $region37
    $region36: #{tpu_custom_call.1} parent=1 // pred_region
      %43 = dma.done [#allocation7], 1024
    $region37: #{tpu_custom_call.1} parent=1 // pred_fallthru
      _
    %v45 = vld [vmem:[%s0] sm:$0xff]
    %v46 = vld [vmem:[%s0 + $0x8] sm:$0xff]
    %v47 = vld [vmem:[%s0 + $0x10] sm:$0xff]
    %v48 = vld [vmem:[%s0 + $0x18] sm:$0xff]
    %v49 = vld [vmem:[%s0 + $0x20] sm:$0xff]
    %v50 = vld [vmem:[%s0 + $0x28] sm:$0xff]
    %v51 = vld [vmem:[%s0 + $0x30] sm:$0xff]
    %v52 = vld [vmem:[%s0 + $0x38] sm:$0xff]
    %v53 = vld [vmem:[%s0 + $0x40] sm:$0xff]
    %v54 = vld [vmem:[%s0 + $0x48] sm:$0xff]
    %v55 = vld [vmem:[%s0 + $0x50] sm:$0xff]
    %v56 = vld [vmem:[%s0 + $0x58] sm:$0xff]
    %v57 = vld [vmem:[%s0 + $0x60] sm:$0xff]
    %v58 = vld [vmem:[%s0 + $0x68] sm:$0xff]
    %v59 = vld [vmem:[%s0 + $0x70] sm:$0xff]
    %v60 = vld [vmem:[%s0 + $0x78] sm:$0xff]
    %v61 = vld [vmem:[%s2] sm:$0xff]
    %v62 = vld [vmem:[%s2 + $0x8] sm:$0xff]
    %v63 = vld [vmem:[%s2 + $0x10] sm:$0xff]
    %v64 = vld [vmem:[%s2 + $0x18] sm:$0xff]
    %v65 = vpack.c.bf16 %v46, %v45
    %v66 = vpack.c.bf16 %v48, %v47
    %v67 = vpack.c.bf16 %v50, %v49
    %v68 = vpack.c.bf16 %v52, %v51
    %v69 = vpack.c.bf16 %v54, %v53
    %v70 = vpack.c.bf16 %v56, %v55
    %v71 = vpack.c.bf16 %v58, %v57
    %v72 = vpack.c.bf16 %v60, %v59
    %v73 = vunpack.c.l.bf16 %v65
    %v74 = vunpack.c.h.bf16 %v65
    %v75 = vunpack.c.l.bf16 %v66
    %v76 = vunpack.c.h.bf16 %v66
    %v77 = vunpack.c.l.bf16 %v67
    %v78 = vunpack.c.h.bf16 %v67
    %v79 = vunpack.c.l.bf16 %v68
    %v80 = vunpack.c.h.bf16 %v68
    %v81 = vunpack.c.l.bf16 %v69
    %v82 = vunpack.c.h.bf16 %v69
    %v83 = vunpack.c.l.bf16 %v70
    %v84 = vunpack.c.h.bf16 %v70
    %v85 = vunpack.c.l.bf16 %v71
    %v86 = vunpack.c.h.bf16 %v71
    %v87 = vunpack.c.l.bf16 %v72
    %v88 = vunpack.c.h.bf16 %v72
    %v89 = vsub.f32 %v45, %v73
    %v90 = vsub.f32 %v46, %v74
    %v91 = vsub.f32 %v47, %v75
    %v92 = vsub.f32 %v48, %v76
    %v93 = vsub.f32 %v49, %v77
    %v94 = vsub.f32 %v50, %v78
    %v95 = vsub.f32 %v51, %v79
    %v96 = vsub.f32 %v52, %v80
    %v97 = vsub.f32 %v53, %v81
    %v98 = vsub.f32 %v54, %v82
    %v99 = vsub.f32 %v55, %v83
    %v100 = vsub.f32 %v56, %v84
    %v101 = vsub.f32 %v57, %v85
    %v102 = vsub.f32 %v58, %v86
    %v103 = vsub.f32 %v59, %v87
    %v104 = vsub.f32 %v60, %v88
    %v105 = vpack.c.bf16 %v90, %v89
    %v106 = vpack.c.bf16 %v92, %v91
    %v107 = vpack.c.bf16 %v94, %v93
    %v108 = vpack.c.bf16 %v96, %v95
    %v109 = vpack.c.bf16 %v98, %v97
    %v110 = vpack.c.bf16 %v100, %v99
    %v111 = vpack.c.bf16 %v102, %v101
    %v112 = vpack.c.bf16 %v104, %v103
    %v113 = vpack.c.bf16 %v62, %v61
    %v114 = vpack.c.bf16 %v64, %v63
    %v115 = vunpack.c.l.bf16 %v113
    %v116 = vunpack.c.h.bf16 %v113
    %v117 = vunpack.c.l.bf16 %v114
    %v118 = vunpack.c.h.bf16 %v114
    %v119 = vsub.f32 %v61, %v115
    %v120 = vsub.f32 %v62, %v116
    %v121 = vsub.f32 %v63, %v117
    %v122 = vsub.f32 %v64, %v118
    %v123 = vpack.c.bf16 %v120, %v119
    %v124 = vpack.c.bf16 %v122, %v121
    %vm125 = vcmask 261120
    %v127 = vsel %vm125, %v65, 0
    %v130 = vsel %vm125, %v66, 0
    %v133 = vsel %vm125, %v67, 0
    %v136 = vsel %vm125, %v68, 0
    %v139 = vsel %vm125, %v69, 0
    %v142 = vsel %vm125, %v70, 0
    %v145 = vsel %vm125, %v71, 0
    %v148 = vsel %vm125, %v72, 0
    %150 = vmatprep.subr.bf16.mxu0 0
    %151 = vmatpush1.bf16.msra.mxu0 %v123
    %152 = vmatprep.subr.bf16.mxu0 0
    %153 = vmatpush1.bf16.msra.mxu0 %v124
    %154 = vmatprep.subr.bf16.mxu0 0
    %155 = vmatpush1.bf16.msra.mxu0 0
    %156 = vmatprep.subr.bf16.mxu0 0
    %157 = vmatpush1.bf16.msra.mxu0 0
    %158 = vmatprep.subr.bf16.mxu0 0
    %159 = vmatpush1.bf16.msra.mxu0 0
    %160 = vmatprep.subr.bf16.mxu0 0
    %161 = vmatpush1.bf16.msra.mxu0 0
    %162 = vmatprep.subr.bf16.mxu0 0
    %163 = vmatpush1.bf16.msra.mxu0 0
    %164 = vmatprep.subr.bf16.mxu0 0
    %165 = vmatpush1.bf16.msra.mxu0 0
    %166 = vmatprep.subr.bf16.mxu0 0
    %167 = vmatpush1.bf16.msra.mxu0 0
    %168 = vmatprep.subr.bf16.mxu0 0
    %169 = vmatpush1.bf16.msra.mxu0 0
    %170 = vmatprep.subr.bf16.mxu0 0
    %171 = vmatpush1.bf16.msra.mxu0 0
    %172 = vmatprep.subr.bf16.mxu0 0
    %173 = vmatpush1.bf16.msra.mxu0 0
    %174 = vmatprep.subr.bf16.mxu0 0
    %175 = vmatpush1.bf16.msra.mxu0 0
    %176 = vmatprep.subr.bf16.mxu0 0
    %177 = vmatpush1.bf16.msra.mxu0 0
    %178 = vmatprep.subr.bf16.mxu0 0
    %179 = vmatpush1.bf16.msra.mxu0 0
    %180 = vmatprep.subr.bf16.mxu0 0
    %181 = vmatpush1.bf16.msra.mxu0 0
    %182 = vmatprep.mubr.bf16.mxu0 0
    %183 = vmatmul.mubr.bf16.gmra.mrb[0].mxu0 %v127
    %v184 = vpop.f32.mrb[0].mxu0
    %v185 = vadd.f32 0.0, %v184
    %v186 = vpop.f32.mrb[0].mxu0
    %v187 = vpop.f32.mrb[0].mxu0
    %v188 = vadd.f32 0.0, %v187
    %v189 = vpop.f32.mrb[0].mxu0
    %190 = vmatprep.mubr.bf16.mxu0 0
    %191 = vmatmul.mubr.bf16.gmra.mrb[0].mxu0 %v130
    %v192 = vpop.f32.mrb[0].mxu0
    %v193 = vadd.f32 0.0, %v192
    %v194 = vpop.f32.mrb[0].mxu0
    %v195 = vpop.f32.mrb[0].mxu0
    %v196 = vadd.f32 0.0, %v195
    %v197 = vpop.f32.mrb[0].mxu0
    %198 = vmatprep.mubr.bf16.mxu0 0
    %199 = vmatmul.mubr.bf16.gmra.mrb[0].mxu0 %v133
    %v200 = vpop.f32.mrb[0].mxu0
    %v201 = vadd.f32 0.0, %v200
    %v202 = vpop.f32.mrb[0].mxu0
    %v203 = vpop.f32.mrb[0].mxu0
    %v204 = vadd.f32 0.0, %v203
    %v205 = vpop.f32.mrb[0].mxu0
    %206 = vmatprep.mubr.bf16.mxu0 0
    %207 = vmatmul.mubr.bf16.gmra.mrb[0].mxu0 %v136
    %v208 = vpop.f32.mrb[0].mxu0
    %v209 = vadd.f32 0.0, %v208
    %v210 = vpop.f32.mrb[0].mxu0
    %v211 = vpop.f32.mrb[0].mxu0
    %v212 = vadd.f32 0.0, %v211
    %v213 = vpop.f32.mrb[0].mxu0
    %214 = vmatprep.mubr.bf16.mxu0 0
    %215 = vmatmul.mubr.bf16.gmra.mrb[0].mxu0 %v139
    %v216 = vpop.f32.mrb[0].mxu0
    %v217 = vadd.f32 0.0, %v216
    %v218 = vpop.f32.mrb[0].mxu0
    %v219 = vpop.f32.mrb[0].mxu0
    %v220 = vadd.f32 0.0, %v219
    %v221 = vpop.f32.mrb[0].mxu0
    %222 = vmatprep.mubr.bf16.mxu0 0
    %223 = vmatmul.mubr.bf16.gmra.mrb[0].mxu0 %v142
    %v224 = vpop.f32.mrb[0].mxu0
    %v225 = vadd.f32 0.0, %v224
    %v226 = vpop.f32.mrb[0].mxu0
    %v227 = vpop.f32.mrb[0].mxu0
    %v228 = vadd.f32 0.0, %v227
    %v229 = vpop.f32.mrb[0].mxu0
    %230 = vmatprep.mubr.bf16.mxu0 0
    %231 = vmatmul.mubr.bf16.gmra.mrb[0].mxu0 %v145
    %v232 = vpop.f32.mrb[0].mxu0
    %v233 = vadd.f32 0.0, %v232
    %v234 = vpop.f32.mrb[0].mxu0
    %v235 = vpop.f32.mrb[0].mxu0
    %v236 = vadd.f32 0.0, %v235
    %v237 = vpop.f32.mrb[0].mxu0
    %238 = vmatprep.mubr.bf16.mxu0 0
    %239 = vmatmul.mubr.bf16.gmra.mrb[0].mxu0 %v148
    %v240 = vpop.f32.mrb[0].mxu0
    %v241 = vadd.f32 0.0, %v240
    %v242 = vpop.f32.mrb[0].mxu0
    %v243 = vpop.f32.mrb[0].mxu0
    %v244 = vadd.f32 0.0, %v243
    %v245 = vpop.f32.mrb[0].mxu0
    %246 = vdwg.mxu0
    %247 = vmatprep.subr.bf16.mxu0 0
    %248 = vmatpush1.bf16.msra.mxu0 %v113
    %249 = vmatprep.subr.bf16.mxu0 0
    %250 = vmatpush1.bf16.msra.mxu0 %v114
    %251 = vmatprep.subr.bf16.mxu0 0
    %252 = vmatpush1.bf16.msra.mxu0 0
    %253 = vmatprep.subr.bf16.mxu0 0
    %254 = vmatpush1.bf16.msra.mxu0 0
    %255 = vmatprep.subr.bf16.mxu0 0
    %256 = vmatpush1.bf16.msra.mxu0 0
    %257 = vmatprep.subr.bf16.mxu0 0
    %258 = vmatpush1.bf16.msra.mxu0 0
    %259 = vmatprep.subr.bf16.mxu0 0
    %260 = vmatpush1.bf16.msra.mxu0 0
    %261 = vmatprep.subr.bf16.mxu0 0
    %262 = vmatpush1.bf16.msra.mxu0 0
    %263 = vmatprep.subr.bf16.mxu0 0
    %264 = vmatpush1.bf16.msra.mxu0 0
    %265 = vmatprep.subr.bf16.mxu0 0
    %266 = vmatpush1.bf16.msra.mxu0 0
    %267 = vmatprep.subr.bf16.mxu0 0
    %268 = vmatpush1.bf16.msra.mxu0 0
    %269 = vmatprep.subr.bf16.mxu0 0
    %270 = vmatpush1.bf16.msra.mxu0 0
    %271 = vmatprep.subr.bf16.mxu0 0
    %272 = vmatpush1.bf16.msra.mxu0 0
    %273 = vmatprep.subr.bf16.mxu0 0
    %274 = vmatpush1.bf16.msra.mxu0 0
    %275 = vmatprep.subr.bf16.mxu0 0
    %276 = vmatpush1.bf16.msra.mxu0 0
    %277 = vmatprep.subr.bf16.mxu0 0
    %278 = vmatpush1.bf16.msra.mxu0 0
    %279 = vmatprep.mubr.bf16.mxu0 0
    %280 = vmatmul.mubr.bf16.gmra.mrb[0].mxu0 %v127
    %v281 = vpop.f32.mrb[0].mxu0
    %v282 = vadd.f32 %v185, %v281
    %v283 = vpop.f32.mrb[0].mxu0
    %v284 = vpop.f32.mrb[0].mxu0
    %v285 = vadd.f32 %v188, %v284
    %v286 = vpop.f32.mrb[0].mxu0
    %287 = vmatprep.mubr.bf16.mxu0 0
    %288 = vmatmul.mubr.bf16.gmra.mrb[0].mxu0 %v130
    %v289 = vpop.f32.mrb[0].mxu0
    %v290 = vadd.f32 %v193, %v289
    %v291 = vpop.f32.mrb[0].mxu0
    %v292 = vpop.f32.mrb[0].mxu0
    %v293 = vadd.f32 %v196, %v292
    %v294 = vpop.f32.mrb[0].mxu0
    %295 = vmatprep.mubr.bf16.mxu0 0
    %296 = vmatmul.mubr.bf16.gmra.mrb[0].mxu0 %v133
    %v297 = vpop.f32.mrb[0].mxu0
    %v298 = vadd.f32 %v201, %v297
    %v299 = vpop.f32.mrb[0].mxu0
    %v300 = vpop.f32.mrb[0].mxu0
    %v301 = vadd.f32 %v204, %v300
    %v302 = vpop.f32.mrb[0].mxu0
    %303 = vmatprep.mubr.bf16.mxu0 0
    %304 = vmatmul.mubr.bf16.gmra.mrb[0].mxu0 %v136
    %v305 = vpop.f32.mrb[0].mxu0
    %v306 = vadd.f32 %v209, %v305
    %v307 = vpop.f32.mrb[0].mxu0
    %v308 = vpop.f32.mrb[0].mxu0
    %v309 = vadd.f32 %v212, %v308
    %v310 = vpop.f32.mrb[0].mxu0
    %311 = vmatprep.mubr.bf16.mxu0 0
    %312 = vmatmul.mubr.bf16.gmra.mrb[0].mxu0 %v139
    %v313 = vpop.f32.mrb[0].mxu0
    %v314 = vadd.f32 %v217, %v313
    %v315 = vpop.f32.mrb[0].mxu0
    %v316 = vpop.f32.mrb[0].mxu0
    %v317 = vadd.f32 %v220, %v316
    %v318 = vpop.f32.mrb[0].mxu0
    %319 = vmatprep.mubr.bf16.mxu0 0
    %320 = vmatmul.mubr.bf16.gmra.mrb[0].mxu0 %v142
    %v321 = vpop.f32.mrb[0].mxu0
    %v322 = vadd.f32 %v225, %v321
    %v323 = vpop.f32.mrb[0].mxu0
    %v324 = vpop.f32.mrb[0].mxu0
    %v325 = vadd.f32 %v228, %v324
    %v326 = vpop.f32.mrb[0].mxu0
    %327 = vmatprep.mubr.bf16.mxu0 0
    %328 = vmatmul.mubr.bf16.gmra.mrb[0].mxu0 %v145
    %v329 = vpop.f32.mrb[0].mxu0
    %v330 = vadd.f32 %v233, %v329
    %v331 = vpop.f32.mrb[0].mxu0
    %v332 = vpop.f32.mrb[0].mxu0
    %v333 = vadd.f32 %v236, %v332
    %v334 = vpop.f32.mrb[0].mxu0
    %335 = vmatprep.mubr.bf16.mxu0 0
    %336 = vmatmul.mubr.bf16.gmra.mrb[0].mxu0 %v148
    %v337 = vpop.f32.mrb[0].mxu0
    %v338 = vadd.f32 %v241, %v337
    %v339 = vpop.f32.mrb[0].mxu0
    %v340 = vpop.f32.mrb[0].mxu0
    %v341 = vadd.f32 %v244, %v340
    %v342 = vpop.f32.mrb[0].mxu0
    %343 = vdwg.mxu0
    %v345 = vsel %vm125, %v105, 0
    %v348 = vsel %vm125, %v106, 0
    %v351 = vsel %vm125, %v107, 0
    %v354 = vsel %vm125, %v108, 0
    %v357 = vsel %vm125, %v109, 0
    %v360 = vsel %vm125, %v110, 0
    %v363 = vsel %vm125, %v111, 0
    %v366 = vsel %vm125, %v112, 0
    %368 = vmatprep.subr.bf16.mxu0 0
    %369 = vmatpush1.bf16.msra.mxu0 %v113
    %370 = vmatprep.subr.bf16.mxu0 0
    %371 = vmatpush1.bf16.msra.mxu0 %v114
    %372 = vmatprep.subr.bf16.mxu0 0
    %373 = vmatpush1.bf16.msra.mxu0 0
    %374 = vmatprep.subr.bf16.mxu0 0
    %375 = vmatpush1.bf16.msra.mxu0 0
    %376 = vmatprep.subr.bf16.mxu0 0
    %377 = vmatpush1.bf16.msra.mxu0 0
    %378 = vmatprep.subr.bf16.mxu0 0
    %379 = vmatpush1.bf16.msra.mxu0 0
    %380 = vmatprep.subr.bf16.mxu0 0
    %381 = vmatpush1.bf16.msra.mxu0 0
    %382 = vmatprep.subr.bf16.mxu0 0
    %383 = vmatpush1.bf16.msra.mxu0 0
    %384 = vmatprep.subr.bf16.mxu0 0
    %385 = vmatpush1.bf16.msra.mxu0 0
    %386 = vmatprep.subr.bf16.mxu0 0
    %387 = vmatpush1.bf16.msra.mxu0 0
    %388 = vmatprep.subr.bf16.mxu0 0
    %389 = vmatpush1.bf16.msra.mxu0 0
    %390 = vmatprep.subr.bf16.mxu0 0
    %391 = vmatpush1.bf16.msra.mxu0 0
    %392 = vmatprep.subr.bf16.mxu0 0
    %393 = vmatpush1.bf16.msra.mxu0 0
    %394 = vmatprep.subr.bf16.mxu0 0
    %395 = vmatpush1.bf16.msra.mxu0 0
    %396 = vmatprep.subr.bf16.mxu0 0
    %397 = vmatpush1.bf16.msra.mxu0 0
    %398 = vmatprep.subr.bf16.mxu0 0
    %399 = vmatpush1.bf16.msra.mxu0 0
    %400 = vmatprep.mubr.bf16.mxu0 0
    %401 = vmatmul.mubr.bf16.gmra.mrb[0].mxu0 %v345
    %v402 = vpop.f32.mrb[0].mxu0
    %v403 = vadd.f32 0.0, %v402
    %v404 = vpop.f32.mrb[0].mxu0
    %v405 = vpop.f32.mrb[0].mxu0
    %v406 = vadd.f32 0.0, %v405
    %v407 = vpop.f32.mrb[0].mxu0
    %408 = vmatprep.mubr.bf16.mxu0 0
    %409 = vmatmul.mubr.bf16.gmra.mrb[0].mxu0 %v348
    %v410 = vpop.f32.mrb[0].mxu0
    %v411 = vadd.f32 0.0, %v410
    %v412 = vpop.f32.mrb[0].mxu0
    %v413 = vpop.f32.mrb[0].mxu0
    %v414 = vadd.f32 0.0, %v413
    %v415 = vpop.f32.mrb[0].mxu0
    %416 = vmatprep.mubr.bf16.mxu0 0
    %417 = vmatmul.mubr.bf16.gmra.mrb[0].mxu0 %v351
    %v418 = vpop.f32.mrb[0].mxu0
    %v419 = vadd.f32 0.0, %v418
    %v420 = vpop.f32.mrb[0].mxu0
    %v421 = vpop.f32.mrb[0].mxu0
    %v422 = vadd.f32 0.0, %v421
    %v423 = vpop.f32.mrb[0].mxu0
    %424 = vmatprep.mubr.bf16.mxu0 0
    %425 = vmatmul.mubr.bf16.gmra.mrb[0].mxu0 %v354
    %v426 = vpop.f32.mrb[0].mxu0
    %v427 = vadd.f32 0.0, %v426
    %v428 = vpop.f32.mrb[0].mxu0
    %v429 = vpop.f32.mrb[0].mxu0
    %v430 = vadd.f32 0.0, %v429
    %v431 = vpop.f32.mrb[0].mxu0
    %432 = vmatprep.mubr.bf16.mxu0 0
    %433 = vmatmul.mubr.bf16.gmra.mrb[0].mxu0 %v357
    %v434 = vpop.f32.mrb[0].mxu0
    %v435 = vadd.f32 0.0, %v434
    %v436 = vpop.f32.mrb[0].mxu0
    %v437 = vpop.f32.mrb[0].mxu0
    %v438 = vadd.f32 0.0, %v437
    %v439 = vpop.f32.mrb[0].mxu0
    %440 = vmatprep.mubr.bf16.mxu0 0
    %441 = vmatmul.mubr.bf16.gmra.mrb[0].mxu0 %v360
    %v442 = vpop.f32.mrb[0].mxu0
    %v443 = vadd.f32 0.0, %v442
    %v444 = vpop.f32.mrb[0].mxu0
    %v445 = vpop.f32.mrb[0].mxu0
    %v446 = vadd.f32 0.0, %v445
    %v447 = vpop.f32.mrb[0].mxu0
    %448 = vmatprep.mubr.bf16.mxu0 0
    %449 = vmatmul.mubr.bf16.gmra.mrb[0].mxu0 %v363
    %v450 = vpop.f32.mrb[0].mxu0
    %v451 = vadd.f32 0.0, %v450
    %v452 = vpop.f32.mrb[0].mxu0
    %v453 = vpop.f32.mrb[0].mxu0
    %v454 = vadd.f32 0.0, %v453
    %v455 = vpop.f32.mrb[0].mxu0
    %456 = vmatprep.mubr.bf16.mxu0 0
    %457 = vmatmul.mubr.bf16.gmra.mrb[0].mxu0 %v366
    %v458 = vpop.f32.mrb[0].mxu0
    %v459 = vadd.f32 0.0, %v458
    %v460 = vpop.f32.mrb[0].mxu0
    %v461 = vpop.f32.mrb[0].mxu0
    %v462 = vadd.f32 0.0, %v461
    %v463 = vpop.f32.mrb[0].mxu0
    %464 = vdwg.mxu0
    %v465 = vadd.f32 %v282, %v403
    %v466 = vadd.f32 %v285, %v406
    %v467 = vadd.f32 %v290, %v411
    %v468 = vadd.f32 %v293, %v414
    %v469 = vadd.f32 %v298, %v419
    %v470 = vadd.f32 %v301, %v422
    %v471 = vadd.f32 %v306, %v427
    %v472 = vadd.f32 %v309, %v430
    %v473 = vadd.f32 %v314, %v435
    %v474 = vadd.f32 %v317, %v438
    %v475 = vadd.f32 %v322, %v443
    %v476 = vadd.f32 %v325, %v446
    %v477 = vadd.f32 %v330, %v451
    %v478 = vadd.f32 %v333, %v454
    %v479 = vadd.f32 %v338, %v459
    %v480 = vadd.f32 %v341, %v462
    %v481 = vld [vmem:[%s3] sm:$0xff]
    %v482 = vpack.c.bf16 %v481, %v481
    %v483 = vunpack.c.l.bf16 %v482
    %v484 = vsub.f32 %v481, %v483
    %v485 = vpack.c.bf16 %v484, %v484
    %v486 = vpack.c.bf16 %v466, %v465
    %v487 = vpack.c.bf16 %v468, %v467
    %v488 = vpack.c.bf16 %v470, %v469
    %v489 = vpack.c.bf16 %v472, %v471
    %v490 = vpack.c.bf16 %v474, %v473
    %v491 = vpack.c.bf16 %v476, %v475
    %v492 = vpack.c.bf16 %v478, %v477
    %v493 = vpack.c.bf16 %v480, %v479
    %v494 = vunpack.c.l.bf16 %v486
    %v495 = vunpack.c.h.bf16 %v486
    %v496 = vunpack.c.l.bf16 %v487
    %v497 = vunpack.c.h.bf16 %v487
    %v498 = vunpack.c.l.bf16 %v488
    %v499 = vunpack.c.h.bf16 %v488
    %v500 = vunpack.c.l.bf16 %v489
    %v501 = vunpack.c.h.bf16 %v489
    %v502 = vunpack.c.l.bf16 %v490
    %v503 = vunpack.c.h.bf16 %v490
    %v504 = vunpack.c.l.bf16 %v491
    %v505 = vunpack.c.h.bf16 %v491
    %v506 = vunpack.c.l.bf16 %v492
    %v507 = vunpack.c.h.bf16 %v492
    %v508 = vunpack.c.l.bf16 %v493
    %v509 = vunpack.c.h.bf16 %v493
    %v510 = vsub.f32 %v465, %v494
    %v511 = vsub.f32 %v466, %v495
    %v512 = vsub.f32 %v467, %v496
    %v513 = vsub.f32 %v468, %v497
    %v514 = vsub.f32 %v469, %v498
    %v515 = vsub.f32 %v470, %v499
    %v516 = vsub.f32 %v471, %v500
    %v517 = vsub.f32 %v472, %v501
    %v518 = vsub.f32 %v473, %v502
    %v519 = vsub.f32 %v474, %v503
    %v520 = vsub.f32 %v475, %v504
    %v521 = vsub.f32 %v476, %v505
    %v522 = vsub.f32 %v477, %v506
    %v523 = vsub.f32 %v478, %v507
    %v524 = vsub.f32 %v479, %v508
    %v525 = vsub.f32 %v480, %v509
    %v526 = vpack.c.bf16 %v511, %v510
    %v527 = vpack.c.bf16 %v513, %v512
    %v528 = vpack.c.bf16 %v515, %v514
    %v529 = vpack.c.bf16 %v517, %v516
    %v530 = vpack.c.bf16 %v519, %v518
    %v531 = vpack.c.bf16 %v521, %v520
    %v532 = vpack.c.bf16 %v523, %v522
    %v533 = vpack.c.bf16 %v525, %v524
    %vm534 = vcmask 588800
    %v536 = vsel %vm534, %v482, 0
    %v539 = vsel %vm534, %v526, 0
    %v542 = vsel %vm534, %v527, 0
    %v545 = vsel %vm534, %v528, 0
    %v548 = vsel %vm534, %v529, 0
    %v551 = vsel %vm534, %v530, 0
    %v554 = vsel %vm534, %v531, 0
    %v557 = vsel %vm534, %v532, 0
    %v560 = vsel %vm534, %v533, 0
    %562 = vmatprep.subr.bf16.mxu0 0
    %563 = vmatpush1.bf16.xpose.msra.mxu0 %v539
    %564 = vmatprep.subr.bf16.mxu0 0
    %565 = vmatpush1.bf16.xpose.msra.mxu0 %v542
    %566 = vmatprep.subr.bf16.mxu0 0
    %567 = vmatpush1.bf16.xpose.msra.mxu0 %v545
    %568 = vmatprep.subr.bf16.mxu0 0
    %569 = vmatpush1.bf16.xpose.msra.mxu0 %v548
    %570 = vmatprep.subr.bf16.mxu0 0
    %571 = vmatpush1.bf16.xpose.msra.mxu0 %v551
    %572 = vmatprep.subr.bf16.mxu0 0
    %573 = vmatpush1.bf16.xpose.msra.mxu0 %v554
    %574 = vmatprep.subr.bf16.mxu0 0
    %575 = vmatpush1.bf16.xpose.msra.mxu0 %v557
    %576 = vmatprep.subr.bf16.mxu0 0
    %577 = vmatpush1.bf16.xpose.msra.mxu0 %v560
    %578 = vmatprep.subr.bf16.mxu0 0
    %579 = vmatpush1.bf16.xpose.msra.mxu0 0
    %580 = vmatprep.subr.bf16.mxu0 0
    %581 = vmatpush1.bf16.xpose.msra.mxu0 0
    %582 = vmatprep.subr.bf16.mxu0 0
    %583 = vmatpush1.bf16.xpose.msra.mxu0 0
    %584 = vmatprep.subr.bf16.mxu0 0
    %585 = vmatpush1.bf16.xpose.msra.mxu0 0
    %586 = vmatprep.subr.bf16.mxu0 0
    %587 = vmatpush1.bf16.xpose.msra.mxu0 0
    %588 = vmatprep.subr.bf16.mxu0 0
    %589 = vmatpush1.bf16.xpose.msra.mxu0 0
    %590 = vmatprep.subr.bf16.mxu0 0
    %591 = vmatpush1.bf16.xpose.msra.mxu0 0
    %592 = vmatprep.subr.bf16.mxu0 0
    %593 = vmatpush1.bf16.xpose.msra.mxu0 0
    %594 = vmatprep.mubr.bf16.mxu0 0
    %595 = vmatmul.mubr.bf16.gmra.mrb[0].mxu0 %v536
    %v596 = vpop.f32.mrb[0].mxu0
    %v597 = vadd.f32 0.0, %v596
    %v598 = vpop.f32.mrb[0].mxu0
    %v599 = vpop.f32.mrb[0].mxu0
    %v600 = vpop.f32.mrb[0].mxu0
    %601 = vdwg.mxu0
    %v603 = vsel %vm534, %v486, 0
    %v606 = vsel %vm534, %v487, 0
    %v609 = vsel %vm534, %v488, 0
    %v612 = vsel %vm534, %v489, 0
    %v615 = vsel %vm534, %v490, 0
    %v618 = vsel %vm534, %v491, 0
    %v621 = vsel %vm534, %v492, 0
    %v624 = vsel %vm534, %v493, 0
    %626 = vmatprep.subr.bf16.mxu0 0
    %627 = vmatpush1.bf16.xpose.msra.mxu0 %v603
    %628 = vmatprep.subr.bf16.mxu0 0
    %629 = vmatpush1.bf16.xpose.msra.mxu0 %v606
    %630 = vmatprep.subr.bf16.mxu0 0
    %631 = vmatpush1.bf16.xpose.msra.mxu0 %v609
    %632 = vmatprep.subr.bf16.mxu0 0
    %633 = vmatpush1.bf16.xpose.msra.mxu0 %v612
    %634 = vmatprep.subr.bf16.mxu0 0
    %635 = vmatpush1.bf16.xpose.msra.mxu0 %v615
    %636 = vmatprep.subr.bf16.mxu0 0
    %637 = vmatpush1.bf16.xpose.msra.mxu0 %v618
    %638 = vmatprep.subr.bf16.mxu0 0
    %639 = vmatpush1.bf16.xpose.msra.mxu0 %v621
    %640 = vmatprep.subr.bf16.mxu0 0
    %641 = vmatpush1.bf16.xpose.msra.mxu0 %v624
    %642 = vmatprep.subr.bf16.mxu0 0
    %643 = vmatpush1.bf16.xpose.msra.mxu0 0
    %644 = vmatprep.subr.bf16.mxu0 0
    %645 = vmatpush1.bf16.xpose.msra.mxu0 0
    %646 = vmatprep.subr.bf16.mxu0 0
    %647 = vmatpush1.bf16.xpose.msra.mxu0 0
    %648 = vmatprep.subr.bf16.mxu0 0
    %649 = vmatpush1.bf16.xpose.msra.mxu0 0
    %650 = vmatprep.subr.bf16.mxu0 0
    %651 = vmatpush1.bf16.xpose.msra.mxu0 0
    %652 = vmatprep.subr.bf16.mxu0 0
    %653 = vmatpush1.bf16.xpose.msra.mxu0 0
    %654 = vmatprep.subr.bf16.mxu0 0
    %655 = vmatpush1.bf16.xpose.msra.mxu0 0
    %656 = vmatprep.subr.bf16.mxu0 0
    %657 = vmatpush1.bf16.xpose.msra.mxu0 0
    %658 = vmatprep.mubr.bf16.mxu0 0
    %659 = vmatmul.mubr.bf16.gmra.mrb[0].mxu0 %v536
    %v660 = vpop.f32.mrb[0].mxu0
    %v661 = vadd.f32 %v597, %v660
    %v662 = vpop.f32.mrb[0].mxu0
    %v663 = vpop.f32.mrb[0].mxu0
    %v664 = vpop.f32.mrb[0].mxu0
    %665 = vdwg.mxu0
    %v667 = vsel %vm534, %v485, 0
    %669 = vmatprep.subr.bf16.mxu0 0
    %670 = vmatpush1.bf16.xpose.msra.mxu0 %v603
    %671 = vmatprep.subr.bf16.mxu0 0
    %672 = vmatpush1.bf16.xpose.msra.mxu0 %v606
    %673 = vmatprep.subr.bf16.mxu0 0
    %674 = vmatpush1.bf16.xpose.msra.mxu0 %v609
    %675 = vmatprep.subr.bf16.mxu0 0
    %676 = vmatpush1.bf16.xpose.msra.mxu0 %v612
    %677 = vmatprep.subr.bf16.mxu0 0
    %678 = vmatpush1.bf16.xpose.msra.mxu0 %v615
    %679 = vmatprep.subr.bf16.mxu0 0
    %680 = vmatpush1.bf16.xpose.msra.mxu0 %v618
    %681 = vmatprep.subr.bf16.mxu0 0
    %682 = vmatpush1.bf16.xpose.msra.mxu0 %v621
    %683 = vmatprep.subr.bf16.mxu0 0
    %684 = vmatpush1.bf16.xpose.msra.mxu0 %v624
    %685 = vmatprep.subr.bf16.mxu0 0
    %686 = vmatpush1.bf16.xpose.msra.mxu0 0
    %687 = vmatprep.subr.bf16.mxu0 0
    %688 = vmatpush1.bf16.xpose.msra.mxu0 0
    %689 = vmatprep.subr.bf16.mxu0 0
    %690 = vmatpush1.bf16.xpose.msra.mxu0 0
    %691 = vmatprep.subr.bf16.mxu0 0
    %692 = vmatpush1.bf16.xpose.msra.mxu0 0
    %693 = vmatprep.subr.bf16.mxu0 0
    %694 = vmatpush1.bf16.xpose.msra.mxu0 0
    %695 = vmatprep.subr.bf16.mxu0 0
    %696 = vmatpush1.bf16.xpose.msra.mxu0 0
    %697 = vmatprep.subr.bf16.mxu0 0
    %698 = vmatpush1.bf16.xpose.msra.mxu0 0
    %699 = vmatprep.subr.bf16.mxu0 0
    %700 = vmatpush1.bf16.xpose.msra.mxu0 0
    %701 = vmatprep.mubr.bf16.mxu0 0
    %702 = vmatmul.mubr.bf16.gmra.mrb[0].mxu0 %v667
    %v703 = vpop.f32.mrb[0].mxu0
    %v704 = vadd.f32 0.0, %v703
    %v705 = vpop.f32.mrb[0].mxu0
    %v706 = vpop.f32.mrb[0].mxu0
    %v707 = vpop.f32.mrb[0].mxu0
    %708 = vdwg.mxu0
    %v709 = vadd.f32 %v661, %v704
    %vm710 = vcmask 523264
    %711 = vst.msk [vmem:[#allocation4] sm:$0xff] %vm710, 0
    %712 = vst.msk [vmem:[#allocation4 + $0x8] sm:$0xff] %vm710, 0
    %713 = vst.msk [vmem:[#allocation4 + $0x10] sm:$0xff] %vm710, 0
    %714 = vst.msk [vmem:[#allocation4 + $0x18] sm:$0xff] %vm710, 0
    %715 = vst.msk [vmem:[#allocation4 + $0x20] sm:$0xff] %vm710, 0
    %716 = vst.msk [vmem:[#allocation4 + $0x28] sm:$0xff] %vm710, 0
    %717 = vst.msk [vmem:[#allocation4 + $0x30] sm:$0xff] %vm710, 0
    %718 = vst.msk [vmem:[#allocation4 + $0x38] sm:$0xff] %vm710, 0
    %719 = vst.msk [vmem:[#allocation4 + $0x40] sm:$0xff] %vm710, 0
    %720 = vst.msk [vmem:[#allocation4 + $0x48] sm:$0xff] %vm710, 0
    %721 = vst.msk [vmem:[#allocation4 + $0x50] sm:$0xff] %vm710, 0
    %722 = vst.msk [vmem:[#allocation4 + $0x58] sm:$0xff] %vm710, 0
    %723 = vst.msk [vmem:[#allocation4 + $0x60] sm:$0xff] %vm710, 0
    %724 = vst.msk [vmem:[#allocation4 + $0x68] sm:$0xff] %vm710, 0
    %725 = vst.msk [vmem:[#allocation4 + $0x70] sm:$0xff] %vm710, 0
    %726 = vst.msk [vmem:[#allocation4 + $0x78] sm:$0xff] %vm710, 0
    %727 = vst.msk [vmem:[#allocation4 + $0x80] sm:$0xff] %vm710, 0
    %728 = vst.msk [vmem:[#allocation4 + $0x88] sm:$0xff] %vm710, 0
    %729 = vst.msk [vmem:[#allocation4 + $0x90] sm:$0xff] %vm710, 0
    %730 = vst.msk [vmem:[#allocation4 + $0x98] sm:$0xff] %vm710, 0
    %731 = vst.msk [vmem:[#allocation4 + $0xa0] sm:$0xff] %vm710, 0
    %732 = vst.msk [vmem:[#allocation4 + $0xa8] sm:$0xff] %vm710, 0
    %733 = vst.msk [vmem:[#allocation4 + $0xb0] sm:$0xff] %vm710, 0
    %734 = vst.msk [vmem:[#allocation4 + $0xb8] sm:$0xff] %vm710, 0
    %735 = vst.msk [vmem:[#allocation4 + $0xc0] sm:$0xff] %vm710, 0
    %736 = vst.msk [vmem:[#allocation4 + $0xc8] sm:$0xff] %vm710, 0
    %737 = vst.msk [vmem:[#allocation4 + $0xd0] sm:$0xff] %vm710, 0
    %738 = vst.msk [vmem:[#allocation4 + $0xd8] sm:$0xff] %vm710, 0
    %739 = vst.msk [vmem:[#allocation4 + $0xe0] sm:$0xff] %vm710, 0
    %740 = vst.msk [vmem:[#allocation4 + $0xe8] sm:$0xff] %vm710, 0
    %741 = vst.msk [vmem:[#allocation4 + $0xf0] sm:$0xff] %vm710, 0
    %742 = vst.msk [vmem:[#allocation4 + $0xf8] sm:$0xff] %vm710, 0
    %743 = vst.msk [vmem:[#allocation4 + $0x100] sm:$0xff] %vm710, 0
    %744 = vst.msk [vmem:[#allocation4 + $0x108] sm:$0xff] %vm710, 0
    %745 = vst.msk [vmem:[#allocation4 + $0x110] sm:$0xff] %vm710, 0
    %746 = vst.msk [vmem:[#allocation4 + $0x118] sm:$0xff] %vm710, 0
    %747 = vst.msk [vmem:[#allocation4 + $0x120] sm:$0xff] %vm710, 0
    %748 = vst.msk [vmem:[#allocation4 + $0x128] sm:$0xff] %vm710, 0
    %749 = vst.msk [vmem:[#allocation4 + $0x130] sm:$0xff] %vm710, 0
    %750 = vst.msk [vmem:[#allocation4 + $0x138] sm:$0xff] %vm710, 0
    %751 = vst.msk [vmem:[#allocation4 + $0x140] sm:$0xff] %vm710, 0
    %752 = vst.msk [vmem:[#allocation4 + $0x148] sm:$0xff] %vm710, 0
    %753 = vst.msk [vmem:[#allocation4 + $0x150] sm:$0xff] %vm710, 0
    %754 = vst.msk [vmem:[#allocation4 + $0x158] sm:$0xff] %vm710, 0
    %755 = vst.msk [vmem:[#allocation4 + $0x160] sm:$0xff] %vm710, 0
    %756 = vst.msk [vmem:[#allocation4 + $0x168] sm:$0xff] %vm710, 0
    %757 = vst.msk [vmem:[#allocation4 + $0x170] sm:$0xff] %vm710, 0
    %758 = vst.msk [vmem:[#allocation4 + $0x178] sm:$0xff] %vm710, 0
    %759 = vst.msk [vmem:[#allocation4 + $0x180] sm:$0xff] %vm710, 0
    %760 = vst.msk [vmem:[#allocation4 + $0x188] sm:$0xff] %vm710, 0
    %761 = vst.msk [vmem:[#allocation4 + $0x190] sm:$0xff] %vm710, 0
    %762 = vst.msk [vmem:[#allocation4 + $0x198] sm:$0xff] %vm710, 0
    %763 = vst.msk [vmem:[#allocation4 + $0x1a0] sm:$0xff] %vm710, 0
    %764 = vst.msk [vmem:[#allocation4 + $0x1a8] sm:$0xff] %vm710, 0
    %765 = vst.msk [vmem:[#allocation4 + $0x1b0] sm:$0xff] %vm710, 0
    %766 = vst.msk [vmem:[#allocation4 + $0x1b8] sm:$0xff] %vm710, 0
    %767 = vst.msk [vmem:[#allocation4 + $0x1c0] sm:$0xff] %vm710, 0
    %768 = vst.msk [vmem:[#allocation4 + $0x1c8] sm:$0xff] %vm710, 0
    %769 = vst.msk [vmem:[#allocation4 + $0x1d0] sm:$0xff] %vm710, 0
    %770 = vst.msk [vmem:[#allocation4 + $0x1d8] sm:$0xff] %vm710, 0
    %771 = vst.msk [vmem:[#allocation4 + $0x1e0] sm:$0xff] %vm710, 0
    %772 = vst.msk [vmem:[#allocation4 + $0x1e8] sm:$0xff] %vm710, 0
    %773 = vst.msk [vmem:[#allocation4 + $0x1f0] sm:$0xff] %vm710, 0
    %774 = vst.msk [vmem:[#allocation4 + $0x1f8] sm:$0xff] %vm710, 0
    %775 = vst.msk [vmem:[#allocation5] sm:$0xff] %vm710, 0
    %776 = vst.msk [vmem:[#allocation5 + $0x8] sm:$0xff] %vm710, 0
    %777 = vst.msk [vmem:[#allocation5 + $0x10] sm:$0xff] %vm710, 0
    %778 = vst.msk [vmem:[#allocation5 + $0x18] sm:$0xff] %vm710, 0
    %779 = vst.msk [vmem:[#allocation5 + $0x20] sm:$0xff] %vm710, 0
    %780 = vst.msk [vmem:[#allocation5 + $0x28] sm:$0xff] %vm710, 0
    %781 = vst.msk [vmem:[#allocation5 + $0x30] sm:$0xff] %vm710, 0
    %782 = vst.msk [vmem:[#allocation5 + $0x38] sm:$0xff] %vm710, 0
    %783 = vst.msk [vmem:[#allocation5 + $0x40] sm:$0xff] %vm710, 0
    %784 = vst.msk [vmem:[#allocation5 + $0x48] sm:$0xff] %vm710, 0
    %785 = vst.msk [vmem:[#allocation5 + $0x50] sm:$0xff] %vm710, 0
    %786 = vst.msk [vmem:[#allocation5 + $0x58] sm:$0xff] %vm710, 0
    %787 = vst.msk [vmem:[#allocation5 + $0x60] sm:$0xff] %vm710, 0
    %788 = vst.msk [vmem:[#allocation5 + $0x68] sm:$0xff] %vm710, 0
    %789 = vst.msk [vmem:[#allocation5 + $0x70] sm:$0xff] %vm710, 0
    %790 = vst.msk [vmem:[#allocation5 + $0x78] sm:$0xff] %vm710, 0
    %791 = vst.msk [vmem:[#allocation5 + $0x80] sm:$0xff] %vm710, 0
    %792 = vst.msk [vmem:[#allocation5 + $0x88] sm:$0xff] %vm710, 0
    %793 = vst.msk [vmem:[#allocation5 + $0x90] sm:$0xff] %vm710, 0
    %794 = vst.msk [vmem:[#allocation5 + $0x98] sm:$0xff] %vm710, 0
    %795 = vst.msk [vmem:[#allocation5 + $0xa0] sm:$0xff] %vm710, 0
    %796 = vst.msk [vmem:[#allocation5 + $0xa8] sm:$0xff] %vm710, 0
    %797 = vst.msk [vmem:[#allocation5 + $0xb0] sm:$0xff] %vm710, 0
    %798 = vst.msk [vmem:[#allocation5 + $0xb8] sm:$0xff] %vm710, 0
    %799 = vst.msk [vmem:[#allocation5 + $0xc0] sm:$0xff] %vm710, 0
    %800 = vst.msk [vmem:[#allocation5 + $0xc8] sm:$0xff] %vm710, 0
    %801 = vst.msk [vmem:[#allocation5 + $0xd0] sm:$0xff] %vm710, 0
    %802 = vst.msk [vmem:[#allocation5 + $0xd8] sm:$0xff] %vm710, 0
    %803 = vst.msk [vmem:[#allocation5 + $0xe0] sm:$0xff] %vm710, 0
    %804 = vst.msk [vmem:[#allocation5 + $0xe8] sm:$0xff] %vm710, 0
    %805 = vst.msk [vmem:[#allocation5 + $0xf0] sm:$0xff] %vm710, 0
    %806 = vst.msk [vmem:[#allocation5 + $0xf8] sm:$0xff] %vm710, 0
    %807 = vst.msk [vmem:[#allocation5 + $0x100] sm:$0xff] %vm710, 0
    %808 = vst.msk [vmem:[#allocation5 + $0x108] sm:$0xff] %vm710, 0
    %809 = vst.msk [vmem:[#allocation5 + $0x110] sm:$0xff] %vm710, 0
    %810 = vst.msk [vmem:[#allocation5 + $0x118] sm:$0xff] %vm710, 0
    %811 = vst.msk [vmem:[#allocation5 + $0x120] sm:$0xff] %vm710, 0
    %812 = vst.msk [vmem:[#allocation5 + $0x128] sm:$0xff] %vm710, 0
    %813 = vst.msk [vmem:[#allocation5 + $0x130] sm:$0xff] %vm710, 0
    %814 = vst.msk [vmem:[#allocation5 + $0x138] sm:$0xff] %vm710, 0
    %815 = vst.msk [vmem:[#allocation5 + $0x140] sm:$0xff] %vm710, 0
    %816 = vst.msk [vmem:[#allocation5 + $0x148] sm:$0xff] %vm710, 0
    %817 = vst.msk [vmem:[#allocation5 + $0x150] sm:$0xff] %vm710, 0
    %818 = vst.msk [vmem:[#allocation5 + $0x158] sm:$0xff] %vm710, 0
    %819 = vst.msk [vmem:[#allocation5 + $0x160] sm:$0xff] %vm710, 0
    %820 = vst.msk [vmem:[#allocation5 + $0x168] sm:$0xff] %vm710, 0
    %821 = vst.msk [vmem:[#allocation5 + $0x170] sm:$0xff] %vm710, 0
    %822 = vst.msk [vmem:[#allocation5 + $0x178] sm:$0xff] %vm710, 0
    %823 = vst.msk [vmem:[#allocation5 + $0x180] sm:$0xff] %vm710, 0
    %824 = vst.msk [vmem:[#allocation5 + $0x188] sm:$0xff] %vm710, 0
    %825 = vst.msk [vmem:[#allocation5 + $0x190] sm:$0xff] %vm710, 0
    %826 = vst.msk [vmem:[#allocation5 + $0x198] sm:$0xff] %vm710, 0
    %827 = vst.msk [vmem:[#allocation5 + $0x1a0] sm:$0xff] %vm710, 0
    %828 = vst.msk [vmem:[#allocation5 + $0x1a8] sm:$0xff] %vm710, 0
    %829 = vst.msk [vmem:[#allocation5 + $0x1b0] sm:$0xff] %vm710, 0
    %830 = vst.msk [vmem:[#allocation5 + $0x1b8] sm:$0xff] %vm710, 0
    %831 = vst.msk [vmem:[#allocation5 + $0x1c0] sm:$0xff] %vm710, 0
    %832 = vst.msk [vmem:[#allocation5 + $0x1c8] sm:$0xff] %vm710, 0
    %833 = vst.msk [vmem:[#allocation5 + $0x1d0] sm:$0xff] %vm710, 0
    %834 = vst.msk [vmem:[#allocation5 + $0x1d8] sm:$0xff] %vm710, 0
    %835 = vst.msk [vmem:[#allocation5 + $0x1e0] sm:$0xff] %vm710, 0
    %836 = vst.msk [vmem:[#allocation5 + $0x1e8] sm:$0xff] %vm710, 0
    %837 = vst.msk [vmem:[#allocation5 + $0x1f0] sm:$0xff] %vm710, 0
    %838 = vst.msk [vmem:[#allocation5 + $0x1f8] sm:$0xff] %vm710, 0
    %840 = vset.pattern.permute.xlu0 64
    %841 = vperm.xlu0 %840, %v465
    %v842 = vpop.permute.xlu0 %841
    %845 = vset.pattern.permute.xlu0 64
    %846 = vperm.xlu0 %845, %v466
    %v847 = vpop.permute.xlu0 %846
    %850 = vset.pattern.permute.xlu0 64
    %851 = vperm.xlu0 %850, %v467
    %v852 = vpop.permute.xlu0 %851
    %855 = vset.pattern.permute.xlu0 64
    %856 = vperm.xlu0 %855, %v468
    %v857 = vpop.permute.xlu0 %856
    %860 = vset.pattern.permute.xlu0 64
    %861 = vperm.xlu0 %860, %v469
    %v862 = vpop.permute.xlu0 %861
    %865 = vset.pattern.permute.xlu0 64
    %866 = vperm.xlu0 %865, %v470
    %v867 = vpop.permute.xlu0 %866
    %870 = vset.pattern.permute.xlu0 64
    %871 = vperm.xlu0 %870, %v471
    %v872 = vpop.permute.xlu0 %871
    %875 = vset.pattern.permute.xlu0 64
    %876 = vperm.xlu0 %875, %v472
    %v877 = vpop.permute.xlu0 %876
    %880 = vset.pattern.permute.xlu0 64
    %881 = vperm.xlu0 %880, %v473
    %v882 = vpop.permute.xlu0 %881
    %885 = vset.pattern.permute.xlu0 64
    %886 = vperm.xlu0 %885, %v474
    %v887 = vpop.permute.xlu0 %886
    %890 = vset.pattern.permute.xlu0 64
    %891 = vperm.xlu0 %890, %v475
    %v892 = vpop.permute.xlu0 %891
    %895 = vset.pattern.permute.xlu0 64
    %896 = vperm.xlu0 %895, %v476
    %v897 = vpop.permute.xlu0 %896
    %900 = vset.pattern.permute.xlu0 64
    %901 = vperm.xlu0 %900, %v477
    %v902 = vpop.permute.xlu0 %901
    %905 = vset.pattern.permute.xlu0 64
    %906 = vperm.xlu0 %905, %v478
    %v907 = vpop.permute.xlu0 %906
    %910 = vset.pattern.permute.xlu0 64
    %911 = vperm.xlu0 %910, %v479
    %v912 = vpop.permute.xlu0 %911
    %915 = vset.pattern.permute.xlu0 64
    %916 = vperm.xlu0 %915, %v480
    %v917 = vpop.permute.xlu0 %916
    %v919 = vlaneseq
    %v920 = vshrl.u32 %v919, 7
    %v921 = vsub.s32 0, %v920
    %v922 = vrot.slane %v709, %v921
    %v923 = vadd.f32 %v842, %v922
    %v924 = vadd.f32 %v847, %v922
    %v925 = vadd.f32 %v852, %v922
    %v926 = vadd.f32 %v857, %v922
    %v927 = vadd.f32 %v862, %v922
    %v928 = vadd.f32 %v867, %v922
    %v929 = vadd.f32 %v872, %v922
    %v930 = vadd.f32 %v877, %v922
    %v931 = vadd.f32 %v882, %v922
    %v932 = vadd.f32 %v887, %v922
    %v933 = vadd.f32 %v892, %v922
    %v934 = vadd.f32 %v897, %v922
    %v935 = vadd.f32 %v902, %v922
    %v936 = vadd.f32 %v907, %v922
    %v937 = vadd.f32 %v912, %v922
    %v938 = vadd.f32 %v917, %v922
    %vm939 = vcmp.gt.f32.partialorder %v923, 0.0
    %vm940 = vcmp.gt.f32.partialorder %v924, 0.0
    %vm941 = vcmp.gt.f32.partialorder %v925, 0.0
    %vm942 = vcmp.gt.f32.partialorder %v926, 0.0
    %vm943 = vcmp.gt.f32.partialorder %v927, 0.0
    %vm944 = vcmp.gt.f32.partialorder %v928, 0.0
    %vm945 = vcmp.gt.f32.partialorder %v929, 0.0
    %vm946 = vcmp.gt.f32.partialorder %v930, 0.0
    %vm947 = vcmp.gt.f32.partialorder %v931, 0.0
    %vm948 = vcmp.gt.f32.partialorder %v932, 0.0
    %vm949 = vcmp.gt.f32.partialorder %v933, 0.0
    %vm950 = vcmp.gt.f32.partialorder %v934, 0.0
    %vm951 = vcmp.gt.f32.partialorder %v935, 0.0
    %vm952 = vcmp.gt.f32.partialorder %v936, 0.0
    %vm953 = vcmp.gt.f32.partialorder %v937, 0.0
    %vm954 = vcmp.gt.f32.partialorder %v938, 0.0
    %v955 = vmul.f32 %v923, 0.2
    %v956 = vmul.f32 %v924, 0.2
    %v957 = vmul.f32 %v925, 0.2
    %v958 = vmul.f32 %v926, 0.2
    %v959 = vmul.f32 %v927, 0.2
    %v960 = vmul.f32 %v928, 0.2
    %v961 = vmul.f32 %v929, 0.2
    %v962 = vmul.f32 %v930, 0.2
    %v963 = vmul.f32 %v931, 0.2
    %v964 = vmul.f32 %v932, 0.2
    %v965 = vmul.f32 %v933, 0.2
    %v966 = vmul.f32 %v934, 0.2
    %v967 = vmul.f32 %v935, 0.2
    %v968 = vmul.f32 %v936, 0.2
    %v969 = vmul.f32 %v937, 0.2
    %v970 = vmul.f32 %v938, 0.2
    %v971 = vsel %vm939, %v923, %v955
    %v972 = vsel %vm940, %v924, %v956
    %v973 = vsel %vm941, %v925, %v957
    %v974 = vsel %vm942, %v926, %v958
    %v975 = vsel %vm943, %v927, %v959
    %v976 = vsel %vm944, %v928, %v960
    %v977 = vsel %vm945, %v929, %v961
    %v978 = vsel %vm946, %v930, %v962
    %v979 = vsel %vm947, %v931, %v963
    %v980 = vsel %vm948, %v932, %v964
    %v981 = vsel %vm949, %v933, %v965
    %v982 = vsel %vm950, %v934, %v966
    %v983 = vsel %vm951, %v935, %v967
    %v984 = vsel %vm952, %v936, %v968
    %v985 = vsel %vm953, %v937, %v969
    %v986 = vsel %vm954, %v938, %v970
    %v987 = vld [vmem:[%s1] sm:$0xff]
    %v988 = vld [vmem:[%s1 + $0x8] sm:$0xff]
    %v989 = vld [vmem:[%s1 + $0x10] sm:$0xff]
    %v990 = vld [vmem:[%s1 + $0x18] sm:$0xff]
    %v991 = vld [vmem:[%s1 + $0x20] sm:$0xff]
    %v992 = vld [vmem:[%s1 + $0x28] sm:$0xff]
    %v993 = vld [vmem:[%s1 + $0x30] sm:$0xff]
    %v994 = vld [vmem:[%s1 + $0x38] sm:$0xff]
    %v995 = vld [vmem:[%s1 + $0x40] sm:$0xff]
    %v996 = vld [vmem:[%s1 + $0x48] sm:$0xff]
    %v997 = vld [vmem:[%s1 + $0x50] sm:$0xff]
    %v998 = vld [vmem:[%s1 + $0x58] sm:$0xff]
    %v999 = vld [vmem:[%s1 + $0x60] sm:$0xff]
    %v1000 = vld [vmem:[%s1 + $0x68] sm:$0xff]
    %v1001 = vld [vmem:[%s1 + $0x70] sm:$0xff]
    %v1002 = vld [vmem:[%s1 + $0x78] sm:$0xff]
    %v1003 = vadd.f32 %v971, %v987
    %v1004 = vadd.f32 %v972, %v988
    %v1005 = vadd.f32 %v973, %v989
    %v1006 = vadd.f32 %v974, %v990
    %v1007 = vadd.f32 %v975, %v991
    %v1008 = vadd.f32 %v976, %v992
    %v1009 = vadd.f32 %v977, %v993
    %v1010 = vadd.f32 %v978, %v994
    %v1011 = vadd.f32 %v979, %v995
    %v1012 = vadd.f32 %v980, %v996
    %v1013 = vadd.f32 %v981, %v997
    %v1014 = vadd.f32 %v982, %v998
    %v1015 = vadd.f32 %v983, %v999
    %v1016 = vadd.f32 %v984, %v1000
    %v1017 = vadd.f32 %v985, %v1001
    %v1018 = vadd.f32 %v986, %v1002
    %1019 = vmax.xlane.f32.xlu0 %v1003
    %v1020 = vpop.xlane.xlu0 %1019
    %1021 = vmax.xlane.f32.xlu0 %v1004
    %v1022 = vpop.xlane.xlu0 %1021
    %1023 = vmax.xlane.f32.xlu0 %v1005
    %v1024 = vpop.xlane.xlu0 %1023
    %1025 = vmax.xlane.f32.xlu0 %v1006
    %v1026 = vpop.xlane.xlu0 %1025
    %1027 = vmax.xlane.f32.xlu0 %v1007
    %v1028 = vpop.xlane.xlu0 %1027
    %1029 = vmax.xlane.f32.xlu0 %v1008
    %v1030 = vpop.xlane.xlu0 %1029
    %1031 = vmax.xlane.f32.xlu0 %v1009
    %v1032 = vpop.xlane.xlu0 %1031
    %1033 = vmax.xlane.f32.xlu0 %v1010
    %v1034 = vpop.xlane.xlu0 %1033
    %1035 = vmax.xlane.f32.xlu0 %v1011
    %v1036 = vpop.xlane.xlu0 %1035
    %1037 = vmax.xlane.f32.xlu0 %v1012
    %v1038 = vpop.xlane.xlu0 %1037
    %1039 = vmax.xlane.f32.xlu0 %v1013
    %v1040 = vpop.xlane.xlu0 %1039
    %1041 = vmax.xlane.f32.xlu0 %v1014
    %v1042 = vpop.xlane.xlu0 %1041
    %1043 = vmax.xlane.f32.xlu0 %v1015
    %v1044 = vpop.xlane.xlu0 %1043
    %1045 = vmax.xlane.f32.xlu0 %v1016
    %v1046 = vpop.xlane.xlu0 %1045
    %1047 = vmax.xlane.f32.xlu0 %v1017
    %v1048 = vpop.xlane.xlu0 %1047
    %1049 = vmax.xlane.f32.xlu0 %v1018
    %v1050 = vpop.xlane.xlu0 %1049
    %v1051 = vsub.f32 %v1003, %v1020
    %v1052 = vsub.f32 %v1004, %v1022
    %v1053 = vsub.f32 %v1005, %v1024
    %v1054 = vsub.f32 %v1006, %v1026
    %v1055 = vsub.f32 %v1007, %v1028
    %v1056 = vsub.f32 %v1008, %v1030
    %v1057 = vsub.f32 %v1009, %v1032
    %v1058 = vsub.f32 %v1010, %v1034
    %v1059 = vsub.f32 %v1011, %v1036
    %v1060 = vsub.f32 %v1012, %v1038
    %v1061 = vsub.f32 %v1013, %v1040
    %v1062 = vsub.f32 %v1014, %v1042
    %v1063 = vsub.f32 %v1015, %v1044
    %v1064 = vsub.f32 %v1016, %v1046
    %v1065 = vsub.f32 %v1017, %v1048
    %v1066 = vsub.f32 %v1018, %v1050
    %v1067 = vmul.f32 %v1051, 1.442695
    %v1068 = vpow.pop %v1067
    %v1069 = vmul.f32 %v1052, 1.442695
    %v1070 = vpow.pop %v1069
    %v1071 = vmul.f32 %v1053, 1.442695
    %v1072 = vpow.pop %v1071
    %v1073 = vmul.f32 %v1054, 1.442695
    %v1074 = vpow.pop %v1073
    %v1075 = vmul.f32 %v1055, 1.442695
    %v1076 = vpow.pop %v1075
    %v1077 = vmul.f32 %v1056, 1.442695
    %v1078 = vpow.pop %v1077
    %v1079 = vmul.f32 %v1057, 1.442695
    %v1080 = vpow.pop %v1079
    %v1081 = vmul.f32 %v1058, 1.442695
    %v1082 = vpow.pop %v1081
    %v1083 = vmul.f32 %v1059, 1.442695
    %v1084 = vpow.pop %v1083
    %v1085 = vmul.f32 %v1060, 1.442695
    %v1086 = vpow.pop %v1085
    %v1087 = vmul.f32 %v1061, 1.442695
    %v1088 = vpow.pop %v1087
    %v1089 = vmul.f32 %v1062, 1.442695
    %v1090 = vpow.pop %v1089
    %v1091 = vmul.f32 %v1063, 1.442695
    %v1092 = vpow.pop %v1091
    %v1093 = vmul.f32 %v1064, 1.442695
    %v1094 = vpow.pop %v1093
    %v1095 = vmul.f32 %v1065, 1.442695
    %v1096 = vpow.pop %v1095
    %v1097 = vmul.f32 %v1066, 1.442695
    %v1098 = vpow.pop %v1097
    %1099 = vadd.xlane.f32.xlu0 %v1068
    %v1100 = vpop.xlane.xlu0 %1099
    %1101 = vadd.xlane.f32.xlu0 %v1070
    %v1102 = vpop.xlane.xlu0 %1101
    %1103 = vadd.xlane.f32.xlu0 %v1072
    %v1104 = vpop.xlane.xlu0 %1103
    %1105 = vadd.xlane.f32.xlu0 %v1074
    %v1106 = vpop.xlane.xlu0 %1105
    %1107 = vadd.xlane.f32.xlu0 %v1076
    %v1108 = vpop.xlane.xlu0 %1107
    %1109 = vadd.xlane.f32.xlu0 %v1078
    %v1110 = vpop.xlane.xlu0 %1109
    %1111 = vadd.xlane.f32.xlu0 %v1080
    %v1112 = vpop.xlane.xlu0 %1111
    %1113 = vadd.xlane.f32.xlu0 %v1082
    %v1114 = vpop.xlane.xlu0 %1113
    %1115 = vadd.xlane.f32.xlu0 %v1084
    %v1116 = vpop.xlane.xlu0 %1115
    %1117 = vadd.xlane.f32.xlu0 %v1086
    %v1118 = vpop.xlane.xlu0 %1117
    %1119 = vadd.xlane.f32.xlu0 %v1088
    %v1120 = vpop.xlane.xlu0 %1119
    %1121 = vadd.xlane.f32.xlu0 %v1090
    %v1122 = vpop.xlane.xlu0 %1121
    %1123 = vadd.xlane.f32.xlu0 %v1092
    %v1124 = vpop.xlane.xlu0 %1123
    %1125 = vadd.xlane.f32.xlu0 %v1094
    %v1126 = vpop.xlane.xlu0 %1125
    %1127 = vadd.xlane.f32.xlu0 %v1096
    %v1128 = vpop.xlane.xlu0 %1127
    %1129 = vadd.xlane.f32.xlu0 %v1098
    %v1130 = vpop.xlane.xlu0 %1129
    %v1131 = vrcp.pop %v1100
    %v1132 = vrcp.pop %v1102
    %v1133 = vrcp.pop %v1104
    %v1134 = vrcp.pop %v1106
    %v1135 = vrcp.pop %v1108
    %v1136 = vrcp.pop %v1110
    %v1137 = vrcp.pop %v1112
    %v1138 = vrcp.pop %v1114
    %v1139 = vrcp.pop %v1116
    %v1140 = vrcp.pop %v1118
    %v1141 = vrcp.pop %v1120
    %v1142 = vrcp.pop %v1122
    %v1143 = vrcp.pop %v1124
    %v1144 = vrcp.pop %v1126
    %v1145 = vrcp.pop %v1128
    %v1146 = vrcp.pop %v1130
    %v1147 = vmul.f32 %v1100, %v1131
    %v1148 = vmul.f32 %v1102, %v1132
    %v1149 = vmul.f32 %v1104, %v1133
    %v1150 = vmul.f32 %v1106, %v1134
    %v1151 = vmul.f32 %v1108, %v1135
    %v1152 = vmul.f32 %v1110, %v1136
    %v1153 = vmul.f32 %v1112, %v1137
    %v1154 = vmul.f32 %v1114, %v1138
    %v1155 = vmul.f32 %v1116, %v1139
    %v1156 = vmul.f32 %v1118, %v1140
    %v1157 = vmul.f32 %v1120, %v1141
    %v1158 = vmul.f32 %v1122, %v1142
    %v1159 = vmul.f32 %v1124, %v1143
    %v1160 = vmul.f32 %v1126, %v1144
    %v1161 = vmul.f32 %v1128, %v1145
    %v1162 = vmul.f32 %v1130, %v1146
    %v1163 = vsub.f32 2.0, %v1147
    %v1164 = vsub.f32 2.0, %v1148
    %v1165 = vsub.f32 2.0, %v1149
    %v1166 = vsub.f32 2.0, %v1150
    %v1167 = vsub.f32 2.0, %v1151
    %v1168 = vsub.f32 2.0, %v1152
    %v1169 = vsub.f32 2.0, %v1153
    %v1170 = vsub.f32 2.0, %v1154
    %v1171 = vsub.f32 2.0, %v1155
    %v1172 = vsub.f32 2.0, %v1156
    %v1173 = vsub.f32 2.0, %v1157
    %v1174 = vsub.f32 2.0, %v1158
    %v1175 = vsub.f32 2.0, %v1159
    %v1176 = vsub.f32 2.0, %v1160
    %v1177 = vsub.f32 2.0, %v1161
    %v1178 = vsub.f32 2.0, %v1162
    %v1179 = vmul.f32 %v1131, %v1163
    %v1180 = vmul.f32 %v1132, %v1164
    %v1181 = vmul.f32 %v1133, %v1165
    %v1182 = vmul.f32 %v1134, %v1166
    %v1183 = vmul.f32 %v1135, %v1167
    %v1184 = vmul.f32 %v1136, %v1168
    %v1185 = vmul.f32 %v1137, %v1169
    %v1186 = vmul.f32 %v1138, %v1170
    %v1187 = vmul.f32 %v1139, %v1171
    %v1188 = vmul.f32 %v1140, %v1172
    %v1189 = vmul.f32 %v1141, %v1173
    %v1190 = vmul.f32 %v1142, %v1174
    %v1191 = vmul.f32 %v1143, %v1175
    %v1192 = vmul.f32 %v1144, %v1176
    %v1193 = vmul.f32 %v1145, %v1177
    %v1194 = vmul.f32 %v1146, %v1178
    %v1195 = vmul.f32 %v1068, %v1179
    %v1196 = vmul.f32 %v1070, %v1180
    %v1197 = vmul.f32 %v1072, %v1181
    %v1198 = vmul.f32 %v1074, %v1182
    %v1199 = vmul.f32 %v1076, %v1183
    %v1200 = vmul.f32 %v1078, %v1184
    %v1201 = vmul.f32 %v1080, %v1185
    %v1202 = vmul.f32 %v1082, %v1186
    %v1203 = vmul.f32 %v1084, %v1187
    %v1204 = vmul.f32 %v1086, %v1188
    %v1205 = vmul.f32 %v1088, %v1189
    %v1206 = vmul.f32 %v1090, %v1190
    %v1207 = vmul.f32 %v1092, %v1191
    %v1208 = vmul.f32 %v1094, %v1192
    %v1209 = vmul.f32 %v1096, %v1193
    %v1210 = vmul.f32 %v1098, %v1194
    %v1211 = vpack.c.bf16 %v1196, %v1195
    %v1212 = vpack.c.bf16 %v1198, %v1197
    %v1213 = vpack.c.bf16 %v1200, %v1199
    %v1214 = vpack.c.bf16 %v1202, %v1201
    %v1215 = vpack.c.bf16 %v1204, %v1203
    %v1216 = vpack.c.bf16 %v1206, %v1205
    %v1217 = vpack.c.bf16 %v1208, %v1207
    %v1218 = vpack.c.bf16 %v1210, %v1209
    %v1219 = vunpack.c.l.bf16 %v1211
    %v1220 = vunpack.c.h.bf16 %v1211
    %v1221 = vunpack.c.l.bf16 %v1212
    %v1222 = vunpack.c.h.bf16 %v1212
    %v1223 = vunpack.c.l.bf16 %v1213
    %v1224 = vunpack.c.h.bf16 %v1213
    %v1225 = vunpack.c.l.bf16 %v1214
    %v1226 = vunpack.c.h.bf16 %v1214
    %v1227 = vunpack.c.l.bf16 %v1215
    %v1228 = vunpack.c.h.bf16 %v1215
    %v1229 = vunpack.c.l.bf16 %v1216
    %v1230 = vunpack.c.h.bf16 %v1216
    %v1231 = vunpack.c.l.bf16 %v1217
    %v1232 = vunpack.c.h.bf16 %v1217
    %v1233 = vunpack.c.l.bf16 %v1218
    %v1234 = vunpack.c.h.bf16 %v1218
    %v1235 = vsub.f32 %v1195, %v1219
    %v1236 = vsub.f32 %v1196, %v1220
    %v1237 = vsub.f32 %v1197, %v1221
    %v1238 = vsub.f32 %v1198, %v1222
    %v1239 = vsub.f32 %v1199, %v1223
    %v1240 = vsub.f32 %v1200, %v1224
    %v1241 = vsub.f32 %v1201, %v1225
    %v1242 = vsub.f32 %v1202, %v1226
    %v1243 = vsub.f32 %v1203, %v1227
    %v1244 = vsub.f32 %v1204, %v1228
    %v1245 = vsub.f32 %v1205, %v1229
    %v1246 = vsub.f32 %v1206, %v1230
    %v1247 = vsub.f32 %v1207, %v1231
    %v1248 = vsub.f32 %v1208, %v1232
    %v1249 = vsub.f32 %v1209, %v1233
    %v1250 = vsub.f32 %v1210, %v1234
    %v1251 = vpack.c.bf16 %v1236, %v1235
    %v1252 = vpack.c.bf16 %v1238, %v1237
    %v1253 = vpack.c.bf16 %v1240, %v1239
    %v1254 = vpack.c.bf16 %v1242, %v1241
    %v1255 = vpack.c.bf16 %v1244, %v1243
    %v1256 = vpack.c.bf16 %v1246, %v1245
    %v1257 = vpack.c.bf16 %v1248, %v1247
    %v1258 = vpack.c.bf16 %v1250, %v1249
    %1259 = vst [vmem:[#allocation2] sm:$0xff] %v1211
    %1260 = vst [vmem:[#allocation2 + $0x40] sm:$0xff] %v1212
    %1261 = vst [vmem:[#allocation2 + $0x80] sm:$0xff] %v1213
    %1262 = vst [vmem:[#allocation2 + $0xc0] sm:$0xff] %v1214
    %1263 = vst [vmem:[#allocation2 + $0x100] sm:$0xff] %v1215
    %1264 = vst [vmem:[#allocation2 + $0x140] sm:$0xff] %v1216
    %1265 = vst [vmem:[#allocation2 + $0x180] sm:$0xff] %v1217
    %1266 = vst [vmem:[#allocation2 + $0x1c0] sm:$0xff] %v1218
    %1267 = vst [vmem:[#allocation3] sm:$0xff] %v1251
    %1268 = vst [vmem:[#allocation3 + $0x40] sm:$0xff] %v1252
    %1269 = vst [vmem:[#allocation3 + $0x80] sm:$0xff] %v1253
    %1270 = vst [vmem:[#allocation3 + $0xc0] sm:$0xff] %v1254
    %1271 = vst [vmem:[#allocation3 + $0x100] sm:$0xff] %v1255
    %1272 = vst [vmem:[#allocation3 + $0x140] sm:$0xff] %v1256
    %1273 = vst [vmem:[#allocation3 + $0x180] sm:$0xff] %v1257
    %1274 = vst [vmem:[#allocation3 + $0x1c0] sm:$0xff] %v1258
    %vm1275 = vcmask 64512
    %1276 = vst.msk [vmem:[#allocation4] sm:$0xff] %vm1275, %v486
    %1277 = vst.msk [vmem:[#allocation4 + $0x8] sm:$0xff] %vm1275, %v487
    %1278 = vst.msk [vmem:[#allocation4 + $0x10] sm:$0xff] %vm1275, %v488
    %1279 = vst.msk [vmem:[#allocation4 + $0x18] sm:$0xff] %vm1275, %v489
    %1280 = vst.msk [vmem:[#allocation4 + $0x20] sm:$0xff] %vm1275, %v490
    %1281 = vst.msk [vmem:[#allocation4 + $0x28] sm:$0xff] %vm1275, %v491
    %1282 = vst.msk [vmem:[#allocation4 + $0x30] sm:$0xff] %vm1275, %v492
    %1283 = vst.msk [vmem:[#allocation4 + $0x38] sm:$0xff] %vm1275, %v493
    %1284 = vst.msk [vmem:[#allocation5] sm:$0xff] %vm1275, %v526
    %1285 = vst.msk [vmem:[#allocation5 + $0x8] sm:$0xff] %vm1275, %v527
    %1286 = vst.msk [vmem:[#allocation5 + $0x10] sm:$0xff] %vm1275, %v528
    %1287 = vst.msk [vmem:[#allocation5 + $0x18] sm:$0xff] %vm1275, %v529
    %1288 = vst.msk [vmem:[#allocation5 + $0x20] sm:$0xff] %vm1275, %v530
    %1289 = vst.msk [vmem:[#allocation5 + $0x28] sm:$0xff] %vm1275, %v531
    %1290 = vst.msk [vmem:[#allocation5 + $0x30] sm:$0xff] %vm1275, %v532
    %1291 = vst.msk [vmem:[#allocation5 + $0x38] sm:$0xff] %vm1275, %v533
    %1292 = vset.pattern.permute.xlu0 65
    %1293 = vperm.xlu0 %1292, %v465
    %v1294 = vpop.permute.xlu0 %1293
    %1296 = vset.pattern.permute.xlu0 65
    %1297 = vperm.xlu0 %1296, %v466
    %v1298 = vpop.permute.xlu0 %1297
    %1300 = vset.pattern.permute.xlu0 65
    %1301 = vperm.xlu0 %1300, %v467
    %v1302 = vpop.permute.xlu0 %1301
    %1304 = vset.pattern.permute.xlu0 65
    %1305 = vperm.xlu0 %1304, %v468
    %v1306 = vpop.permute.xlu0 %1305
    %1308 = vset.pattern.permute.xlu0 65
    %1309 = vperm.xlu0 %1308, %v469
    %v1310 = vpop.permute.xlu0 %1309
    %1312 = vset.pattern.permute.xlu0 65
    %1313 = vperm.xlu0 %1312, %v470
    %v1314 = vpop.permute.xlu0 %1313
    %1316 = vset.pattern.permute.xlu0 65
    %1317 = vperm.xlu0 %1316, %v471
    %v1318 = vpop.permute.xlu0 %1317
    %1320 = vset.pattern.permute.xlu0 65
    %1321 = vperm.xlu0 %1320, %v472
    %v1322 = vpop.permute.xlu0 %1321
    %1324 = vset.pattern.permute.xlu0 65
    %1325 = vperm.xlu0 %1324, %v473
    %v1326 = vpop.permute.xlu0 %1325
    %1328 = vset.pattern.permute.xlu0 65
    %1329 = vperm.xlu0 %1328, %v474
    %v1330 = vpop.permute.xlu0 %1329
    %1332 = vset.pattern.permute.xlu0 65
    %1333 = vperm.xlu0 %1332, %v475
    %v1334 = vpop.permute.xlu0 %1333
    %1336 = vset.pattern.permute.xlu0 65
    %1337 = vperm.xlu0 %1336, %v476
    %v1338 = vpop.permute.xlu0 %1337
    %1340 = vset.pattern.permute.xlu0 65
    %1341 = vperm.xlu0 %1340, %v477
    %v1342 = vpop.permute.xlu0 %1341
    %1344 = vset.pattern.permute.xlu0 65
    %1345 = vperm.xlu0 %1344, %v478
    %v1346 = vpop.permute.xlu0 %1345
    %1348 = vset.pattern.permute.xlu0 65
    %1349 = vperm.xlu0 %1348, %v479
    %v1350 = vpop.permute.xlu0 %1349
    %1352 = vset.pattern.permute.xlu0 65
    %1353 = vperm.xlu0 %1352, %v480
    %v1354 = vpop.permute.xlu0 %1353
    %v1356 = vlaneseq
    %v1357 = vshrl.u32 %v1356, 7
    %v1358 = vsub.s32 1, %v1357
    %v1359 = vrot.slane %v709, %v1358
    %v1360 = vadd.f32 %v1294, %v1359
    %v1361 = vadd.f32 %v1298, %v1359
    %v1362 = vadd.f32 %v1302, %v1359
    %v1363 = vadd.f32 %v1306, %v1359
    %v1364 = vadd.f32 %v1310, %v1359
    %v1365 = vadd.f32 %v1314, %v1359
    %v1366 = vadd.f32 %v1318, %v1359
    %v1367 = vadd.f32 %v1322, %v1359
    %v1368 = vadd.f32 %v1326, %v1359
    %v1369 = vadd.f32 %v1330, %v1359
    %v1370 = vadd.f32 %v1334, %v1359
    %v1371 = vadd.f32 %v1338, %v1359
    %v1372 = vadd.f32 %v1342, %v1359
    %v1373 = vadd.f32 %v1346, %v1359
    %v1374 = vadd.f32 %v1350, %v1359
    %v1375 = vadd.f32 %v1354, %v1359
    %vm1376 = vcmp.gt.f32.partialorder %v1360, 0.0
    %vm1377 = vcmp.gt.f32.partialorder %v1361, 0.0
    %vm1378 = vcmp.gt.f32.partialorder %v1362, 0.0
    %vm1379 = vcmp.gt.f32.partialorder %v1363, 0.0
    %vm1380 = vcmp.gt.f32.partialorder %v1364, 0.0
    %vm1381 = vcmp.gt.f32.partialorder %v1365, 0.0
    %vm1382 = vcmp.gt.f32.partialorder %v1366, 0.0
    %vm1383 = vcmp.gt.f32.partialorder %v1367, 0.0
    %vm1384 = vcmp.gt.f32.partialorder %v1368, 0.0
    %vm1385 = vcmp.gt.f32.partialorder %v1369, 0.0
    %vm1386 = vcmp.gt.f32.partialorder %v1370, 0.0
    %vm1387 = vcmp.gt.f32.partialorder %v1371, 0.0
    %vm1388 = vcmp.gt.f32.partialorder %v1372, 0.0
    %vm1389 = vcmp.gt.f32.partialorder %v1373, 0.0
    %vm1390 = vcmp.gt.f32.partialorder %v1374, 0.0
    %vm1391 = vcmp.gt.f32.partialorder %v1375, 0.0
    %v1392 = vmul.f32 %v1360, 0.2
    %v1393 = vmul.f32 %v1361, 0.2
    %v1394 = vmul.f32 %v1362, 0.2
    %v1395 = vmul.f32 %v1363, 0.2
    %v1396 = vmul.f32 %v1364, 0.2
    %v1397 = vmul.f32 %v1365, 0.2
    %v1398 = vmul.f32 %v1366, 0.2
    %v1399 = vmul.f32 %v1367, 0.2
    %v1400 = vmul.f32 %v1368, 0.2
    %v1401 = vmul.f32 %v1369, 0.2
    %v1402 = vmul.f32 %v1370, 0.2
    %v1403 = vmul.f32 %v1371, 0.2
    %v1404 = vmul.f32 %v1372, 0.2
    %v1405 = vmul.f32 %v1373, 0.2
    %v1406 = vmul.f32 %v1374, 0.2
    %v1407 = vmul.f32 %v1375, 0.2
    %v1408 = vsel %vm1376, %v1360, %v1392
    %v1409 = vsel %vm1377, %v1361, %v1393
    %v1410 = vsel %vm1378, %v1362, %v1394
    %v1411 = vsel %vm1379, %v1363, %v1395
    %v1412 = vsel %vm1380, %v1364, %v1396
    %v1413 = vsel %vm1381, %v1365, %v1397
    %v1414 = vsel %vm1382, %v1366, %v1398
    %v1415 = vsel %vm1383, %v1367, %v1399
    %v1416 = vsel %vm1384, %v1368, %v1400
    %v1417 = vsel %vm1385, %v1369, %v1401
    %v1418 = vsel %vm1386, %v1370, %v1402
    %v1419 = vsel %vm1387, %v1371, %v1403
    %v1420 = vsel %vm1388, %v1372, %v1404
    %v1421 = vsel %vm1389, %v1373, %v1405
    %v1422 = vsel %vm1390, %v1374, %v1406
    %v1423 = vsel %vm1391, %v1375, %v1407
    %v1424 = vld [vmem:[%s1] sm:$0xff]
    %v1425 = vld [vmem:[%s1 + $0x8] sm:$0xff]
    %v1426 = vld [vmem:[%s1 + $0x10] sm:$0xff]
    %v1427 = vld [vmem:[%s1 + $0x18] sm:$0xff]
    %v1428 = vld [vmem:[%s1 + $0x20] sm:$0xff]
    %v1429 = vld [vmem:[%s1 + $0x28] sm:$0xff]
    %v1430 = vld [vmem:[%s1 + $0x30] sm:$0xff]
    %v1431 = vld [vmem:[%s1 + $0x38] sm:$0xff]
    %v1432 = vld [vmem:[%s1 + $0x40] sm:$0xff]
    %v1433 = vld [vmem:[%s1 + $0x48] sm:$0xff]
    %v1434 = vld [vmem:[%s1 + $0x50] sm:$0xff]
    %v1435 = vld [vmem:[%s1 + $0x58] sm:$0xff]
    %v1436 = vld [vmem:[%s1 + $0x60] sm:$0xff]
    %v1437 = vld [vmem:[%s1 + $0x68] sm:$0xff]
    %v1438 = vld [vmem:[%s1 + $0x70] sm:$0xff]
    %v1439 = vld [vmem:[%s1 + $0x78] sm:$0xff]
    %v1440 = vadd.f32 %v1408, %v1424
    %v1441 = vadd.f32 %v1409, %v1425
    %v1442 = vadd.f32 %v1410, %v1426
    %v1443 = vadd.f32 %v1411, %v1427
    %v1444 = vadd.f32 %v1412, %v1428
    %v1445 = vadd.f32 %v1413, %v1429
    %v1446 = vadd.f32 %v1414, %v1430
    %v1447 = vadd.f32 %v1415, %v1431
    %v1448 = vadd.f32 %v1416, %v1432
    %v1449 = vadd.f32 %v1417, %v1433
    %v1450 = vadd.f32 %v1418, %v1434
    %v1451 = vadd.f32 %v1419, %v1435
    %v1452 = vadd.f32 %v1420, %v1436
    %v1453 = vadd.f32 %v1421, %v1437
    %v1454 = vadd.f32 %v1422, %v1438
    %v1455 = vadd.f32 %v1423, %v1439
    %1456 = vmax.xlane.f32.xlu0 %v1440
    %v1457 = vpop.xlane.xlu0 %1456
    %1458 = vmax.xlane.f32.xlu0 %v1441
    %v1459 = vpop.xlane.xlu0 %1458
    %1460 = vmax.xlane.f32.xlu0 %v1442
    %v1461 = vpop.xlane.xlu0 %1460
    %1462 = vmax.xlane.f32.xlu0 %v1443
    %v1463 = vpop.xlane.xlu0 %1462
    %1464 = vmax.xlane.f32.xlu0 %v1444
    %v1465 = vpop.xlane.xlu0 %1464
    %1466 = vmax.xlane.f32.xlu0 %v1445
    %v1467 = vpop.xlane.xlu0 %1466
    %1468 = vmax.xlane.f32.xlu0 %v1446
    %v1469 = vpop.xlane.xlu0 %1468
    %1470 = vmax.xlane.f32.xlu0 %v1447
    %v1471 = vpop.xlane.xlu0 %1470
    %1472 = vmax.xlane.f32.xlu0 %v1448
    %v1473 = vpop.xlane.xlu0 %1472
    %1474 = vmax.xlane.f32.xlu0 %v1449
    %v1475 = vpop.xlane.xlu0 %1474
    %1476 = vmax.xlane.f32.xlu0 %v1450
    %v1477 = vpop.xlane.xlu0 %1476
    %1478 = vmax.xlane.f32.xlu0 %v1451
    %v1479 = vpop.xlane.xlu0 %1478
    %1480 = vmax.xlane.f32.xlu0 %v1452
    %v1481 = vpop.xlane.xlu0 %1480
    %1482 = vmax.xlane.f32.xlu0 %v1453
    %v1483 = vpop.xlane.xlu0 %1482
    %1484 = vmax.xlane.f32.xlu0 %v1454
    %v1485 = vpop.xlane.xlu0 %1484
    %1486 = vmax.xlane.f32.xlu0 %v1455
    %v1487 = vpop.xlane.xlu0 %1486
    %v1488 = vsub.f32 %v1440, %v1457
    %v1489 = vsub.f32 %v1441, %v1459
    %v1490 = vsub.f32 %v1442, %v1461
    %v1491 = vsub.f32 %v1443, %v1463
    %v1492 = vsub.f32 %v1444, %v1465
    %v1493 = vsub.f32 %v1445, %v1467
    %v1494 = vsub.f32 %v1446, %v1469
    %v1495 = vsub.f32 %v1447, %v1471
    %v1496 = vsub.f32 %v1448, %v1473
    %v1497 = vsub.f32 %v1449, %v1475
    %v1498 = vsub.f32 %v1450, %v1477
    %v1499 = vsub.f32 %v1451, %v1479
    %v1500 = vsub.f32 %v1452, %v1481
    %v1501 = vsub.f32 %v1453, %v1483
    %v1502 = vsub.f32 %v1454, %v1485
    %v1503 = vsub.f32 %v1455, %v1487
    %v1504 = vmul.f32 %v1488, 1.442695
    %v1505 = vpow.pop %v1504
    %v1506 = vmul.f32 %v1489, 1.442695
    %v1507 = vpow.pop %v1506
    %v1508 = vmul.f32 %v1490, 1.442695
    %v1509 = vpow.pop %v1508
    %v1510 = vmul.f32 %v1491, 1.442695
    %v1511 = vpow.pop %v1510
    %v1512 = vmul.f32 %v1492, 1.442695
    %v1513 = vpow.pop %v1512
    %v1514 = vmul.f32 %v1493, 1.442695
    %v1515 = vpow.pop %v1514
    %v1516 = vmul.f32 %v1494, 1.442695
    %v1517 = vpow.pop %v1516
    %v1518 = vmul.f32 %v1495, 1.442695
    %v1519 = vpow.pop %v1518
    %v1520 = vmul.f32 %v1496, 1.442695
    %v1521 = vpow.pop %v1520
    %v1522 = vmul.f32 %v1497, 1.442695
    %v1523 = vpow.pop %v1522
    %v1524 = vmul.f32 %v1498, 1.442695
    %v1525 = vpow.pop %v1524
    %v1526 = vmul.f32 %v1499, 1.442695
    %v1527 = vpow.pop %v1526
    %v1528 = vmul.f32 %v1500, 1.442695
    %v1529 = vpow.pop %v1528
    %v1530 = vmul.f32 %v1501, 1.442695
    %v1531 = vpow.pop %v1530
    %v1532 = vmul.f32 %v1502, 1.442695
    %v1533 = vpow.pop %v1532
    %v1534 = vmul.f32 %v1503, 1.442695
    %v1535 = vpow.pop %v1534
    %1536 = vadd.xlane.f32.xlu0 %v1505
    %v1537 = vpop.xlane.xlu0 %1536
    %1538 = vadd.xlane.f32.xlu0 %v1507
    %v1539 = vpop.xlane.xlu0 %1538
    %1540 = vadd.xlane.f32.xlu0 %v1509
    %v1541 = vpop.xlane.xlu0 %1540
    %1542 = vadd.xlane.f32.xlu0 %v1511
    %v1543 = vpop.xlane.xlu0 %1542
    %1544 = vadd.xlane.f32.xlu0 %v1513
    %v1545 = vpop.xlane.xlu0 %1544
    %1546 = vadd.xlane.f32.xlu0 %v1515
    %v1547 = vpop.xlane.xlu0 %1546
    %1548 = vadd.xlane.f32.xlu0 %v1517
    %v1549 = vpop.xlane.xlu0 %1548
    %1550 = vadd.xlane.f32.xlu0 %v1519
    %v1551 = vpop.xlane.xlu0 %1550
    %1552 = vadd.xlane.f32.xlu0 %v1521
    %v1553 = vpop.xlane.xlu0 %1552
    %1554 = vadd.xlane.f32.xlu0 %v1523
    %v1555 = vpop.xlane.xlu0 %1554
    %1556 = vadd.xlane.f32.xlu0 %v1525
    %v1557 = vpop.xlane.xlu0 %1556
    %1558 = vadd.xlane.f32.xlu0 %v1527
    %v1559 = vpop.xlane.xlu0 %1558
    %1560 = vadd.xlane.f32.xlu0 %v1529
    %v1561 = vpop.xlane.xlu0 %1560
    %1562 = vadd.xlane.f32.xlu0 %v1531
    %v1563 = vpop.xlane.xlu0 %1562
    %1564 = vadd.xlane.f32.xlu0 %v1533
    %v1565 = vpop.xlane.xlu0 %1564
    %1566 = vadd.xlane.f32.xlu0 %v1535
    %v1567 = vpop.xlane.xlu0 %1566
    %v1568 = vrcp.pop %v1537
    %v1569 = vrcp.pop %v1539
    %v1570 = vrcp.pop %v1541
    %v1571 = vrcp.pop %v1543
    %v1572 = vrcp.pop %v1545
    %v1573 = vrcp.pop %v1547
    %v1574 = vrcp.pop %v1549
    %v1575 = vrcp.pop %v1551
    %v1576 = vrcp.pop %v1553
    %v1577 = vrcp.pop %v1555
    %v1578 = vrcp.pop %v1557
    %v1579 = vrcp.pop %v1559
    %v1580 = vrcp.pop %v1561
    %v1581 = vrcp.pop %v1563
    %v1582 = vrcp.pop %v1565
    %v1583 = vrcp.pop %v1567
    %v1584 = vmul.f32 %v1537, %v1568
    %v1585 = vmul.f32 %v1539, %v1569
    %v1586 = vmul.f32 %v1541, %v1570
    %v1587 = vmul.f32 %v1543, %v1571
    %v1588 = vmul.f32 %v1545, %v1572
    %v1589 = vmul.f32 %v1547, %v1573
    %v1590 = vmul.f32 %v1549, %v1574
    %v1591 = vmul.f32 %v1551, %v1575
    %v1592 = vmul.f32 %v1553, %v1576
    %v1593 = vmul.f32 %v1555, %v1577
    %v1594 = vmul.f32 %v1557, %v1578
    %v1595 = vmul.f32 %v1559, %v1579
    %v1596 = vmul.f32 %v1561, %v1580
    %v1597 = vmul.f32 %v1563, %v1581
    %v1598 = vmul.f32 %v1565, %v1582
    %v1599 = vmul.f32 %v1567, %v1583
    %v1600 = vsub.f32 2.0, %v1584
    %v1601 = vsub.f32 2.0, %v1585
    %v1602 = vsub.f32 2.0, %v1586
    %v1603 = vsub.f32 2.0, %v1587
    %v1604 = vsub.f32 2.0, %v1588
    %v1605 = vsub.f32 2.0, %v1589
    %v1606 = vsub.f32 2.0, %v1590
    %v1607 = vsub.f32 2.0, %v1591
    %v1608 = vsub.f32 2.0, %v1592
    %v1609 = vsub.f32 2.0, %v1593
    %v1610 = vsub.f32 2.0, %v1594
    %v1611 = vsub.f32 2.0, %v1595
    %v1612 = vsub.f32 2.0, %v1596
    %v1613 = vsub.f32 2.0, %v1597
    %v1614 = vsub.f32 2.0, %v1598
    %v1615 = vsub.f32 2.0, %v1599
    %v1616 = vmul.f32 %v1568, %v1600
    %v1617 = vmul.f32 %v1569, %v1601
    %v1618 = vmul.f32 %v1570, %v1602
    %v1619 = vmul.f32 %v1571, %v1603
    %v1620 = vmul.f32 %v1572, %v1604
    %v1621 = vmul.f32 %v1573, %v1605
    %v1622 = vmul.f32 %v1574, %v1606
    %v1623 = vmul.f32 %v1575, %v1607
    %v1624 = vmul.f32 %v1576, %v1608
    %v1625 = vmul.f32 %v1577, %v1609
    %v1626 = vmul.f32 %v1578, %v1610
    %v1627 = vmul.f32 %v1579, %v1611
    %v1628 = vmul.f32 %v1580, %v1612
    %v1629 = vmul.f32 %v1581, %v1613
    %v1630 = vmul.f32 %v1582, %v1614
    %v1631 = vmul.f32 %v1583, %v1615
    %v1632 = vmul.f32 %v1505, %v1616
    %v1633 = vmul.f32 %v1507, %v1617
    %v1634 = vmul.f32 %v1509, %v1618
    %v1635 = vmul.f32 %v1511, %v1619
    %v1636 = vmul.f32 %v1513, %v1620
    %v1637 = vmul.f32 %v1515, %v1621
    %v1638 = vmul.f32 %v1517, %v1622
    %v1639 = vmul.f32 %v1519, %v1623
    %v1640 = vmul.f32 %v1521, %v1624
    %v1641 = vmul.f32 %v1523, %v1625
    %v1642 = vmul.f32 %v1525, %v1626
    %v1643 = vmul.f32 %v1527, %v1627
    %v1644 = vmul.f32 %v1529, %v1628
    %v1645 = vmul.f32 %v1531, %v1629
    %v1646 = vmul.f32 %v1533, %v1630
    %v1647 = vmul.f32 %v1535, %v1631
    %v1648 = vpack.c.bf16 %v1633, %v1632
    %v1649 = vpack.c.bf16 %v1635, %v1634
    %v1650 = vpack.c.bf16 %v1637, %v1636
    %v1651 = vpack.c.bf16 %v1639, %v1638
    %v1652 = vpack.c.bf16 %v1641, %v1640
    %v1653 = vpack.c.bf16 %v1643, %v1642
    %v1654 = vpack.c.bf16 %v1645, %v1644
    %v1655 = vpack.c.bf16 %v1647, %v1646
    %v1656 = vunpack.c.l.bf16 %v1648
    %v1657 = vunpack.c.h.bf16 %v1648
    %v1658 = vunpack.c.l.bf16 %v1649
    %v1659 = vunpack.c.h.bf16 %v1649
    %v1660 = vunpack.c.l.bf16 %v1650
    %v1661 = vunpack.c.h.bf16 %v1650
    %v1662 = vunpack.c.l.bf16 %v1651
    %v1663 = vunpack.c.h.bf16 %v1651
    %v1664 = vunpack.c.l.bf16 %v1652
    %v1665 = vunpack.c.h.bf16 %v1652
    %v1666 = vunpack.c.l.bf16 %v1653
    %v1667 = vunpack.c.h.bf16 %v1653
    %v1668 = vunpack.c.l.bf16 %v1654
    %v1669 = vunpack.c.h.bf16 %v1654
    %v1670 = vunpack.c.l.bf16 %v1655
    %v1671 = vunpack.c.h.bf16 %v1655
    %v1672 = vsub.f32 %v1632, %v1656
    %v1673 = vsub.f32 %v1633, %v1657
    %v1674 = vsub.f32 %v1634, %v1658
    %v1675 = vsub.f32 %v1635, %v1659
    %v1676 = vsub.f32 %v1636, %v1660
    %v1677 = vsub.f32 %v1637, %v1661
    %v1678 = vsub.f32 %v1638, %v1662
    %v1679 = vsub.f32 %v1639, %v1663
    %v1680 = vsub.f32 %v1640, %v1664
    %v1681 = vsub.f32 %v1641, %v1665
    %v1682 = vsub.f32 %v1642, %v1666
    %v1683 = vsub.f32 %v1643, %v1667
    %v1684 = vsub.f32 %v1644, %v1668
    %v1685 = vsub.f32 %v1645, %v1669
    %v1686 = vsub.f32 %v1646, %v1670
    %v1687 = vsub.f32 %v1647, %v1671
    %v1688 = vpack.c.bf16 %v1673, %v1672
    %v1689 = vpack.c.bf16 %v1675, %v1674
    %v1690 = vpack.c.bf16 %v1677, %v1676
    %v1691 = vpack.c.bf16 %v1679, %v1678
    %v1692 = vpack.c.bf16 %v1681, %v1680
    %v1693 = vpack.c.bf16 %v1683, %v1682
    %v1694 = vpack.c.bf16 %v1685, %v1684
    %v1695 = vpack.c.bf16 %v1687, %v1686
    %1696 = vst [vmem:[#allocation2 + $0x8] sm:$0xff] %v1648
    %1697 = vst [vmem:[#allocation2 + $0x48] sm:$0xff] %v1649
    %1698 = vst [vmem:[#allocation2 + $0x88] sm:$0xff] %v1650
    %1699 = vst [vmem:[#allocation2 + $0xc8] sm:$0xff] %v1651
    %1700 = vst [vmem:[#allocation2 + $0x108] sm:$0xff] %v1652
    %1701 = vst [vmem:[#allocation2 + $0x148] sm:$0xff] %v1653
    %1702 = vst [vmem:[#allocation2 + $0x188] sm:$0xff] %v1654
    %1703 = vst [vmem:[#allocation2 + $0x1c8] sm:$0xff] %v1655
    %1704 = vst [vmem:[#allocation3 + $0x8] sm:$0xff] %v1688
    %1705 = vst [vmem:[#allocation3 + $0x48] sm:$0xff] %v1689
    %1706 = vst [vmem:[#allocation3 + $0x88] sm:$0xff] %v1690
    %1707 = vst [vmem:[#allocation3 + $0xc8] sm:$0xff] %v1691
    %1708 = vst [vmem:[#allocation3 + $0x108] sm:$0xff] %v1692
    %1709 = vst [vmem:[#allocation3 + $0x148] sm:$0xff] %v1693
    %1710 = vst [vmem:[#allocation3 + $0x188] sm:$0xff] %v1694
    %1711 = vst [vmem:[#allocation3 + $0x1c8] sm:$0xff] %v1695
    %vm1712 = vcmask 130112
    %1713 = vst.msk [vmem:[#allocation4 + $0x40] sm:$0xff] %vm1712, %v486
    %1714 = vst.msk [vmem:[#allocation4 + $0x48] sm:$0xff] %vm1712, %v487
    %1715 = vst.msk [vmem:[#allocation4 + $0x50] sm:$0xff] %vm1712, %v488
    %1716 = vst.msk [vmem:[#allocation4 + $0x58] sm:$0xff] %vm1712, %v489
    %1717 = vst.msk [vmem:[#allocation4 + $0x60] sm:$0xff] %vm1712, %v490
    %1718 = vst.msk [vmem:[#allocation4 + $0x68] sm:$0xff] %vm1712, %v491
    %1719 = vst.msk [vmem:[#allocation4 + $0x70] sm:$0xff] %vm1712, %v492
    %1720 = vst.msk [vmem:[#allocation4 + $0x78] sm:$0xff] %vm1712, %v493
    %1721 = vst.msk [vmem:[#allocation5 + $0x40] sm:$0xff] %vm1712, %v526
    %1722 = vst.msk [vmem:[#allocation5 + $0x48] sm:$0xff] %vm1712, %v527
    %1723 = vst.msk [vmem:[#allocation5 + $0x50] sm:$0xff] %vm1712, %v528
    %1724 = vst.msk [vmem:[#allocation5 + $0x58] sm:$0xff] %vm1712, %v529
    %1725 = vst.msk [vmem:[#allocation5 + $0x60] sm:$0xff] %vm1712, %v530
    %1726 = vst.msk [vmem:[#allocation5 + $0x68] sm:$0xff] %vm1712, %v531
    %1727 = vst.msk [vmem:[#allocation5 + $0x70] sm:$0xff] %vm1712, %v532
    %1728 = vst.msk [vmem:[#allocation5 + $0x78] sm:$0xff] %vm1712, %v533
    %1729 = vset.pattern.permute.xlu0 66
    %1730 = vperm.xlu0 %1729, %v465
    %v1731 = vpop.permute.xlu0 %1730
    %1733 = vset.pattern.permute.xlu0 66
    %1734 = vperm.xlu0 %1733, %v466
    %v1735 = vpop.permute.xlu0 %1734
    %1737 = vset.pattern.permute.xlu0 66
    %1738 = vperm.xlu0 %1737, %v467
    %v1739 = vpop.permute.xlu0 %1738
    %1741 = vset.pattern.permute.xlu0 66
    %1742 = vperm.xlu0 %1741, %v468
    %v1743 = vpop.permute.xlu0 %1742
    %1745 = vset.pattern.permute.xlu0 66
    %1746 = vperm.xlu0 %1745, %v469
    %v1747 = vpop.permute.xlu0 %1746
    %1749 = vset.pattern.permute.xlu0 66
    %1750 = vperm.xlu0 %1749, %v470
    %v1751 = vpop.permute.xlu0 %1750
    %1753 = vset.pattern.permute.xlu0 66
    %1754 = vperm.xlu0 %1753, %v471
    %v1755 = vpop.permute.xlu0 %1754
    %1757 = vset.pattern.permute.xlu0 66
    %1758 = vperm.xlu0 %1757, %v472
    %v1759 = vpop.permute.xlu0 %1758
    %1761 = vset.pattern.permute.xlu0 66
    %1762 = vperm.xlu0 %1761, %v473
    %v1763 = vpop.permute.xlu0 %1762
    %1765 = vset.pattern.permute.xlu0 66
    %1766 = vperm.xlu0 %1765, %v474
    %v1767 = vpop.permute.xlu0 %1766
    %1769 = vset.pattern.permute.xlu0 66
    %1770 = vperm.xlu0 %1769, %v475
    %v1771 = vpop.permute.xlu0 %1770
    %1773 = vset.pattern.permute.xlu0 66
    %1774 = vperm.xlu0 %1773, %v476
    %v1775 = vpop.permute.xlu0 %1774
    %1777 = vset.pattern.permute.xlu0 66
    %1778 = vperm.xlu0 %1777, %v477
    %v1779 = vpop.permute.xlu0 %1778
    %1781 = vset.pattern.permute.xlu0 66
    %1782 = vperm.xlu0 %1781, %v478
    %v1783 = vpop.permute.xlu0 %1782
    %1785 = vset.pattern.permute.xlu0 66
    %1786 = vperm.xlu0 %1785, %v479
    %v1787 = vpop.permute.xlu0 %1786
    %1789 = vset.pattern.permute.xlu0 66
    %1790 = vperm.xlu0 %1789, %v480
    %v1791 = vpop.permute.xlu0 %1790
    %v1793 = vlaneseq
    %v1794 = vshrl.u32 %v1793, 7
    %v1795 = vsub.s32 2, %v1794
    %v1796 = vrot.slane %v709, %v1795
    %v1797 = vadd.f32 %v1731, %v1796
    %v1798 = vadd.f32 %v1735, %v1796
    %v1799 = vadd.f32 %v1739, %v1796
    %v1800 = vadd.f32 %v1743, %v1796
    %v1801 = vadd.f32 %v1747, %v1796
    %v1802 = vadd.f32 %v1751, %v1796
    %v1803 = vadd.f32 %v1755, %v1796
    %v1804 = vadd.f32 %v1759, %v1796
    %v1805 = vadd.f32 %v1763, %v1796
    %v1806 = vadd.f32 %v1767, %v1796
    %v1807 = vadd.f32 %v1771, %v1796
    %v1808 = vadd.f32 %v1775, %v1796
    %v1809 = vadd.f32 %v1779, %v1796
    %v1810 = vadd.f32 %v1783, %v1796
    %v1811 = vadd.f32 %v1787, %v1796
    %v1812 = vadd.f32 %v1791, %v1796
    %vm1813 = vcmp.gt.f32.partialorder %v1797, 0.0
    %vm1814 = vcmp.gt.f32.partialorder %v1798, 0.0
    %vm1815 = vcmp.gt.f32.partialorder %v1799, 0.0
    %vm1816 = vcmp.gt.f32.partialorder %v1800, 0.0
    %vm1817 = vcmp.gt.f32.partialorder %v1801, 0.0
    %vm1818 = vcmp.gt.f32.partialorder %v1802, 0.0
    %vm1819 = vcmp.gt.f32.partialorder %v1803, 0.0
    %vm1820 = vcmp.gt.f32.partialorder %v1804, 0.0
    %vm1821 = vcmp.gt.f32.partialorder %v1805, 0.0
    %vm1822 = vcmp.gt.f32.partialorder %v1806, 0.0
    %vm1823 = vcmp.gt.f32.partialorder %v1807, 0.0
    %vm1824 = vcmp.gt.f32.partialorder %v1808, 0.0
    %vm1825 = vcmp.gt.f32.partialorder %v1809, 0.0
    %vm1826 = vcmp.gt.f32.partialorder %v1810, 0.0
    %vm1827 = vcmp.gt.f32.partialorder %v1811, 0.0
    %vm1828 = vcmp.gt.f32.partialorder %v1812, 0.0
    %v1829 = vmul.f32 %v1797, 0.2
    %v1830 = vmul.f32 %v1798, 0.2
    %v1831 = vmul.f32 %v1799, 0.2
    %v1832 = vmul.f32 %v1800, 0.2
    %v1833 = vmul.f32 %v1801, 0.2
    %v1834 = vmul.f32 %v1802, 0.2
    %v1835 = vmul.f32 %v1803, 0.2
    %v1836 = vmul.f32 %v1804, 0.2
    %v1837 = vmul.f32 %v1805, 0.2
    %v1838 = vmul.f32 %v1806, 0.2
    %v1839 = vmul.f32 %v1807, 0.2
    %v1840 = vmul.f32 %v1808, 0.2
    %v1841 = vmul.f32 %v1809, 0.2
    %v1842 = vmul.f32 %v1810, 0.2
    %v1843 = vmul.f32 %v1811, 0.2
    %v1844 = vmul.f32 %v1812, 0.2
    %v1845 = vsel %vm1813, %v1797, %v1829
    %v1846 = vsel %vm1814, %v1798, %v1830
    %v1847 = vsel %vm1815, %v1799, %v1831
    %v1848 = vsel %vm1816, %v1800, %v1832
    %v1849 = vsel %vm1817, %v1801, %v1833
    %v1850 = vsel %vm1818, %v1802, %v1834
    %v1851 = vsel %vm1819, %v1803, %v1835
    %v1852 = vsel %vm1820, %v1804, %v1836
    %v1853 = vsel %vm1821, %v1805, %v1837
    %v1854 = vsel %vm1822, %v1806, %v1838
    %v1855 = vsel %vm1823, %v1807, %v1839
    %v1856 = vsel %vm1824, %v1808, %v1840
    %v1857 = vsel %vm1825, %v1809, %v1841
    %v1858 = vsel %vm1826, %v1810, %v1842
    %v1859 = vsel %vm1827, %v1811, %v1843
    %v1860 = vsel %vm1828, %v1812, %v1844
    %v1861 = vld [vmem:[%s1] sm:$0xff]
    %v1862 = vld [vmem:[%s1 + $0x8] sm:$0xff]
    %v1863 = vld [vmem:[%s1 + $0x10] sm:$0xff]
    %v1864 = vld [vmem:[%s1 + $0x18] sm:$0xff]
    %v1865 = vld [vmem:[%s1 + $0x20] sm:$0xff]
    %v1866 = vld [vmem:[%s1 + $0x28] sm:$0xff]
    %v1867 = vld [vmem:[%s1 + $0x30] sm:$0xff]
    %v1868 = vld [vmem:[%s1 + $0x38] sm:$0xff]
    %v1869 = vld [vmem:[%s1 + $0x40] sm:$0xff]
    %v1870 = vld [vmem:[%s1 + $0x48] sm:$0xff]
    %v1871 = vld [vmem:[%s1 + $0x50] sm:$0xff]
    %v1872 = vld [vmem:[%s1 + $0x58] sm:$0xff]
    %v1873 = vld [vmem:[%s1 + $0x60] sm:$0xff]
    %v1874 = vld [vmem:[%s1 + $0x68] sm:$0xff]
    %v1875 = vld [vmem:[%s1 + $0x70] sm:$0xff]
    %v1876 = vld [vmem:[%s1 + $0x78] sm:$0xff]
    %v1877 = vadd.f32 %v1845, %v1861
    %v1878 = vadd.f32 %v1846, %v1862
    %v1879 = vadd.f32 %v1847, %v1863
    %v1880 = vadd.f32 %v1848, %v1864
    %v1881 = vadd.f32 %v1849, %v1865
    %v1882 = vadd.f32 %v1850, %v1866
    %v1883 = vadd.f32 %v1851, %v1867
    %v1884 = vadd.f32 %v1852, %v1868
    %v1885 = vadd.f32 %v1853, %v1869
    %v1886 = vadd.f32 %v1854, %v1870
    %v1887 = vadd.f32 %v1855, %v1871
    %v1888 = vadd.f32 %v1856, %v1872
    %v1889 = vadd.f32 %v1857, %v1873
    %v1890 = vadd.f32 %v1858, %v1874
    %v1891 = vadd.f32 %v1859, %v1875
    %v1892 = vadd.f32 %v1860, %v1876
    %1893 = vmax.xlane.f32.xlu0 %v1877
    %v1894 = vpop.xlane.xlu0 %1893
    %1895 = vmax.xlane.f32.xlu0 %v1878
    %v1896 = vpop.xlane.xlu0 %1895
    %1897 = vmax.xlane.f32.xlu0 %v1879
    %v1898 = vpop.xlane.xlu0 %1897
    %1899 = vmax.xlane.f32.xlu0 %v1880
    %v1900 = vpop.xlane.xlu0 %1899
    %1901 = vmax.xlane.f32.xlu0 %v1881
    %v1902 = vpop.xlane.xlu0 %1901
    %1903 = vmax.xlane.f32.xlu0 %v1882
    %v1904 = vpop.xlane.xlu0 %1903
    %1905 = vmax.xlane.f32.xlu0 %v1883
    %v1906 = vpop.xlane.xlu0 %1905
    %1907 = vmax.xlane.f32.xlu0 %v1884
    %v1908 = vpop.xlane.xlu0 %1907
    %1909 = vmax.xlane.f32.xlu0 %v1885
    %v1910 = vpop.xlane.xlu0 %1909
    %1911 = vmax.xlane.f32.xlu0 %v1886
    %v1912 = vpop.xlane.xlu0 %1911
    %1913 = vmax.xlane.f32.xlu0 %v1887
    %v1914 = vpop.xlane.xlu0 %1913
    %1915 = vmax.xlane.f32.xlu0 %v1888
    %v1916 = vpop.xlane.xlu0 %1915
    %1917 = vmax.xlane.f32.xlu0 %v1889
    %v1918 = vpop.xlane.xlu0 %1917
    %1919 = vmax.xlane.f32.xlu0 %v1890
    %v1920 = vpop.xlane.xlu0 %1919
    %1921 = vmax.xlane.f32.xlu0 %v1891
    %v1922 = vpop.xlane.xlu0 %1921
    %1923 = vmax.xlane.f32.xlu0 %v1892
    %v1924 = vpop.xlane.xlu0 %1923
    %v1925 = vsub.f32 %v1877, %v1894
    %v1926 = vsub.f32 %v1878, %v1896
    %v1927 = vsub.f32 %v1879, %v1898
    %v1928 = vsub.f32 %v1880, %v1900
    %v1929 = vsub.f32 %v1881, %v1902
    %v1930 = vsub.f32 %v1882, %v1904
    %v1931 = vsub.f32 %v1883, %v1906
    %v1932 = vsub.f32 %v1884, %v1908
    %v1933 = vsub.f32 %v1885, %v1910
    %v1934 = vsub.f32 %v1886, %v1912
    %v1935 = vsub.f32 %v1887, %v1914
    %v1936 = vsub.f32 %v1888, %v1916
    %v1937 = vsub.f32 %v1889, %v1918
    %v1938 = vsub.f32 %v1890, %v1920
    %v1939 = vsub.f32 %v1891, %v1922
    %v1940 = vsub.f32 %v1892, %v1924
    %v1941 = vmul.f32 %v1925, 1.442695
    %v1942 = vpow.pop %v1941
    %v1943 = vmul.f32 %v1926, 1.442695
    %v1944 = vpow.pop %v1943
    %v1945 = vmul.f32 %v1927, 1.442695
    %v1946 = vpow.pop %v1945
    %v1947 = vmul.f32 %v1928, 1.442695
    %v1948 = vpow.pop %v1947
    %v1949 = vmul.f32 %v1929, 1.442695
    %v1950 = vpow.pop %v1949
    %v1951 = vmul.f32 %v1930, 1.442695
    %v1952 = vpow.pop %v1951
    %v1953 = vmul.f32 %v1931, 1.442695
    %v1954 = vpow.pop %v1953
    %v1955 = vmul.f32 %v1932, 1.442695
    %v1956 = vpow.pop %v1955
    %v1957 = vmul.f32 %v1933, 1.442695
    %v1958 = vpow.pop %v1957
    %v1959 = vmul.f32 %v1934, 1.442695
    %v1960 = vpow.pop %v1959
    %v1961 = vmul.f32 %v1935, 1.442695
    %v1962 = vpow.pop %v1961
    %v1963 = vmul.f32 %v1936, 1.442695
    %v1964 = vpow.pop %v1963
    %v1965 = vmul.f32 %v1937, 1.442695
    %v1966 = vpow.pop %v1965
    %v1967 = vmul.f32 %v1938, 1.442695
    %v1968 = vpow.pop %v1967
    %v1969 = vmul.f32 %v1939, 1.442695
    %v1970 = vpow.pop %v1969
    %v1971 = vmul.f32 %v1940, 1.442695
    %v1972 = vpow.pop %v1971
    %1973 = vadd.xlane.f32.xlu0 %v1942
    %v1974 = vpop.xlane.xlu0 %1973
    %1975 = vadd.xlane.f32.xlu0 %v1944
    %v1976 = vpop.xlane.xlu0 %1975
    %1977 = vadd.xlane.f32.xlu0 %v1946
    %v1978 = vpop.xlane.xlu0 %1977
    %1979 = vadd.xlane.f32.xlu0 %v1948
    %v1980 = vpop.xlane.xlu0 %1979
    %1981 = vadd.xlane.f32.xlu0 %v1950
    %v1982 = vpop.xlane.xlu0 %1981
    %1983 = vadd.xlane.f32.xlu0 %v1952
    %v1984 = vpop.xlane.xlu0 %1983
    %1985 = vadd.xlane.f32.xlu0 %v1954
    %v1986 = vpop.xlane.xlu0 %1985
    %1987 = vadd.xlane.f32.xlu0 %v1956
    %v1988 = vpop.xlane.xlu0 %1987
    %1989 = vadd.xlane.f32.xlu0 %v1958
    %v1990 = vpop.xlane.xlu0 %1989
    %1991 = vadd.xlane.f32.xlu0 %v1960
    %v1992 = vpop.xlane.xlu0 %1991
    %1993 = vadd.xlane.f32.xlu0 %v1962
    %v1994 = vpop.xlane.xlu0 %1993
    %1995 = vadd.xlane.f32.xlu0 %v1964
    %v1996 = vpop.xlane.xlu0 %1995
    %1997 = vadd.xlane.f32.xlu0 %v1966
    %v1998 = vpop.xlane.xlu0 %1997
    %1999 = vadd.xlane.f32.xlu0 %v1968
    %v2000 = vpop.xlane.xlu0 %1999
    %2001 = vadd.xlane.f32.xlu0 %v1970
    %v2002 = vpop.xlane.xlu0 %2001
    %2003 = vadd.xlane.f32.xlu0 %v1972
    %v2004 = vpop.xlane.xlu0 %2003
    %v2005 = vrcp.pop %v1974
    %v2006 = vrcp.pop %v1976
    %v2007 = vrcp.pop %v1978
    %v2008 = vrcp.pop %v1980
    %v2009 = vrcp.pop %v1982
    %v2010 = vrcp.pop %v1984
    %v2011 = vrcp.pop %v1986
    %v2012 = vrcp.pop %v1988
    %v2013 = vrcp.pop %v1990
    %v2014 = vrcp.pop %v1992
    %v2015 = vrcp.pop %v1994
    %v2016 = vrcp.pop %v1996
    %v2017 = vrcp.pop %v1998
    %v2018 = vrcp.pop %v2000
    %v2019 = vrcp.pop %v2002
    %v2020 = vrcp.pop %v2004
    %v2021 = vmul.f32 %v1974, %v2005
    %v2022 = vmul.f32 %v1976, %v2006
    %v2023 = vmul.f32 %v1978, %v2007
    %v2024 = vmul.f32 %v1980, %v2008
    %v2025 = vmul.f32 %v1982, %v2009
    %v2026 = vmul.f32 %v1984, %v2010
    %v2027 = vmul.f32 %v1986, %v2011
    %v2028 = vmul.f32 %v1988, %v2012
    %v2029 = vmul.f32 %v1990, %v2013
    %v2030 = vmul.f32 %v1992, %v2014
    %v2031 = vmul.f32 %v1994, %v2015
    %v2032 = vmul.f32 %v1996, %v2016
    %v2033 = vmul.f32 %v1998, %v2017
    %v2034 = vmul.f32 %v2000, %v2018
    %v2035 = vmul.f32 %v2002, %v2019
    %v2036 = vmul.f32 %v2004, %v2020
    %v2037 = vsub.f32 2.0, %v2021
    %v2038 = vsub.f32 2.0, %v2022
    %v2039 = vsub.f32 2.0, %v2023
    %v2040 = vsub.f32 2.0, %v2024
    %v2041 = vsub.f32 2.0, %v2025
    %v2042 = vsub.f32 2.0, %v2026
    %v2043 = vsub.f32 2.0, %v2027
    %v2044 = vsub.f32 2.0, %v2028
    %v2045 = vsub.f32 2.0, %v2029
    %v2046 = vsub.f32 2.0, %v2030
    %v2047 = vsub.f32 2.0, %v2031
    %v2048 = vsub.f32 2.0, %v2032
    %v2049 = vsub.f32 2.0, %v2033
    %v2050 = vsub.f32 2.0, %v2034
    %v2051 = vsub.f32 2.0, %v2035
    %v2052 = vsub.f32 2.0, %v2036
    %v2053 = vmul.f32 %v2005, %v2037
    %v2054 = vmul.f32 %v2006, %v2038
    %v2055 = vmul.f32 %v2007, %v2039
    %v2056 = vmul.f32 %v2008, %v2040
    %v2057 = vmul.f32 %v2009, %v2041
    %v2058 = vmul.f32 %v2010, %v2042
    %v2059 = vmul.f32 %v2011, %v2043
    %v2060 = vmul.f32 %v2012, %v2044
    %v2061 = vmul.f32 %v2013, %v2045
    %v2062 = vmul.f32 %v2014, %v2046
    %v2063 = vmul.f32 %v2015, %v2047
    %v2064 = vmul.f32 %v2016, %v2048
    %v2065 = vmul.f32 %v2017, %v2049
    %v2066 = vmul.f32 %v2018, %v2050
    %v2067 = vmul.f32 %v2019, %v2051
    %v2068 = vmul.f32 %v2020, %v2052
    %v2069 = vmul.f32 %v1942, %v2053
    %v2070 = vmul.f32 %v1944, %v2054
    %v2071 = vmul.f32 %v1946, %v2055
    %v2072 = vmul.f32 %v1948, %v2056
    %v2073 = vmul.f32 %v1950, %v2057
    %v2074 = vmul.f32 %v1952, %v2058
    %v2075 = vmul.f32 %v1954, %v2059
    %v2076 = vmul.f32 %v1956, %v2060
    %v2077 = vmul.f32 %v1958, %v2061
    %v2078 = vmul.f32 %v1960, %v2062
    %v2079 = vmul.f32 %v1962, %v2063
    %v2080 = vmul.f32 %v1964, %v2064
    %v2081 = vmul.f32 %v1966, %v2065
    %v2082 = vmul.f32 %v1968, %v2066
    %v2083 = vmul.f32 %v1970, %v2067
    %v2084 = vmul.f32 %v1972, %v2068
    %v2085 = vpack.c.bf16 %v2070, %v2069
    %v2086 = vpack.c.bf16 %v2072, %v2071
    %v2087 = vpack.c.bf16 %v2074, %v2073
    %v2088 = vpack.c.bf16 %v2076, %v2075
    %v2089 = vpack.c.bf16 %v2078, %v2077
    %v2090 = vpack.c.bf16 %v2080, %v2079
    %v2091 = vpack.c.bf16 %v2082, %v2081
    %v2092 = vpack.c.bf16 %v2084, %v2083
    %v2093 = vunpack.c.l.bf16 %v2085
    %v2094 = vunpack.c.h.bf16 %v2085
    %v2095 = vunpack.c.l.bf16 %v2086
    %v2096 = vunpack.c.h.bf16 %v2086
    %v2097 = vunpack.c.l.bf16 %v2087
    %v2098 = vunpack.c.h.bf16 %v2087
    %v2099 = vunpack.c.l.bf16 %v2088
    %v2100 = vunpack.c.h.bf16 %v2088
    %v2101 = vunpack.c.l.bf16 %v2089
    %v2102 = vunpack.c.h.bf16 %v2089
    %v2103 = vunpack.c.l.bf16 %v2090
    %v2104 = vunpack.c.h.bf16 %v2090
    %v2105 = vunpack.c.l.bf16 %v2091
    %v2106 = vunpack.c.h.bf16 %v2091
    %v2107 = vunpack.c.l.bf16 %v2092
    %v2108 = vunpack.c.h.bf16 %v2092
    %v2109 = vsub.f32 %v2069, %v2093
    %v2110 = vsub.f32 %v2070, %v2094
    %v2111 = vsub.f32 %v2071, %v2095
    %v2112 = vsub.f32 %v2072, %v2096
    %v2113 = vsub.f32 %v2073, %v2097
    %v2114 = vsub.f32 %v2074, %v2098
    %v2115 = vsub.f32 %v2075, %v2099
    %v2116 = vsub.f32 %v2076, %v2100
    %v2117 = vsub.f32 %v2077, %v2101
    %v2118 = vsub.f32 %v2078, %v2102
    %v2119 = vsub.f32 %v2079, %v2103
    %v2120 = vsub.f32 %v2080, %v2104
    %v2121 = vsub.f32 %v2081, %v2105
    %v2122 = vsub.f32 %v2082, %v2106
    %v2123 = vsub.f32 %v2083, %v2107
    %v2124 = vsub.f32 %v2084, %v2108
    %v2125 = vpack.c.bf16 %v2110, %v2109
    %v2126 = vpack.c.bf16 %v2112, %v2111
    %v2127 = vpack.c.bf16 %v2114, %v2113
    %v2128 = vpack.c.bf16 %v2116, %v2115
    %v2129 = vpack.c.bf16 %v2118, %v2117
    %v2130 = vpack.c.bf16 %v2120, %v2119
    %v2131 = vpack.c.bf16 %v2122, %v2121
    %v2132 = vpack.c.bf16 %v2124, %v2123
    %2133 = vst [vmem:[#allocation2 + $0x10] sm:$0xff] %v2085
    %2134 = vst [vmem:[#allocation2 + $0x50] sm:$0xff] %v2086
    %2135 = vst [vmem:[#allocation2 + $0x90] sm:$0xff] %v2087
    %2136 = vst [vmem:[#allocation2 + $0xd0] sm:$0xff] %v2088
    %2137 = vst [vmem:[#allocation2 + $0x110] sm:$0xff] %v2089
    %2138 = vst [vmem:[#allocation2 + $0x150] sm:$0xff] %v2090
    %2139 = vst [vmem:[#allocation2 + $0x190] sm:$0xff] %v2091
    %2140 = vst [vmem:[#allocation2 + $0x1d0] sm:$0xff] %v2092
    %2141 = vst [vmem:[#allocation3 + $0x10] sm:$0xff] %v2125
    %2142 = vst [vmem:[#allocation3 + $0x50] sm:$0xff] %v2126
    %2143 = vst [vmem:[#allocation3 + $0x90] sm:$0xff] %v2127
    %2144 = vst [vmem:[#allocation3 + $0xd0] sm:$0xff] %v2128
    %2145 = vst [vmem:[#allocation3 + $0x110] sm:$0xff] %v2129
    %2146 = vst [vmem:[#allocation3 + $0x150] sm:$0xff] %v2130
    %2147 = vst [vmem:[#allocation3 + $0x190] sm:$0xff] %v2131
    %2148 = vst [vmem:[#allocation3 + $0x1d0] sm:$0xff] %v2132
    %vm2149 = vcmask 195712
    %2150 = vst.msk [vmem:[#allocation4 + $0x80] sm:$0xff] %vm2149, %v486
    %2151 = vst.msk [vmem:[#allocation4 + $0x88] sm:$0xff] %vm2149, %v487
    %2152 = vst.msk [vmem:[#allocation4 + $0x90] sm:$0xff] %vm2149, %v488
    %2153 = vst.msk [vmem:[#allocation4 + $0x98] sm:$0xff] %vm2149, %v489
    %2154 = vst.msk [vmem:[#allocation4 + $0xa0] sm:$0xff] %vm2149, %v490
    %2155 = vst.msk [vmem:[#allocation4 + $0xa8] sm:$0xff] %vm2149, %v491
    %2156 = vst.msk [vmem:[#allocation4 + $0xb0] sm:$0xff] %vm2149, %v492
    %2157 = vst.msk [vmem:[#allocation4 + $0xb8] sm:$0xff] %vm2149, %v493
    %2158 = vst.msk [vmem:[#allocation5 + $0x80] sm:$0xff] %vm2149, %v526
    %2159 = vst.msk [vmem:[#allocation5 + $0x88] sm:$0xff] %vm2149, %v527
    %2160 = vst.msk [vmem:[#allocation5 + $0x90] sm:$0xff] %vm2149, %v528
    %2161 = vst.msk [vmem:[#allocation5 + $0x98] sm:$0xff] %vm2149, %v529
    %2162 = vst.msk [vmem:[#allocation5 + $0xa0] sm:$0xff] %vm2149, %v530
    %2163 = vst.msk [vmem:[#allocation5 + $0xa8] sm:$0xff] %vm2149, %v531
    %2164 = vst.msk [vmem:[#allocation5 + $0xb0] sm:$0xff] %vm2149, %v532
    %2165 = vst.msk [vmem:[#allocation5 + $0xb8] sm:$0xff] %vm2149, %v533
    %2166 = vset.pattern.permute.xlu0 67
    %2167 = vperm.xlu0 %2166, %v465
    %v2168 = vpop.permute.xlu0 %2167
    %2170 = vset.pattern.permute.xlu0 67
    %2171 = vperm.xlu0 %2170, %v466
    %v2172 = vpop.permute.xlu0 %2171
    %2174 = vset.pattern.permute.xlu0 67
    %2175 = vperm.xlu0 %2174, %v467
    %v2176 = vpop.permute.xlu0 %2175
    %2178 = vset.pattern.permute.xlu0 67
    %2179 = vperm.xlu0 %2178, %v468
    %v2180 = vpop.permute.xlu0 %2179
    %2182 = vset.pattern.permute.xlu0 67
    %2183 = vperm.xlu0 %2182, %v469
    %v2184 = vpop.permute.xlu0 %2183
    %2186 = vset.pattern.permute.xlu0 67
    %2187 = vperm.xlu0 %2186, %v470
    %v2188 = vpop.permute.xlu0 %2187
    %2190 = vset.pattern.permute.xlu0 67
    %2191 = vperm.xlu0 %2190, %v471
    %v2192 = vpop.permute.xlu0 %2191
    %2194 = vset.pattern.permute.xlu0 67
    %2195 = vperm.xlu0 %2194, %v472
    %v2196 = vpop.permute.xlu0 %2195
    %2198 = vset.pattern.permute.xlu0 67
    %2199 = vperm.xlu0 %2198, %v473
    %v2200 = vpop.permute.xlu0 %2199
    %2202 = vset.pattern.permute.xlu0 67
    %2203 = vperm.xlu0 %2202, %v474
    %v2204 = vpop.permute.xlu0 %2203
    %2206 = vset.pattern.permute.xlu0 67
    %2207 = vperm.xlu0 %2206, %v475
    %v2208 = vpop.permute.xlu0 %2207
    %2210 = vset.pattern.permute.xlu0 67
    %2211 = vperm.xlu0 %2210, %v476
    %v2212 = vpop.permute.xlu0 %2211
    %2214 = vset.pattern.permute.xlu0 67
    %2215 = vperm.xlu0 %2214, %v477
    %v2216 = vpop.permute.xlu0 %2215
    %2218 = vset.pattern.permute.xlu0 67
    %2219 = vperm.xlu0 %2218, %v478
    %v2220 = vpop.permute.xlu0 %2219
    %2222 = vset.pattern.permute.xlu0 67
    %2223 = vperm.xlu0 %2222, %v479
    %v2224 = vpop.permute.xlu0 %2223
    %2226 = vset.pattern.permute.xlu0 67
    %2227 = vperm.xlu0 %2226, %v480
    %v2228 = vpop.permute.xlu0 %2227
    %v2230 = vlaneseq
    %v2231 = vshrl.u32 %v2230, 7
    %v2232 = vsub.s32 3, %v2231
    %v2233 = vrot.slane %v709, %v2232
    %v2234 = vadd.f32 %v2168, %v2233
    %v2235 = vadd.f32 %v2172, %v2233
    %v2236 = vadd.f32 %v2176, %v2233
    %v2237 = vadd.f32 %v2180, %v2233
    %v2238 = vadd.f32 %v2184, %v2233
    %v2239 = vadd.f32 %v2188, %v2233
    %v2240 = vadd.f32 %v2192, %v2233
    %v2241 = vadd.f32 %v2196, %v2233
    %v2242 = vadd.f32 %v2200, %v2233
    %v2243 = vadd.f32 %v2204, %v2233
    %v2244 = vadd.f32 %v2208, %v2233
    %v2245 = vadd.f32 %v2212, %v2233
    %v2246 = vadd.f32 %v2216, %v2233
    %v2247 = vadd.f32 %v2220, %v2233
    %v2248 = vadd.f32 %v2224, %v2233
    %v2249 = vadd.f32 %v2228, %v2233
    %vm2250 = vcmp.gt.f32.partialorder %v2234, 0.0
    %vm2251 = vcmp.gt.f32.partialorder %v2235, 0.0
    %vm2252 = vcmp.gt.f32.partialorder %v2236, 0.0
    %vm2253 = vcmp.gt.f32.partialorder %v2237, 0.0
    %vm2254 = vcmp.gt.f32.partialorder %v2238, 0.0
    %vm2255 = vcmp.gt.f32.partialorder %v2239, 0.0
    %vm2256 = vcmp.gt.f32.partialorder %v2240, 0.0
    %vm2257 = vcmp.gt.f32.partialorder %v2241, 0.0
    %vm2258 = vcmp.gt.f32.partialorder %v2242, 0.0
    %vm2259 = vcmp.gt.f32.partialorder %v2243, 0.0
    %vm2260 = vcmp.gt.f32.partialorder %v2244, 0.0
    %vm2261 = vcmp.gt.f32.partialorder %v2245, 0.0
    %vm2262 = vcmp.gt.f32.partialorder %v2246, 0.0
    %vm2263 = vcmp.gt.f32.partialorder %v2247, 0.0
    %vm2264 = vcmp.gt.f32.partialorder %v2248, 0.0
    %vm2265 = vcmp.gt.f32.partialorder %v2249, 0.0
    %v2266 = vmul.f32 %v2234, 0.2
    %v2267 = vmul.f32 %v2235, 0.2
    %v2268 = vmul.f32 %v2236, 0.2
    %v2269 = vmul.f32 %v2237, 0.2
    %v2270 = vmul.f32 %v2238, 0.2
    %v2271 = vmul.f32 %v2239, 0.2
    %v2272 = vmul.f32 %v2240, 0.2
    %v2273 = vmul.f32 %v2241, 0.2
    %v2274 = vmul.f32 %v2242, 0.2
    %v2275 = vmul.f32 %v2243, 0.2
    %v2276 = vmul.f32 %v2244, 0.2
    %v2277 = vmul.f32 %v2245, 0.2
    %v2278 = vmul.f32 %v2246, 0.2
    %v2279 = vmul.f32 %v2247, 0.2
    %v2280 = vmul.f32 %v2248, 0.2
    %v2281 = vmul.f32 %v2249, 0.2
    %v2282 = vsel %vm2250, %v2234, %v2266
    %v2283 = vsel %vm2251, %v2235, %v2267
    %v2284 = vsel %vm2252, %v2236, %v2268
    %v2285 = vsel %vm2253, %v2237, %v2269
    %v2286 = vsel %vm2254, %v2238, %v2270
    %v2287 = vsel %vm2255, %v2239, %v2271
    %v2288 = vsel %vm2256, %v2240, %v2272
    %v2289 = vsel %vm2257, %v2241, %v2273
    %v2290 = vsel %vm2258, %v2242, %v2274
    %v2291 = vsel %vm2259, %v2243, %v2275
    %v2292 = vsel %vm2260, %v2244, %v2276
    %v2293 = vsel %vm2261, %v2245, %v2277
    %v2294 = vsel %vm2262, %v2246, %v2278
    %v2295 = vsel %vm2263, %v2247, %v2279
    %v2296 = vsel %vm2264, %v2248, %v2280
    %v2297 = vsel %vm2265, %v2249, %v2281
    %v2298 = vld [vmem:[%s1] sm:$0xff]
    %v2299 = vld [vmem:[%s1 + $0x8] sm:$0xff]
    %v2300 = vld [vmem:[%s1 + $0x10] sm:$0xff]
    %v2301 = vld [vmem:[%s1 + $0x18] sm:$0xff]
    %v2302 = vld [vmem:[%s1 + $0x20] sm:$0xff]
    %v2303 = vld [vmem:[%s1 + $0x28] sm:$0xff]
    %v2304 = vld [vmem:[%s1 + $0x30] sm:$0xff]
    %v2305 = vld [vmem:[%s1 + $0x38] sm:$0xff]
    %v2306 = vld [vmem:[%s1 + $0x40] sm:$0xff]
    %v2307 = vld [vmem:[%s1 + $0x48] sm:$0xff]
    %v2308 = vld [vmem:[%s1 + $0x50] sm:$0xff]
    %v2309 = vld [vmem:[%s1 + $0x58] sm:$0xff]
    %v2310 = vld [vmem:[%s1 + $0x60] sm:$0xff]
    %v2311 = vld [vmem:[%s1 + $0x68] sm:$0xff]
    %v2312 = vld [vmem:[%s1 + $0x70] sm:$0xff]
    %v2313 = vld [vmem:[%s1 + $0x78] sm:$0xff]
    %v2314 = vadd.f32 %v2282, %v2298
    %v2315 = vadd.f32 %v2283, %v2299
    %v2316 = vadd.f32 %v2284, %v2300
    %v2317 = vadd.f32 %v2285, %v2301
    %v2318 = vadd.f32 %v2286, %v2302
    %v2319 = vadd.f32 %v2287, %v2303
    %v2320 = vadd.f32 %v2288, %v2304
    %v2321 = vadd.f32 %v2289, %v2305
    %v2322 = vadd.f32 %v2290, %v2306
    %v2323 = vadd.f32 %v2291, %v2307
    %v2324 = vadd.f32 %v2292, %v2308
    %v2325 = vadd.f32 %v2293, %v2309
    %v2326 = vadd.f32 %v2294, %v2310
    %v2327 = vadd.f32 %v2295, %v2311
    %v2328 = vadd.f32 %v2296, %v2312
    %v2329 = vadd.f32 %v2297, %v2313
    %2330 = vmax.xlane.f32.xlu0 %v2314
    %v2331 = vpop.xlane.xlu0 %2330
    %2332 = vmax.xlane.f32.xlu0 %v2315
    %v2333 = vpop.xlane.xlu0 %2332
    %2334 = vmax.xlane.f32.xlu0 %v2316
    %v2335 = vpop.xlane.xlu0 %2334
    %2336 = vmax.xlane.f32.xlu0 %v2317
    %v2337 = vpop.xlane.xlu0 %2336
    %2338 = vmax.xlane.f32.xlu0 %v2318
    %v2339 = vpop.xlane.xlu0 %2338
    %2340 = vmax.xlane.f32.xlu0 %v2319
    %v2341 = vpop.xlane.xlu0 %2340
    %2342 = vmax.xlane.f32.xlu0 %v2320
    %v2343 = vpop.xlane.xlu0 %2342
    %2344 = vmax.xlane.f32.xlu0 %v2321
    %v2345 = vpop.xlane.xlu0 %2344
    %2346 = vmax.xlane.f32.xlu0 %v2322
    %v2347 = vpop.xlane.xlu0 %2346
    %2348 = vmax.xlane.f32.xlu0 %v2323
    %v2349 = vpop.xlane.xlu0 %2348
    %2350 = vmax.xlane.f32.xlu0 %v2324
    %v2351 = vpop.xlane.xlu0 %2350
    %2352 = vmax.xlane.f32.xlu0 %v2325
    %v2353 = vpop.xlane.xlu0 %2352
    %2354 = vmax.xlane.f32.xlu0 %v2326
    %v2355 = vpop.xlane.xlu0 %2354
    %2356 = vmax.xlane.f32.xlu0 %v2327
    %v2357 = vpop.xlane.xlu0 %2356
    %2358 = vmax.xlane.f32.xlu0 %v2328
    %v2359 = vpop.xlane.xlu0 %2358
    %2360 = vmax.xlane.f32.xlu0 %v2329
    %v2361 = vpop.xlane.xlu0 %2360
    %v2362 = vsub.f32 %v2314, %v2331
    %v2363 = vsub.f32 %v2315, %v2333
    %v2364 = vsub.f32 %v2316, %v2335
    %v2365 = vsub.f32 %v2317, %v2337
    %v2366 = vsub.f32 %v2318, %v2339
    %v2367 = vsub.f32 %v2319, %v2341
    %v2368 = vsub.f32 %v2320, %v2343
    %v2369 = vsub.f32 %v2321, %v2345
    %v2370 = vsub.f32 %v2322, %v2347
    %v2371 = vsub.f32 %v2323, %v2349
    %v2372 = vsub.f32 %v2324, %v2351
    %v2373 = vsub.f32 %v2325, %v2353
    %v2374 = vsub.f32 %v2326, %v2355
    %v2375 = vsub.f32 %v2327, %v2357
    %v2376 = vsub.f32 %v2328, %v2359
    %v2377 = vsub.f32 %v2329, %v2361
    %v2378 = vmul.f32 %v2362, 1.442695
    %v2379 = vpow.pop %v2378
    %v2380 = vmul.f32 %v2363, 1.442695
    %v2381 = vpow.pop %v2380
    %v2382 = vmul.f32 %v2364, 1.442695
    %v2383 = vpow.pop %v2382
    %v2384 = vmul.f32 %v2365, 1.442695
    %v2385 = vpow.pop %v2384
    %v2386 = vmul.f32 %v2366, 1.442695
    %v2387 = vpow.pop %v2386
    %v2388 = vmul.f32 %v2367, 1.442695
    %v2389 = vpow.pop %v2388
    %v2390 = vmul.f32 %v2368, 1.442695
    %v2391 = vpow.pop %v2390
    %v2392 = vmul.f32 %v2369, 1.442695
    %v2393 = vpow.pop %v2392
    %v2394 = vmul.f32 %v2370, 1.442695
    %v2395 = vpow.pop %v2394
    %v2396 = vmul.f32 %v2371, 1.442695
    %v2397 = vpow.pop %v2396
    %v2398 = vmul.f32 %v2372, 1.442695
    %v2399 = vpow.pop %v2398
    %v2400 = vmul.f32 %v2373, 1.442695
    %v2401 = vpow.pop %v2400
    %v2402 = vmul.f32 %v2374, 1.442695
    %v2403 = vpow.pop %v2402
    %v2404 = vmul.f32 %v2375, 1.442695
    %v2405 = vpow.pop %v2404
    %v2406 = vmul.f32 %v2376, 1.442695
    %v2407 = vpow.pop %v2406
    %v2408 = vmul.f32 %v2377, 1.442695
    %v2409 = vpow.pop %v2408
    %2410 = vadd.xlane.f32.xlu0 %v2379
    %v2411 = vpop.xlane.xlu0 %2410
    %2412 = vadd.xlane.f32.xlu0 %v2381
    %v2413 = vpop.xlane.xlu0 %2412
    %2414 = vadd.xlane.f32.xlu0 %v2383
    %v2415 = vpop.xlane.xlu0 %2414
    %2416 = vadd.xlane.f32.xlu0 %v2385
    %v2417 = vpop.xlane.xlu0 %2416
    %2418 = vadd.xlane.f32.xlu0 %v2387
    %v2419 = vpop.xlane.xlu0 %2418
    %2420 = vadd.xlane.f32.xlu0 %v2389
    %v2421 = vpop.xlane.xlu0 %2420
    %2422 = vadd.xlane.f32.xlu0 %v2391
    %v2423 = vpop.xlane.xlu0 %2422
    %2424 = vadd.xlane.f32.xlu0 %v2393
    %v2425 = vpop.xlane.xlu0 %2424
    %2426 = vadd.xlane.f32.xlu0 %v2395
    %v2427 = vpop.xlane.xlu0 %2426
    %2428 = vadd.xlane.f32.xlu0 %v2397
    %v2429 = vpop.xlane.xlu0 %2428
    %2430 = vadd.xlane.f32.xlu0 %v2399
    %v2431 = vpop.xlane.xlu0 %2430
    %2432 = vadd.xlane.f32.xlu0 %v2401
    %v2433 = vpop.xlane.xlu0 %2432
    %2434 = vadd.xlane.f32.xlu0 %v2403
    %v2435 = vpop.xlane.xlu0 %2434
    %2436 = vadd.xlane.f32.xlu0 %v2405
    %v2437 = vpop.xlane.xlu0 %2436
    %2438 = vadd.xlane.f32.xlu0 %v2407
    %v2439 = vpop.xlane.xlu0 %2438
    %2440 = vadd.xlane.f32.xlu0 %v2409
    %v2441 = vpop.xlane.xlu0 %2440
    %v2442 = vrcp.pop %v2411
    %v2443 = vrcp.pop %v2413
    %v2444 = vrcp.pop %v2415
    %v2445 = vrcp.pop %v2417
    %v2446 = vrcp.pop %v2419
    %v2447 = vrcp.pop %v2421
    %v2448 = vrcp.pop %v2423
    %v2449 = vrcp.pop %v2425
    %v2450 = vrcp.pop %v2427
    %v2451 = vrcp.pop %v2429
    %v2452 = vrcp.pop %v2431
    %v2453 = vrcp.pop %v2433
    %v2454 = vrcp.pop %v2435
    %v2455 = vrcp.pop %v2437
    %v2456 = vrcp.pop %v2439
    %v2457 = vrcp.pop %v2441
    %v2458 = vmul.f32 %v2411, %v2442
    %v2459 = vmul.f32 %v2413, %v2443
    %v2460 = vmul.f32 %v2415, %v2444
    %v2461 = vmul.f32 %v2417, %v2445
    %v2462 = vmul.f32 %v2419, %v2446
    %v2463 = vmul.f32 %v2421, %v2447
    %v2464 = vmul.f32 %v2423, %v2448
    %v2465 = vmul.f32 %v2425, %v2449
    %v2466 = vmul.f32 %v2427, %v2450
    %v2467 = vmul.f32 %v2429, %v2451
    %v2468 = vmul.f32 %v2431, %v2452
    %v2469 = vmul.f32 %v2433, %v2453
    %v2470 = vmul.f32 %v2435, %v2454
    %v2471 = vmul.f32 %v2437, %v2455
    %v2472 = vmul.f32 %v2439, %v2456
    %v2473 = vmul.f32 %v2441, %v2457
    %v2474 = vsub.f32 2.0, %v2458
    %v2475 = vsub.f32 2.0, %v2459
    %v2476 = vsub.f32 2.0, %v2460
    %v2477 = vsub.f32 2.0, %v2461
    %v2478 = vsub.f32 2.0, %v2462
    %v2479 = vsub.f32 2.0, %v2463
    %v2480 = vsub.f32 2.0, %v2464
    %v2481 = vsub.f32 2.0, %v2465
    %v2482 = vsub.f32 2.0, %v2466
    %v2483 = vsub.f32 2.0, %v2467
    %v2484 = vsub.f32 2.0, %v2468
    %v2485 = vsub.f32 2.0, %v2469
    %v2486 = vsub.f32 2.0, %v2470
    %v2487 = vsub.f32 2.0, %v2471
    %v2488 = vsub.f32 2.0, %v2472
    %v2489 = vsub.f32 2.0, %v2473
    %v2490 = vmul.f32 %v2442, %v2474
    %v2491 = vmul.f32 %v2443, %v2475
    %v2492 = vmul.f32 %v2444, %v2476
    %v2493 = vmul.f32 %v2445, %v2477
    %v2494 = vmul.f32 %v2446, %v2478
    %v2495 = vmul.f32 %v2447, %v2479
    %v2496 = vmul.f32 %v2448, %v2480
    %v2497 = vmul.f32 %v2449, %v2481
    %v2498 = vmul.f32 %v2450, %v2482
    %v2499 = vmul.f32 %v2451, %v2483
    %v2500 = vmul.f32 %v2452, %v2484
    %v2501 = vmul.f32 %v2453, %v2485
    %v2502 = vmul.f32 %v2454, %v2486
    %v2503 = vmul.f32 %v2455, %v2487
    %v2504 = vmul.f32 %v2456, %v2488
    %v2505 = vmul.f32 %v2457, %v2489
    %v2506 = vmul.f32 %v2379, %v2490
    %v2507 = vmul.f32 %v2381, %v2491
    %v2508 = vmul.f32 %v2383, %v2492
    %v2509 = vmul.f32 %v2385, %v2493
    %v2510 = vmul.f32 %v2387, %v2494
    %v2511 = vmul.f32 %v2389, %v2495
    %v2512 = vmul.f32 %v2391, %v2496
    %v2513 = vmul.f32 %v2393, %v2497
    %v2514 = vmul.f32 %v2395, %v2498
    %v2515 = vmul.f32 %v2397, %v2499
    %v2516 = vmul.f32 %v2399, %v2500
    %v2517 = vmul.f32 %v2401, %v2501
    %v2518 = vmul.f32 %v2403, %v2502
    %v2519 = vmul.f32 %v2405, %v2503
    %v2520 = vmul.f32 %v2407, %v2504
    %v2521 = vmul.f32 %v2409, %v2505
    %v2522 = vpack.c.bf16 %v2507, %v2506
    %v2523 = vpack.c.bf16 %v2509, %v2508
    %v2524 = vpack.c.bf16 %v2511, %v2510
    %v2525 = vpack.c.bf16 %v2513, %v2512
    %v2526 = vpack.c.bf16 %v2515, %v2514
    %v2527 = vpack.c.bf16 %v2517, %v2516
    %v2528 = vpack.c.bf16 %v2519, %v2518
    %v2529 = vpack.c.bf16 %v2521, %v2520
    %v2530 = vunpack.c.l.bf16 %v2522
    %v2531 = vunpack.c.h.bf16 %v2522
    %v2532 = vunpack.c.l.bf16 %v2523
    %v2533 = vunpack.c.h.bf16 %v2523
    %v2534 = vunpack.c.l.bf16 %v2524
    %v2535 = vunpack.c.h.bf16 %v2524
    %v2536 = vunpack.c.l.bf16 %v2525
    %v2537 = vunpack.c.h.bf16 %v2525
    %v2538 = vunpack.c.l.bf16 %v2526
    %v2539 = vunpack.c.h.bf16 %v2526
    %v2540 = vunpack.c.l.bf16 %v2527
    %v2541 = vunpack.c.h.bf16 %v2527
    %v2542 = vunpack.c.l.bf16 %v2528
    %v2543 = vunpack.c.h.bf16 %v2528
    %v2544 = vunpack.c.l.bf16 %v2529
    %v2545 = vunpack.c.h.bf16 %v2529
    %v2546 = vsub.f32 %v2506, %v2530
    %v2547 = vsub.f32 %v2507, %v2531
    %v2548 = vsub.f32 %v2508, %v2532
    %v2549 = vsub.f32 %v2509, %v2533
    %v2550 = vsub.f32 %v2510, %v2534
    %v2551 = vsub.f32 %v2511, %v2535
    %v2552 = vsub.f32 %v2512, %v2536
    %v2553 = vsub.f32 %v2513, %v2537
    %v2554 = vsub.f32 %v2514, %v2538
    %v2555 = vsub.f32 %v2515, %v2539
    %v2556 = vsub.f32 %v2516, %v2540
    %v2557 = vsub.f32 %v2517, %v2541
    %v2558 = vsub.f32 %v2518, %v2542
    %v2559 = vsub.f32 %v2519, %v2543
    %v2560 = vsub.f32 %v2520, %v2544
    %v2561 = vsub.f32 %v2521, %v2545
    %v2562 = vpack.c.bf16 %v2547, %v2546
    %v2563 = vpack.c.bf16 %v2549, %v2548
    %v2564 = vpack.c.bf16 %v2551, %v2550
    %v2565 = vpack.c.bf16 %v2553, %v2552
    %v2566 = vpack.c.bf16 %v2555, %v2554
    %v2567 = vpack.c.bf16 %v2557, %v2556
    %v2568 = vpack.c.bf16 %v2559, %v2558
    %v2569 = vpack.c.bf16 %v2561, %v2560
    %2570 = vst [vmem:[#allocation2 + $0x18] sm:$0xff] %v2522
    %2571 = vst [vmem:[#allocation2 + $0x58] sm:$0xff] %v2523
    %2572 = vst [vmem:[#allocation2 + $0x98] sm:$0xff] %v2524
    %2573 = vst [vmem:[#allocation2 + $0xd8] sm:$0xff] %v2525
    %2574 = vst [vmem:[#allocation2 + $0x118] sm:$0xff] %v2526
    %2575 = vst [vmem:[#allocation2 + $0x158] sm:$0xff] %v2527
    %2576 = vst [vmem:[#allocation2 + $0x198] sm:$0xff] %v2528
    %2577 = vst [vmem:[#allocation2 + $0x1d8] sm:$0xff] %v2529
    %2578 = vst [vmem:[#allocation3 + $0x18] sm:$0xff] %v2562
    %2579 = vst [vmem:[#allocation3 + $0x58] sm:$0xff] %v2563
    %2580 = vst [vmem:[#allocation3 + $0x98] sm:$0xff] %v2564
    %2581 = vst [vmem:[#allocation3 + $0xd8] sm:$0xff] %v2565
    %2582 = vst [vmem:[#allocation3 + $0x118] sm:$0xff] %v2566
    %2583 = vst [vmem:[#allocation3 + $0x158] sm:$0xff] %v2567
    %2584 = vst [vmem:[#allocation3 + $0x198] sm:$0xff] %v2568
    %2585 = vst [vmem:[#allocation3 + $0x1d8] sm:$0xff] %v2569
    %vm2586 = vcmask 261312
    %2587 = vst.msk [vmem:[#allocation4 + $0xc0] sm:$0xff] %vm2586, %v486
    %2588 = vst.msk [vmem:[#allocation4 + $0xc8] sm:$0xff] %vm2586, %v487
    %2589 = vst.msk [vmem:[#allocation4 + $0xd0] sm:$0xff] %vm2586, %v488
    %2590 = vst.msk [vmem:[#allocation4 + $0xd8] sm:$0xff] %vm2586, %v489
    %2591 = vst.msk [vmem:[#allocation4 + $0xe0] sm:$0xff] %vm2586, %v490
    %2592 = vst.msk [vmem:[#allocation4 + $0xe8] sm:$0xff] %vm2586, %v491
    %2593 = vst.msk [vmem:[#allocation4 + $0xf0] sm:$0xff] %vm2586, %v492
    %2594 = vst.msk [vmem:[#allocation4 + $0xf8] sm:$0xff] %vm2586, %v493
    %2595 = vst.msk [vmem:[#allocation5 + $0xc0] sm:$0xff] %vm2586, %v526
    %2596 = vst.msk [vmem:[#allocation5 + $0xc8] sm:$0xff] %vm2586, %v527
    %2597 = vst.msk [vmem:[#allocation5 + $0xd0] sm:$0xff] %vm2586, %v528
    %2598 = vst.msk [vmem:[#allocation5 + $0xd8] sm:$0xff] %vm2586, %v529
    %2599 = vst.msk [vmem:[#allocation5 + $0xe0] sm:$0xff] %vm2586, %v530
    %2600 = vst.msk [vmem:[#allocation5 + $0xe8] sm:$0xff] %vm2586, %v531
    %2601 = vst.msk [vmem:[#allocation5 + $0xf0] sm:$0xff] %vm2586, %v532
    %2602 = vst.msk [vmem:[#allocation5 + $0xf8] sm:$0xff] %vm2586, %v533
    %2603 = vset.pattern.permute.xlu0 68
    %2604 = vperm.xlu0 %2603, %v465
    %v2605 = vpop.permute.xlu0 %2604
    %2607 = vset.pattern.permute.xlu0 68
    %2608 = vperm.xlu0 %2607, %v466
    %v2609 = vpop.permute.xlu0 %2608
    %2611 = vset.pattern.permute.xlu0 68
    %2612 = vperm.xlu0 %2611, %v467
    %v2613 = vpop.permute.xlu0 %2612
    %2615 = vset.pattern.permute.xlu0 68
    %2616 = vperm.xlu0 %2615, %v468
    %v2617 = vpop.permute.xlu0 %2616
    %2619 = vset.pattern.permute.xlu0 68
    %2620 = vperm.xlu0 %2619, %v469
    %v2621 = vpop.permute.xlu0 %2620
    %2623 = vset.pattern.permute.xlu0 68
    %2624 = vperm.xlu0 %2623, %v470
    %v2625 = vpop.permute.xlu0 %2624
    %2627 = vset.pattern.permute.xlu0 68
    %2628 = vperm.xlu0 %2627, %v471
    %v2629 = vpop.permute.xlu0 %2628
    %2631 = vset.pattern.permute.xlu0 68
    %2632 = vperm.xlu0 %2631, %v472
    %v2633 = vpop.permute.xlu0 %2632
    %2635 = vset.pattern.permute.xlu0 68
    %2636 = vperm.xlu0 %2635, %v473
    %v2637 = vpop.permute.xlu0 %2636
    %2639 = vset.pattern.permute.xlu0 68
    %2640 = vperm.xlu0 %2639, %v474
    %v2641 = vpop.permute.xlu0 %2640
    %2643 = vset.pattern.permute.xlu0 68
    %2644 = vperm.xlu0 %2643, %v475
    %v2645 = vpop.permute.xlu0 %2644
    %2647 = vset.pattern.permute.xlu0 68
    %2648 = vperm.xlu0 %2647, %v476
    %v2649 = vpop.permute.xlu0 %2648
    %2651 = vset.pattern.permute.xlu0 68
    %2652 = vperm.xlu0 %2651, %v477
    %v2653 = vpop.permute.xlu0 %2652
    %2655 = vset.pattern.permute.xlu0 68
    %2656 = vperm.xlu0 %2655, %v478
    %v2657 = vpop.permute.xlu0 %2656
    %2659 = vset.pattern.permute.xlu0 68
    %2660 = vperm.xlu0 %2659, %v479
    %v2661 = vpop.permute.xlu0 %2660
    %2663 = vset.pattern.permute.xlu0 68
    %2664 = vperm.xlu0 %2663, %v480
    %v2665 = vpop.permute.xlu0 %2664
    %v2667 = vlaneseq
    %v2668 = vshrl.u32 %v2667, 7
    %v2669 = vsub.s32 4, %v2668
    %v2670 = vrot.slane %v709, %v2669
    %v2671 = vadd.f32 %v2605, %v2670
    %v2672 = vadd.f32 %v2609, %v2670
    %v2673 = vadd.f32 %v2613, %v2670
    %v2674 = vadd.f32 %v2617, %v2670
    %v2675 = vadd.f32 %v2621, %v2670
    %v2676 = vadd.f32 %v2625, %v2670
    %v2677 = vadd.f32 %v2629, %v2670
    %v2678 = vadd.f32 %v2633, %v2670
    %v2679 = vadd.f32 %v2637, %v2670
    %v2680 = vadd.f32 %v2641, %v2670
    %v2681 = vadd.f32 %v2645, %v2670
    %v2682 = vadd.f32 %v2649, %v2670
    %v2683 = vadd.f32 %v2653, %v2670
    %v2684 = vadd.f32 %v2657, %v2670
    %v2685 = vadd.f32 %v2661, %v2670
    %v2686 = vadd.f32 %v2665, %v2670
    %vm2687 = vcmp.gt.f32.partialorder %v2671, 0.0
    %vm2688 = vcmp.gt.f32.partialorder %v2672, 0.0
    %vm2689 = vcmp.gt.f32.partialorder %v2673, 0.0
    %vm2690 = vcmp.gt.f32.partialorder %v2674, 0.0
    %vm2691 = vcmp.gt.f32.partialorder %v2675, 0.0
    %vm2692 = vcmp.gt.f32.partialorder %v2676, 0.0
    %vm2693 = vcmp.gt.f32.partialorder %v2677, 0.0
    %vm2694 = vcmp.gt.f32.partialorder %v2678, 0.0
    %vm2695 = vcmp.gt.f32.partialorder %v2679, 0.0
    %vm2696 = vcmp.gt.f32.partialorder %v2680, 0.0
    %vm2697 = vcmp.gt.f32.partialorder %v2681, 0.0
    %vm2698 = vcmp.gt.f32.partialorder %v2682, 0.0
    %vm2699 = vcmp.gt.f32.partialorder %v2683, 0.0
    %vm2700 = vcmp.gt.f32.partialorder %v2684, 0.0
    %vm2701 = vcmp.gt.f32.partialorder %v2685, 0.0
    %vm2702 = vcmp.gt.f32.partialorder %v2686, 0.0
    %v2703 = vmul.f32 %v2671, 0.2
    %v2704 = vmul.f32 %v2672, 0.2
    %v2705 = vmul.f32 %v2673, 0.2
    %v2706 = vmul.f32 %v2674, 0.2
    %v2707 = vmul.f32 %v2675, 0.2
    %v2708 = vmul.f32 %v2676, 0.2
    %v2709 = vmul.f32 %v2677, 0.2
    %v2710 = vmul.f32 %v2678, 0.2
    %v2711 = vmul.f32 %v2679, 0.2
    %v2712 = vmul.f32 %v2680, 0.2
    %v2713 = vmul.f32 %v2681, 0.2
    %v2714 = vmul.f32 %v2682, 0.2
    %v2715 = vmul.f32 %v2683, 0.2
    %v2716 = vmul.f32 %v2684, 0.2
    %v2717 = vmul.f32 %v2685, 0.2
    %v2718 = vmul.f32 %v2686, 0.2
    %v2719 = vsel %vm2687, %v2671, %v2703
    %v2720 = vsel %vm2688, %v2672, %v2704
    %v2721 = vsel %vm2689, %v2673, %v2705
    %v2722 = vsel %vm2690, %v2674, %v2706
    %v2723 = vsel %vm2691, %v2675, %v2707
    %v2724 = vsel %vm2692, %v2676, %v2708
    %v2725 = vsel %vm2693, %v2677, %v2709
    %v2726 = vsel %vm2694, %v2678, %v2710
    %v2727 = vsel %vm2695, %v2679, %v2711
    %v2728 = vsel %vm2696, %v2680, %v2712
    %v2729 = vsel %vm2697, %v2681, %v2713
    %v2730 = vsel %vm2698, %v2682, %v2714
    %v2731 = vsel %vm2699, %v2683, %v2715
    %v2732 = vsel %vm2700, %v2684, %v2716
    %v2733 = vsel %vm2701, %v2685, %v2717
    %v2734 = vsel %vm2702, %v2686, %v2718
    %v2735 = vld [vmem:[%s1] sm:$0xff]
    %v2736 = vld [vmem:[%s1 + $0x8] sm:$0xff]
    %v2737 = vld [vmem:[%s1 + $0x10] sm:$0xff]
    %v2738 = vld [vmem:[%s1 + $0x18] sm:$0xff]
    %v2739 = vld [vmem:[%s1 + $0x20] sm:$0xff]
    %v2740 = vld [vmem:[%s1 + $0x28] sm:$0xff]
    %v2741 = vld [vmem:[%s1 + $0x30] sm:$0xff]
    %v2742 = vld [vmem:[%s1 + $0x38] sm:$0xff]
    %v2743 = vld [vmem:[%s1 + $0x40] sm:$0xff]
    %v2744 = vld [vmem:[%s1 + $0x48] sm:$0xff]
    %v2745 = vld [vmem:[%s1 + $0x50] sm:$0xff]
    %v2746 = vld [vmem:[%s1 + $0x58] sm:$0xff]
    %v2747 = vld [vmem:[%s1 + $0x60] sm:$0xff]
    %v2748 = vld [vmem:[%s1 + $0x68] sm:$0xff]
    %v2749 = vld [vmem:[%s1 + $0x70] sm:$0xff]
    %v2750 = vld [vmem:[%s1 + $0x78] sm:$0xff]
    %v2751 = vadd.f32 %v2719, %v2735
    %v2752 = vadd.f32 %v2720, %v2736
    %v2753 = vadd.f32 %v2721, %v2737
    %v2754 = vadd.f32 %v2722, %v2738
    %v2755 = vadd.f32 %v2723, %v2739
    %v2756 = vadd.f32 %v2724, %v2740
    %v2757 = vadd.f32 %v2725, %v2741
    %v2758 = vadd.f32 %v2726, %v2742
    %v2759 = vadd.f32 %v2727, %v2743
    %v2760 = vadd.f32 %v2728, %v2744
    %v2761 = vadd.f32 %v2729, %v2745
    %v2762 = vadd.f32 %v2730, %v2746
    %v2763 = vadd.f32 %v2731, %v2747
    %v2764 = vadd.f32 %v2732, %v2748
    %v2765 = vadd.f32 %v2733, %v2749
    %v2766 = vadd.f32 %v2734, %v2750
    %2767 = vmax.xlane.f32.xlu0 %v2751
    %v2768 = vpop.xlane.xlu0 %2767
    %2769 = vmax.xlane.f32.xlu0 %v2752
    %v2770 = vpop.xlane.xlu0 %2769
    %2771 = vmax.xlane.f32.xlu0 %v2753
    %v2772 = vpop.xlane.xlu0 %2771
    %2773 = vmax.xlane.f32.xlu0 %v2754
    %v2774 = vpop.xlane.xlu0 %2773
    %2775 = vmax.xlane.f32.xlu0 %v2755
    %v2776 = vpop.xlane.xlu0 %2775
    %2777 = vmax.xlane.f32.xlu0 %v2756
    %v2778 = vpop.xlane.xlu0 %2777
    %2779 = vmax.xlane.f32.xlu0 %v2757
    %v2780 = vpop.xlane.xlu0 %2779
    %2781 = vmax.xlane.f32.xlu0 %v2758
    %v2782 = vpop.xlane.xlu0 %2781
    %2783 = vmax.xlane.f32.xlu0 %v2759
    %v2784 = vpop.xlane.xlu0 %2783
    %2785 = vmax.xlane.f32.xlu0 %v2760
    %v2786 = vpop.xlane.xlu0 %2785
    %2787 = vmax.xlane.f32.xlu0 %v2761
    %v2788 = vpop.xlane.xlu0 %2787
    %2789 = vmax.xlane.f32.xlu0 %v2762
    %v2790 = vpop.xlane.xlu0 %2789
    %2791 = vmax.xlane.f32.xlu0 %v2763
    %v2792 = vpop.xlane.xlu0 %2791
    %2793 = vmax.xlane.f32.xlu0 %v2764
    %v2794 = vpop.xlane.xlu0 %2793
    %2795 = vmax.xlane.f32.xlu0 %v2765
    %v2796 = vpop.xlane.xlu0 %2795
    %2797 = vmax.xlane.f32.xlu0 %v2766
    %v2798 = vpop.xlane.xlu0 %2797
    %v2799 = vsub.f32 %v2751, %v2768
    %v2800 = vsub.f32 %v2752, %v2770
    %v2801 = vsub.f32 %v2753, %v2772
    %v2802 = vsub.f32 %v2754, %v2774
    %v2803 = vsub.f32 %v2755, %v2776
    %v2804 = vsub.f32 %v2756, %v2778
    %v2805 = vsub.f32 %v2757, %v2780
    %v2806 = vsub.f32 %v2758, %v2782
    %v2807 = vsub.f32 %v2759, %v2784
    %v2808 = vsub.f32 %v2760, %v2786
    %v2809 = vsub.f32 %v2761, %v2788
    %v2810 = vsub.f32 %v2762, %v2790
    %v2811 = vsub.f32 %v2763, %v2792
    %v2812 = vsub.f32 %v2764, %v2794
    %v2813 = vsub.f32 %v2765, %v2796
    %v2814 = vsub.f32 %v2766, %v2798
    %v2815 = vmul.f32 %v2799, 1.442695
    %v2816 = vpow.pop %v2815
    %v2817 = vmul.f32 %v2800, 1.442695
    %v2818 = vpow.pop %v2817
    %v2819 = vmul.f32 %v2801, 1.442695
    %v2820 = vpow.pop %v2819
    %v2821 = vmul.f32 %v2802, 1.442695
    %v2822 = vpow.pop %v2821
    %v2823 = vmul.f32 %v2803, 1.442695
    %v2824 = vpow.pop %v2823
    %v2825 = vmul.f32 %v2804, 1.442695
    %v2826 = vpow.pop %v2825
    %v2827 = vmul.f32 %v2805, 1.442695
    %v2828 = vpow.pop %v2827
    %v2829 = vmul.f32 %v2806, 1.442695
    %v2830 = vpow.pop %v2829
    %v2831 = vmul.f32 %v2807, 1.442695
    %v2832 = vpow.pop %v2831
    %v2833 = vmul.f32 %v2808, 1.442695
    %v2834 = vpow.pop %v2833
    %v2835 = vmul.f32 %v2809, 1.442695
    %v2836 = vpow.pop %v2835
    %v2837 = vmul.f32 %v2810, 1.442695
    %v2838 = vpow.pop %v2837
    %v2839 = vmul.f32 %v2811, 1.442695
    %v2840 = vpow.pop %v2839
    %v2841 = vmul.f32 %v2812, 1.442695
    %v2842 = vpow.pop %v2841
    %v2843 = vmul.f32 %v2813, 1.442695
    %v2844 = vpow.pop %v2843
    %v2845 = vmul.f32 %v2814, 1.442695
    %v2846 = vpow.pop %v2845
    %2847 = vadd.xlane.f32.xlu0 %v2816
    %v2848 = vpop.xlane.xlu0 %2847
    %2849 = vadd.xlane.f32.xlu0 %v2818
    %v2850 = vpop.xlane.xlu0 %2849
    %2851 = vadd.xlane.f32.xlu0 %v2820
    %v2852 = vpop.xlane.xlu0 %2851
    %2853 = vadd.xlane.f32.xlu0 %v2822
    %v2854 = vpop.xlane.xlu0 %2853
    %2855 = vadd.xlane.f32.xlu0 %v2824
    %v2856 = vpop.xlane.xlu0 %2855
    %2857 = vadd.xlane.f32.xlu0 %v2826
    %v2858 = vpop.xlane.xlu0 %2857
    %2859 = vadd.xlane.f32.xlu0 %v2828
    %v2860 = vpop.xlane.xlu0 %2859
    %2861 = vadd.xlane.f32.xlu0 %v2830
    %v2862 = vpop.xlane.xlu0 %2861
    %2863 = vadd.xlane.f32.xlu0 %v2832
    %v2864 = vpop.xlane.xlu0 %2863
    %2865 = vadd.xlane.f32.xlu0 %v2834
    %v2866 = vpop.xlane.xlu0 %2865
    %2867 = vadd.xlane.f32.xlu0 %v2836
    %v2868 = vpop.xlane.xlu0 %2867
    %2869 = vadd.xlane.f32.xlu0 %v2838
    %v2870 = vpop.xlane.xlu0 %2869
    %2871 = vadd.xlane.f32.xlu0 %v2840
    %v2872 = vpop.xlane.xlu0 %2871
    %2873 = vadd.xlane.f32.xlu0 %v2842
    %v2874 = vpop.xlane.xlu0 %2873
    %2875 = vadd.xlane.f32.xlu0 %v2844
    %v2876 = vpop.xlane.xlu0 %2875
    %2877 = vadd.xlane.f32.xlu0 %v2846
    %v2878 = vpop.xlane.xlu0 %2877
    %v2879 = vrcp.pop %v2848
    %v2880 = vrcp.pop %v2850
    %v2881 = vrcp.pop %v2852
    %v2882 = vrcp.pop %v2854
    %v2883 = vrcp.pop %v2856
    %v2884 = vrcp.pop %v2858
    %v2885 = vrcp.pop %v2860
    %v2886 = vrcp.pop %v2862
    %v2887 = vrcp.pop %v2864
    %v2888 = vrcp.pop %v2866
    %v2889 = vrcp.pop %v2868
    %v2890 = vrcp.pop %v2870
    %v2891 = vrcp.pop %v2872
    %v2892 = vrcp.pop %v2874
    %v2893 = vrcp.pop %v2876
    %v2894 = vrcp.pop %v2878
    %v2895 = vmul.f32 %v2848, %v2879
    %v2896 = vmul.f32 %v2850, %v2880
    %v2897 = vmul.f32 %v2852, %v2881
    %v2898 = vmul.f32 %v2854, %v2882
    %v2899 = vmul.f32 %v2856, %v2883
    %v2900 = vmul.f32 %v2858, %v2884
    %v2901 = vmul.f32 %v2860, %v2885
    %v2902 = vmul.f32 %v2862, %v2886
    %v2903 = vmul.f32 %v2864, %v2887
    %v2904 = vmul.f32 %v2866, %v2888
    %v2905 = vmul.f32 %v2868, %v2889
    %v2906 = vmul.f32 %v2870, %v2890
    %v2907 = vmul.f32 %v2872, %v2891
    %v2908 = vmul.f32 %v2874, %v2892
    %v2909 = vmul.f32 %v2876, %v2893
    %v2910 = vmul.f32 %v2878, %v2894
    %v2911 = vsub.f32 2.0, %v2895
    %v2912 = vsub.f32 2.0, %v2896
    %v2913 = vsub.f32 2.0, %v2897
    %v2914 = vsub.f32 2.0, %v2898
    %v2915 = vsub.f32 2.0, %v2899
    %v2916 = vsub.f32 2.0, %v2900
    %v2917 = vsub.f32 2.0, %v2901
    %v2918 = vsub.f32 2.0, %v2902
    %v2919 = vsub.f32 2.0, %v2903
    %v2920 = vsub.f32 2.0, %v2904
    %v2921 = vsub.f32 2.0, %v2905
    %v2922 = vsub.f32 2.0, %v2906
    %v2923 = vsub.f32 2.0, %v2907
    %v2924 = vsub.f32 2.0, %v2908
    %v2925 = vsub.f32 2.0, %v2909
    %v2926 = vsub.f32 2.0, %v2910
    %v2927 = vmul.f32 %v2879, %v2911
    %v2928 = vmul.f32 %v2880, %v2912
    %v2929 = vmul.f32 %v2881, %v2913
    %v2930 = vmul.f32 %v2882, %v2914
    %v2931 = vmul.f32 %v2883, %v2915
    %v2932 = vmul.f32 %v2884, %v2916
    %v2933 = vmul.f32 %v2885, %v2917
    %v2934 = vmul.f32 %v2886, %v2918
    %v2935 = vmul.f32 %v2887, %v2919
    %v2936 = vmul.f32 %v2888, %v2920
    %v2937 = vmul.f32 %v2889, %v2921
    %v2938 = vmul.f32 %v2890, %v2922
    %v2939 = vmul.f32 %v2891, %v2923
    %v2940 = vmul.f32 %v2892, %v2924
    %v2941 = vmul.f32 %v2893, %v2925
    %v2942 = vmul.f32 %v2894, %v2926
    %v2943 = vmul.f32 %v2816, %v2927
    %v2944 = vmul.f32 %v2818, %v2928
    %v2945 = vmul.f32 %v2820, %v2929
    %v2946 = vmul.f32 %v2822, %v2930
    %v2947 = vmul.f32 %v2824, %v2931
    %v2948 = vmul.f32 %v2826, %v2932
    %v2949 = vmul.f32 %v2828, %v2933
    %v2950 = vmul.f32 %v2830, %v2934
    %v2951 = vmul.f32 %v2832, %v2935
    %v2952 = vmul.f32 %v2834, %v2936
    %v2953 = vmul.f32 %v2836, %v2937
    %v2954 = vmul.f32 %v2838, %v2938
    %v2955 = vmul.f32 %v2840, %v2939
    %v2956 = vmul.f32 %v2842, %v2940
    %v2957 = vmul.f32 %v2844, %v2941
    %v2958 = vmul.f32 %v2846, %v2942
    %v2959 = vpack.c.bf16 %v2944, %v2943
    %v2960 = vpack.c.bf16 %v2946, %v2945
    %v2961 = vpack.c.bf16 %v2948, %v2947
    %v2962 = vpack.c.bf16 %v2950, %v2949
    %v2963 = vpack.c.bf16 %v2952, %v2951
    %v2964 = vpack.c.bf16 %v2954, %v2953
    %v2965 = vpack.c.bf16 %v2956, %v2955
    %v2966 = vpack.c.bf16 %v2958, %v2957
    %v2967 = vunpack.c.l.bf16 %v2959
    %v2968 = vunpack.c.h.bf16 %v2959
    %v2969 = vunpack.c.l.bf16 %v2960
    %v2970 = vunpack.c.h.bf16 %v2960
    %v2971 = vunpack.c.l.bf16 %v2961
    %v2972 = vunpack.c.h.bf16 %v2961
    %v2973 = vunpack.c.l.bf16 %v2962
    %v2974 = vunpack.c.h.bf16 %v2962
    %v2975 = vunpack.c.l.bf16 %v2963
    %v2976 = vunpack.c.h.bf16 %v2963
    %v2977 = vunpack.c.l.bf16 %v2964
    %v2978 = vunpack.c.h.bf16 %v2964
    %v2979 = vunpack.c.l.bf16 %v2965
    %v2980 = vunpack.c.h.bf16 %v2965
    %v2981 = vunpack.c.l.bf16 %v2966
    %v2982 = vunpack.c.h.bf16 %v2966
    %v2983 = vsub.f32 %v2943, %v2967
    %v2984 = vsub.f32 %v2944, %v2968
    %v2985 = vsub.f32 %v2945, %v2969
    %v2986 = vsub.f32 %v2946, %v2970
    %v2987 = vsub.f32 %v2947, %v2971
    %v2988 = vsub.f32 %v2948, %v2972
    %v2989 = vsub.f32 %v2949, %v2973
    %v2990 = vsub.f32 %v2950, %v2974
    %v2991 = vsub.f32 %v2951, %v2975
    %v2992 = vsub.f32 %v2952, %v2976
    %v2993 = vsub.f32 %v2953, %v2977
    %v2994 = vsub.f32 %v2954, %v2978
    %v2995 = vsub.f32 %v2955, %v2979
    %v2996 = vsub.f32 %v2956, %v2980
    %v2997 = vsub.f32 %v2957, %v2981
    %v2998 = vsub.f32 %v2958, %v2982
    %v2999 = vpack.c.bf16 %v2984, %v2983
    %v3000 = vpack.c.bf16 %v2986, %v2985
    %v3001 = vpack.c.bf16 %v2988, %v2987
    %v3002 = vpack.c.bf16 %v2990, %v2989
    %v3003 = vpack.c.bf16 %v2992, %v2991
    %v3004 = vpack.c.bf16 %v2994, %v2993
    %v3005 = vpack.c.bf16 %v2996, %v2995
    %v3006 = vpack.c.bf16 %v2998, %v2997
    %3007 = vst [vmem:[#allocation2 + $0x20] sm:$0xff] %v2959
    %3008 = vst [vmem:[#allocation2 + $0x60] sm:$0xff] %v2960
    %3009 = vst [vmem:[#allocation2 + $0xa0] sm:$0xff] %v2961
    %3010 = vst [vmem:[#allocation2 + $0xe0] sm:$0xff] %v2962
    %3011 = vst [vmem:[#allocation2 + $0x120] sm:$0xff] %v2963
    %3012 = vst [vmem:[#allocation2 + $0x160] sm:$0xff] %v2964
    %3013 = vst [vmem:[#allocation2 + $0x1a0] sm:$0xff] %v2965
    %3014 = vst [vmem:[#allocation2 + $0x1e0] sm:$0xff] %v2966
    %3015 = vst [vmem:[#allocation3 + $0x20] sm:$0xff] %v2999
    %3016 = vst [vmem:[#allocation3 + $0x60] sm:$0xff] %v3000
    %3017 = vst [vmem:[#allocation3 + $0xa0] sm:$0xff] %v3001
    %3018 = vst [vmem:[#allocation3 + $0xe0] sm:$0xff] %v3002
    %3019 = vst [vmem:[#allocation3 + $0x120] sm:$0xff] %v3003
    %3020 = vst [vmem:[#allocation3 + $0x160] sm:$0xff] %v3004
    %3021 = vst [vmem:[#allocation3 + $0x1a0] sm:$0xff] %v3005
    %3022 = vst [vmem:[#allocation3 + $0x1e0] sm:$0xff] %v3006
    %vm3023 = vcmask 326912
    %3024 = vst.msk [vmem:[#allocation4 + $0x100] sm:$0xff] %vm3023, %v486
    %3025 = vst.msk [vmem:[#allocation4 + $0x108] sm:$0xff] %vm3023, %v487
    %3026 = vst.msk [vmem:[#allocation4 + $0x110] sm:$0xff] %vm3023, %v488
    %3027 = vst.msk [vmem:[#allocation4 + $0x118] sm:$0xff] %vm3023, %v489
    %3028 = vst.msk [vmem:[#allocation4 + $0x120] sm:$0xff] %vm3023, %v490
    %3029 = vst.msk [vmem:[#allocation4 + $0x128] sm:$0xff] %vm3023, %v491
    %3030 = vst.msk [vmem:[#allocation4 + $0x130] sm:$0xff] %vm3023, %v492
    %3031 = vst.msk [vmem:[#allocation4 + $0x138] sm:$0xff] %vm3023, %v493
    %3032 = vst.msk [vmem:[#allocation5 + $0x100] sm:$0xff] %vm3023, %v526
    %3033 = vst.msk [vmem:[#allocation5 + $0x108] sm:$0xff] %vm3023, %v527
    %3034 = vst.msk [vmem:[#allocation5 + $0x110] sm:$0xff] %vm3023, %v528
    %3035 = vst.msk [vmem:[#allocation5 + $0x118] sm:$0xff] %vm3023, %v529
    %3036 = vst.msk [vmem:[#allocation5 + $0x120] sm:$0xff] %vm3023, %v530
    %3037 = vst.msk [vmem:[#allocation5 + $0x128] sm:$0xff] %vm3023, %v531
    %3038 = vst.msk [vmem:[#allocation5 + $0x130] sm:$0xff] %vm3023, %v532
    %3039 = vst.msk [vmem:[#allocation5 + $0x138] sm:$0xff] %vm3023, %v533
    %3040 = vset.pattern.permute.xlu0 69
    %3041 = vperm.xlu0 %3040, %v465
    %v3042 = vpop.permute.xlu0 %3041
    %3044 = vset.pattern.permute.xlu0 69
    %3045 = vperm.xlu0 %3044, %v466
    %v3046 = vpop.permute.xlu0 %3045
    %3048 = vset.pattern.permute.xlu0 69
    %3049 = vperm.xlu0 %3048, %v467
    %v3050 = vpop.permute.xlu0 %3049
    %3052 = vset.pattern.permute.xlu0 69
    %3053 = vperm.xlu0 %3052, %v468
    %v3054 = vpop.permute.xlu0 %3053
    %3056 = vset.pattern.permute.xlu0 69
    %3057 = vperm.xlu0 %3056, %v469
    %v3058 = vpop.permute.xlu0 %3057
    %3060 = vset.pattern.permute.xlu0 69
    %3061 = vperm.xlu0 %3060, %v470
    %v3062 = vpop.permute.xlu0 %3061
    %3064 = vset.pattern.permute.xlu0 69
    %3065 = vperm.xlu0 %3064, %v471
    %v3066 = vpop.permute.xlu0 %3065
    %3068 = vset.pattern.permute.xlu0 69
    %3069 = vperm.xlu0 %3068, %v472
    %v3070 = vpop.permute.xlu0 %3069
    %3072 = vset.pattern.permute.xlu0 69
    %3073 = vperm.xlu0 %3072, %v473
    %v3074 = vpop.permute.xlu0 %3073
    %3076 = vset.pattern.permute.xlu0 69
    %3077 = vperm.xlu0 %3076, %v474
    %v3078 = vpop.permute.xlu0 %3077
    %3080 = vset.pattern.permute.xlu0 69
    %3081 = vperm.xlu0 %3080, %v475
    %v3082 = vpop.permute.xlu0 %3081
    %3084 = vset.pattern.permute.xlu0 69
    %3085 = vperm.xlu0 %3084, %v476
    %v3086 = vpop.permute.xlu0 %3085
    %3088 = vset.pattern.permute.xlu0 69
    %3089 = vperm.xlu0 %3088, %v477
    %v3090 = vpop.permute.xlu0 %3089
    %3092 = vset.pattern.permute.xlu0 69
    %3093 = vperm.xlu0 %3092, %v478
    %v3094 = vpop.permute.xlu0 %3093
    %3096 = vset.pattern.permute.xlu0 69
    %3097 = vperm.xlu0 %3096, %v479
    %v3098 = vpop.permute.xlu0 %3097
    %3100 = vset.pattern.permute.xlu0 69
    %3101 = vperm.xlu0 %3100, %v480
    %v3102 = vpop.permute.xlu0 %3101
    %v3104 = vlaneseq
    %v3105 = vshrl.u32 %v3104, 7
    %v3106 = vsub.s32 5, %v3105
    %v3107 = vrot.slane %v709, %v3106
    %v3108 = vadd.f32 %v3042, %v3107
    %v3109 = vadd.f32 %v3046, %v3107
    %v3110 = vadd.f32 %v3050, %v3107
    %v3111 = vadd.f32 %v3054, %v3107
    %v3112 = vadd.f32 %v3058, %v3107
    %v3113 = vadd.f32 %v3062, %v3107
    %v3114 = vadd.f32 %v3066, %v3107
    %v3115 = vadd.f32 %v3070, %v3107
    %v3116 = vadd.f32 %v3074, %v3107
    %v3117 = vadd.f32 %v3078, %v3107
    %v3118 = vadd.f32 %v3082, %v3107
    %v3119 = vadd.f32 %v3086, %v3107
    %v3120 = vadd.f32 %v3090, %v3107
    %v3121 = vadd.f32 %v3094, %v3107
    %v3122 = vadd.f32 %v3098, %v3107
    %v3123 = vadd.f32 %v3102, %v3107
    %vm3124 = vcmp.gt.f32.partialorder %v3108, 0.0
    %vm3125 = vcmp.gt.f32.partialorder %v3109, 0.0
    %vm3126 = vcmp.gt.f32.partialorder %v3110, 0.0
    %vm3127 = vcmp.gt.f32.partialorder %v3111, 0.0
    %vm3128 = vcmp.gt.f32.partialorder %v3112, 0.0
    %vm3129 = vcmp.gt.f32.partialorder %v3113, 0.0
    %vm3130 = vcmp.gt.f32.partialorder %v3114, 0.0
    %vm3131 = vcmp.gt.f32.partialorder %v3115, 0.0
    %vm3132 = vcmp.gt.f32.partialorder %v3116, 0.0
    %vm3133 = vcmp.gt.f32.partialorder %v3117, 0.0
    %vm3134 = vcmp.gt.f32.partialorder %v3118, 0.0
    %vm3135 = vcmp.gt.f32.partialorder %v3119, 0.0
    %vm3136 = vcmp.gt.f32.partialorder %v3120, 0.0
    %vm3137 = vcmp.gt.f32.partialorder %v3121, 0.0
    %vm3138 = vcmp.gt.f32.partialorder %v3122, 0.0
    %vm3139 = vcmp.gt.f32.partialorder %v3123, 0.0
    %v3140 = vmul.f32 %v3108, 0.2
    %v3141 = vmul.f32 %v3109, 0.2
    %v3142 = vmul.f32 %v3110, 0.2
    %v3143 = vmul.f32 %v3111, 0.2
    %v3144 = vmul.f32 %v3112, 0.2
    %v3145 = vmul.f32 %v3113, 0.2
    %v3146 = vmul.f32 %v3114, 0.2
    %v3147 = vmul.f32 %v3115, 0.2
    %v3148 = vmul.f32 %v3116, 0.2
    %v3149 = vmul.f32 %v3117, 0.2
    %v3150 = vmul.f32 %v3118, 0.2
    %v3151 = vmul.f32 %v3119, 0.2
    %v3152 = vmul.f32 %v3120, 0.2
    %v3153 = vmul.f32 %v3121, 0.2
    %v3154 = vmul.f32 %v3122, 0.2
    %v3155 = vmul.f32 %v3123, 0.2
    %v3156 = vsel %vm3124, %v3108, %v3140
    %v3157 = vsel %vm3125, %v3109, %v3141
    %v3158 = vsel %vm3126, %v3110, %v3142
    %v3159 = vsel %vm3127, %v3111, %v3143
    %v3160 = vsel %vm3128, %v3112, %v3144
    %v3161 = vsel %vm3129, %v3113, %v3145
    %v3162 = vsel %vm3130, %v3114, %v3146
    %v3163 = vsel %vm3131, %v3115, %v3147
    %v3164 = vsel %vm3132, %v3116, %v3148
    %v3165 = vsel %vm3133, %v3117, %v3149
    %v3166 = vsel %vm3134, %v3118, %v3150
    %v3167 = vsel %vm3135, %v3119, %v3151
    %v3168 = vsel %vm3136, %v3120, %v3152
    %v3169 = vsel %vm3137, %v3121, %v3153
    %v3170 = vsel %vm3138, %v3122, %v3154
    %v3171 = vsel %vm3139, %v3123, %v3155
    %v3172 = vld [vmem:[%s1] sm:$0xff]
    %v3173 = vld [vmem:[%s1 + $0x8] sm:$0xff]
    %v3174 = vld [vmem:[%s1 + $0x10] sm:$0xff]
    %v3175 = vld [vmem:[%s1 + $0x18] sm:$0xff]
    %v3176 = vld [vmem:[%s1 + $0x20] sm:$0xff]
    %v3177 = vld [vmem:[%s1 + $0x28] sm:$0xff]
    %v3178 = vld [vmem:[%s1 + $0x30] sm:$0xff]
    %v3179 = vld [vmem:[%s1 + $0x38] sm:$0xff]
    %v3180 = vld [vmem:[%s1 + $0x40] sm:$0xff]
    %v3181 = vld [vmem:[%s1 + $0x48] sm:$0xff]
    %v3182 = vld [vmem:[%s1 + $0x50] sm:$0xff]
    %v3183 = vld [vmem:[%s1 + $0x58] sm:$0xff]
    %v3184 = vld [vmem:[%s1 + $0x60] sm:$0xff]
    %v3185 = vld [vmem:[%s1 + $0x68] sm:$0xff]
    %v3186 = vld [vmem:[%s1 + $0x70] sm:$0xff]
    %v3187 = vld [vmem:[%s1 + $0x78] sm:$0xff]
    %v3188 = vadd.f32 %v3156, %v3172
    %v3189 = vadd.f32 %v3157, %v3173
    %v3190 = vadd.f32 %v3158, %v3174
    %v3191 = vadd.f32 %v3159, %v3175
    %v3192 = vadd.f32 %v3160, %v3176
    %v3193 = vadd.f32 %v3161, %v3177
    %v3194 = vadd.f32 %v3162, %v3178
    %v3195 = vadd.f32 %v3163, %v3179
    %v3196 = vadd.f32 %v3164, %v3180
    %v3197 = vadd.f32 %v3165, %v3181
    %v3198 = vadd.f32 %v3166, %v3182
    %v3199 = vadd.f32 %v3167, %v3183
    %v3200 = vadd.f32 %v3168, %v3184
    %v3201 = vadd.f32 %v3169, %v3185
    %v3202 = vadd.f32 %v3170, %v3186
    %v3203 = vadd.f32 %v3171, %v3187
    %3204 = vmax.xlane.f32.xlu0 %v3188
    %v3205 = vpop.xlane.xlu0 %3204
    %3206 = vmax.xlane.f32.xlu0 %v3189
    %v3207 = vpop.xlane.xlu0 %3206
    %3208 = vmax.xlane.f32.xlu0 %v3190
    %v3209 = vpop.xlane.xlu0 %3208
    %3210 = vmax.xlane.f32.xlu0 %v3191
    %v3211 = vpop.xlane.xlu0 %3210
    %3212 = vmax.xlane.f32.xlu0 %v3192
    %v3213 = vpop.xlane.xlu0 %3212
    %3214 = vmax.xlane.f32.xlu0 %v3193
    %v3215 = vpop.xlane.xlu0 %3214
    %3216 = vmax.xlane.f32.xlu0 %v3194
    %v3217 = vpop.xlane.xlu0 %3216
    %3218 = vmax.xlane.f32.xlu0 %v3195
    %v3219 = vpop.xlane.xlu0 %3218
    %3220 = vmax.xlane.f32.xlu0 %v3196
    %v3221 = vpop.xlane.xlu0 %3220
    %3222 = vmax.xlane.f32.xlu0 %v3197
    %v3223 = vpop.xlane.xlu0 %3222
    %3224 = vmax.xlane.f32.xlu0 %v3198
    %v3225 = vpop.xlane.xlu0 %3224
    %3226 = vmax.xlane.f32.xlu0 %v3199
    %v3227 = vpop.xlane.xlu0 %3226
    %3228 = vmax.xlane.f32.xlu0 %v3200
    %v3229 = vpop.xlane.xlu0 %3228
    %3230 = vmax.xlane.f32.xlu0 %v3201
    %v3231 = vpop.xlane.xlu0 %3230
    %3232 = vmax.xlane.f32.xlu0 %v3202
    %v3233 = vpop.xlane.xlu0 %3232
    %3234 = vmax.xlane.f32.xlu0 %v3203
    %v3235 = vpop.xlane.xlu0 %3234
    %v3236 = vsub.f32 %v3188, %v3205
    %v3237 = vsub.f32 %v3189, %v3207
    %v3238 = vsub.f32 %v3190, %v3209
    %v3239 = vsub.f32 %v3191, %v3211
    %v3240 = vsub.f32 %v3192, %v3213
    %v3241 = vsub.f32 %v3193, %v3215
    %v3242 = vsub.f32 %v3194, %v3217
    %v3243 = vsub.f32 %v3195, %v3219
    %v3244 = vsub.f32 %v3196, %v3221
    %v3245 = vsub.f32 %v3197, %v3223
    %v3246 = vsub.f32 %v3198, %v3225
    %v3247 = vsub.f32 %v3199, %v3227
    %v3248 = vsub.f32 %v3200, %v3229
    %v3249 = vsub.f32 %v3201, %v3231
    %v3250 = vsub.f32 %v3202, %v3233
    %v3251 = vsub.f32 %v3203, %v3235
    %v3252 = vmul.f32 %v3236, 1.442695
    %v3253 = vpow.pop %v3252
    %v3254 = vmul.f32 %v3237, 1.442695
    %v3255 = vpow.pop %v3254
    %v3256 = vmul.f32 %v3238, 1.442695
    %v3257 = vpow.pop %v3256
    %v3258 = vmul.f32 %v3239, 1.442695
    %v3259 = vpow.pop %v3258
    %v3260 = vmul.f32 %v3240, 1.442695
    %v3261 = vpow.pop %v3260
    %v3262 = vmul.f32 %v3241, 1.442695
    %v3263 = vpow.pop %v3262
    %v3264 = vmul.f32 %v3242, 1.442695
    %v3265 = vpow.pop %v3264
    %v3266 = vmul.f32 %v3243, 1.442695
    %v3267 = vpow.pop %v3266
    %v3268 = vmul.f32 %v3244, 1.442695
    %v3269 = vpow.pop %v3268
    %v3270 = vmul.f32 %v3245, 1.442695
    %v3271 = vpow.pop %v3270
    %v3272 = vmul.f32 %v3246, 1.442695
    %v3273 = vpow.pop %v3272
    %v3274 = vmul.f32 %v3247, 1.442695
    %v3275 = vpow.pop %v3274
    %v3276 = vmul.f32 %v3248, 1.442695
    %v3277 = vpow.pop %v3276
    %v3278 = vmul.f32 %v3249, 1.442695
    %v3279 = vpow.pop %v3278
    %v3280 = vmul.f32 %v3250, 1.442695
    %v3281 = vpow.pop %v3280
    %v3282 = vmul.f32 %v3251, 1.442695
    %v3283 = vpow.pop %v3282
    %3284 = vadd.xlane.f32.xlu0 %v3253
    %v3285 = vpop.xlane.xlu0 %3284
    %3286 = vadd.xlane.f32.xlu0 %v3255
    %v3287 = vpop.xlane.xlu0 %3286
    %3288 = vadd.xlane.f32.xlu0 %v3257
    %v3289 = vpop.xlane.xlu0 %3288
    %3290 = vadd.xlane.f32.xlu0 %v3259
    %v3291 = vpop.xlane.xlu0 %3290
    %3292 = vadd.xlane.f32.xlu0 %v3261
    %v3293 = vpop.xlane.xlu0 %3292
    %3294 = vadd.xlane.f32.xlu0 %v3263
    %v3295 = vpop.xlane.xlu0 %3294
    %3296 = vadd.xlane.f32.xlu0 %v3265
    %v3297 = vpop.xlane.xlu0 %3296
    %3298 = vadd.xlane.f32.xlu0 %v3267
    %v3299 = vpop.xlane.xlu0 %3298
    %3300 = vadd.xlane.f32.xlu0 %v3269
    %v3301 = vpop.xlane.xlu0 %3300
    %3302 = vadd.xlane.f32.xlu0 %v3271
    %v3303 = vpop.xlane.xlu0 %3302
    %3304 = vadd.xlane.f32.xlu0 %v3273
    %v3305 = vpop.xlane.xlu0 %3304
    %3306 = vadd.xlane.f32.xlu0 %v3275
    %v3307 = vpop.xlane.xlu0 %3306
    %3308 = vadd.xlane.f32.xlu0 %v3277
    %v3309 = vpop.xlane.xlu0 %3308
    %3310 = vadd.xlane.f32.xlu0 %v3279
    %v3311 = vpop.xlane.xlu0 %3310
    %3312 = vadd.xlane.f32.xlu0 %v3281
    %v3313 = vpop.xlane.xlu0 %3312
    %3314 = vadd.xlane.f32.xlu0 %v3283
    %v3315 = vpop.xlane.xlu0 %3314
    %v3316 = vrcp.pop %v3285
    %v3317 = vrcp.pop %v3287
    %v3318 = vrcp.pop %v3289
    %v3319 = vrcp.pop %v3291
    %v3320 = vrcp.pop %v3293
    %v3321 = vrcp.pop %v3295
    %v3322 = vrcp.pop %v3297
    %v3323 = vrcp.pop %v3299
    %v3324 = vrcp.pop %v3301
    %v3325 = vrcp.pop %v3303
    %v3326 = vrcp.pop %v3305
    %v3327 = vrcp.pop %v3307
    %v3328 = vrcp.pop %v3309
    %v3329 = vrcp.pop %v3311
    %v3330 = vrcp.pop %v3313
    %v3331 = vrcp.pop %v3315
    %v3332 = vmul.f32 %v3285, %v3316
    %v3333 = vmul.f32 %v3287, %v3317
    %v3334 = vmul.f32 %v3289, %v3318
    %v3335 = vmul.f32 %v3291, %v3319
    %v3336 = vmul.f32 %v3293, %v3320
    %v3337 = vmul.f32 %v3295, %v3321
    %v3338 = vmul.f32 %v3297, %v3322
    %v3339 = vmul.f32 %v3299, %v3323
    %v3340 = vmul.f32 %v3301, %v3324
    %v3341 = vmul.f32 %v3303, %v3325
    %v3342 = vmul.f32 %v3305, %v3326
    %v3343 = vmul.f32 %v3307, %v3327
    %v3344 = vmul.f32 %v3309, %v3328
    %v3345 = vmul.f32 %v3311, %v3329
    %v3346 = vmul.f32 %v3313, %v3330
    %v3347 = vmul.f32 %v3315, %v3331
    %v3348 = vsub.f32 2.0, %v3332
    %v3349 = vsub.f32 2.0, %v3333
    %v3350 = vsub.f32 2.0, %v3334
    %v3351 = vsub.f32 2.0, %v3335
    %v3352 = vsub.f32 2.0, %v3336
    %v3353 = vsub.f32 2.0, %v3337
    %v3354 = vsub.f32 2.0, %v3338
    %v3355 = vsub.f32 2.0, %v3339
    %v3356 = vsub.f32 2.0, %v3340
    %v3357 = vsub.f32 2.0, %v3341
    %v3358 = vsub.f32 2.0, %v3342
    %v3359 = vsub.f32 2.0, %v3343
    %v3360 = vsub.f32 2.0, %v3344
    %v3361 = vsub.f32 2.0, %v3345
    %v3362 = vsub.f32 2.0, %v3346
    %v3363 = vsub.f32 2.0, %v3347
    %v3364 = vmul.f32 %v3316, %v3348
    %v3365 = vmul.f32 %v3317, %v3349
    %v3366 = vmul.f32 %v3318, %v3350
    %v3367 = vmul.f32 %v3319, %v3351
    %v3368 = vmul.f32 %v3320, %v3352
    %v3369 = vmul.f32 %v3321, %v3353
    %v3370 = vmul.f32 %v3322, %v3354
    %v3371 = vmul.f32 %v3323, %v3355
    %v3372 = vmul.f32 %v3324, %v3356
    %v3373 = vmul.f32 %v3325, %v3357
    %v3374 = vmul.f32 %v3326, %v3358
    %v3375 = vmul.f32 %v3327, %v3359
    %v3376 = vmul.f32 %v3328, %v3360
    %v3377 = vmul.f32 %v3329, %v3361
    %v3378 = vmul.f32 %v3330, %v3362
    %v3379 = vmul.f32 %v3331, %v3363
    %v3380 = vmul.f32 %v3253, %v3364
    %v3381 = vmul.f32 %v3255, %v3365
    %v3382 = vmul.f32 %v3257, %v3366
    %v3383 = vmul.f32 %v3259, %v3367
    %v3384 = vmul.f32 %v3261, %v3368
    %v3385 = vmul.f32 %v3263, %v3369
    %v3386 = vmul.f32 %v3265, %v3370
    %v3387 = vmul.f32 %v3267, %v3371
    %v3388 = vmul.f32 %v3269, %v3372
    %v3389 = vmul.f32 %v3271, %v3373
    %v3390 = vmul.f32 %v3273, %v3374
    %v3391 = vmul.f32 %v3275, %v3375
    %v3392 = vmul.f32 %v3277, %v3376
    %v3393 = vmul.f32 %v3279, %v3377
    %v3394 = vmul.f32 %v3281, %v3378
    %v3395 = vmul.f32 %v3283, %v3379
    %v3396 = vpack.c.bf16 %v3381, %v3380
    %v3397 = vpack.c.bf16 %v3383, %v3382
    %v3398 = vpack.c.bf16 %v3385, %v3384
    %v3399 = vpack.c.bf16 %v3387, %v3386
    %v3400 = vpack.c.bf16 %v3389, %v3388
    %v3401 = vpack.c.bf16 %v3391, %v3390
    %v3402 = vpack.c.bf16 %v3393, %v3392
    %v3403 = vpack.c.bf16 %v3395, %v3394
    %v3404 = vunpack.c.l.bf16 %v3396
    %v3405 = vunpack.c.h.bf16 %v3396
    %v3406 = vunpack.c.l.bf16 %v3397
    %v3407 = vunpack.c.h.bf16 %v3397
    %v3408 = vunpack.c.l.bf16 %v3398
    %v3409 = vunpack.c.h.bf16 %v3398
    %v3410 = vunpack.c.l.bf16 %v3399
    %v3411 = vunpack.c.h.bf16 %v3399
    %v3412 = vunpack.c.l.bf16 %v3400
    %v3413 = vunpack.c.h.bf16 %v3400
    %v3414 = vunpack.c.l.bf16 %v3401
    %v3415 = vunpack.c.h.bf16 %v3401
    %v3416 = vunpack.c.l.bf16 %v3402
    %v3417 = vunpack.c.h.bf16 %v3402
    %v3418 = vunpack.c.l.bf16 %v3403
    %v3419 = vunpack.c.h.bf16 %v3403
    %v3420 = vsub.f32 %v3380, %v3404
    %v3421 = vsub.f32 %v3381, %v3405
    %v3422 = vsub.f32 %v3382, %v3406
    %v3423 = vsub.f32 %v3383, %v3407
    %v3424 = vsub.f32 %v3384, %v3408
    %v3425 = vsub.f32 %v3385, %v3409
    %v3426 = vsub.f32 %v3386, %v3410
    %v3427 = vsub.f32 %v3387, %v3411
    %v3428 = vsub.f32 %v3388, %v3412
    %v3429 = vsub.f32 %v3389, %v3413
    %v3430 = vsub.f32 %v3390, %v3414
    %v3431 = vsub.f32 %v3391, %v3415
    %v3432 = vsub.f32 %v3392, %v3416
    %v3433 = vsub.f32 %v3393, %v3417
    %v3434 = vsub.f32 %v3394, %v3418
    %v3435 = vsub.f32 %v3395, %v3419
    %v3436 = vpack.c.bf16 %v3421, %v3420
    %v3437 = vpack.c.bf16 %v3423, %v3422
    %v3438 = vpack.c.bf16 %v3425, %v3424
    %v3439 = vpack.c.bf16 %v3427, %v3426
    %v3440 = vpack.c.bf16 %v3429, %v3428
    %v3441 = vpack.c.bf16 %v3431, %v3430
    %v3442 = vpack.c.bf16 %v3433, %v3432
    %v3443 = vpack.c.bf16 %v3435, %v3434
    %3444 = vst [vmem:[#allocation2 + $0x28] sm:$0xff] %v3396
    %3445 = vst [vmem:[#allocation2 + $0x68] sm:$0xff] %v3397
    %3446 = vst [vmem:[#allocation2 + $0xa8] sm:$0xff] %v3398
    %3447 = vst [vmem:[#allocation2 + $0xe8] sm:$0xff] %v3399
    %3448 = vst [vmem:[#allocation2 + $0x128] sm:$0xff] %v3400
    %3449 = vst [vmem:[#allocation2 + $0x168] sm:$0xff] %v3401
    %3450 = vst [vmem:[#allocation2 + $0x1a8] sm:$0xff] %v3402
    %3451 = vst [vmem:[#allocation2 + $0x1e8] sm:$0xff] %v3403
    %3452 = vst [vmem:[#allocation3 + $0x28] sm:$0xff] %v3436
    %3453 = vst [vmem:[#allocation3 + $0x68] sm:$0xff] %v3437
    %3454 = vst [vmem:[#allocation3 + $0xa8] sm:$0xff] %v3438
    %3455 = vst [vmem:[#allocation3 + $0xe8] sm:$0xff] %v3439
    %3456 = vst [vmem:[#allocation3 + $0x128] sm:$0xff] %v3440
    %3457 = vst [vmem:[#allocation3 + $0x168] sm:$0xff] %v3441
    %3458 = vst [vmem:[#allocation3 + $0x1a8] sm:$0xff] %v3442
    %3459 = vst [vmem:[#allocation3 + $0x1e8] sm:$0xff] %v3443
    %vm3460 = vcmask 392512
    %3461 = vst.msk [vmem:[#allocation4 + $0x140] sm:$0xff] %vm3460, %v486
    %3462 = vst.msk [vmem:[#allocation4 + $0x148] sm:$0xff] %vm3460, %v487
    %3463 = vst.msk [vmem:[#allocation4 + $0x150] sm:$0xff] %vm3460, %v488
    %3464 = vst.msk [vmem:[#allocation4 + $0x158] sm:$0xff] %vm3460, %v489
    %3465 = vst.msk [vmem:[#allocation4 + $0x160] sm:$0xff] %vm3460, %v490
    %3466 = vst.msk [vmem:[#allocation4 + $0x168] sm:$0xff] %vm3460, %v491
    %3467 = vst.msk [vmem:[#allocation4 + $0x170] sm:$0xff] %vm3460, %v492
    %3468 = vst.msk [vmem:[#allocation4 + $0x178] sm:$0xff] %vm3460, %v493
    %3469 = vst.msk [vmem:[#allocation5 + $0x140] sm:$0xff] %vm3460, %v526
    %3470 = vst.msk [vmem:[#allocation5 + $0x148] sm:$0xff] %vm3460, %v527
    %3471 = vst.msk [vmem:[#allocation5 + $0x150] sm:$0xff] %vm3460, %v528
    %3472 = vst.msk [vmem:[#allocation5 + $0x158] sm:$0xff] %vm3460, %v529
    %3473 = vst.msk [vmem:[#allocation5 + $0x160] sm:$0xff] %vm3460, %v530
    %3474 = vst.msk [vmem:[#allocation5 + $0x168] sm:$0xff] %vm3460, %v531
    %3475 = vst.msk [vmem:[#allocation5 + $0x170] sm:$0xff] %vm3460, %v532
    %3476 = vst.msk [vmem:[#allocation5 + $0x178] sm:$0xff] %vm3460, %v533
    %3477 = vset.pattern.permute.xlu0 70
    %3478 = vperm.xlu0 %3477, %v465
    %v3479 = vpop.permute.xlu0 %3478
    %3481 = vset.pattern.permute.xlu0 70
    %3482 = vperm.xlu0 %3481, %v466
    %v3483 = vpop.permute.xlu0 %3482
    %3485 = vset.pattern.permute.xlu0 70
    %3486 = vperm.xlu0 %3485, %v467
    %v3487 = vpop.permute.xlu0 %3486
    %3489 = vset.pattern.permute.xlu0 70
    %3490 = vperm.xlu0 %3489, %v468
    %v3491 = vpop.permute.xlu0 %3490
    %3493 = vset.pattern.permute.xlu0 70
    %3494 = vperm.xlu0 %3493, %v469
    %v3495 = vpop.permute.xlu0 %3494
    %3497 = vset.pattern.permute.xlu0 70
    %3498 = vperm.xlu0 %3497, %v470
    %v3499 = vpop.permute.xlu0 %3498
    %3501 = vset.pattern.permute.xlu0 70
    %3502 = vperm.xlu0 %3501, %v471
    %v3503 = vpop.permute.xlu0 %3502
    %3505 = vset.pattern.permute.xlu0 70
    %3506 = vperm.xlu0 %3505, %v472
    %v3507 = vpop.permute.xlu0 %3506
    %3509 = vset.pattern.permute.xlu0 70
    %3510 = vperm.xlu0 %3509, %v473
    %v3511 = vpop.permute.xlu0 %3510
    %3513 = vset.pattern.permute.xlu0 70
    %3514 = vperm.xlu0 %3513, %v474
    %v3515 = vpop.permute.xlu0 %3514
    %3517 = vset.pattern.permute.xlu0 70
    %3518 = vperm.xlu0 %3517, %v475
    %v3519 = vpop.permute.xlu0 %3518
    %3521 = vset.pattern.permute.xlu0 70
    %3522 = vperm.xlu0 %3521, %v476
    %v3523 = vpop.permute.xlu0 %3522
    %3525 = vset.pattern.permute.xlu0 70
    %3526 = vperm.xlu0 %3525, %v477
    %v3527 = vpop.permute.xlu0 %3526
    %3529 = vset.pattern.permute.xlu0 70
    %3530 = vperm.xlu0 %3529, %v478
    %v3531 = vpop.permute.xlu0 %3530
    %3533 = vset.pattern.permute.xlu0 70
    %3534 = vperm.xlu0 %3533, %v479
    %v3535 = vpop.permute.xlu0 %3534
    %3537 = vset.pattern.permute.xlu0 70
    %3538 = vperm.xlu0 %3537, %v480
    %v3539 = vpop.permute.xlu0 %3538
    %v3541 = vlaneseq
    %v3542 = vshrl.u32 %v3541, 7
    %v3543 = vsub.s32 6, %v3542
    %v3544 = vrot.slane %v709, %v3543
    %v3545 = vadd.f32 %v3479, %v3544
    %v3546 = vadd.f32 %v3483, %v3544
    %v3547 = vadd.f32 %v3487, %v3544
    %v3548 = vadd.f32 %v3491, %v3544
    %v3549 = vadd.f32 %v3495, %v3544
    %v3550 = vadd.f32 %v3499, %v3544
    %v3551 = vadd.f32 %v3503, %v3544
    %v3552 = vadd.f32 %v3507, %v3544
    %v3553 = vadd.f32 %v3511, %v3544
    %v3554 = vadd.f32 %v3515, %v3544
    %v3555 = vadd.f32 %v3519, %v3544
    %v3556 = vadd.f32 %v3523, %v3544
    %v3557 = vadd.f32 %v3527, %v3544
    %v3558 = vadd.f32 %v3531, %v3544
    %v3559 = vadd.f32 %v3535, %v3544
    %v3560 = vadd.f32 %v3539, %v3544
    %vm3561 = vcmp.gt.f32.partialorder %v3545, 0.0
    %vm3562 = vcmp.gt.f32.partialorder %v3546, 0.0
    %vm3563 = vcmp.gt.f32.partialorder %v3547, 0.0
    %vm3564 = vcmp.gt.f32.partialorder %v3548, 0.0
    %vm3565 = vcmp.gt.f32.partialorder %v3549, 0.0
    %vm3566 = vcmp.gt.f32.partialorder %v3550, 0.0
    %vm3567 = vcmp.gt.f32.partialorder %v3551, 0.0
    %vm3568 = vcmp.gt.f32.partialorder %v3552, 0.0
    %vm3569 = vcmp.gt.f32.partialorder %v3553, 0.0
    %vm3570 = vcmp.gt.f32.partialorder %v3554, 0.0
    %vm3571 = vcmp.gt.f32.partialorder %v3555, 0.0
    %vm3572 = vcmp.gt.f32.partialorder %v3556, 0.0
    %vm3573 = vcmp.gt.f32.partialorder %v3557, 0.0
    %vm3574 = vcmp.gt.f32.partialorder %v3558, 0.0
    %vm3575 = vcmp.gt.f32.partialorder %v3559, 0.0
    %vm3576 = vcmp.gt.f32.partialorder %v3560, 0.0
    %v3577 = vmul.f32 %v3545, 0.2
    %v3578 = vmul.f32 %v3546, 0.2
    %v3579 = vmul.f32 %v3547, 0.2
    %v3580 = vmul.f32 %v3548, 0.2
    %v3581 = vmul.f32 %v3549, 0.2
    %v3582 = vmul.f32 %v3550, 0.2
    %v3583 = vmul.f32 %v3551, 0.2
    %v3584 = vmul.f32 %v3552, 0.2
    %v3585 = vmul.f32 %v3553, 0.2
    %v3586 = vmul.f32 %v3554, 0.2
    %v3587 = vmul.f32 %v3555, 0.2
    %v3588 = vmul.f32 %v3556, 0.2
    %v3589 = vmul.f32 %v3557, 0.2
    %v3590 = vmul.f32 %v3558, 0.2
    %v3591 = vmul.f32 %v3559, 0.2
    %v3592 = vmul.f32 %v3560, 0.2
    %v3593 = vsel %vm3561, %v3545, %v3577
    %v3594 = vsel %vm3562, %v3546, %v3578
    %v3595 = vsel %vm3563, %v3547, %v3579
    %v3596 = vsel %vm3564, %v3548, %v3580
    %v3597 = vsel %vm3565, %v3549, %v3581
    %v3598 = vsel %vm3566, %v3550, %v3582
    %v3599 = vsel %vm3567, %v3551, %v3583
    %v3600 = vsel %vm3568, %v3552, %v3584
    %v3601 = vsel %vm3569, %v3553, %v3585
    %v3602 = vsel %vm3570, %v3554, %v3586
    %v3603 = vsel %vm3571, %v3555, %v3587
    %v3604 = vsel %vm3572, %v3556, %v3588
    %v3605 = vsel %vm3573, %v3557, %v3589
    %v3606 = vsel %vm3574, %v3558, %v3590
    %v3607 = vsel %vm3575, %v3559, %v3591
    %v3608 = vsel %vm3576, %v3560, %v3592
    %v3609 = vld [vmem:[%s1] sm:$0xff]
    %v3610 = vld [vmem:[%s1 + $0x8] sm:$0xff]
    %v3611 = vld [vmem:[%s1 + $0x10] sm:$0xff]
    %v3612 = vld [vmem:[%s1 + $0x18] sm:$0xff]
    %v3613 = vld [vmem:[%s1 + $0x20] sm:$0xff]
    %v3614 = vld [vmem:[%s1 + $0x28] sm:$0xff]
    %v3615 = vld [vmem:[%s1 + $0x30] sm:$0xff]
    %v3616 = vld [vmem:[%s1 + $0x38] sm:$0xff]
    %v3617 = vld [vmem:[%s1 + $0x40] sm:$0xff]
    %v3618 = vld [vmem:[%s1 + $0x48] sm:$0xff]
    %v3619 = vld [vmem:[%s1 + $0x50] sm:$0xff]
    %v3620 = vld [vmem:[%s1 + $0x58] sm:$0xff]
    %v3621 = vld [vmem:[%s1 + $0x60] sm:$0xff]
    %v3622 = vld [vmem:[%s1 + $0x68] sm:$0xff]
    %v3623 = vld [vmem:[%s1 + $0x70] sm:$0xff]
    %v3624 = vld [vmem:[%s1 + $0x78] sm:$0xff]
    %v3625 = vadd.f32 %v3593, %v3609
    %v3626 = vadd.f32 %v3594, %v3610
    %v3627 = vadd.f32 %v3595, %v3611
    %v3628 = vadd.f32 %v3596, %v3612
    %v3629 = vadd.f32 %v3597, %v3613
    %v3630 = vadd.f32 %v3598, %v3614
    %v3631 = vadd.f32 %v3599, %v3615
    %v3632 = vadd.f32 %v3600, %v3616
    %v3633 = vadd.f32 %v3601, %v3617
    %v3634 = vadd.f32 %v3602, %v3618
    %v3635 = vadd.f32 %v3603, %v3619
    %v3636 = vadd.f32 %v3604, %v3620
    %v3637 = vadd.f32 %v3605, %v3621
    %v3638 = vadd.f32 %v3606, %v3622
    %v3639 = vadd.f32 %v3607, %v3623
    %v3640 = vadd.f32 %v3608, %v3624
    %3641 = vmax.xlane.f32.xlu0 %v3625
    %v3642 = vpop.xlane.xlu0 %3641
    %3643 = vmax.xlane.f32.xlu0 %v3626
    %v3644 = vpop.xlane.xlu0 %3643
    %3645 = vmax.xlane.f32.xlu0 %v3627
    %v3646 = vpop.xlane.xlu0 %3645
    %3647 = vmax.xlane.f32.xlu0 %v3628
    %v3648 = vpop.xlane.xlu0 %3647
    %3649 = vmax.xlane.f32.xlu0 %v3629
    %v3650 = vpop.xlane.xlu0 %3649
    %3651 = vmax.xlane.f32.xlu0 %v3630
    %v3652 = vpop.xlane.xlu0 %3651
    %3653 = vmax.xlane.f32.xlu0 %v3631
    %v3654 = vpop.xlane.xlu0 %3653
    %3655 = vmax.xlane.f32.xlu0 %v3632
    %v3656 = vpop.xlane.xlu0 %3655
    %3657 = vmax.xlane.f32.xlu0 %v3633
    %v3658 = vpop.xlane.xlu0 %3657
    %3659 = vmax.xlane.f32.xlu0 %v3634
    %v3660 = vpop.xlane.xlu0 %3659
    %3661 = vmax.xlane.f32.xlu0 %v3635
    %v3662 = vpop.xlane.xlu0 %3661
    %3663 = vmax.xlane.f32.xlu0 %v3636
    %v3664 = vpop.xlane.xlu0 %3663
    %3665 = vmax.xlane.f32.xlu0 %v3637
    %v3666 = vpop.xlane.xlu0 %3665
    %3667 = vmax.xlane.f32.xlu0 %v3638
    %v3668 = vpop.xlane.xlu0 %3667
    %3669 = vmax.xlane.f32.xlu0 %v3639
    %v3670 = vpop.xlane.xlu0 %3669
    %3671 = vmax.xlane.f32.xlu0 %v3640
    %v3672 = vpop.xlane.xlu0 %3671
    %v3673 = vsub.f32 %v3625, %v3642
    %v3674 = vsub.f32 %v3626, %v3644
    %v3675 = vsub.f32 %v3627, %v3646
    %v3676 = vsub.f32 %v3628, %v3648
    %v3677 = vsub.f32 %v3629, %v3650
    %v3678 = vsub.f32 %v3630, %v3652
    %v3679 = vsub.f32 %v3631, %v3654
    %v3680 = vsub.f32 %v3632, %v3656
    %v3681 = vsub.f32 %v3633, %v3658
    %v3682 = vsub.f32 %v3634, %v3660
    %v3683 = vsub.f32 %v3635, %v3662
    %v3684 = vsub.f32 %v3636, %v3664
    %v3685 = vsub.f32 %v3637, %v3666
    %v3686 = vsub.f32 %v3638, %v3668
    %v3687 = vsub.f32 %v3639, %v3670
    %v3688 = vsub.f32 %v3640, %v3672
    %v3689 = vmul.f32 %v3673, 1.442695
    %v3690 = vpow.pop %v3689
    %v3691 = vmul.f32 %v3674, 1.442695
    %v3692 = vpow.pop %v3691
    %v3693 = vmul.f32 %v3675, 1.442695
    %v3694 = vpow.pop %v3693
    %v3695 = vmul.f32 %v3676, 1.442695
    %v3696 = vpow.pop %v3695
    %v3697 = vmul.f32 %v3677, 1.442695
    %v3698 = vpow.pop %v3697
    %v3699 = vmul.f32 %v3678, 1.442695
    %v3700 = vpow.pop %v3699
    %v3701 = vmul.f32 %v3679, 1.442695
    %v3702 = vpow.pop %v3701
    %v3703 = vmul.f32 %v3680, 1.442695
    %v3704 = vpow.pop %v3703
    %v3705 = vmul.f32 %v3681, 1.442695
    %v3706 = vpow.pop %v3705
    %v3707 = vmul.f32 %v3682, 1.442695
    %v3708 = vpow.pop %v3707
    %v3709 = vmul.f32 %v3683, 1.442695
    %v3710 = vpow.pop %v3709
    %v3711 = vmul.f32 %v3684, 1.442695
    %v3712 = vpow.pop %v3711
    %v3713 = vmul.f32 %v3685, 1.442695
    %v3714 = vpow.pop %v3713
    %v3715 = vmul.f32 %v3686, 1.442695
    %v3716 = vpow.pop %v3715
    %v3717 = vmul.f32 %v3687, 1.442695
    %v3718 = vpow.pop %v3717
    %v3719 = vmul.f32 %v3688, 1.442695
    %v3720 = vpow.pop %v3719
    %3721 = vadd.xlane.f32.xlu0 %v3690
    %v3722 = vpop.xlane.xlu0 %3721
    %3723 = vadd.xlane.f32.xlu0 %v3692
    %v3724 = vpop.xlane.xlu0 %3723
    %3725 = vadd.xlane.f32.xlu0 %v3694
    %v3726 = vpop.xlane.xlu0 %3725
    %3727 = vadd.xlane.f32.xlu0 %v3696
    %v3728 = vpop.xlane.xlu0 %3727
    %3729 = vadd.xlane.f32.xlu0 %v3698
    %v3730 = vpop.xlane.xlu0 %3729
    %3731 = vadd.xlane.f32.xlu0 %v3700
    %v3732 = vpop.xlane.xlu0 %3731
    %3733 = vadd.xlane.f32.xlu0 %v3702
    %v3734 = vpop.xlane.xlu0 %3733
    %3735 = vadd.xlane.f32.xlu0 %v3704
    %v3736 = vpop.xlane.xlu0 %3735
    %3737 = vadd.xlane.f32.xlu0 %v3706
    %v3738 = vpop.xlane.xlu0 %3737
    %3739 = vadd.xlane.f32.xlu0 %v3708
    %v3740 = vpop.xlane.xlu0 %3739
    %3741 = vadd.xlane.f32.xlu0 %v3710
    %v3742 = vpop.xlane.xlu0 %3741
    %3743 = vadd.xlane.f32.xlu0 %v3712
    %v3744 = vpop.xlane.xlu0 %3743
    %3745 = vadd.xlane.f32.xlu0 %v3714
    %v3746 = vpop.xlane.xlu0 %3745
    %3747 = vadd.xlane.f32.xlu0 %v3716
    %v3748 = vpop.xlane.xlu0 %3747
    %3749 = vadd.xlane.f32.xlu0 %v3718
    %v3750 = vpop.xlane.xlu0 %3749
    %3751 = vadd.xlane.f32.xlu0 %v3720
    %v3752 = vpop.xlane.xlu0 %3751
    %v3753 = vrcp.pop %v3722
    %v3754 = vrcp.pop %v3724
    %v3755 = vrcp.pop %v3726
    %v3756 = vrcp.pop %v3728
    %v3757 = vrcp.pop %v3730
    %v3758 = vrcp.pop %v3732
    %v3759 = vrcp.pop %v3734
    %v3760 = vrcp.pop %v3736
    %v3761 = vrcp.pop %v3738
    %v3762 = vrcp.pop %v3740
    %v3763 = vrcp.pop %v3742
    %v3764 = vrcp.pop %v3744
    %v3765 = vrcp.pop %v3746
    %v3766 = vrcp.pop %v3748
    %v3767 = vrcp.pop %v3750
    %v3768 = vrcp.pop %v3752
    %v3769 = vmul.f32 %v3722, %v3753
    %v3770 = vmul.f32 %v3724, %v3754
    %v3771 = vmul.f32 %v3726, %v3755
    %v3772 = vmul.f32 %v3728, %v3756
    %v3773 = vmul.f32 %v3730, %v3757
    %v3774 = vmul.f32 %v3732, %v3758
    %v3775 = vmul.f32 %v3734, %v3759
    %v3776 = vmul.f32 %v3736, %v3760
    %v3777 = vmul.f32 %v3738, %v3761
    %v3778 = vmul.f32 %v3740, %v3762
    %v3779 = vmul.f32 %v3742, %v3763
    %v3780 = vmul.f32 %v3744, %v3764
    %v3781 = vmul.f32 %v3746, %v3765
    %v3782 = vmul.f32 %v3748, %v3766
    %v3783 = vmul.f32 %v3750, %v3767
    %v3784 = vmul.f32 %v3752, %v3768
    %v3785 = vsub.f32 2.0, %v3769
    %v3786 = vsub.f32 2.0, %v3770
    %v3787 = vsub.f32 2.0, %v3771
    %v3788 = vsub.f32 2.0, %v3772
    %v3789 = vsub.f32 2.0, %v3773
    %v3790 = vsub.f32 2.0, %v3774
    %v3791 = vsub.f32 2.0, %v3775
    %v3792 = vsub.f32 2.0, %v3776
    %v3793 = vsub.f32 2.0, %v3777
    %v3794 = vsub.f32 2.0, %v3778
    %v3795 = vsub.f32 2.0, %v3779
    %v3796 = vsub.f32 2.0, %v3780
    %v3797 = vsub.f32 2.0, %v3781
    %v3798 = vsub.f32 2.0, %v3782
    %v3799 = vsub.f32 2.0, %v3783
    %v3800 = vsub.f32 2.0, %v3784
    %v3801 = vmul.f32 %v3753, %v3785
    %v3802 = vmul.f32 %v3754, %v3786
    %v3803 = vmul.f32 %v3755, %v3787
    %v3804 = vmul.f32 %v3756, %v3788
    %v3805 = vmul.f32 %v3757, %v3789
    %v3806 = vmul.f32 %v3758, %v3790
    %v3807 = vmul.f32 %v3759, %v3791
    %v3808 = vmul.f32 %v3760, %v3792
    %v3809 = vmul.f32 %v3761, %v3793
    %v3810 = vmul.f32 %v3762, %v3794
    %v3811 = vmul.f32 %v3763, %v3795
    %v3812 = vmul.f32 %v3764, %v3796
    %v3813 = vmul.f32 %v3765, %v3797
    %v3814 = vmul.f32 %v3766, %v3798
    %v3815 = vmul.f32 %v3767, %v3799
    %v3816 = vmul.f32 %v3768, %v3800
    %v3817 = vmul.f32 %v3690, %v3801
    %v3818 = vmul.f32 %v3692, %v3802
    %v3819 = vmul.f32 %v3694, %v3803
    %v3820 = vmul.f32 %v3696, %v3804
    %v3821 = vmul.f32 %v3698, %v3805
    %v3822 = vmul.f32 %v3700, %v3806
    %v3823 = vmul.f32 %v3702, %v3807
    %v3824 = vmul.f32 %v3704, %v3808
    %v3825 = vmul.f32 %v3706, %v3809
    %v3826 = vmul.f32 %v3708, %v3810
    %v3827 = vmul.f32 %v3710, %v3811
    %v3828 = vmul.f32 %v3712, %v3812
    %v3829 = vmul.f32 %v3714, %v3813
    %v3830 = vmul.f32 %v3716, %v3814
    %v3831 = vmul.f32 %v3718, %v3815
    %v3832 = vmul.f32 %v3720, %v3816
    %v3833 = vpack.c.bf16 %v3818, %v3817
    %v3834 = vpack.c.bf16 %v3820, %v3819
    %v3835 = vpack.c.bf16 %v3822, %v3821
    %v3836 = vpack.c.bf16 %v3824, %v3823
    %v3837 = vpack.c.bf16 %v3826, %v3825
    %v3838 = vpack.c.bf16 %v3828, %v3827
    %v3839 = vpack.c.bf16 %v3830, %v3829
    %v3840 = vpack.c.bf16 %v3832, %v3831
    %v3841 = vunpack.c.l.bf16 %v3833
    %v3842 = vunpack.c.h.bf16 %v3833
    %v3843 = vunpack.c.l.bf16 %v3834
    %v3844 = vunpack.c.h.bf16 %v3834
    %v3845 = vunpack.c.l.bf16 %v3835
    %v3846 = vunpack.c.h.bf16 %v3835
    %v3847 = vunpack.c.l.bf16 %v3836
    %v3848 = vunpack.c.h.bf16 %v3836
    %v3849 = vunpack.c.l.bf16 %v3837
    %v3850 = vunpack.c.h.bf16 %v3837
    %v3851 = vunpack.c.l.bf16 %v3838
    %v3852 = vunpack.c.h.bf16 %v3838
    %v3853 = vunpack.c.l.bf16 %v3839
    %v3854 = vunpack.c.h.bf16 %v3839
    %v3855 = vunpack.c.l.bf16 %v3840
    %v3856 = vunpack.c.h.bf16 %v3840
    %v3857 = vsub.f32 %v3817, %v3841
    %v3858 = vsub.f32 %v3818, %v3842
    %v3859 = vsub.f32 %v3819, %v3843
    %v3860 = vsub.f32 %v3820, %v3844
    %v3861 = vsub.f32 %v3821, %v3845
    %v3862 = vsub.f32 %v3822, %v3846
    %v3863 = vsub.f32 %v3823, %v3847
    %v3864 = vsub.f32 %v3824, %v3848
    %v3865 = vsub.f32 %v3825, %v3849
    %v3866 = vsub.f32 %v3826, %v3850
    %v3867 = vsub.f32 %v3827, %v3851
    %v3868 = vsub.f32 %v3828, %v3852
    %v3869 = vsub.f32 %v3829, %v3853
    %v3870 = vsub.f32 %v3830, %v3854
    %v3871 = vsub.f32 %v3831, %v3855
    %v3872 = vsub.f32 %v3832, %v3856
    %v3873 = vpack.c.bf16 %v3858, %v3857
    %v3874 = vpack.c.bf16 %v3860, %v3859
    %v3875 = vpack.c.bf16 %v3862, %v3861
    %v3876 = vpack.c.bf16 %v3864, %v3863
    %v3877 = vpack.c.bf16 %v3866, %v3865
    %v3878 = vpack.c.bf16 %v3868, %v3867
    %v3879 = vpack.c.bf16 %v3870, %v3869
    %v3880 = vpack.c.bf16 %v3872, %v3871
    %3881 = vst [vmem:[#allocation2 + $0x30] sm:$0xff] %v3833
    %3882 = vst [vmem:[#allocation2 + $0x70] sm:$0xff] %v3834
    %3883 = vst [vmem:[#allocation2 + $0xb0] sm:$0xff] %v3835
    %3884 = vst [vmem:[#allocation2 + $0xf0] sm:$0xff] %v3836
    %3885 = vst [vmem:[#allocation2 + $0x130] sm:$0xff] %v3837
    %3886 = vst [vmem:[#allocation2 + $0x170] sm:$0xff] %v3838
    %3887 = vst [vmem:[#allocation2 + $0x1b0] sm:$0xff] %v3839
    %3888 = vst [vmem:[#allocation2 + $0x1f0] sm:$0xff] %v3840
    %3889 = vst [vmem:[#allocation3 + $0x30] sm:$0xff] %v3873
    %3890 = vst [vmem:[#allocation3 + $0x70] sm:$0xff] %v3874
    %3891 = vst [vmem:[#allocation3 + $0xb0] sm:$0xff] %v3875
    %3892 = vst [vmem:[#allocation3 + $0xf0] sm:$0xff] %v3876
    %3893 = vst [vmem:[#allocation3 + $0x130] sm:$0xff] %v3877
    %3894 = vst [vmem:[#allocation3 + $0x170] sm:$0xff] %v3878
    %3895 = vst [vmem:[#allocation3 + $0x1b0] sm:$0xff] %v3879
    %3896 = vst [vmem:[#allocation3 + $0x1f0] sm:$0xff] %v3880
    %vm3897 = vcmask 458112
    %3898 = vst.msk [vmem:[#allocation4 + $0x180] sm:$0xff] %vm3897, %v486
    %3899 = vst.msk [vmem:[#allocation4 + $0x188] sm:$0xff] %vm3897, %v487
    %3900 = vst.msk [vmem:[#allocation4 + $0x190] sm:$0xff] %vm3897, %v488
    %3901 = vst.msk [vmem:[#allocation4 + $0x198] sm:$0xff] %vm3897, %v489
    %3902 = vst.msk [vmem:[#allocation4 + $0x1a0] sm:$0xff] %vm3897, %v490
    %3903 = vst.msk [vmem:[#allocation4 + $0x1a8] sm:$0xff] %vm3897, %v491
    %3904 = vst.msk [vmem:[#allocation4 + $0x1b0] sm:$0xff] %vm3897, %v492
    %3905 = vst.msk [vmem:[#allocation4 + $0x1b8] sm:$0xff] %vm3897, %v493
    %3906 = vst.msk [vmem:[#allocation5 + $0x180] sm:$0xff] %vm3897, %v526
    %3907 = vst.msk [vmem:[#allocation5 + $0x188] sm:$0xff] %vm3897, %v527
    %3908 = vst.msk [vmem:[#allocation5 + $0x190] sm:$0xff] %vm3897, %v528
    %3909 = vst.msk [vmem:[#allocation5 + $0x198] sm:$0xff] %vm3897, %v529
    %3910 = vst.msk [vmem:[#allocation5 + $0x1a0] sm:$0xff] %vm3897, %v530
    %3911 = vst.msk [vmem:[#allocation5 + $0x1a8] sm:$0xff] %vm3897, %v531
    %3912 = vst.msk [vmem:[#allocation5 + $0x1b0] sm:$0xff] %vm3897, %v532
    %3913 = vst.msk [vmem:[#allocation5 + $0x1b8] sm:$0xff] %vm3897, %v533
    %3914 = vset.pattern.permute.xlu0 71
    %3915 = vperm.xlu0 %3914, %v465
    %v3916 = vpop.permute.xlu0 %3915
    %3918 = vset.pattern.permute.xlu0 71
    %3919 = vperm.xlu0 %3918, %v466
    %v3920 = vpop.permute.xlu0 %3919
    %3922 = vset.pattern.permute.xlu0 71
    %3923 = vperm.xlu0 %3922, %v467
    %v3924 = vpop.permute.xlu0 %3923
    %3926 = vset.pattern.permute.xlu0 71
    %3927 = vperm.xlu0 %3926, %v468
    %v3928 = vpop.permute.xlu0 %3927
    %3930 = vset.pattern.permute.xlu0 71
    %3931 = vperm.xlu0 %3930, %v469
    %v3932 = vpop.permute.xlu0 %3931
    %3934 = vset.pattern.permute.xlu0 71
    %3935 = vperm.xlu0 %3934, %v470
    %v3936 = vpop.permute.xlu0 %3935
    %3938 = vset.pattern.permute.xlu0 71
    %3939 = vperm.xlu0 %3938, %v471
    %v3940 = vpop.permute.xlu0 %3939
    %3942 = vset.pattern.permute.xlu0 71
    %3943 = vperm.xlu0 %3942, %v472
    %v3944 = vpop.permute.xlu0 %3943
    %3946 = vset.pattern.permute.xlu0 71
    %3947 = vperm.xlu0 %3946, %v473
    %v3948 = vpop.permute.xlu0 %3947
    %3950 = vset.pattern.permute.xlu0 71
    %3951 = vperm.xlu0 %3950, %v474
    %v3952 = vpop.permute.xlu0 %3951
    %3954 = vset.pattern.permute.xlu0 71
    %3955 = vperm.xlu0 %3954, %v475
    %v3956 = vpop.permute.xlu0 %3955
    %3958 = vset.pattern.permute.xlu0 71
    %3959 = vperm.xlu0 %3958, %v476
    %v3960 = vpop.permute.xlu0 %3959
    %3962 = vset.pattern.permute.xlu0 71
    %3963 = vperm.xlu0 %3962, %v477
    %v3964 = vpop.permute.xlu0 %3963
    %3966 = vset.pattern.permute.xlu0 71
    %3967 = vperm.xlu0 %3966, %v478
    %v3968 = vpop.permute.xlu0 %3967
    %3970 = vset.pattern.permute.xlu0 71
    %3971 = vperm.xlu0 %3970, %v479
    %v3972 = vpop.permute.xlu0 %3971
    %3974 = vset.pattern.permute.xlu0 71
    %3975 = vperm.xlu0 %3974, %v480
    %v3976 = vpop.permute.xlu0 %3975
    %v3978 = vlaneseq
    %v3979 = vshrl.u32 %v3978, 7
    %v3980 = vsub.s32 7, %v3979
    %v3981 = vrot.slane %v709, %v3980
    %v3982 = vadd.f32 %v3916, %v3981
    %v3983 = vadd.f32 %v3920, %v3981
    %v3984 = vadd.f32 %v3924, %v3981
    %v3985 = vadd.f32 %v3928, %v3981
    %v3986 = vadd.f32 %v3932, %v3981
    %v3987 = vadd.f32 %v3936, %v3981
    %v3988 = vadd.f32 %v3940, %v3981
    %v3989 = vadd.f32 %v3944, %v3981
    %v3990 = vadd.f32 %v3948, %v3981
    %v3991 = vadd.f32 %v3952, %v3981
    %v3992 = vadd.f32 %v3956, %v3981
    %v3993 = vadd.f32 %v3960, %v3981
    %v3994 = vadd.f32 %v3964, %v3981
    %v3995 = vadd.f32 %v3968, %v3981
    %v3996 = vadd.f32 %v3972, %v3981
    %v3997 = vadd.f32 %v3976, %v3981
    %vm3998 = vcmp.gt.f32.partialorder %v3982, 0.0
    %vm3999 = vcmp.gt.f32.partialorder %v3983, 0.0
    %vm4000 = vcmp.gt.f32.partialorder %v3984, 0.0
    %vm4001 = vcmp.gt.f32.partialorder %v3985, 0.0
    %vm4002 = vcmp.gt.f32.partialorder %v3986, 0.0
    %vm4003 = vcmp.gt.f32.partialorder %v3987, 0.0
    %vm4004 = vcmp.gt.f32.partialorder %v3988, 0.0
    %vm4005 = vcmp.gt.f32.partialorder %v3989, 0.0
    %vm4006 = vcmp.gt.f32.partialorder %v3990, 0.0
    %vm4007 = vcmp.gt.f32.partialorder %v3991, 0.0
    %vm4008 = vcmp.gt.f32.partialorder %v3992, 0.0
    %vm4009 = vcmp.gt.f32.partialorder %v3993, 0.0
    %vm4010 = vcmp.gt.f32.partialorder %v3994, 0.0
    %vm4011 = vcmp.gt.f32.partialorder %v3995, 0.0
    %vm4012 = vcmp.gt.f32.partialorder %v3996, 0.0
    %vm4013 = vcmp.gt.f32.partialorder %v3997, 0.0
    %v4014 = vmul.f32 %v3982, 0.2
    %v4015 = vmul.f32 %v3983, 0.2
    %v4016 = vmul.f32 %v3984, 0.2
    %v4017 = vmul.f32 %v3985, 0.2
    %v4018 = vmul.f32 %v3986, 0.2
    %v4019 = vmul.f32 %v3987, 0.2
    %v4020 = vmul.f32 %v3988, 0.2
    %v4021 = vmul.f32 %v3989, 0.2
    %v4022 = vmul.f32 %v3990, 0.2
    %v4023 = vmul.f32 %v3991, 0.2
    %v4024 = vmul.f32 %v3992, 0.2
    %v4025 = vmul.f32 %v3993, 0.2
    %v4026 = vmul.f32 %v3994, 0.2
    %v4027 = vmul.f32 %v3995, 0.2
    %v4028 = vmul.f32 %v3996, 0.2
    %v4029 = vmul.f32 %v3997, 0.2
    %v4030 = vsel %vm3998, %v3982, %v4014
    %v4031 = vsel %vm3999, %v3983, %v4015
    %v4032 = vsel %vm4000, %v3984, %v4016
    %v4033 = vsel %vm4001, %v3985, %v4017
    %v4034 = vsel %vm4002, %v3986, %v4018
    %v4035 = vsel %vm4003, %v3987, %v4019
    %v4036 = vsel %vm4004, %v3988, %v4020
    %v4037 = vsel %vm4005, %v3989, %v4021
    %v4038 = vsel %vm4006, %v3990, %v4022
    %v4039 = vsel %vm4007, %v3991, %v4023
    %v4040 = vsel %vm4008, %v3992, %v4024
    %v4041 = vsel %vm4009, %v3993, %v4025
    %v4042 = vsel %vm4010, %v3994, %v4026
    %v4043 = vsel %vm4011, %v3995, %v4027
    %v4044 = vsel %vm4012, %v3996, %v4028
    %v4045 = vsel %vm4013, %v3997, %v4029
    %v4046 = vld [vmem:[%s1] sm:$0xff]
    %v4047 = vld [vmem:[%s1 + $0x8] sm:$0xff]
    %v4048 = vld [vmem:[%s1 + $0x10] sm:$0xff]
    %v4049 = vld [vmem:[%s1 + $0x18] sm:$0xff]
    %v4050 = vld [vmem:[%s1 + $0x20] sm:$0xff]
    %v4051 = vld [vmem:[%s1 + $0x28] sm:$0xff]
    %v4052 = vld [vmem:[%s1 + $0x30] sm:$0xff]
    %v4053 = vld [vmem:[%s1 + $0x38] sm:$0xff]
    %v4054 = vld [vmem:[%s1 + $0x40] sm:$0xff]
    %v4055 = vld [vmem:[%s1 + $0x48] sm:$0xff]
    %v4056 = vld [vmem:[%s1 + $0x50] sm:$0xff]
    %v4057 = vld [vmem:[%s1 + $0x58] sm:$0xff]
    %v4058 = vld [vmem:[%s1 + $0x60] sm:$0xff]
    %v4059 = vld [vmem:[%s1 + $0x68] sm:$0xff]
    %v4060 = vld [vmem:[%s1 + $0x70] sm:$0xff]
    %v4061 = vld [vmem:[%s1 + $0x78] sm:$0xff]
    %v4062 = vadd.f32 %v4030, %v4046
    %v4063 = vadd.f32 %v4031, %v4047
    %v4064 = vadd.f32 %v4032, %v4048
    %v4065 = vadd.f32 %v4033, %v4049
    %v4066 = vadd.f32 %v4034, %v4050
    %v4067 = vadd.f32 %v4035, %v4051
    %v4068 = vadd.f32 %v4036, %v4052
    %v4069 = vadd.f32 %v4037, %v4053
    %v4070 = vadd.f32 %v4038, %v4054
    %v4071 = vadd.f32 %v4039, %v4055
    %v4072 = vadd.f32 %v4040, %v4056
    %v4073 = vadd.f32 %v4041, %v4057
    %v4074 = vadd.f32 %v4042, %v4058
    %v4075 = vadd.f32 %v4043, %v4059
    %v4076 = vadd.f32 %v4044, %v4060
    %v4077 = vadd.f32 %v4045, %v4061
    %4078 = vmax.xlane.f32.xlu0 %v4062
    %v4079 = vpop.xlane.xlu0 %4078
    %4080 = vmax.xlane.f32.xlu0 %v4063
    %v4081 = vpop.xlane.xlu0 %4080
    %4082 = vmax.xlane.f32.xlu0 %v4064
    %v4083 = vpop.xlane.xlu0 %4082
    %4084 = vmax.xlane.f32.xlu0 %v4065
    %v4085 = vpop.xlane.xlu0 %4084
    %4086 = vmax.xlane.f32.xlu0 %v4066
    %v4087 = vpop.xlane.xlu0 %4086
    %4088 = vmax.xlane.f32.xlu0 %v4067
    %v4089 = vpop.xlane.xlu0 %4088
    %4090 = vmax.xlane.f32.xlu0 %v4068
    %v4091 = vpop.xlane.xlu0 %4090
    %4092 = vmax.xlane.f32.xlu0 %v4069
    %v4093 = vpop.xlane.xlu0 %4092
    %4094 = vmax.xlane.f32.xlu0 %v4070
    %v4095 = vpop.xlane.xlu0 %4094
    %4096 = vmax.xlane.f32.xlu0 %v4071
    %v4097 = vpop.xlane.xlu0 %4096
    %4098 = vmax.xlane.f32.xlu0 %v4072
    %v4099 = vpop.xlane.xlu0 %4098
    %4100 = vmax.xlane.f32.xlu0 %v4073
    %v4101 = vpop.xlane.xlu0 %4100
    %4102 = vmax.xlane.f32.xlu0 %v4074
    %v4103 = vpop.xlane.xlu0 %4102
    %4104 = vmax.xlane.f32.xlu0 %v4075
    %v4105 = vpop.xlane.xlu0 %4104
    %4106 = vmax.xlane.f32.xlu0 %v4076
    %v4107 = vpop.xlane.xlu0 %4106
    %4108 = vmax.xlane.f32.xlu0 %v4077
    %v4109 = vpop.xlane.xlu0 %4108
    %v4110 = vsub.f32 %v4062, %v4079
    %v4111 = vsub.f32 %v4063, %v4081
    %v4112 = vsub.f32 %v4064, %v4083
    %v4113 = vsub.f32 %v4065, %v4085
    %v4114 = vsub.f32 %v4066, %v4087
    %v4115 = vsub.f32 %v4067, %v4089
    %v4116 = vsub.f32 %v4068, %v4091
    %v4117 = vsub.f32 %v4069, %v4093
    %v4118 = vsub.f32 %v4070, %v4095
    %v4119 = vsub.f32 %v4071, %v4097
    %v4120 = vsub.f32 %v4072, %v4099
    %v4121 = vsub.f32 %v4073, %v4101
    %v4122 = vsub.f32 %v4074, %v4103
    %v4123 = vsub.f32 %v4075, %v4105
    %v4124 = vsub.f32 %v4076, %v4107
    %v4125 = vsub.f32 %v4077, %v4109
    %v4126 = vmul.f32 %v4110, 1.442695
    %v4127 = vpow.pop %v4126
    %v4128 = vmul.f32 %v4111, 1.442695
    %v4129 = vpow.pop %v4128
    %v4130 = vmul.f32 %v4112, 1.442695
    %v4131 = vpow.pop %v4130
    %v4132 = vmul.f32 %v4113, 1.442695
    %v4133 = vpow.pop %v4132
    %v4134 = vmul.f32 %v4114, 1.442695
    %v4135 = vpow.pop %v4134
    %v4136 = vmul.f32 %v4115, 1.442695
    %v4137 = vpow.pop %v4136
    %v4138 = vmul.f32 %v4116, 1.442695
    %v4139 = vpow.pop %v4138
    %v4140 = vmul.f32 %v4117, 1.442695
    %v4141 = vpow.pop %v4140
    %v4142 = vmul.f32 %v4118, 1.442695
    %v4143 = vpow.pop %v4142
    %v4144 = vmul.f32 %v4119, 1.442695
    %v4145 = vpow.pop %v4144
    %v4146 = vmul.f32 %v4120, 1.442695
    %v4147 = vpow.pop %v4146
    %v4148 = vmul.f32 %v4121, 1.442695
    %v4149 = vpow.pop %v4148
    %v4150 = vmul.f32 %v4122, 1.442695
    %v4151 = vpow.pop %v4150
    %v4152 = vmul.f32 %v4123, 1.442695
    %v4153 = vpow.pop %v4152
    %v4154 = vmul.f32 %v4124, 1.442695
    %v4155 = vpow.pop %v4154
    %v4156 = vmul.f32 %v4125, 1.442695
    %v4157 = vpow.pop %v4156
    %4158 = vadd.xlane.f32.xlu0 %v4127
    %v4159 = vpop.xlane.xlu0 %4158
    %4160 = vadd.xlane.f32.xlu0 %v4129
    %v4161 = vpop.xlane.xlu0 %4160
    %4162 = vadd.xlane.f32.xlu0 %v4131
    %v4163 = vpop.xlane.xlu0 %4162
    %4164 = vadd.xlane.f32.xlu0 %v4133
    %v4165 = vpop.xlane.xlu0 %4164
    %4166 = vadd.xlane.f32.xlu0 %v4135
    %v4167 = vpop.xlane.xlu0 %4166
    %4168 = vadd.xlane.f32.xlu0 %v4137
    %v4169 = vpop.xlane.xlu0 %4168
    %4170 = vadd.xlane.f32.xlu0 %v4139
    %v4171 = vpop.xlane.xlu0 %4170
    %4172 = vadd.xlane.f32.xlu0 %v4141
    %v4173 = vpop.xlane.xlu0 %4172
    %4174 = vadd.xlane.f32.xlu0 %v4143
    %v4175 = vpop.xlane.xlu0 %4174
    %4176 = vadd.xlane.f32.xlu0 %v4145
    %v4177 = vpop.xlane.xlu0 %4176
    %4178 = vadd.xlane.f32.xlu0 %v4147
    %v4179 = vpop.xlane.xlu0 %4178
    %4180 = vadd.xlane.f32.xlu0 %v4149
    %v4181 = vpop.xlane.xlu0 %4180
    %4182 = vadd.xlane.f32.xlu0 %v4151
    %v4183 = vpop.xlane.xlu0 %4182
    %4184 = vadd.xlane.f32.xlu0 %v4153
    %v4185 = vpop.xlane.xlu0 %4184
    %4186 = vadd.xlane.f32.xlu0 %v4155
    %v4187 = vpop.xlane.xlu0 %4186
    %4188 = vadd.xlane.f32.xlu0 %v4157
    %v4189 = vpop.xlane.xlu0 %4188
    %v4190 = vrcp.pop %v4159
    %v4191 = vrcp.pop %v4161
    %v4192 = vrcp.pop %v4163
    %v4193 = vrcp.pop %v4165
    %v4194 = vrcp.pop %v4167
    %v4195 = vrcp.pop %v4169
    %v4196 = vrcp.pop %v4171
    %v4197 = vrcp.pop %v4173
    %v4198 = vrcp.pop %v4175
    %v4199 = vrcp.pop %v4177
    %v4200 = vrcp.pop %v4179
    %v4201 = vrcp.pop %v4181
    %v4202 = vrcp.pop %v4183
    %v4203 = vrcp.pop %v4185
    %v4204 = vrcp.pop %v4187
    %v4205 = vrcp.pop %v4189
    %v4206 = vmul.f32 %v4159, %v4190
    %v4207 = vmul.f32 %v4161, %v4191
    %v4208 = vmul.f32 %v4163, %v4192
    %v4209 = vmul.f32 %v4165, %v4193
    %v4210 = vmul.f32 %v4167, %v4194
    %v4211 = vmul.f32 %v4169, %v4195
    %v4212 = vmul.f32 %v4171, %v4196
    %v4213 = vmul.f32 %v4173, %v4197
    %v4214 = vmul.f32 %v4175, %v4198
    %v4215 = vmul.f32 %v4177, %v4199
    %v4216 = vmul.f32 %v4179, %v4200
    %v4217 = vmul.f32 %v4181, %v4201
    %v4218 = vmul.f32 %v4183, %v4202
    %v4219 = vmul.f32 %v4185, %v4203
    %v4220 = vmul.f32 %v4187, %v4204
    %v4221 = vmul.f32 %v4189, %v4205
    %v4222 = vsub.f32 2.0, %v4206
    %v4223 = vsub.f32 2.0, %v4207
    %v4224 = vsub.f32 2.0, %v4208
    %v4225 = vsub.f32 2.0, %v4209
    %v4226 = vsub.f32 2.0, %v4210
    %v4227 = vsub.f32 2.0, %v4211
    %v4228 = vsub.f32 2.0, %v4212
    %v4229 = vsub.f32 2.0, %v4213
    %v4230 = vsub.f32 2.0, %v4214
    %v4231 = vsub.f32 2.0, %v4215
    %v4232 = vsub.f32 2.0, %v4216
    %v4233 = vsub.f32 2.0, %v4217
    %v4234 = vsub.f32 2.0, %v4218
    %v4235 = vsub.f32 2.0, %v4219
    %v4236 = vsub.f32 2.0, %v4220
    %v4237 = vsub.f32 2.0, %v4221
    %v4238 = vmul.f32 %v4190, %v4222
    %v4239 = vmul.f32 %v4191, %v4223
    %v4240 = vmul.f32 %v4192, %v4224
    %v4241 = vmul.f32 %v4193, %v4225
    %v4242 = vmul.f32 %v4194, %v4226
    %v4243 = vmul.f32 %v4195, %v4227
    %v4244 = vmul.f32 %v4196, %v4228
    %v4245 = vmul.f32 %v4197, %v4229
    %v4246 = vmul.f32 %v4198, %v4230
    %v4247 = vmul.f32 %v4199, %v4231
    %v4248 = vmul.f32 %v4200, %v4232
    %v4249 = vmul.f32 %v4201, %v4233
    %v4250 = vmul.f32 %v4202, %v4234
    %v4251 = vmul.f32 %v4203, %v4235
    %v4252 = vmul.f32 %v4204, %v4236
    %v4253 = vmul.f32 %v4205, %v4237
    %v4254 = vmul.f32 %v4127, %v4238
    %v4255 = vmul.f32 %v4129, %v4239
    %v4256 = vmul.f32 %v4131, %v4240
    %v4257 = vmul.f32 %v4133, %v4241
    %v4258 = vmul.f32 %v4135, %v4242
    %v4259 = vmul.f32 %v4137, %v4243
    %v4260 = vmul.f32 %v4139, %v4244
    %v4261 = vmul.f32 %v4141, %v4245
    %v4262 = vmul.f32 %v4143, %v4246
    %v4263 = vmul.f32 %v4145, %v4247
    %v4264 = vmul.f32 %v4147, %v4248
    %v4265 = vmul.f32 %v4149, %v4249
    %v4266 = vmul.f32 %v4151, %v4250
    %v4267 = vmul.f32 %v4153, %v4251
    %v4268 = vmul.f32 %v4155, %v4252
    %v4269 = vmul.f32 %v4157, %v4253
    %v4270 = vpack.c.bf16 %v4255, %v4254
    %v4271 = vpack.c.bf16 %v4257, %v4256
    %v4272 = vpack.c.bf16 %v4259, %v4258
    %v4273 = vpack.c.bf16 %v4261, %v4260
    %v4274 = vpack.c.bf16 %v4263, %v4262
    %v4275 = vpack.c.bf16 %v4265, %v4264
    %v4276 = vpack.c.bf16 %v4267, %v4266
    %v4277 = vpack.c.bf16 %v4269, %v4268
    %v4278 = vunpack.c.l.bf16 %v4270
    %v4279 = vunpack.c.h.bf16 %v4270
    %v4280 = vunpack.c.l.bf16 %v4271
    %v4281 = vunpack.c.h.bf16 %v4271
    %v4282 = vunpack.c.l.bf16 %v4272
    %v4283 = vunpack.c.h.bf16 %v4272
    %v4284 = vunpack.c.l.bf16 %v4273
    %v4285 = vunpack.c.h.bf16 %v4273
    %v4286 = vunpack.c.l.bf16 %v4274
    %v4287 = vunpack.c.h.bf16 %v4274
    %v4288 = vunpack.c.l.bf16 %v4275
    %v4289 = vunpack.c.h.bf16 %v4275
    %v4290 = vunpack.c.l.bf16 %v4276
    %v4291 = vunpack.c.h.bf16 %v4276
    %v4292 = vunpack.c.l.bf16 %v4277
    %v4293 = vunpack.c.h.bf16 %v4277
    %v4294 = vsub.f32 %v4254, %v4278
    %v4295 = vsub.f32 %v4255, %v4279
    %v4296 = vsub.f32 %v4256, %v4280
    %v4297 = vsub.f32 %v4257, %v4281
    %v4298 = vsub.f32 %v4258, %v4282
    %v4299 = vsub.f32 %v4259, %v4283
    %v4300 = vsub.f32 %v4260, %v4284
    %v4301 = vsub.f32 %v4261, %v4285
    %v4302 = vsub.f32 %v4262, %v4286
    %v4303 = vsub.f32 %v4263, %v4287
    %v4304 = vsub.f32 %v4264, %v4288
    %v4305 = vsub.f32 %v4265, %v4289
    %v4306 = vsub.f32 %v4266, %v4290
    %v4307 = vsub.f32 %v4267, %v4291
    %v4308 = vsub.f32 %v4268, %v4292
    %v4309 = vsub.f32 %v4269, %v4293
    %v4310 = vpack.c.bf16 %v4295, %v4294
    %v4311 = vpack.c.bf16 %v4297, %v4296
    %v4312 = vpack.c.bf16 %v4299, %v4298
    %v4313 = vpack.c.bf16 %v4301, %v4300
    %v4314 = vpack.c.bf16 %v4303, %v4302
    %v4315 = vpack.c.bf16 %v4305, %v4304
    %v4316 = vpack.c.bf16 %v4307, %v4306
    %v4317 = vpack.c.bf16 %v4309, %v4308
    %4318 = vst [vmem:[#allocation2 + $0x38] sm:$0xff] %v4270
    %4319 = vst [vmem:[#allocation2 + $0x78] sm:$0xff] %v4271
    %4320 = vst [vmem:[#allocation2 + $0xb8] sm:$0xff] %v4272
    %4321 = vst [vmem:[#allocation2 + $0xf8] sm:$0xff] %v4273
    %4322 = vst [vmem:[#allocation2 + $0x138] sm:$0xff] %v4274
    %4323 = vst [vmem:[#allocation2 + $0x178] sm:$0xff] %v4275
    %4324 = vst [vmem:[#allocation2 + $0x1b8] sm:$0xff] %v4276
    %4325 = vst [vmem:[#allocation2 + $0x1f8] sm:$0xff] %v4277
    %4326 = vst [vmem:[#allocation3 + $0x38] sm:$0xff] %v4310
    %4327 = vst [vmem:[#allocation3 + $0x78] sm:$0xff] %v4311
    %4328 = vst [vmem:[#allocation3 + $0xb8] sm:$0xff] %v4312
    %4329 = vst [vmem:[#allocation3 + $0xf8] sm:$0xff] %v4313
    %4330 = vst [vmem:[#allocation3 + $0x138] sm:$0xff] %v4314
    %4331 = vst [vmem:[#allocation3 + $0x178] sm:$0xff] %v4315
    %4332 = vst [vmem:[#allocation3 + $0x1b8] sm:$0xff] %v4316
    %4333 = vst [vmem:[#allocation3 + $0x1f8] sm:$0xff] %v4317
    %vm4334 = vcmask 523712
    %4335 = vst.msk [vmem:[#allocation4 + $0x1c0] sm:$0xff] %vm4334, %v486
    %4336 = vst.msk [vmem:[#allocation4 + $0x1c8] sm:$0xff] %vm4334, %v487
    %4337 = vst.msk [vmem:[#allocation4 + $0x1d0] sm:$0xff] %vm4334, %v488
    %4338 = vst.msk [vmem:[#allocation4 + $0x1d8] sm:$0xff] %vm4334, %v489
    %4339 = vst.msk [vmem:[#allocation4 + $0x1e0] sm:$0xff] %vm4334, %v490
    %4340 = vst.msk [vmem:[#allocation4 + $0x1e8] sm:$0xff] %vm4334, %v491
    %4341 = vst.msk [vmem:[#allocation4 + $0x1f0] sm:$0xff] %vm4334, %v492
    %4342 = vst.msk [vmem:[#allocation4 + $0x1f8] sm:$0xff] %vm4334, %v493
    %4343 = vst.msk [vmem:[#allocation5 + $0x1c0] sm:$0xff] %vm4334, %v526
    %4344 = vst.msk [vmem:[#allocation5 + $0x1c8] sm:$0xff] %vm4334, %v527
    %4345 = vst.msk [vmem:[#allocation5 + $0x1d0] sm:$0xff] %vm4334, %v528
    %4346 = vst.msk [vmem:[#allocation5 + $0x1d8] sm:$0xff] %vm4334, %v529
    %4347 = vst.msk [vmem:[#allocation5 + $0x1e0] sm:$0xff] %vm4334, %v530
    %4348 = vst.msk [vmem:[#allocation5 + $0x1e8] sm:$0xff] %vm4334, %v531
    %4349 = vst.msk [vmem:[#allocation5 + $0x1f0] sm:$0xff] %vm4334, %v532
    %4350 = vst.msk [vmem:[#allocation5 + $0x1f8] sm:$0xff] %vm4334, %v533
    %v4351 = vld [vmem:[#allocation2] sm:$0xff]
    %v4352 = vld [vmem:[#allocation2 + $0x8] sm:$0xff]
    %v4353 = vld [vmem:[#allocation2 + $0x40] sm:$0xff]
    %v4354 = vld [vmem:[#allocation2 + $0x48] sm:$0xff]
    %v4355 = vld [vmem:[#allocation2 + $0x80] sm:$0xff]
    %v4356 = vld [vmem:[#allocation2 + $0x88] sm:$0xff]
    %v4357 = vld [vmem:[#allocation2 + $0xc0] sm:$0xff]
    %v4358 = vld [vmem:[#allocation2 + $0xc8] sm:$0xff]
    %v4359 = vld [vmem:[#allocation2 + $0x100] sm:$0xff]
    %v4360 = vld [vmem:[#allocation2 + $0x108] sm:$0xff]
    %v4361 = vld [vmem:[#allocation2 + $0x140] sm:$0xff]
    %v4362 = vld [vmem:[#allocation2 + $0x148] sm:$0xff]
    %v4363 = vld [vmem:[#allocation2 + $0x180] sm:$0xff]
    %v4364 = vld [vmem:[#allocation2 + $0x188] sm:$0xff]
    %v4365 = vld [vmem:[#allocation2 + $0x1c0] sm:$0xff]
    %v4366 = vld [vmem:[#allocation2 + $0x1c8] sm:$0xff]
    %v4367 = vld [vmem:[#allocation4] sm:$0xff]
    %v4368 = vld [vmem:[#allocation4 + $0x8] sm:$0xff]
    %v4369 = vld [vmem:[#allocation4 + $0x10] sm:$0xff]
    %v4370 = vld [vmem:[#allocation4 + $0x18] sm:$0xff]
    %v4371 = vld [vmem:[#allocation4 + $0x20] sm:$0xff]
    %v4372 = vld [vmem:[#allocation4 + $0x28] sm:$0xff]
    %v4373 = vld [vmem:[#allocation4 + $0x30] sm:$0xff]
    %v4374 = vld [vmem:[#allocation4 + $0x38] sm:$0xff]
    %v4375 = vld [vmem:[#allocation4 + $0x40] sm:$0xff]
    %v4376 = vld [vmem:[#allocation4 + $0x48] sm:$0xff]
    %v4377 = vld [vmem:[#allocation4 + $0x50] sm:$0xff]
    %v4378 = vld [vmem:[#allocation4 + $0x58] sm:$0xff]
    %v4379 = vld [vmem:[#allocation4 + $0x60] sm:$0xff]
    %v4380 = vld [vmem:[#allocation4 + $0x68] sm:$0xff]
    %v4381 = vld [vmem:[#allocation4 + $0x70] sm:$0xff]
    %v4382 = vld [vmem:[#allocation4 + $0x78] sm:$0xff]
    %v4383 = vld [vmem:[#allocation5] sm:$0xff]
    %v4384 = vld [vmem:[#allocation5 + $0x8] sm:$0xff]
    %v4385 = vld [vmem:[#allocation5 + $0x10] sm:$0xff]
    %v4386 = vld [vmem:[#allocation5 + $0x18] sm:$0xff]
    %v4387 = vld [vmem:[#allocation5 + $0x20] sm:$0xff]
    %v4388 = vld [vmem:[#allocation5 + $0x28] sm:$0xff]
    %v4389 = vld [vmem:[#allocation5 + $0x30] sm:$0xff]
    %v4390 = vld [vmem:[#allocation5 + $0x38] sm:$0xff]
    %v4391 = vld [vmem:[#allocation5 + $0x40] sm:$0xff]
    %v4392 = vld [vmem:[#allocation5 + $0x48] sm:$0xff]
    %v4393 = vld [vmem:[#allocation5 + $0x50] sm:$0xff]
    %v4394 = vld [vmem:[#allocation5 + $0x58] sm:$0xff]
    %v4395 = vld [vmem:[#allocation5 + $0x60] sm:$0xff]
    %v4396 = vld [vmem:[#allocation5 + $0x68] sm:$0xff]
    %v4397 = vld [vmem:[#allocation5 + $0x70] sm:$0xff]
    %v4398 = vld [vmem:[#allocation5 + $0x78] sm:$0xff]
    %4399 = vmatprep.subr.bf16.mxu0 0
    %4400 = vmatpush1.bf16.msra.mxu0 %v4383
    %4401 = vmatprep.subr.bf16.mxu0 0
    %4402 = vmatpush1.bf16.msra.mxu0 %v4384
    %4403 = vmatprep.subr.bf16.mxu0 0
    %4404 = vmatpush1.bf16.msra.mxu0 %v4385
    %4405 = vmatprep.subr.bf16.mxu0 0
    %4406 = vmatpush1.bf16.msra.mxu0 %v4386
    %4407 = vmatprep.subr.bf16.mxu0 0
    %4408 = vmatpush1.bf16.msra.mxu0 %v4387
    %4409 = vmatprep.subr.bf16.mxu0 0
    %4410 = vmatpush1.bf16.msra.mxu0 %v4388
    %4411 = vmatprep.subr.bf16.mxu0 0
    %4412 = vmatpush1.bf16.msra.mxu0 %v4389
    %4413 = vmatprep.subr.bf16.mxu0 0
    %4414 = vmatpush1.bf16.msra.mxu0 %v4390
    %4415 = vmatprep.subr.bf16.mxu0 0
    %4416 = vmatpush1.bf16.msra.mxu0 %v4391
    %4417 = vmatprep.subr.bf16.mxu0 0
    %4418 = vmatpush1.bf16.msra.mxu0 %v4392
    %4419 = vmatprep.subr.bf16.mxu0 0
    %4420 = vmatpush1.bf16.msra.mxu0 %v4393
    %4421 = vmatprep.subr.bf16.mxu0 0
    %4422 = vmatpush1.bf16.msra.mxu0 %v4394
    %4423 = vmatprep.subr.bf16.mxu0 0
    %4424 = vmatpush1.bf16.msra.mxu0 %v4395
    %4425 = vmatprep.subr.bf16.mxu0 0
    %4426 = vmatpush1.bf16.msra.mxu0 %v4396
    %4427 = vmatprep.subr.bf16.mxu0 0
    %4428 = vmatpush1.bf16.msra.mxu0 %v4397
    %4429 = vmatprep.subr.bf16.mxu0 0
    %4430 = vmatpush1.bf16.msra.mxu0 %v4398
    %4431 = vmatprep.mubr.bf16.mxu0 %v4352
    %4432 = vmatmul.mubr.bf16.gmra.mrb[0].mxu0 %v4351
    %v4433 = vpop.f32.mrb[0].mxu0
    %v4434 = vadd.f32 0.0, %v4433
    %v4435 = vpop.f32.mrb[0].mxu0
    %v4436 = vpop.f32.mrb[0].mxu0
    %v4437 = vadd.f32 0.0, %v4436
    %v4438 = vpop.f32.mrb[0].mxu0
    %4439 = vmatprep.mubr.bf16.mxu0 %v4354
    %4440 = vmatmul.mubr.bf16.gmra.mrb[0].mxu0 %v4353
    %v4441 = vpop.f32.mrb[0].mxu0
    %v4442 = vadd.f32 0.0, %v4441
    %v4443 = vpop.f32.mrb[0].mxu0
    %v4444 = vpop.f32.mrb[0].mxu0
    %v4445 = vadd.f32 0.0, %v4444
    %v4446 = vpop.f32.mrb[0].mxu0
    %4447 = vmatprep.mubr.bf16.mxu0 %v4356
    %4448 = vmatmul.mubr.bf16.gmra.mrb[0].mxu0 %v4355
    %v4449 = vpop.f32.mrb[0].mxu0
    %v4450 = vadd.f32 0.0, %v4449
    %v4451 = vpop.f32.mrb[0].mxu0
    %v4452 = vpop.f32.mrb[0].mxu0
    %v4453 = vadd.f32 0.0, %v4452
    %v4454 = vpop.f32.mrb[0].mxu0
    %4455 = vmatprep.mubr.bf16.mxu0 %v4358
    %4456 = vmatmul.mubr.bf16.gmra.mrb[0].mxu0 %v4357
    %v4457 = vpop.f32.mrb[0].mxu0
    %v4458 = vadd.f32 0.0, %v4457
    %v4459 = vpop.f32.mrb[0].mxu0
    %v4460 = vpop.f32.mrb[0].mxu0
    %v4461 = vadd.f32 0.0, %v4460
    %v4462 = vpop.f32.mrb[0].mxu0
    %4463 = vmatprep.mubr.bf16.mxu0 %v4360
    %4464 = vmatmul.mubr.bf16.gmra.mrb[0].mxu0 %v4359
    %v4465 = vpop.f32.mrb[0].mxu0
    %v4466 = vadd.f32 0.0, %v4465
    %v4467 = vpop.f32.mrb[0].mxu0
    %v4468 = vpop.f32.mrb[0].mxu0
    %v4469 = vadd.f32 0.0, %v4468
    %v4470 = vpop.f32.mrb[0].mxu0
    %4471 = vmatprep.mubr.bf16.mxu0 %v4362
    %4472 = vmatmul.mubr.bf16.gmra.mrb[0].mxu0 %v4361
    %v4473 = vpop.f32.mrb[0].mxu0
    %v4474 = vadd.f32 0.0, %v4473
    %v4475 = vpop.f32.mrb[0].mxu0
    %v4476 = vpop.f32.mrb[0].mxu0
    %v4477 = vadd.f32 0.0, %v4476
    %v4478 = vpop.f32.mrb[0].mxu0
    %4479 = vmatprep.mubr.bf16.mxu0 %v4364
    %4480 = vmatmul.mubr.bf16.gmra.mrb[0].mxu0 %v4363
    %v4481 = vpop.f32.mrb[0].mxu0
    %v4482 = vadd.f32 0.0, %v4481
    %v4483 = vpop.f32.mrb[0].mxu0
    %v4484 = vpop.f32.mrb[0].mxu0
    %v4485 = vadd.f32 0.0, %v4484
    %v4486 = vpop.f32.mrb[0].mxu0
    %4487 = vmatprep.mubr.bf16.mxu0 %v4366
    %4488 = vmatmul.mubr.bf16.gmra.mrb[0].mxu0 %v4365
    %v4489 = vpop.f32.mrb[0].mxu0
    %v4490 = vadd.f32 0.0, %v4489
    %v4491 = vpop.f32.mrb[0].mxu0
    %v4492 = vpop.f32.mrb[0].mxu0
    %v4493 = vadd.f32 0.0, %v4492
    %v4494 = vpop.f32.mrb[0].mxu0
    %4495 = vdwg.mxu0
    %4496 = vmatprep.subr.bf16.mxu0 0
    %4497 = vmatpush1.bf16.msra.mxu0 %v4367
    %4498 = vmatprep.subr.bf16.mxu0 0
    %4499 = vmatpush1.bf16.msra.mxu0 %v4368
    %4500 = vmatprep.subr.bf16.mxu0 0
    %4501 = vmatpush1.bf16.msra.mxu0 %v4369
    %4502 = vmatprep.subr.bf16.mxu0 0
    %4503 = vmatpush1.bf16.msra.mxu0 %v4370
    %4504 = vmatprep.subr.bf16.mxu0 0
    %4505 = vmatpush1.bf16.msra.mxu0 %v4371
    %4506 = vmatprep.subr.bf16.mxu0 0
    %4507 = vmatpush1.bf16.msra.mxu0 %v4372
    %4508 = vmatprep.subr.bf16.mxu0 0
    %4509 = vmatpush1.bf16.msra.mxu0 %v4373
    %4510 = vmatprep.subr.bf16.mxu0 0
    %4511 = vmatpush1.bf16.msra.mxu0 %v4374
    %4512 = vmatprep.subr.bf16.mxu0 0
    %4513 = vmatpush1.bf16.msra.mxu0 %v4375
    %4514 = vmatprep.subr.bf16.mxu0 0
    %4515 = vmatpush1.bf16.msra.mxu0 %v4376
    %4516 = vmatprep.subr.bf16.mxu0 0
    %4517 = vmatpush1.bf16.msra.mxu0 %v4377
    %4518 = vmatprep.subr.bf16.mxu0 0
    %4519 = vmatpush1.bf16.msra.mxu0 %v4378
    %4520 = vmatprep.subr.bf16.mxu0 0
    %4521 = vmatpush1.bf16.msra.mxu0 %v4379
    %4522 = vmatprep.subr.bf16.mxu0 0
    %4523 = vmatpush1.bf16.msra.mxu0 %v4380
    %4524 = vmatprep.subr.bf16.mxu0 0
    %4525 = vmatpush1.bf16.msra.mxu0 %v4381
    %4526 = vmatprep.subr.bf16.mxu0 0
    %4527 = vmatpush1.bf16.msra.mxu0 %v4382
    %4528 = vmatprep.mubr.bf16.mxu0 %v4352
    %4529 = vmatmul.mubr.bf16.gmra.mrb[0].mxu0 %v4351
    %v4530 = vpop.f32.mrb[0].mxu0
    %v4531 = vadd.f32 %v4434, %v4530
    %v4532 = vpop.f32.mrb[0].mxu0
    %v4533 = vpop.f32.mrb[0].mxu0
    %v4534 = vadd.f32 %v4437, %v4533
    %v4535 = vpop.f32.mrb[0].mxu0
    %4536 = vmatprep.mubr.bf16.mxu0 %v4354
    %4537 = vmatmul.mubr.bf16.gmra.mrb[0].mxu0 %v4353
    %v4538 = vpop.f32.mrb[0].mxu0
    %v4539 = vadd.f32 %v4442, %v4538
    %v4540 = vpop.f32.mrb[0].mxu0
    %v4541 = vpop.f32.mrb[0].mxu0
    %v4542 = vadd.f32 %v4445, %v4541
    %v4543 = vpop.f32.mrb[0].mxu0
    %4544 = vmatprep.mubr.bf16.mxu0 %v4356
    %4545 = vmatmul.mubr.bf16.gmra.mrb[0].mxu0 %v4355
    %v4546 = vpop.f32.mrb[0].mxu0
    %v4547 = vadd.f32 %v4450, %v4546
    %v4548 = vpop.f32.mrb[0].mxu0
    %v4549 = vpop.f32.mrb[0].mxu0
    %v4550 = vadd.f32 %v4453, %v4549
    %v4551 = vpop.f32.mrb[0].mxu0
    %4552 = vmatprep.mubr.bf16.mxu0 %v4358
    %4553 = vmatmul.mubr.bf16.gmra.mrb[0].mxu0 %v4357
    %v4554 = vpop.f32.mrb[0].mxu0
    %v4555 = vadd.f32 %v4458, %v4554
    %v4556 = vpop.f32.mrb[0].mxu0
    %v4557 = vpop.f32.mrb[0].mxu0
    %v4558 = vadd.f32 %v4461, %v4557
    %v4559 = vpop.f32.mrb[0].mxu0
    %4560 = vmatprep.mubr.bf16.mxu0 %v4360
    %4561 = vmatmul.mubr.bf16.gmra.mrb[0].mxu0 %v4359
    %v4562 = vpop.f32.mrb[0].mxu0
    %v4563 = vadd.f32 %v4466, %v4562
    %v4564 = vpop.f32.mrb[0].mxu0
    %v4565 = vpop.f32.mrb[0].mxu0
    %v4566 = vadd.f32 %v4469, %v4565
    %v4567 = vpop.f32.mrb[0].mxu0
    %4568 = vmatprep.mubr.bf16.mxu0 %v4362
    %4569 = vmatmul.mubr.bf16.gmra.mrb[0].mxu0 %v4361
    %v4570 = vpop.f32.mrb[0].mxu0
    %v4571 = vadd.f32 %v4474, %v4570
    %v4572 = vpop.f32.mrb[0].mxu0
    %v4573 = vpop.f32.mrb[0].mxu0
    %v4574 = vadd.f32 %v4477, %v4573
    %v4575 = vpop.f32.mrb[0].mxu0
    %4576 = vmatprep.mubr.bf16.mxu0 %v4364
    %4577 = vmatmul.mubr.bf16.gmra.mrb[0].mxu0 %v4363
    %v4578 = vpop.f32.mrb[0].mxu0
    %v4579 = vadd.f32 %v4482, %v4578
    %v4580 = vpop.f32.mrb[0].mxu0
    %v4581 = vpop.f32.mrb[0].mxu0
    %v4582 = vadd.f32 %v4485, %v4581
    %v4583 = vpop.f32.mrb[0].mxu0
    %4584 = vmatprep.mubr.bf16.mxu0 %v4366
    %4585 = vmatmul.mubr.bf16.gmra.mrb[0].mxu0 %v4365
    %v4586 = vpop.f32.mrb[0].mxu0
    %v4587 = vadd.f32 %v4490, %v4586
    %v4588 = vpop.f32.mrb[0].mxu0
    %v4589 = vpop.f32.mrb[0].mxu0
    %v4590 = vadd.f32 %v4493, %v4589
    %v4591 = vpop.f32.mrb[0].mxu0
    %4592 = vdwg.mxu0
    %v4593 = vld [vmem:[#allocation3] sm:$0xff]
    %v4594 = vld [vmem:[#allocation3 + $0x8] sm:$0xff]
    %v4595 = vld [vmem:[#allocation3 + $0x40] sm:$0xff]
    %v4596 = vld [vmem:[#allocation3 + $0x48] sm:$0xff]
    %v4597 = vld [vmem:[#allocation3 + $0x80] sm:$0xff]
    %v4598 = vld [vmem:[#allocation3 + $0x88] sm:$0xff]
    %v4599 = vld [vmem:[#allocation3 + $0xc0] sm:$0xff]
    %v4600 = vld [vmem:[#allocation3 + $0xc8] sm:$0xff]
    %v4601 = vld [vmem:[#allocation3 + $0x100] sm:$0xff]
    %v4602 = vld [vmem:[#allocation3 + $0x108] sm:$0xff]
    %v4603 = vld [vmem:[#allocation3 + $0x140] sm:$0xff]
    %v4604 = vld [vmem:[#allocation3 + $0x148] sm:$0xff]
    %v4605 = vld [vmem:[#allocation3 + $0x180] sm:$0xff]
    %v4606 = vld [vmem:[#allocation3 + $0x188] sm:$0xff]
    %v4607 = vld [vmem:[#allocation3 + $0x1c0] sm:$0xff]
    %v4608 = vld [vmem:[#allocation3 + $0x1c8] sm:$0xff]
    %4609 = vmatprep.subr.bf16.mxu0 0
    %4610 = vmatpush1.bf16.msra.mxu0 %v4367
    %4611 = vmatprep.subr.bf16.mxu0 0
    %4612 = vmatpush1.bf16.msra.mxu0 %v4368
    %4613 = vmatprep.subr.bf16.mxu0 0
    %4614 = vmatpush1.bf16.msra.mxu0 %v4369
    %4615 = vmatprep.subr.bf16.mxu0 0
    %4616 = vmatpush1.bf16.msra.mxu0 %v4370
    %4617 = vmatprep.subr.bf16.mxu0 0
    %4618 = vmatpush1.bf16.msra.mxu0 %v4371
    %4619 = vmatprep.subr.bf16.mxu0 0
    %4620 = vmatpush1.bf16.msra.mxu0 %v4372
    %4621 = vmatprep.subr.bf16.mxu0 0
    %4622 = vmatpush1.bf16.msra.mxu0 %v4373
    %4623 = vmatprep.subr.bf16.mxu0 0
    %4624 = vmatpush1.bf16.msra.mxu0 %v4374
    %4625 = vmatprep.subr.bf16.mxu0 0
    %4626 = vmatpush1.bf16.msra.mxu0 %v4375
    %4627 = vmatprep.subr.bf16.mxu0 0
    %4628 = vmatpush1.bf16.msra.mxu0 %v4376
    %4629 = vmatprep.subr.bf16.mxu0 0
    %4630 = vmatpush1.bf16.msra.mxu0 %v4377
    %4631 = vmatprep.subr.bf16.mxu0 0
    %4632 = vmatpush1.bf16.msra.mxu0 %v4378
    %4633 = vmatprep.subr.bf16.mxu0 0
    %4634 = vmatpush1.bf16.msra.mxu0 %v4379
    %4635 = vmatprep.subr.bf16.mxu0 0
    %4636 = vmatpush1.bf16.msra.mxu0 %v4380
    %4637 = vmatprep.subr.bf16.mxu0 0
    %4638 = vmatpush1.bf16.msra.mxu0 %v4381
    %4639 = vmatprep.subr.bf16.mxu0 0
    %4640 = vmatpush1.bf16.msra.mxu0 %v4382
    %4641 = vmatprep.mubr.bf16.mxu0 %v4594
    %4642 = vmatmul.mubr.bf16.gmra.mrb[0].mxu0 %v4593
    %v4643 = vpop.f32.mrb[0].mxu0
    %v4644 = vadd.f32 0.0, %v4643
    %v4645 = vpop.f32.mrb[0].mxu0
    %v4646 = vpop.f32.mrb[0].mxu0
    %v4647 = vadd.f32 0.0, %v4646
    %v4648 = vpop.f32.mrb[0].mxu0
    %4649 = vmatprep.mubr.bf16.mxu0 %v4596
    %4650 = vmatmul.mubr.bf16.gmra.mrb[0].mxu0 %v4595
    %v4651 = vpop.f32.mrb[0].mxu0
    %v4652 = vadd.f32 0.0, %v4651
    %v4653 = vpop.f32.mrb[0].mxu0
    %v4654 = vpop.f32.mrb[0].mxu0
    %v4655 = vadd.f32 0.0, %v4654
    %v4656 = vpop.f32.mrb[0].mxu0
    %4657 = vmatprep.mubr.bf16.mxu0 %v4598
    %4658 = vmatmul.mubr.bf16.gmra.mrb[0].mxu0 %v4597
    %v4659 = vpop.f32.mrb[0].mxu0
    %v4660 = vadd.f32 0.0, %v4659
    %v4661 = vpop.f32.mrb[0].mxu0
    %v4662 = vpop.f32.mrb[0].mxu0
    %v4663 = vadd.f32 0.0, %v4662
    %v4664 = vpop.f32.mrb[0].mxu0
    %4665 = vmatprep.mubr.bf16.mxu0 %v4600
    %4666 = vmatmul.mubr.bf16.gmra.mrb[0].mxu0 %v4599
    %v4667 = vpop.f32.mrb[0].mxu0
    %v4668 = vadd.f32 0.0, %v4667
    %v4669 = vpop.f32.mrb[0].mxu0
    %v4670 = vpop.f32.mrb[0].mxu0
    %v4671 = vadd.f32 0.0, %v4670
    %v4672 = vpop.f32.mrb[0].mxu0
    %4673 = vmatprep.mubr.bf16.mxu0 %v4602
    %4674 = vmatmul.mubr.bf16.gmra.mrb[0].mxu0 %v4601
    %v4675 = vpop.f32.mrb[0].mxu0
    %v4676 = vadd.f32 0.0, %v4675
    %v4677 = vpop.f32.mrb[0].mxu0
    %v4678 = vpop.f32.mrb[0].mxu0
    %v4679 = vadd.f32 0.0, %v4678
    %v4680 = vpop.f32.mrb[0].mxu0
    %4681 = vmatprep.mubr.bf16.mxu0 %v4604
    %4682 = vmatmul.mubr.bf16.gmra.mrb[0].mxu0 %v4603
    %v4683 = vpop.f32.mrb[0].mxu0
    %v4684 = vadd.f32 0.0, %v4683
    %v4685 = vpop.f32.mrb[0].mxu0
    %v4686 = vpop.f32.mrb[0].mxu0
    %v4687 = vadd.f32 0.0, %v4686
    %v4688 = vpop.f32.mrb[0].mxu0
    %4689 = vmatprep.mubr.bf16.mxu0 %v4606
    %4690 = vmatmul.mubr.bf16.gmra.mrb[0].mxu0 %v4605
    %v4691 = vpop.f32.mrb[0].mxu0
    %v4692 = vadd.f32 0.0, %v4691
    %v4693 = vpop.f32.mrb[0].mxu0
    %v4694 = vpop.f32.mrb[0].mxu0
    %v4695 = vadd.f32 0.0, %v4694
    %v4696 = vpop.f32.mrb[0].mxu0
    %4697 = vmatprep.mubr.bf16.mxu0 %v4608
    %4698 = vmatmul.mubr.bf16.gmra.mrb[0].mxu0 %v4607
    %v4699 = vpop.f32.mrb[0].mxu0
    %v4700 = vadd.f32 0.0, %v4699
    %v4701 = vpop.f32.mrb[0].mxu0
    %v4702 = vpop.f32.mrb[0].mxu0
    %v4703 = vadd.f32 0.0, %v4702
    %v4704 = vpop.f32.mrb[0].mxu0
    %4705 = vdwg.mxu0
    %v4706 = vadd.f32 %v4531, %v4644
    %v4707 = vadd.f32 %v4534, %v4647
    %v4708 = vadd.f32 %v4539, %v4652
    %v4709 = vadd.f32 %v4542, %v4655
    %v4710 = vadd.f32 %v4547, %v4660
    %v4711 = vadd.f32 %v4550, %v4663
    %v4712 = vadd.f32 %v4555, %v4668
    %v4713 = vadd.f32 %v4558, %v4671
    %v4714 = vadd.f32 %v4563, %v4676
    %v4715 = vadd.f32 %v4566, %v4679
    %v4716 = vadd.f32 %v4571, %v4684
    %v4717 = vadd.f32 %v4574, %v4687
    %v4718 = vadd.f32 %v4579, %v4692
    %v4719 = vadd.f32 %v4582, %v4695
    %v4720 = vadd.f32 %v4587, %v4700
    %v4721 = vadd.f32 %v4590, %v4703
    %v4722 = vld [vmem:[#allocation2 + $0x10] sm:$0xff]
    %v4723 = vld [vmem:[#allocation2 + $0x18] sm:$0xff]
    %v4724 = vld [vmem:[#allocation2 + $0x50] sm:$0xff]
    %v4725 = vld [vmem:[#allocation2 + $0x58] sm:$0xff]
    %v4726 = vld [vmem:[#allocation2 + $0x90] sm:$0xff]
    %v4727 = vld [vmem:[#allocation2 + $0x98] sm:$0xff]
    %v4728 = vld [vmem:[#allocation2 + $0xd0] sm:$0xff]
    %v4729 = vld [vmem:[#allocation2 + $0xd8] sm:$0xff]
    %v4730 = vld [vmem:[#allocation2 + $0x110] sm:$0xff]
    %v4731 = vld [vmem:[#allocation2 + $0x118] sm:$0xff]
    %v4732 = vld [vmem:[#allocation2 + $0x150] sm:$0xff]
    %v4733 = vld [vmem:[#allocation2 + $0x158] sm:$0xff]
    %v4734 = vld [vmem:[#allocation2 + $0x190] sm:$0xff]
    %v4735 = vld [vmem:[#allocation2 + $0x198] sm:$0xff]
    %v4736 = vld [vmem:[#allocation2 + $0x1d0] sm:$0xff]
    %v4737 = vld [vmem:[#allocation2 + $0x1d8] sm:$0xff]
    %v4738 = vld [vmem:[#allocation4 + $0x80] sm:$0xff]
    %v4739 = vld [vmem:[#allocation4 + $0x88] sm:$0xff]
    %v4740 = vld [vmem:[#allocation4 + $0x90] sm:$0xff]
    %v4741 = vld [vmem:[#allocation4 + $0x98] sm:$0xff]
    %v4742 = vld [vmem:[#allocation4 + $0xa0] sm:$0xff]
    %v4743 = vld [vmem:[#allocation4 + $0xa8] sm:$0xff]
    %v4744 = vld [vmem:[#allocation4 + $0xb0] sm:$0xff]
    %v4745 = vld [vmem:[#allocation4 + $0xb8] sm:$0xff]
    %v4746 = vld [vmem:[#allocation4 + $0xc0] sm:$0xff]
    %v4747 = vld [vmem:[#allocation4 + $0xc8] sm:$0xff]
    %v4748 = vld [vmem:[#allocation4 + $0xd0] sm:$0xff]
    %v4749 = vld [vmem:[#allocation4 + $0xd8] sm:$0xff]
    %v4750 = vld [vmem:[#allocation4 + $0xe0] sm:$0xff]
    %v4751 = vld [vmem:[#allocation4 + $0xe8] sm:$0xff]
    %v4752 = vld [vmem:[#allocation4 + $0xf0] sm:$0xff]
    %v4753 = vld [vmem:[#allocation4 + $0xf8] sm:$0xff]
    %v4754 = vld [vmem:[#allocation5 + $0x80] sm:$0xff]
    %v4755 = vld [vmem:[#allocation5 + $0x88] sm:$0xff]
    %v4756 = vld [vmem:[#allocation5 + $0x90] sm:$0xff]
    %v4757 = vld [vmem:[#allocation5 + $0x98] sm:$0xff]
    %v4758 = vld [vmem:[#allocation5 + $0xa0] sm:$0xff]
    %v4759 = vld [vmem:[#allocation5 + $0xa8] sm:$0xff]
    %v4760 = vld [vmem:[#allocation5 + $0xb0] sm:$0xff]
    %v4761 = vld [vmem:[#allocation5 + $0xb8] sm:$0xff]
    %v4762 = vld [vmem:[#allocation5 + $0xc0] sm:$0xff]
    %v4763 = vld [vmem:[#allocation5 + $0xc8] sm:$0xff]
    %v4764 = vld [vmem:[#allocation5 + $0xd0] sm:$0xff]
    %v4765 = vld [vmem:[#allocation5 + $0xd8] sm:$0xff]
    %v4766 = vld [vmem:[#allocation5 + $0xe0] sm:$0xff]
    %v4767 = vld [vmem:[#allocation5 + $0xe8] sm:$0xff]
    %v4768 = vld [vmem:[#allocation5 + $0xf0] sm:$0xff]
    %v4769 = vld [vmem:[#allocation5 + $0xf8] sm:$0xff]
    %4770 = vmatprep.subr.bf16.mxu0 0
    %4771 = vmatpush1.bf16.msra.mxu0 %v4754
    %4772 = vmatprep.subr.bf16.mxu0 0
    %4773 = vmatpush1.bf16.msra.mxu0 %v4755
    %4774 = vmatprep.subr.bf16.mxu0 0
    %4775 = vmatpush1.bf16.msra.mxu0 %v4756
    %4776 = vmatprep.subr.bf16.mxu0 0
    %4777 = vmatpush1.bf16.msra.mxu0 %v4757
    %4778 = vmatprep.subr.bf16.mxu0 0
    %4779 = vmatpush1.bf16.msra.mxu0 %v4758
    %4780 = vmatprep.subr.bf16.mxu0 0
    %4781 = vmatpush1.bf16.msra.mxu0 %v4759
    %4782 = vmatprep.subr.bf16.mxu0 0
    %4783 = vmatpush1.bf16.msra.mxu0 %v4760
    %4784 = vmatprep.subr.bf16.mxu0 0
    %4785 = vmatpush1.bf16.msra.mxu0 %v4761
    %4786 = vmatprep.subr.bf16.mxu0 0
    %4787 = vmatpush1.bf16.msra.mxu0 %v4762
    %4788 = vmatprep.subr.bf16.mxu0 0
    %4789 = vmatpush1.bf16.msra.mxu0 %v4763
    %4790 = vmatprep.subr.bf16.mxu0 0
    %4791 = vmatpush1.bf16.msra.mxu0 %v4764
    %4792 = vmatprep.subr.bf16.mxu0 0
    %4793 = vmatpush1.bf16.msra.mxu0 %v4765
    %4794 = vmatprep.subr.bf16.mxu0 0
    %4795 = vmatpush1.bf16.msra.mxu0 %v4766
    %4796 = vmatprep.subr.bf16.mxu0 0
    %4797 = vmatpush1.bf16.msra.mxu0 %v4767
    %4798 = vmatprep.subr.bf16.mxu0 0
    %4799 = vmatpush1.bf16.msra.mxu0 %v4768
    %4800 = vmatprep.subr.bf16.mxu0 0
    %4801 = vmatpush1.bf16.msra.mxu0 %v4769
    %4802 = vmatprep.mubr.bf16.mxu0 %v4723
    %4803 = vmatmul.mubr.bf16.gmra.mrb[0].mxu0 %v4722
    %v4804 = vpop.f32.mrb[0].mxu0
    %v4805 = vadd.f32 0.0, %v4804
    %v4806 = vpop.f32.mrb[0].mxu0
    %v4807 = vpop.f32.mrb[0].mxu0
    %v4808 = vadd.f32 0.0, %v4807
    %v4809 = vpop.f32.mrb[0].mxu0
    %4810 = vmatprep.mubr.bf16.mxu0 %v4725
    %4811 = vmatmul.mubr.bf16.gmra.mrb[0].mxu0 %v4724
    %v4812 = vpop.f32.mrb[0].mxu0
    %v4813 = vadd.f32 0.0, %v4812
    %v4814 = vpop.f32.mrb[0].mxu0
    %v4815 = vpop.f32.mrb[0].mxu0
    %v4816 = vadd.f32 0.0, %v4815
    %v4817 = vpop.f32.mrb[0].mxu0
    %4818 = vmatprep.mubr.bf16.mxu0 %v4727
    %4819 = vmatmul.mubr.bf16.gmra.mrb[0].mxu0 %v4726
    %v4820 = vpop.f32.mrb[0].mxu0
    %v4821 = vadd.f32 0.0, %v4820
    %v4822 = vpop.f32.mrb[0].mxu0
    %v4823 = vpop.f32.mrb[0].mxu0
    %v4824 = vadd.f32 0.0, %v4823
    %v4825 = vpop.f32.mrb[0].mxu0
    %4826 = vmatprep.mubr.bf16.mxu0 %v4729
    %4827 = vmatmul.mubr.bf16.gmra.mrb[0].mxu0 %v4728
    %v4828 = vpop.f32.mrb[0].mxu0
    %v4829 = vadd.f32 0.0, %v4828
    %v4830 = vpop.f32.mrb[0].mxu0
    %v4831 = vpop.f32.mrb[0].mxu0
    %v4832 = vadd.f32 0.0, %v4831
    %v4833 = vpop.f32.mrb[0].mxu0
    %4834 = vmatprep.mubr.bf16.mxu0 %v4731
    %4835 = vmatmul.mubr.bf16.gmra.mrb[0].mxu0 %v4730
    %v4836 = vpop.f32.mrb[0].mxu0
    %v4837 = vadd.f32 0.0, %v4836
    %v4838 = vpop.f32.mrb[0].mxu0
    %v4839 = vpop.f32.mrb[0].mxu0
    %v4840 = vadd.f32 0.0, %v4839
    %v4841 = vpop.f32.mrb[0].mxu0
    %4842 = vmatprep.mubr.bf16.mxu0 %v4733
    %4843 = vmatmul.mubr.bf16.gmra.mrb[0].mxu0 %v4732
    %v4844 = vpop.f32.mrb[0].mxu0
    %v4845 = vadd.f32 0.0, %v4844
    %v4846 = vpop.f32.mrb[0].mxu0
    %v4847 = vpop.f32.mrb[0].mxu0
    %v4848 = vadd.f32 0.0, %v4847
    %v4849 = vpop.f32.mrb[0].mxu0
    %4850 = vmatprep.mubr.bf16.mxu0 %v4735
    %4851 = vmatmul.mubr.bf16.gmra.mrb[0].mxu0 %v4734
    %v4852 = vpop.f32.mrb[0].mxu0
    %v4853 = vadd.f32 0.0, %v4852
    %v4854 = vpop.f32.mrb[0].mxu0
    %v4855 = vpop.f32.mrb[0].mxu0
    %v4856 = vadd.f32 0.0, %v4855
    %v4857 = vpop.f32.mrb[0].mxu0
    %4858 = vmatprep.mubr.bf16.mxu0 %v4737
    %4859 = vmatmul.mubr.bf16.gmra.mrb[0].mxu0 %v4736
    %v4860 = vpop.f32.mrb[0].mxu0
    %v4861 = vadd.f32 0.0, %v4860
    %v4862 = vpop.f32.mrb[0].mxu0
    %v4863 = vpop.f32.mrb[0].mxu0
    %v4864 = vadd.f32 0.0, %v4863
    %v4865 = vpop.f32.mrb[0].mxu0
    %4866 = vdwg.mxu0
    %4867 = vmatprep.subr.bf16.mxu0 0
    %4868 = vmatpush1.bf16.msra.mxu0 %v4738
    %4869 = vmatprep.subr.bf16.mxu0 0
    %4870 = vmatpush1.bf16.msra.mxu0 %v4739
    %4871 = vmatprep.subr.bf16.mxu0 0
    %4872 = vmatpush1.bf16.msra.mxu0 %v4740
    %4873 = vmatprep.subr.bf16.mxu0 0
    %4874 = vmatpush1.bf16.msra.mxu0 %v4741
    %4875 = vmatprep.subr.bf16.mxu0 0
    %4876 = vmatpush1.bf16.msra.mxu0 %v4742
    %4877 = vmatprep.subr.bf16.mxu0 0
    %4878 = vmatpush1.bf16.msra.mxu0 %v4743
    %4879 = vmatprep.subr.bf16.mxu0 0
    %4880 = vmatpush1.bf16.msra.mxu0 %v4744
    %4881 = vmatprep.subr.bf16.mxu0 0
    %4882 = vmatpush1.bf16.msra.mxu0 %v4745
    %4883 = vmatprep.subr.bf16.mxu0 0
    %4884 = vmatpush1.bf16.msra.mxu0 %v4746
    %4885 = vmatprep.subr.bf16.mxu0 0
    %4886 = vmatpush1.bf16.msra.mxu0 %v4747
    %4887 = vmatprep.subr.bf16.mxu0 0
    %4888 = vmatpush1.bf16.msra.mxu0 %v4748
    %4889 = vmatprep.subr.bf16.mxu0 0
    %4890 = vmatpush1.bf16.msra.mxu0 %v4749
    %4891 = vmatprep.subr.bf16.mxu0 0
    %4892 = vmatpush1.bf16.msra.mxu0 %v4750
    %4893 = vmatprep.subr.bf16.mxu0 0
    %4894 = vmatpush1.bf16.msra.mxu0 %v4751
    %4895 = vmatprep.subr.bf16.mxu0 0
    %4896 = vmatpush1.bf16.msra.mxu0 %v4752
    %4897 = vmatprep.subr.bf16.mxu0 0
    %4898 = vmatpush1.bf16.msra.mxu0 %v4753
    %4899 = vmatprep.mubr.bf16.mxu0 %v4723
    %4900 = vmatmul.mubr.bf16.gmra.mrb[0].mxu0 %v4722
    %v4901 = vpop.f32.mrb[0].mxu0
    %v4902 = vadd.f32 %v4805, %v4901
    %v4903 = vpop.f32.mrb[0].mxu0
    %v4904 = vpop.f32.mrb[0].mxu0
    %v4905 = vadd.f32 %v4808, %v4904
    %v4906 = vpop.f32.mrb[0].mxu0
    %4907 = vmatprep.mubr.bf16.mxu0 %v4725
    %4908 = vmatmul.mubr.bf16.gmra.mrb[0].mxu0 %v4724
    %v4909 = vpop.f32.mrb[0].mxu0
    %v4910 = vadd.f32 %v4813, %v4909
    %v4911 = vpop.f32.mrb[0].mxu0
    %v4912 = vpop.f32.mrb[0].mxu0
    %v4913 = vadd.f32 %v4816, %v4912
    %v4914 = vpop.f32.mrb[0].mxu0
    %4915 = vmatprep.mubr.bf16.mxu0 %v4727
    %4916 = vmatmul.mubr.bf16.gmra.mrb[0].mxu0 %v4726
    %v4917 = vpop.f32.mrb[0].mxu0
    %v4918 = vadd.f32 %v4821, %v4917
    %v4919 = vpop.f32.mrb[0].mxu0
    %v4920 = vpop.f32.mrb[0].mxu0
    %v4921 = vadd.f32 %v4824, %v4920
    %v4922 = vpop.f32.mrb[0].mxu0
    %4923 = vmatprep.mubr.bf16.mxu0 %v4729
    %4924 = vmatmul.mubr.bf16.gmra.mrb[0].mxu0 %v4728
    %v4925 = vpop.f32.mrb[0].mxu0
    %v4926 = vadd.f32 %v4829, %v4925
    %v4927 = vpop.f32.mrb[0].mxu0
    %v4928 = vpop.f32.mrb[0].mxu0
    %v4929 = vadd.f32 %v4832, %v4928
    %v4930 = vpop.f32.mrb[0].mxu0
    %4931 = vmatprep.mubr.bf16.mxu0 %v4731
    %4932 = vmatmul.mubr.bf16.gmra.mrb[0].mxu0 %v4730
    %v4933 = vpop.f32.mrb[0].mxu0
    %v4934 = vadd.f32 %v4837, %v4933
    %v4935 = vpop.f32.mrb[0].mxu0
    %v4936 = vpop.f32.mrb[0].mxu0
    %v4937 = vadd.f32 %v4840, %v4936
    %v4938 = vpop.f32.mrb[0].mxu0
    %4939 = vmatprep.mubr.bf16.mxu0 %v4733
    %4940 = vmatmul.mubr.bf16.gmra.mrb[0].mxu0 %v4732
    %v4941 = vpop.f32.mrb[0].mxu0
    %v4942 = vadd.f32 %v4845, %v4941
    %v4943 = vpop.f32.mrb[0].mxu0
    %v4944 = vpop.f32.mrb[0].mxu0
    %v4945 = vadd.f32 %v4848, %v4944
    %v4946 = vpop.f32.mrb[0].mxu0
    %4947 = vmatprep.mubr.bf16.mxu0 %v4735
    %4948 = vmatmul.mubr.bf16.gmra.mrb[0].mxu0 %v4734
    %v4949 = vpop.f32.mrb[0].mxu0
    %v4950 = vadd.f32 %v4853, %v4949
    %v4951 = vpop.f32.mrb[0].mxu0
    %v4952 = vpop.f32.mrb[0].mxu0
    %v4953 = vadd.f32 %v4856, %v4952
    %v4954 = vpop.f32.mrb[0].mxu0
    %4955 = vmatprep.mubr.bf16.mxu0 %v4737
    %4956 = vmatmul.mubr.bf16.gmra.mrb[0].mxu0 %v4736
    %v4957 = vpop.f32.mrb[0].mxu0
    %v4958 = vadd.f32 %v4861, %v4957
    %v4959 = vpop.f32.mrb[0].mxu0
    %v4960 = vpop.f32.mrb[0].mxu0
    %v4961 = vadd.f32 %v4864, %v4960
    %v4962 = vpop.f32.mrb[0].mxu0
    %4963 = vdwg.mxu0
    %v4964 = vld [vmem:[#allocation3 + $0x10] sm:$0xff]
    %v4965 = vld [vmem:[#allocation3 + $0x18] sm:$0xff]
    %v4966 = vld [vmem:[#allocation3 + $0x50] sm:$0xff]
    %v4967 = vld [vmem:[#allocation3 + $0x58] sm:$0xff]
    %v4968 = vld [vmem:[#allocation3 + $0x90] sm:$0xff]
    %v4969 = vld [vmem:[#allocation3 + $0x98] sm:$0xff]
    %v4970 = vld [vmem:[#allocation3 + $0xd0] sm:$0xff]
    %v4971 = vld [vmem:[#allocation3 + $0xd8] sm:$0xff]
    %v4972 = vld [vmem:[#allocation3 + $0x110] sm:$0xff]
    %v4973 = vld [vmem:[#allocation3 + $0x118] sm:$0xff]
    %v4974 = vld [vmem:[#allocation3 + $0x150] sm:$0xff]
    %v4975 = vld [vmem:[#allocation3 + $0x158] sm:$0xff]
    %v4976 = vld [vmem:[#allocation3 + $0x190] sm:$0xff]
    %v4977 = vld [vmem:[#allocation3 + $0x198] sm:$0xff]
    %v4978 = vld [vmem:[#allocation3 + $0x1d0] sm:$0xff]
    %v4979 = vld [vmem:[#allocation3 + $0x1d8] sm:$0xff]
    %4980 = vmatprep.subr.bf16.mxu0 0
    %4981 = vmatpush1.bf16.msra.mxu0 %v4738
    %4982 = vmatprep.subr.bf16.mxu0 0
    %4983 = vmatpush1.bf16.msra.mxu0 %v4739
    %4984 = vmatprep.subr.bf16.mxu0 0
    %4985 = vmatpush1.bf16.msra.mxu0 %v4740
    %4986 = vmatprep.subr.bf16.mxu0 0
    %4987 = vmatpush1.bf16.msra.mxu0 %v4741
    %4988 = vmatprep.subr.bf16.mxu0 0
    %4989 = vmatpush1.bf16.msra.mxu0 %v4742
    %4990 = vmatprep.subr.bf16.mxu0 0
    %4991 = vmatpush1.bf16.msra.mxu0 %v4743
    %4992 = vmatprep.subr.bf16.mxu0 0
    %4993 = vmatpush1.bf16.msra.mxu0 %v4744
    %4994 = vmatprep.subr.bf16.mxu0 0
    %4995 = vmatpush1.bf16.msra.mxu0 %v4745
    %4996 = vmatprep.subr.bf16.mxu0 0
    %4997 = vmatpush1.bf16.msra.mxu0 %v4746
    %4998 = vmatprep.subr.bf16.mxu0 0
    %4999 = vmatpush1.bf16.msra.mxu0 %v4747
    %5000 = vmatprep.subr.bf16.mxu0 0
    %5001 = vmatpush1.bf16.msra.mxu0 %v4748
    %5002 = vmatprep.subr.bf16.mxu0 0
    %5003 = vmatpush1.bf16.msra.mxu0 %v4749
    %5004 = vmatprep.subr.bf16.mxu0 0
    %5005 = vmatpush1.bf16.msra.mxu0 %v4750
    %5006 = vmatprep.subr.bf16.mxu0 0
    %5007 = vmatpush1.bf16.msra.mxu0 %v4751
    %5008 = vmatprep.subr.bf16.mxu0 0
    %5009 = vmatpush1.bf16.msra.mxu0 %v4752
    %5010 = vmatprep.subr.bf16.mxu0 0
    %5011 = vmatpush1.bf16.msra.mxu0 %v4753
    %5012 = vmatprep.mubr.bf16.mxu0 %v4965
    %5013 = vmatmul.mubr.bf16.gmra.mrb[0].mxu0 %v4964
    %v5014 = vpop.f32.mrb[0].mxu0
    %v5015 = vadd.f32 0.0, %v5014
    %v5016 = vpop.f32.mrb[0].mxu0
    %v5017 = vpop.f32.mrb[0].mxu0
    %v5018 = vadd.f32 0.0, %v5017
    %v5019 = vpop.f32.mrb[0].mxu0
    %5020 = vmatprep.mubr.bf16.mxu0 %v4967
    %5021 = vmatmul.mubr.bf16.gmra.mrb[0].mxu0 %v4966
    %v5022 = vpop.f32.mrb[0].mxu0
    %v5023 = vadd.f32 0.0, %v5022
    %v5024 = vpop.f32.mrb[0].mxu0
    %v5025 = vpop.f32.mrb[0].mxu0
    %v5026 = vadd.f32 0.0, %v5025
    %v5027 = vpop.f32.mrb[0].mxu0
    %5028 = vmatprep.mubr.bf16.mxu0 %v4969
    %5029 = vmatmul.mubr.bf16.gmra.mrb[0].mxu0 %v4968
    %v5030 = vpop.f32.mrb[0].mxu0
    %v5031 = vadd.f32 0.0, %v5030
    %v5032 = vpop.f32.mrb[0].mxu0
    %v5033 = vpop.f32.mrb[0].mxu0
    %v5034 = vadd.f32 0.0, %v5033
    %v5035 = vpop.f32.mrb[0].mxu0
    %5036 = vmatprep.mubr.bf16.mxu0 %v4971
    %5037 = vmatmul.mubr.bf16.gmra.mrb[0].mxu0 %v4970
    %v5038 = vpop.f32.mrb[0].mxu0
    %v5039 = vadd.f32 0.0, %v5038
    %v5040 = vpop.f32.mrb[0].mxu0
    %v5041 = vpop.f32.mrb[0].mxu0
    %v5042 = vadd.f32 0.0, %v5041
    %v5043 = vpop.f32.mrb[0].mxu0
    %5044 = vmatprep.mubr.bf16.mxu0 %v4973
    %5045 = vmatmul.mubr.bf16.gmra.mrb[0].mxu0 %v4972
    %v5046 = vpop.f32.mrb[0].mxu0
    %v5047 = vadd.f32 0.0, %v5046
    %v5048 = vpop.f32.mrb[0].mxu0
    %v5049 = vpop.f32.mrb[0].mxu0
    %v5050 = vadd.f32 0.0, %v5049
    %v5051 = vpop.f32.mrb[0].mxu0
    %5052 = vmatprep.mubr.bf16.mxu0 %v4975
    %5053 = vmatmul.mubr.bf16.gmra.mrb[0].mxu0 %v4974
    %v5054 = vpop.f32.mrb[0].mxu0
    %v5055 = vadd.f32 0.0, %v5054
    %v5056 = vpop.f32.mrb[0].mxu0
    %v5057 = vpop.f32.mrb[0].mxu0
    %v5058 = vadd.f32 0.0, %v5057
    %v5059 = vpop.f32.mrb[0].mxu0
    %5060 = vmatprep.mubr.bf16.mxu0 %v4977
    %5061 = vmatmul.mubr.bf16.gmra.mrb[0].mxu0 %v4976
    %v5062 = vpop.f32.mrb[0].mxu0
    %v5063 = vadd.f32 0.0, %v5062
    %v5064 = vpop.f32.mrb[0].mxu0
    %v5065 = vpop.f32.mrb[0].mxu0
    %v5066 = vadd.f32 0.0, %v5065
    %v5067 = vpop.f32.mrb[0].mxu0
    %5068 = vmatprep.mubr.bf16.mxu0 %v4979
    %5069 = vmatmul.mubr.bf16.gmra.mrb[0].mxu0 %v4978
    %v5070 = vpop.f32.mrb[0].mxu0
    %v5071 = vadd.f32 0.0, %v5070
    %v5072 = vpop.f32.mrb[0].mxu0
    %v5073 = vpop.f32.mrb[0].mxu0
    %v5074 = vadd.f32 0.0, %v5073
    %v5075 = vpop.f32.mrb[0].mxu0
    %5076 = vdwg.mxu0
    %v5077 = vadd.f32 %v4902, %v5015
    %v5078 = vadd.f32 %v4905, %v5018
    %v5079 = vadd.f32 %v4910, %v5023
    %v5080 = vadd.f32 %v4913, %v5026
    %v5081 = vadd.f32 %v4918, %v5031
    %v5082 = vadd.f32 %v4921, %v5034
    %v5083 = vadd.f32 %v4926, %v5039
    %v5084 = vadd.f32 %v4929, %v5042
    %v5085 = vadd.f32 %v4934, %v5047
    %v5086 = vadd.f32 %v4937, %v5050
    %v5087 = vadd.f32 %v4942, %v5055
    %v5088 = vadd.f32 %v4945, %v5058
    %v5089 = vadd.f32 %v4950, %v5063
    %v5090 = vadd.f32 %v4953, %v5066
    %v5091 = vadd.f32 %v4958, %v5071
    %v5092 = vadd.f32 %v4961, %v5074
    %v5093 = vadd.f32 %v4706, %v5077
    %v5094 = vadd.f32 %v4707, %v5078
    %v5095 = vadd.f32 %v4708, %v5079
    %v5096 = vadd.f32 %v4709, %v5080
    %v5097 = vadd.f32 %v4710, %v5081
    %v5098 = vadd.f32 %v4711, %v5082
    %v5099 = vadd.f32 %v4712, %v5083
    %v5100 = vadd.f32 %v4713, %v5084
    %v5101 = vadd.f32 %v4714, %v5085
    %v5102 = vadd.f32 %v4715, %v5086
    %v5103 = vadd.f32 %v4716, %v5087
    %v5104 = vadd.f32 %v4717, %v5088
    %v5105 = vadd.f32 %v4718, %v5089
    %v5106 = vadd.f32 %v4719, %v5090
    %v5107 = vadd.f32 %v4720, %v5091
    %v5108 = vadd.f32 %v4721, %v5092
    %v5109 = vld [vmem:[#allocation2 + $0x20] sm:$0xff]
    %v5110 = vld [vmem:[#allocation2 + $0x28] sm:$0xff]
    %v5111 = vld [vmem:[#allocation2 + $0x60] sm:$0xff]
    %v5112 = vld [vmem:[#allocation2 + $0x68] sm:$0xff]
    %v5113 = vld [vmem:[#allocation2 + $0xa0] sm:$0xff]
    %v5114 = vld [vmem:[#allocation2 + $0xa8] sm:$0xff]
    %v5115 = vld [vmem:[#allocation2 + $0xe0] sm:$0xff]
    %v5116 = vld [vmem:[#allocation2 + $0xe8] sm:$0xff]
    %v5117 = vld [vmem:[#allocation2 + $0x120] sm:$0xff]
    %v5118 = vld [vmem:[#allocation2 + $0x128] sm:$0xff]
    %v5119 = vld [vmem:[#allocation2 + $0x160] sm:$0xff]
    %v5120 = vld [vmem:[#allocation2 + $0x168] sm:$0xff]
    %v5121 = vld [vmem:[#allocation2 + $0x1a0] sm:$0xff]
    %v5122 = vld [vmem:[#allocation2 + $0x1a8] sm:$0xff]
    %v5123 = vld [vmem:[#allocation2 + $0x1e0] sm:$0xff]
    %v5124 = vld [vmem:[#allocation2 + $0x1e8] sm:$0xff]
    %v5125 = vld [vmem:[#allocation4 + $0x100] sm:$0xff]
    %v5126 = vld [vmem:[#allocation4 + $0x108] sm:$0xff]
    %v5127 = vld [vmem:[#allocation4 + $0x110] sm:$0xff]
    %v5128 = vld [vmem:[#allocation4 + $0x118] sm:$0xff]
    %v5129 = vld [vmem:[#allocation4 + $0x120] sm:$0xff]
    %v5130 = vld [vmem:[#allocation4 + $0x128] sm:$0xff]
    %v5131 = vld [vmem:[#allocation4 + $0x130] sm:$0xff]
    %v5132 = vld [vmem:[#allocation4 + $0x138] sm:$0xff]
    %v5133 = vld [vmem:[#allocation4 + $0x140] sm:$0xff]
    %v5134 = vld [vmem:[#allocation4 + $0x148] sm:$0xff]
    %v5135 = vld [vmem:[#allocation4 + $0x150] sm:$0xff]
    %v5136 = vld [vmem:[#allocation4 + $0x158] sm:$0xff]
    %v5137 = vld [vmem:[#allocation4 + $0x160] sm:$0xff]
    %v5138 = vld [vmem:[#allocation4 + $0x168] sm:$0xff]
    %v5139 = vld [vmem:[#allocation4 + $0x170] sm:$0xff]
    %v5140 = vld [vmem:[#allocation4 + $0x178] sm:$0xff]
    %v5141 = vld [vmem:[#allocation5 + $0x100] sm:$0xff]
    %v5142 = vld [vmem:[#allocation5 + $0x108] sm:$0xff]
    %v5143 = vld [vmem:[#allocation5 + $0x110] sm:$0xff]
    %v5144 = vld [vmem:[#allocation5 + $0x118] sm:$0xff]
    %v5145 = vld [vmem:[#allocation5 + $0x120] sm:$0xff]
    %v5146 = vld [vmem:[#allocation5 + $0x128] sm:$0xff]
    %v5147 = vld [vmem:[#allocation5 + $0x130] sm:$0xff]
    %v5148 = vld [vmem:[#allocation5 + $0x138] sm:$0xff]
    %v5149 = vld [vmem:[#allocation5 + $0x140] sm:$0xff]
    %v5150 = vld [vmem:[#allocation5 + $0x148] sm:$0xff]
    %v5151 = vld [vmem:[#allocation5 + $0x150] sm:$0xff]
    %v5152 = vld [vmem:[#allocation5 + $0x158] sm:$0xff]
    %v5153 = vld [vmem:[#allocation5 + $0x160] sm:$0xff]
    %v5154 = vld [vmem:[#allocation5 + $0x168] sm:$0xff]
    %v5155 = vld [vmem:[#allocation5 + $0x170] sm:$0xff]
    %v5156 = vld [vmem:[#allocation5 + $0x178] sm:$0xff]
    %5157 = vmatprep.subr.bf16.mxu0 0
    %5158 = vmatpush1.bf16.msra.mxu0 %v5141
    %5159 = vmatprep.subr.bf16.mxu0 0
    %5160 = vmatpush1.bf16.msra.mxu0 %v5142
    %5161 = vmatprep.subr.bf16.mxu0 0
    %5162 = vmatpush1.bf16.msra.mxu0 %v5143
    %5163 = vmatprep.subr.bf16.mxu0 0
    %5164 = vmatpush1.bf16.msra.mxu0 %v5144
    %5165 = vmatprep.subr.bf16.mxu0 0
    %5166 = vmatpush1.bf16.msra.mxu0 %v5145
    %5167 = vmatprep.subr.bf16.mxu0 0
    %5168 = vmatpush1.bf16.msra.mxu0 %v5146
    %5169 = vmatprep.subr.bf16.mxu0 0
    %5170 = vmatpush1.bf16.msra.mxu0 %v5147
    %5171 = vmatprep.subr.bf16.mxu0 0
    %5172 = vmatpush1.bf16.msra.mxu0 %v5148
    %5173 = vmatprep.subr.bf16.mxu0 0
    %5174 = vmatpush1.bf16.msra.mxu0 %v5149
    %5175 = vmatprep.subr.bf16.mxu0 0
    %5176 = vmatpush1.bf16.msra.mxu0 %v5150
    %5177 = vmatprep.subr.bf16.mxu0 0
    %5178 = vmatpush1.bf16.msra.mxu0 %v5151
    %5179 = vmatprep.subr.bf16.mxu0 0
    %5180 = vmatpush1.bf16.msra.mxu0 %v5152
    %5181 = vmatprep.subr.bf16.mxu0 0
    %5182 = vmatpush1.bf16.msra.mxu0 %v5153
    %5183 = vmatprep.subr.bf16.mxu0 0
    %5184 = vmatpush1.bf16.msra.mxu0 %v5154
    %5185 = vmatprep.subr.bf16.mxu0 0
    %5186 = vmatpush1.bf16.msra.mxu0 %v5155
    %5187 = vmatprep.subr.bf16.mxu0 0
    %5188 = vmatpush1.bf16.msra.mxu0 %v5156
    %5189 = vmatprep.mubr.bf16.mxu0 %v5110
    %5190 = vmatmul.mubr.bf16.gmra.mrb[0].mxu0 %v5109
    %v5191 = vpop.f32.mrb[0].mxu0
    %v5192 = vadd.f32 0.0, %v5191
    %v5193 = vpop.f32.mrb[0].mxu0
    %v5194 = vpop.f32.mrb[0].mxu0
    %v5195 = vadd.f32 0.0, %v5194
    %v5196 = vpop.f32.mrb[0].mxu0
    %5197 = vmatprep.mubr.bf16.mxu0 %v5112
    %5198 = vmatmul.mubr.bf16.gmra.mrb[0].mxu0 %v5111
    %v5199 = vpop.f32.mrb[0].mxu0
    %v5200 = vadd.f32 0.0, %v5199
    %v5201 = vpop.f32.mrb[0].mxu0
    %v5202 = vpop.f32.mrb[0].mxu0
    %v5203 = vadd.f32 0.0, %v5202
    %v5204 = vpop.f32.mrb[0].mxu0
    %5205 = vmatprep.mubr.bf16.mxu0 %v5114
    %5206 = vmatmul.mubr.bf16.gmra.mrb[0].mxu0 %v5113
    %v5207 = vpop.f32.mrb[0].mxu0
    %v5208 = vadd.f32 0.0, %v5207
    %v5209 = vpop.f32.mrb[0].mxu0
    %v5210 = vpop.f32.mrb[0].mxu0
    %v5211 = vadd.f32 0.0, %v5210
    %v5212 = vpop.f32.mrb[0].mxu0
    %5213 = vmatprep.mubr.bf16.mxu0 %v5116
    %5214 = vmatmul.mubr.bf16.gmra.mrb[0].mxu0 %v5115
    %v5215 = vpop.f32.mrb[0].mxu0
    %v5216 = vadd.f32 0.0, %v5215
    %v5217 = vpop.f32.mrb[0].mxu0
    %v5218 = vpop.f32.mrb[0].mxu0
    %v5219 = vadd.f32 0.0, %v5218
    %v5220 = vpop.f32.mrb[0].mxu0
    %5221 = vmatprep.mubr.bf16.mxu0 %v5118
    %5222 = vmatmul.mubr.bf16.gmra.mrb[0].mxu0 %v5117
    %v5223 = vpop.f32.mrb[0].mxu0
    %v5224 = vadd.f32 0.0, %v5223
    %v5225 = vpop.f32.mrb[0].mxu0
    %v5226 = vpop.f32.mrb[0].mxu0
    %v5227 = vadd.f32 0.0, %v5226
    %v5228 = vpop.f32.mrb[0].mxu0
    %5229 = vmatprep.mubr.bf16.mxu0 %v5120
    %5230 = vmatmul.mubr.bf16.gmra.mrb[0].mxu0 %v5119
    %v5231 = vpop.f32.mrb[0].mxu0
    %v5232 = vadd.f32 0.0, %v5231
    %v5233 = vpop.f32.mrb[0].mxu0
    %v5234 = vpop.f32.mrb[0].mxu0
    %v5235 = vadd.f32 0.0, %v5234
    %v5236 = vpop.f32.mrb[0].mxu0
    %5237 = vmatprep.mubr.bf16.mxu0 %v5122
    %5238 = vmatmul.mubr.bf16.gmra.mrb[0].mxu0 %v5121
    %v5239 = vpop.f32.mrb[0].mxu0
    %v5240 = vadd.f32 0.0, %v5239
    %v5241 = vpop.f32.mrb[0].mxu0
    %v5242 = vpop.f32.mrb[0].mxu0
    %v5243 = vadd.f32 0.0, %v5242
    %v5244 = vpop.f32.mrb[0].mxu0
    %5245 = vmatprep.mubr.bf16.mxu0 %v5124
    %5246 = vmatmul.mubr.bf16.gmra.mrb[0].mxu0 %v5123
    %v5247 = vpop.f32.mrb[0].mxu0
    %v5248 = vadd.f32 0.0, %v5247
    %v5249 = vpop.f32.mrb[0].mxu0
    %v5250 = vpop.f32.mrb[0].mxu0
    %v5251 = vadd.f32 0.0, %v5250
    %v5252 = vpop.f32.mrb[0].mxu0
    %5253 = vdwg.mxu0
    %5254 = vmatprep.subr.bf16.mxu0 0
    %5255 = vmatpush1.bf16.msra.mxu0 %v5125
    %5256 = vmatprep.subr.bf16.mxu0 0
    %5257 = vmatpush1.bf16.msra.mxu0 %v5126
    %5258 = vmatprep.subr.bf16.mxu0 0
    %5259 = vmatpush1.bf16.msra.mxu0 %v5127
    %5260 = vmatprep.subr.bf16.mxu0 0
    %5261 = vmatpush1.bf16.msra.mxu0 %v5128
    %5262 = vmatprep.subr.bf16.mxu0 0
    %5263 = vmatpush1.bf16.msra.mxu0 %v5129
    %5264 = vmatprep.subr.bf16.mxu0 0
    %5265 = vmatpush1.bf16.msra.mxu0 %v5130
    %5266 = vmatprep.subr.bf16.mxu0 0
    %5267 = vmatpush1.bf16.msra.mxu0 %v5131
    %5268 = vmatprep.subr.bf16.mxu0 0
    %5269 = vmatpush1.bf16.msra.mxu0 %v5132
    %5270 = vmatprep.subr.bf16.mxu0 0
    %5271 = vmatpush1.bf16.msra.mxu0 %v5133
    %5272 = vmatprep.subr.bf16.mxu0 0
    %5273 = vmatpush1.bf16.msra.mxu0 %v5134
    %5274 = vmatprep.subr.bf16.mxu0 0
    %5275 = vmatpush1.bf16.msra.mxu0 %v5135
    %5276 = vmatprep.subr.bf16.mxu0 0
    %5277 = vmatpush1.bf16.msra.mxu0 %v5136
    %5278 = vmatprep.subr.bf16.mxu0 0
    %5279 = vmatpush1.bf16.msra.mxu0 %v5137
    %5280 = vmatprep.subr.bf16.mxu0 0
    %5281 = vmatpush1.bf16.msra.mxu0 %v5138
    %5282 = vmatprep.subr.bf16.mxu0 0
    %5283 = vmatpush1.bf16.msra.mxu0 %v5139
    %5284 = vmatprep.subr.bf16.mxu0 0
    %5285 = vmatpush1.bf16.msra.mxu0 %v5140
    %5286 = vmatprep.mubr.bf16.mxu0 %v5110
    %5287 = vmatmul.mubr.bf16.gmra.mrb[0].mxu0 %v5109
    %v5288 = vpop.f32.mrb[0].mxu0
    %v5289 = vadd.f32 %v5192, %v5288
    %v5290 = vpop.f32.mrb[0].mxu0
    %v5291 = vpop.f32.mrb[0].mxu0
    %v5292 = vadd.f32 %v5195, %v5291
    %v5293 = vpop.f32.mrb[0].mxu0
    %5294 = vmatprep.mubr.bf16.mxu0 %v5112
    %5295 = vmatmul.mubr.bf16.gmra.mrb[0].mxu0 %v5111
    %v5296 = vpop.f32.mrb[0].mxu0
    %v5297 = vadd.f32 %v5200, %v5296
    %v5298 = vpop.f32.mrb[0].mxu0
    %v5299 = vpop.f32.mrb[0].mxu0
    %v5300 = vadd.f32 %v5203, %v5299
    %v5301 = vpop.f32.mrb[0].mxu0
    %5302 = vmatprep.mubr.bf16.mxu0 %v5114
    %5303 = vmatmul.mubr.bf16.gmra.mrb[0].mxu0 %v5113
    %v5304 = vpop.f32.mrb[0].mxu0
    %v5305 = vadd.f32 %v5208, %v5304
    %v5306 = vpop.f32.mrb[0].mxu0
    %v5307 = vpop.f32.mrb[0].mxu0
    %v5308 = vadd.f32 %v5211, %v5307
    %v5309 = vpop.f32.mrb[0].mxu0
    %5310 = vmatprep.mubr.bf16.mxu0 %v5116
    %5311 = vmatmul.mubr.bf16.gmra.mrb[0].mxu0 %v5115
    %v5312 = vpop.f32.mrb[0].mxu0
    %v5313 = vadd.f32 %v5216, %v5312
    %v5314 = vpop.f32.mrb[0].mxu0
    %v5315 = vpop.f32.mrb[0].mxu0
    %v5316 = vadd.f32 %v5219, %v5315
    %v5317 = vpop.f32.mrb[0].mxu0
    %5318 = vmatprep.mubr.bf16.mxu0 %v5118
    %5319 = vmatmul.mubr.bf16.gmra.mrb[0].mxu0 %v5117
    %v5320 = vpop.f32.mrb[0].mxu0
    %v5321 = vadd.f32 %v5224, %v5320
    %v5322 = vpop.f32.mrb[0].mxu0
    %v5323 = vpop.f32.mrb[0].mxu0
    %v5324 = vadd.f32 %v5227, %v5323
    %v5325 = vpop.f32.mrb[0].mxu0
    %5326 = vmatprep.mubr.bf16.mxu0 %v5120
    %5327 = vmatmul.mubr.bf16.gmra.mrb[0].mxu0 %v5119
    %v5328 = vpop.f32.mrb[0].mxu0
    %v5329 = vadd.f32 %v5232, %v5328
    %v5330 = vpop.f32.mrb[0].mxu0
    %v5331 = vpop.f32.mrb[0].mxu0
    %v5332 = vadd.f32 %v5235, %v5331
    %v5333 = vpop.f32.mrb[0].mxu0
    %5334 = vmatprep.mubr.bf16.mxu0 %v5122
    %5335 = vmatmul.mubr.bf16.gmra.mrb[0].mxu0 %v5121
    %v5336 = vpop.f32.mrb[0].mxu0
    %v5337 = vadd.f32 %v5240, %v5336
    %v5338 = vpop.f32.mrb[0].mxu0
    %v5339 = vpop.f32.mrb[0].mxu0
    %v5340 = vadd.f32 %v5243, %v5339
    %v5341 = vpop.f32.mrb[0].mxu0
    %5342 = vmatprep.mubr.bf16.mxu0 %v5124
    %5343 = vmatmul.mubr.bf16.gmra.mrb[0].mxu0 %v5123
    %v5344 = vpop.f32.mrb[0].mxu0
    %v5345 = vadd.f32 %v5248, %v5344
    %v5346 = vpop.f32.mrb[0].mxu0
    %v5347 = vpop.f32.mrb[0].mxu0
    %v5348 = vadd.f32 %v5251, %v5347
    %v5349 = vpop.f32.mrb[0].mxu0
    %5350 = vdwg.mxu0
    %v5351 = vld [vmem:[#allocation3 + $0x20] sm:$0xff]
    %v5352 = vld [vmem:[#allocation3 + $0x28] sm:$0xff]
    %v5353 = vld [vmem:[#allocation3 + $0x60] sm:$0xff]
    %v5354 = vld [vmem:[#allocation3 + $0x68] sm:$0xff]
    %v5355 = vld [vmem:[#allocation3 + $0xa0] sm:$0xff]
    %v5356 = vld [vmem:[#allocation3 + $0xa8] sm:$0xff]
    %v5357 = vld [vmem:[#allocation3 + $0xe0] sm:$0xff]
    %v5358 = vld [vmem:[#allocation3 + $0xe8] sm:$0xff]
    %v5359 = vld [vmem:[#allocation3 + $0x120] sm:$0xff]
    %v5360 = vld [vmem:[#allocation3 + $0x128] sm:$0xff]
    %v5361 = vld [vmem:[#allocation3 + $0x160] sm:$0xff]
    %v5362 = vld [vmem:[#allocation3 + $0x168] sm:$0xff]
    %v5363 = vld [vmem:[#allocation3 + $0x1a0] sm:$0xff]
    %v5364 = vld [vmem:[#allocation3 + $0x1a8] sm:$0xff]
    %v5365 = vld [vmem:[#allocation3 + $0x1e0] sm:$0xff]
    %v5366 = vld [vmem:[#allocation3 + $0x1e8] sm:$0xff]
    %5367 = vmatprep.subr.bf16.mxu0 0
    %5368 = vmatpush1.bf16.msra.mxu0 %v5125
    %5369 = vmatprep.subr.bf16.mxu0 0
    %5370 = vmatpush1.bf16.msra.mxu0 %v5126
    %5371 = vmatprep.subr.bf16.mxu0 0
    %5372 = vmatpush1.bf16.msra.mxu0 %v5127
    %5373 = vmatprep.subr.bf16.mxu0 0
    %5374 = vmatpush1.bf16.msra.mxu0 %v5128
    %5375 = vmatprep.subr.bf16.mxu0 0
    %5376 = vmatpush1.bf16.msra.mxu0 %v5129
    %5377 = vmatprep.subr.bf16.mxu0 0
    %5378 = vmatpush1.bf16.msra.mxu0 %v5130
    %5379 = vmatprep.subr.bf16.mxu0 0
    %5380 = vmatpush1.bf16.msra.mxu0 %v5131
    %5381 = vmatprep.subr.bf16.mxu0 0
    %5382 = vmatpush1.bf16.msra.mxu0 %v5132
    %5383 = vmatprep.subr.bf16.mxu0 0
    %5384 = vmatpush1.bf16.msra.mxu0 %v5133
    %5385 = vmatprep.subr.bf16.mxu0 0
    %5386 = vmatpush1.bf16.msra.mxu0 %v5134
    %5387 = vmatprep.subr.bf16.mxu0 0
    %5388 = vmatpush1.bf16.msra.mxu0 %v5135
    %5389 = vmatprep.subr.bf16.mxu0 0
    %5390 = vmatpush1.bf16.msra.mxu0 %v5136
    %5391 = vmatprep.subr.bf16.mxu0 0
    %5392 = vmatpush1.bf16.msra.mxu0 %v5137
    %5393 = vmatprep.subr.bf16.mxu0 0
    %5394 = vmatpush1.bf16.msra.mxu0 %v5138
    %5395 = vmatprep.subr.bf16.mxu0 0
    %5396 = vmatpush1.bf16.msra.mxu0 %v5139
    %5397 = vmatprep.subr.bf16.mxu0 0
    %5398 = vmatpush1.bf16.msra.mxu0 %v5140
    %5399 = vmatprep.mubr.bf16.mxu0 %v5352
    %5400 = vmatmul.mubr.bf16.gmra.mrb[0].mxu0 %v5351
    %v5401 = vpop.f32.mrb[0].mxu0
    %v5402 = vadd.f32 0.0, %v5401
    %v5403 = vpop.f32.mrb[0].mxu0
    %v5404 = vpop.f32.mrb[0].mxu0
    %v5405 = vadd.f32 0.0, %v5404
    %v5406 = vpop.f32.mrb[0].mxu0
    %5407 = vmatprep.mubr.bf16.mxu0 %v5354
    %5408 = vmatmul.mubr.bf16.gmra.mrb[0].mxu0 %v5353
    %v5409 = vpop.f32.mrb[0].mxu0
    %v5410 = vadd.f32 0.0, %v5409
    %v5411 = vpop.f32.mrb[0].mxu0
    %v5412 = vpop.f32.mrb[0].mxu0
    %v5413 = vadd.f32 0.0, %v5412
    %v5414 = vpop.f32.mrb[0].mxu0
    %5415 = vmatprep.mubr.bf16.mxu0 %v5356
    %5416 = vmatmul.mubr.bf16.gmra.mrb[0].mxu0 %v5355
    %v5417 = vpop.f32.mrb[0].mxu0
    %v5418 = vadd.f32 0.0, %v5417
    %v5419 = vpop.f32.mrb[0].mxu0
    %v5420 = vpop.f32.mrb[0].mxu0
    %v5421 = vadd.f32 0.0, %v5420
    %v5422 = vpop.f32.mrb[0].mxu0
    %5423 = vmatprep.mubr.bf16.mxu0 %v5358
    %5424 = vmatmul.mubr.bf16.gmra.mrb[0].mxu0 %v5357
    %v5425 = vpop.f32.mrb[0].mxu0
    %v5426 = vadd.f32 0.0, %v5425
    %v5427 = vpop.f32.mrb[0].mxu0
    %v5428 = vpop.f32.mrb[0].mxu0
    %v5429 = vadd.f32 0.0, %v5428
    %v5430 = vpop.f32.mrb[0].mxu0
    %5431 = vmatprep.mubr.bf16.mxu0 %v5360
    %5432 = vmatmul.mubr.bf16.gmra.mrb[0].mxu0 %v5359
    %v5433 = vpop.f32.mrb[0].mxu0
    %v5434 = vadd.f32 0.0, %v5433
    %v5435 = vpop.f32.mrb[0].mxu0
    %v5436 = vpop.f32.mrb[0].mxu0
    %v5437 = vadd.f32 0.0, %v5436
    %v5438 = vpop.f32.mrb[0].mxu0
    %5439 = vmatprep.mubr.bf16.mxu0 %v5362
    %5440 = vmatmul.mubr.bf16.gmra.mrb[0].mxu0 %v5361
    %v5441 = vpop.f32.mrb[0].mxu0
    %v5442 = vadd.f32 0.0, %v5441
    %v5443 = vpop.f32.mrb[0].mxu0
    %v5444 = vpop.f32.mrb[0].mxu0
    %v5445 = vadd.f32 0.0, %v5444
    %v5446 = vpop.f32.mrb[0].mxu0
    %5447 = vmatprep.mubr.bf16.mxu0 %v5364
    %5448 = vmatmul.mubr.bf16.gmra.mrb[0].mxu0 %v5363
    %v5449 = vpop.f32.mrb[0].mxu0
    %v5450 = vadd.f32 0.0, %v5449
    %v5451 = vpop.f32.mrb[0].mxu0
    %v5452 = vpop.f32.mrb[0].mxu0
    %v5453 = vadd.f32 0.0, %v5452
    %v5454 = vpop.f32.mrb[0].mxu0
    %5455 = vmatprep.mubr.bf16.mxu0 %v5366
    %5456 = vmatmul.mubr.bf16.gmra.mrb[0].mxu0 %v5365
    %v5457 = vpop.f32.mrb[0].mxu0
    %v5458 = vadd.f32 0.0, %v5457
    %v5459 = vpop.f32.mrb[0].mxu0
    %v5460 = vpop.f32.mrb[0].mxu0
    %v5461 = vadd.f32 0.0, %v5460
    %v5462 = vpop.f32.mrb[0].mxu0
    %5463 = vdwg.mxu0
    %v5464 = vadd.f32 %v5289, %v5402
    %v5465 = vadd.f32 %v5292, %v5405
    %v5466 = vadd.f32 %v5297, %v5410
    %v5467 = vadd.f32 %v5300, %v5413
    %v5468 = vadd.f32 %v5305, %v5418
    %v5469 = vadd.f32 %v5308, %v5421
    %v5470 = vadd.f32 %v5313, %v5426
    %v5471 = vadd.f32 %v5316, %v5429
    %v5472 = vadd.f32 %v5321, %v5434
    %v5473 = vadd.f32 %v5324, %v5437
    %v5474 = vadd.f32 %v5329, %v5442
    %v5475 = vadd.f32 %v5332, %v5445
    %v5476 = vadd.f32 %v5337, %v5450
    %v5477 = vadd.f32 %v5340, %v5453
    %v5478 = vadd.f32 %v5345, %v5458
    %v5479 = vadd.f32 %v5348, %v5461
    %v5480 = vadd.f32 %v5093, %v5464
    %v5481 = vadd.f32 %v5094, %v5465
    %v5482 = vadd.f32 %v5095, %v5466
    %v5483 = vadd.f32 %v5096, %v5467
    %v5484 = vadd.f32 %v5097, %v5468
    %v5485 = vadd.f32 %v5098, %v5469
    %v5486 = vadd.f32 %v5099, %v5470
    %v5487 = vadd.f32 %v5100, %v5471
    %v5488 = vadd.f32 %v5101, %v5472
    %v5489 = vadd.f32 %v5102, %v5473
    %v5490 = vadd.f32 %v5103, %v5474
    %v5491 = vadd.f32 %v5104, %v5475
    %v5492 = vadd.f32 %v5105, %v5476
    %v5493 = vadd.f32 %v5106, %v5477
    %v5494 = vadd.f32 %v5107, %v5478
    %v5495 = vadd.f32 %v5108, %v5479
    %v5496 = vld [vmem:[#allocation2 + $0x30] sm:$0xff]
    %v5497 = vld [vmem:[#allocation2 + $0x38] sm:$0xff]
    %v5498 = vld [vmem:[#allocation2 + $0x70] sm:$0xff]
    %v5499 = vld [vmem:[#allocation2 + $0x78] sm:$0xff]
    %v5500 = vld [vmem:[#allocation2 + $0xb0] sm:$0xff]
    %v5501 = vld [vmem:[#allocation2 + $0xb8] sm:$0xff]
    %v5502 = vld [vmem:[#allocation2 + $0xf0] sm:$0xff]
    %v5503 = vld [vmem:[#allocation2 + $0xf8] sm:$0xff]
    %v5504 = vld [vmem:[#allocation2 + $0x130] sm:$0xff]
    %v5505 = vld [vmem:[#allocation2 + $0x138] sm:$0xff]
    %v5506 = vld [vmem:[#allocation2 + $0x170] sm:$0xff]
    %v5507 = vld [vmem:[#allocation2 + $0x178] sm:$0xff]
    %v5508 = vld [vmem:[#allocation2 + $0x1b0] sm:$0xff]
    %v5509 = vld [vmem:[#allocation2 + $0x1b8] sm:$0xff]
    %v5510 = vld [vmem:[#allocation2 + $0x1f0] sm:$0xff]
    %v5511 = vld [vmem:[#allocation2 + $0x1f8] sm:$0xff]
    %v5512 = vld [vmem:[#allocation4 + $0x180] sm:$0xff]
    %v5513 = vld [vmem:[#allocation4 + $0x188] sm:$0xff]
    %v5514 = vld [vmem:[#allocation4 + $0x190] sm:$0xff]
    %v5515 = vld [vmem:[#allocation4 + $0x198] sm:$0xff]
    %v5516 = vld [vmem:[#allocation4 + $0x1a0] sm:$0xff]
    %v5517 = vld [vmem:[#allocation4 + $0x1a8] sm:$0xff]
    %v5518 = vld [vmem:[#allocation4 + $0x1b0] sm:$0xff]
    %v5519 = vld [vmem:[#allocation4 + $0x1b8] sm:$0xff]
    %v5520 = vld [vmem:[#allocation4 + $0x1c0] sm:$0xff]
    %v5521 = vld [vmem:[#allocation4 + $0x1c8] sm:$0xff]
    %v5522 = vld [vmem:[#allocation4 + $0x1d0] sm:$0xff]
    %v5523 = vld [vmem:[#allocation4 + $0x1d8] sm:$0xff]
    %v5524 = vld [vmem:[#allocation4 + $0x1e0] sm:$0xff]
    %v5525 = vld [vmem:[#allocation4 + $0x1e8] sm:$0xff]
    %v5526 = vld [vmem:[#allocation4 + $0x1f0] sm:$0xff]
    %v5527 = vld [vmem:[#allocation4 + $0x1f8] sm:$0xff]
    %v5528 = vld [vmem:[#allocation5 + $0x180] sm:$0xff]
    %v5529 = vld [vmem:[#allocation5 + $0x188] sm:$0xff]
    %v5530 = vld [vmem:[#allocation5 + $0x190] sm:$0xff]
    %v5531 = vld [vmem:[#allocation5 + $0x198] sm:$0xff]
    %v5532 = vld [vmem:[#allocation5 + $0x1a0] sm:$0xff]
    %v5533 = vld [vmem:[#allocation5 + $0x1a8] sm:$0xff]
    %v5534 = vld [vmem:[#allocation5 + $0x1b0] sm:$0xff]
    %v5535 = vld [vmem:[#allocation5 + $0x1b8] sm:$0xff]
    %v5536 = vld [vmem:[#allocation5 + $0x1c0] sm:$0xff]
    %v5537 = vld [vmem:[#allocation5 + $0x1c8] sm:$0xff]
    %v5538 = vld [vmem:[#allocation5 + $0x1d0] sm:$0xff]
    %v5539 = vld [vmem:[#allocation5 + $0x1d8] sm:$0xff]
    %v5540 = vld [vmem:[#allocation5 + $0x1e0] sm:$0xff]
    %v5541 = vld [vmem:[#allocation5 + $0x1e8] sm:$0xff]
    %v5542 = vld [vmem:[#allocation5 + $0x1f0] sm:$0xff]
    %v5543 = vld [vmem:[#allocation5 + $0x1f8] sm:$0xff]
    %5544 = vmatprep.subr.bf16.mxu0 0
    %5545 = vmatpush1.bf16.msra.mxu0 %v5528
    %5546 = vmatprep.subr.bf16.mxu0 0
    %5547 = vmatpush1.bf16.msra.mxu0 %v5529
    %5548 = vmatprep.subr.bf16.mxu0 0
    %5549 = vmatpush1.bf16.msra.mxu0 %v5530
    %5550 = vmatprep.subr.bf16.mxu0 0
    %5551 = vmatpush1.bf16.msra.mxu0 %v5531
    %5552 = vmatprep.subr.bf16.mxu0 0
    %5553 = vmatpush1.bf16.msra.mxu0 %v5532
    %5554 = vmatprep.subr.bf16.mxu0 0
    %5555 = vmatpush1.bf16.msra.mxu0 %v5533
    %5556 = vmatprep.subr.bf16.mxu0 0
    %5557 = vmatpush1.bf16.msra.mxu0 %v5534
    %5558 = vmatprep.subr.bf16.mxu0 0
    %5559 = vmatpush1.bf16.msra.mxu0 %v5535
    %5560 = vmatprep.subr.bf16.mxu0 0
    %5561 = vmatpush1.bf16.msra.mxu0 %v5536
    %5562 = vmatprep.subr.bf16.mxu0 0
    %5563 = vmatpush1.bf16.msra.mxu0 %v5537
    %5564 = vmatprep.subr.bf16.mxu0 0
    %5565 = vmatpush1.bf16.msra.mxu0 %v5538
    %5566 = vmatprep.subr.bf16.mxu0 0
    %5567 = vmatpush1.bf16.msra.mxu0 %v5539
    %5568 = vmatprep.subr.bf16.mxu0 0
    %5569 = vmatpush1.bf16.msra.mxu0 %v5540
    %5570 = vmatprep.subr.bf16.mxu0 0
    %5571 = vmatpush1.bf16.msra.mxu0 %v5541
    %5572 = vmatprep.subr.bf16.mxu0 0
    %5573 = vmatpush1.bf16.msra.mxu0 %v5542
    %5574 = vmatprep.subr.bf16.mxu0 0
    %5575 = vmatpush1.bf16.msra.mxu0 %v5543
    %5576 = vmatprep.mubr.bf16.mxu0 %v5497
    %5577 = vmatmul.mubr.bf16.gmra.mrb[0].mxu0 %v5496
    %v5578 = vpop.f32.mrb[0].mxu0
    %v5579 = vadd.f32 0.0, %v5578
    %v5580 = vpop.f32.mrb[0].mxu0
    %v5581 = vpop.f32.mrb[0].mxu0
    %v5582 = vadd.f32 0.0, %v5581
    %v5583 = vpop.f32.mrb[0].mxu0
    %5584 = vmatprep.mubr.bf16.mxu0 %v5499
    %5585 = vmatmul.mubr.bf16.gmra.mrb[0].mxu0 %v5498
    %v5586 = vpop.f32.mrb[0].mxu0
    %v5587 = vadd.f32 0.0, %v5586
    %v5588 = vpop.f32.mrb[0].mxu0
    %v5589 = vpop.f32.mrb[0].mxu0
    %v5590 = vadd.f32 0.0, %v5589
    %v5591 = vpop.f32.mrb[0].mxu0
    %5592 = vmatprep.mubr.bf16.mxu0 %v5501
    %5593 = vmatmul.mubr.bf16.gmra.mrb[0].mxu0 %v5500
    %v5594 = vpop.f32.mrb[0].mxu0
    %v5595 = vadd.f32 0.0, %v5594
    %v5596 = vpop.f32.mrb[0].mxu0
    %v5597 = vpop.f32.mrb[0].mxu0
    %v5598 = vadd.f32 0.0, %v5597
    %v5599 = vpop.f32.mrb[0].mxu0
    %5600 = vmatprep.mubr.bf16.mxu0 %v5503
    %5601 = vmatmul.mubr.bf16.gmra.mrb[0].mxu0 %v5502
    %v5602 = vpop.f32.mrb[0].mxu0
    %v5603 = vadd.f32 0.0, %v5602
    %v5604 = vpop.f32.mrb[0].mxu0
    %v5605 = vpop.f32.mrb[0].mxu0
    %v5606 = vadd.f32 0.0, %v5605
    %v5607 = vpop.f32.mrb[0].mxu0
    %5608 = vmatprep.mubr.bf16.mxu0 %v5505
    %5609 = vmatmul.mubr.bf16.gmra.mrb[0].mxu0 %v5504
    %v5610 = vpop.f32.mrb[0].mxu0
    %v5611 = vadd.f32 0.0, %v5610
    %v5612 = vpop.f32.mrb[0].mxu0
    %v5613 = vpop.f32.mrb[0].mxu0
    %v5614 = vadd.f32 0.0, %v5613
    %v5615 = vpop.f32.mrb[0].mxu0
    %5616 = vmatprep.mubr.bf16.mxu0 %v5507
    %5617 = vmatmul.mubr.bf16.gmra.mrb[0].mxu0 %v5506
    %v5618 = vpop.f32.mrb[0].mxu0
    %v5619 = vadd.f32 0.0, %v5618
    %v5620 = vpop.f32.mrb[0].mxu0
    %v5621 = vpop.f32.mrb[0].mxu0
    %v5622 = vadd.f32 0.0, %v5621
    %v5623 = vpop.f32.mrb[0].mxu0
    %5624 = vmatprep.mubr.bf16.mxu0 %v5509
    %5625 = vmatmul.mubr.bf16.gmra.mrb[0].mxu0 %v5508
    %v5626 = vpop.f32.mrb[0].mxu0
    %v5627 = vadd.f32 0.0, %v5626
    %v5628 = vpop.f32.mrb[0].mxu0
    %v5629 = vpop.f32.mrb[0].mxu0
    %v5630 = vadd.f32 0.0, %v5629
    %v5631 = vpop.f32.mrb[0].mxu0
    %5632 = vmatprep.mubr.bf16.mxu0 %v5511
    %5633 = vmatmul.mubr.bf16.gmra.mrb[0].mxu0 %v5510
    %v5634 = vpop.f32.mrb[0].mxu0
    %v5635 = vadd.f32 0.0, %v5634
    %v5636 = vpop.f32.mrb[0].mxu0
    %v5637 = vpop.f32.mrb[0].mxu0
    %v5638 = vadd.f32 0.0, %v5637
    %v5639 = vpop.f32.mrb[0].mxu0
    %5640 = vdwg.mxu0
    %5641 = vmatprep.subr.bf16.mxu0 0
    %5642 = vmatpush1.bf16.msra.mxu0 %v5512
    %5643 = vmatprep.subr.bf16.mxu0 0
    %5644 = vmatpush1.bf16.msra.mxu0 %v5513
    %5645 = vmatprep.subr.bf16.mxu0 0
    %5646 = vmatpush1.bf16.msra.mxu0 %v5514
    %5647 = vmatprep.subr.bf16.mxu0 0
    %5648 = vmatpush1.bf16.msra.mxu0 %v5515
    %5649 = vmatprep.subr.bf16.mxu0 0
    %5650 = vmatpush1.bf16.msra.mxu0 %v5516
    %5651 = vmatprep.subr.bf16.mxu0 0
    %5652 = vmatpush1.bf16.msra.mxu0 %v5517
    %5653 = vmatprep.subr.bf16.mxu0 0
    %5654 = vmatpush1.bf16.msra.mxu0 %v5518
    %5655 = vmatprep.subr.bf16.mxu0 0
    %5656 = vmatpush1.bf16.msra.mxu0 %v5519
    %5657 = vmatprep.subr.bf16.mxu0 0
    %5658 = vmatpush1.bf16.msra.mxu0 %v5520
    %5659 = vmatprep.subr.bf16.mxu0 0
    %5660 = vmatpush1.bf16.msra.mxu0 %v5521
    %5661 = vmatprep.subr.bf16.mxu0 0
    %5662 = vmatpush1.bf16.msra.mxu0 %v5522
    %5663 = vmatprep.subr.bf16.mxu0 0
    %5664 = vmatpush1.bf16.msra.mxu0 %v5523
    %5665 = vmatprep.subr.bf16.mxu0 0
    %5666 = vmatpush1.bf16.msra.mxu0 %v5524
    %5667 = vmatprep.subr.bf16.mxu0 0
    %5668 = vmatpush1.bf16.msra.mxu0 %v5525
    %5669 = vmatprep.subr.bf16.mxu0 0
    %5670 = vmatpush1.bf16.msra.mxu0 %v5526
    %5671 = vmatprep.subr.bf16.mxu0 0
    %5672 = vmatpush1.bf16.msra.mxu0 %v5527
    %5673 = vmatprep.mubr.bf16.mxu0 %v5497
    %5674 = vmatmul.mubr.bf16.gmra.mrb[0].mxu0 %v5496
    %v5675 = vpop.f32.mrb[0].mxu0
    %v5676 = vadd.f32 %v5579, %v5675
    %v5677 = vpop.f32.mrb[0].mxu0
    %v5678 = vpop.f32.mrb[0].mxu0
    %v5679 = vadd.f32 %v5582, %v5678
    %v5680 = vpop.f32.mrb[0].mxu0
    %5681 = vmatprep.mubr.bf16.mxu0 %v5499
    %5682 = vmatmul.mubr.bf16.gmra.mrb[0].mxu0 %v5498
    %v5683 = vpop.f32.mrb[0].mxu0
    %v5684 = vadd.f32 %v5587, %v5683
    %v5685 = vpop.f32.mrb[0].mxu0
    %v5686 = vpop.f32.mrb[0].mxu0
    %v5687 = vadd.f32 %v5590, %v5686
    %v5688 = vpop.f32.mrb[0].mxu0
    %5689 = vmatprep.mubr.bf16.mxu0 %v5501
    %5690 = vmatmul.mubr.bf16.gmra.mrb[0].mxu0 %v5500
    %v5691 = vpop.f32.mrb[0].mxu0
    %v5692 = vadd.f32 %v5595, %v5691
    %v5693 = vpop.f32.mrb[0].mxu0
    %v5694 = vpop.f32.mrb[0].mxu0
    %v5695 = vadd.f32 %v5598, %v5694
    %v5696 = vpop.f32.mrb[0].mxu0
    %5697 = vmatprep.mubr.bf16.mxu0 %v5503
    %5698 = vmatmul.mubr.bf16.gmra.mrb[0].mxu0 %v5502
    %v5699 = vpop.f32.mrb[0].mxu0
    %v5700 = vadd.f32 %v5603, %v5699
    %v5701 = vpop.f32.mrb[0].mxu0
    %v5702 = vpop.f32.mrb[0].mxu0
    %v5703 = vadd.f32 %v5606, %v5702
    %v5704 = vpop.f32.mrb[0].mxu0
    %5705 = vmatprep.mubr.bf16.mxu0 %v5505
    %5706 = vmatmul.mubr.bf16.gmra.mrb[0].mxu0 %v5504
    %v5707 = vpop.f32.mrb[0].mxu0
    %v5708 = vadd.f32 %v5611, %v5707
    %v5709 = vpop.f32.mrb[0].mxu0
    %v5710 = vpop.f32.mrb[0].mxu0
    %v5711 = vadd.f32 %v5614, %v5710
    %v5712 = vpop.f32.mrb[0].mxu0
    %5713 = vmatprep.mubr.bf16.mxu0 %v5507
    %5714 = vmatmul.mubr.bf16.gmra.mrb[0].mxu0 %v5506
    %v5715 = vpop.f32.mrb[0].mxu0
    %v5716 = vadd.f32 %v5619, %v5715
    %v5717 = vpop.f32.mrb[0].mxu0
    %v5718 = vpop.f32.mrb[0].mxu0
    %v5719 = vadd.f32 %v5622, %v5718
    %v5720 = vpop.f32.mrb[0].mxu0
    %5721 = vmatprep.mubr.bf16.mxu0 %v5509
    %5722 = vmatmul.mubr.bf16.gmra.mrb[0].mxu0 %v5508
    %v5723 = vpop.f32.mrb[0].mxu0
    %v5724 = vadd.f32 %v5627, %v5723
    %v5725 = vpop.f32.mrb[0].mxu0
    %v5726 = vpop.f32.mrb[0].mxu0
    %v5727 = vadd.f32 %v5630, %v5726
    %v5728 = vpop.f32.mrb[0].mxu0
    %5729 = vmatprep.mubr.bf16.mxu0 %v5511
    %5730 = vmatmul.mubr.bf16.gmra.mrb[0].mxu0 %v5510
    %v5731 = vpop.f32.mrb[0].mxu0
    %v5732 = vadd.f32 %v5635, %v5731
    %v5733 = vpop.f32.mrb[0].mxu0
    %v5734 = vpop.f32.mrb[0].mxu0
    %v5735 = vadd.f32 %v5638, %v5734
    %v5736 = vpop.f32.mrb[0].mxu0
    %5737 = vdwg.mxu0
    %v5738 = vld [vmem:[#allocation3 + $0x30] sm:$0xff]
    %v5739 = vld [vmem:[#allocation3 + $0x38] sm:$0xff]
    %v5740 = vld [vmem:[#allocation3 + $0x70] sm:$0xff]
    %v5741 = vld [vmem:[#allocation3 + $0x78] sm:$0xff]
    %v5742 = vld [vmem:[#allocation3 + $0xb0] sm:$0xff]
    %v5743 = vld [vmem:[#allocation3 + $0xb8] sm:$0xff]
    %v5744 = vld [vmem:[#allocation3 + $0xf0] sm:$0xff]
    %v5745 = vld [vmem:[#allocation3 + $0xf8] sm:$0xff]
    %v5746 = vld [vmem:[#allocation3 + $0x130] sm:$0xff]
    %v5747 = vld [vmem:[#allocation3 + $0x138] sm:$0xff]
    %v5748 = vld [vmem:[#allocation3 + $0x170] sm:$0xff]
    %v5749 = vld [vmem:[#allocation3 + $0x178] sm:$0xff]
    %v5750 = vld [vmem:[#allocation3 + $0x1b0] sm:$0xff]
    %v5751 = vld [vmem:[#allocation3 + $0x1b8] sm:$0xff]
    %v5752 = vld [vmem:[#allocation3 + $0x1f0] sm:$0xff]
    %v5753 = vld [vmem:[#allocation3 + $0x1f8] sm:$0xff]
    %5754 = vmatprep.subr.bf16.mxu0 0
    %5755 = vmatpush1.bf16.msra.mxu0 %v5512
    %5756 = vmatprep.subr.bf16.mxu0 0
    %5757 = vmatpush1.bf16.msra.mxu0 %v5513
    %5758 = vmatprep.subr.bf16.mxu0 0
    %5759 = vmatpush1.bf16.msra.mxu0 %v5514
    %5760 = vmatprep.subr.bf16.mxu0 0
    %5761 = vmatpush1.bf16.msra.mxu0 %v5515
    %5762 = vmatprep.subr.bf16.mxu0 0
    %5763 = vmatpush1.bf16.msra.mxu0 %v5516
    %5764 = vmatprep.subr.bf16.mxu0 0
    %5765 = vmatpush1.bf16.msra.mxu0 %v5517
    %5766 = vmatprep.subr.bf16.mxu0 0
    %5767 = vmatpush1.bf16.msra.mxu0 %v5518
    %5768 = vmatprep.subr.bf16.mxu0 0
    %5769 = vmatpush1.bf16.msra.mxu0 %v5519
    %5770 = vmatprep.subr.bf16.mxu0 0
    %5771 = vmatpush1.bf16.msra.mxu0 %v5520
    %5772 = vmatprep.subr.bf16.mxu0 0
    %5773 = vmatpush1.bf16.msra.mxu0 %v5521
    %5774 = vmatprep.subr.bf16.mxu0 0
    %5775 = vmatpush1.bf16.msra.mxu0 %v5522
    %5776 = vmatprep.subr.bf16.mxu0 0
    %5777 = vmatpush1.bf16.msra.mxu0 %v5523
    %5778 = vmatprep.subr.bf16.mxu0 0
    %5779 = vmatpush1.bf16.msra.mxu0 %v5524
    %5780 = vmatprep.subr.bf16.mxu0 0
    %5781 = vmatpush1.bf16.msra.mxu0 %v5525
    %5782 = vmatprep.subr.bf16.mxu0 0
    %5783 = vmatpush1.bf16.msra.mxu0 %v5526
    %5784 = vmatprep.subr.bf16.mxu0 0
    %5785 = vmatpush1.bf16.msra.mxu0 %v5527
    %5786 = vmatprep.mubr.bf16.mxu0 %v5739
    %5787 = vmatmul.mubr.bf16.gmra.mrb[0].mxu0 %v5738
    %v5788 = vpop.f32.mrb[0].mxu0
    %v5789 = vadd.f32 0.0, %v5788
    %v5790 = vpop.f32.mrb[0].mxu0
    %v5791 = vpop.f32.mrb[0].mxu0
    %v5792 = vadd.f32 0.0, %v5791
    %v5793 = vpop.f32.mrb[0].mxu0
    %5794 = vmatprep.mubr.bf16.mxu0 %v5741
    %5795 = vmatmul.mubr.bf16.gmra.mrb[0].mxu0 %v5740
    %v5796 = vpop.f32.mrb[0].mxu0
    %v5797 = vadd.f32 0.0, %v5796
    %v5798 = vpop.f32.mrb[0].mxu0
    %v5799 = vpop.f32.mrb[0].mxu0
    %v5800 = vadd.f32 0.0, %v5799
    %v5801 = vpop.f32.mrb[0].mxu0
    %5802 = vmatprep.mubr.bf16.mxu0 %v5743
    %5803 = vmatmul.mubr.bf16.gmra.mrb[0].mxu0 %v5742
    %v5804 = vpop.f32.mrb[0].mxu0
    %v5805 = vadd.f32 0.0, %v5804
    %v5806 = vpop.f32.mrb[0].mxu0
    %v5807 = vpop.f32.mrb[0].mxu0
    %v5808 = vadd.f32 0.0, %v5807
    %v5809 = vpop.f32.mrb[0].mxu0
    %5810 = vmatprep.mubr.bf16.mxu0 %v5745
    %5811 = vmatmul.mubr.bf16.gmra.mrb[0].mxu0 %v5744
    %v5812 = vpop.f32.mrb[0].mxu0
    %v5813 = vadd.f32 0.0, %v5812
    %v5814 = vpop.f32.mrb[0].mxu0
    %v5815 = vpop.f32.mrb[0].mxu0
    %v5816 = vadd.f32 0.0, %v5815
    %v5817 = vpop.f32.mrb[0].mxu0
    %5818 = vmatprep.mubr.bf16.mxu0 %v5747
    %5819 = vmatmul.mubr.bf16.gmra.mrb[0].mxu0 %v5746
    %v5820 = vpop.f32.mrb[0].mxu0
    %v5821 = vadd.f32 0.0, %v5820
    %v5822 = vpop.f32.mrb[0].mxu0
    %v5823 = vpop.f32.mrb[0].mxu0
    %v5824 = vadd.f32 0.0, %v5823
    %v5825 = vpop.f32.mrb[0].mxu0
    %5826 = vmatprep.mubr.bf16.mxu0 %v5749
    %5827 = vmatmul.mubr.bf16.gmra.mrb[0].mxu0 %v5748
    %v5828 = vpop.f32.mrb[0].mxu0
    %v5829 = vadd.f32 0.0, %v5828
    %v5830 = vpop.f32.mrb[0].mxu0
    %v5831 = vpop.f32.mrb[0].mxu0
    %v5832 = vadd.f32 0.0, %v5831
    %v5833 = vpop.f32.mrb[0].mxu0
    %5834 = vmatprep.mubr.bf16.mxu0 %v5751
    %5835 = vmatmul.mubr.bf16.gmra.mrb[0].mxu0 %v5750
    %v5836 = vpop.f32.mrb[0].mxu0
    %v5837 = vadd.f32 0.0, %v5836
    %v5838 = vpop.f32.mrb[0].mxu0
    %v5839 = vpop.f32.mrb[0].mxu0
    %v5840 = vadd.f32 0.0, %v5839
    %v5841 = vpop.f32.mrb[0].mxu0
    %5842 = vmatprep.mubr.bf16.mxu0 %v5753
    %5843 = vmatmul.mubr.bf16.gmra.mrb[0].mxu0 %v5752
    %v5844 = vpop.f32.mrb[0].mxu0
    %v5845 = vadd.f32 0.0, %v5844
    %v5846 = vpop.f32.mrb[0].mxu0
    %v5847 = vpop.f32.mrb[0].mxu0
    %v5848 = vadd.f32 0.0, %v5847
    %v5849 = vpop.f32.mrb[0].mxu0
    %5850 = vdwg.mxu0
    %v5851 = vadd.f32 %v5676, %v5789
    %v5852 = vadd.f32 %v5679, %v5792
    %v5853 = vadd.f32 %v5684, %v5797
    %v5854 = vadd.f32 %v5687, %v5800
    %v5855 = vadd.f32 %v5692, %v5805
    %v5856 = vadd.f32 %v5695, %v5808
    %v5857 = vadd.f32 %v5700, %v5813
    %v5858 = vadd.f32 %v5703, %v5816
    %v5859 = vadd.f32 %v5708, %v5821
    %v5860 = vadd.f32 %v5711, %v5824
    %v5861 = vadd.f32 %v5716, %v5829
    %v5862 = vadd.f32 %v5719, %v5832
    %v5863 = vadd.f32 %v5724, %v5837
    %v5864 = vadd.f32 %v5727, %v5840
    %v5865 = vadd.f32 %v5732, %v5845
    %v5866 = vadd.f32 %v5735, %v5848
    %v5867 = vadd.f32 %v5480, %v5851
    %v5868 = vadd.f32 %v5481, %v5852
    %v5869 = vadd.f32 %v5482, %v5853
    %v5870 = vadd.f32 %v5483, %v5854
    %v5871 = vadd.f32 %v5484, %v5855
    %v5872 = vadd.f32 %v5485, %v5856
    %v5873 = vadd.f32 %v5486, %v5857
    %v5874 = vadd.f32 %v5487, %v5858
    %v5875 = vadd.f32 %v5488, %v5859
    %v5876 = vadd.f32 %v5489, %v5860
    %v5877 = vadd.f32 %v5490, %v5861
    %v5878 = vadd.f32 %v5491, %v5862
    %v5879 = vadd.f32 %v5492, %v5863
    %v5880 = vadd.f32 %v5493, %v5864
    %v5881 = vadd.f32 %v5494, %v5865
    %v5882 = vadd.f32 %v5495, %v5866
    %v5883 = vld [vmem:[%s4] sm:$0x1]
    %v5885 = vlaneseq
    %v5886 = vshrl.u32 %v5885, 7
    %v5887 = vsub.s32 0, %v5886
    %v5888 = vrot.slane %v5883, %v5887
    %v5890 = vadd.f32 %v5867, %v5888
    %v5891 = vadd.f32 %v5868, %v5888
    %v5892 = vadd.f32 %v5869, %v5888
    %v5893 = vadd.f32 %v5870, %v5888
    %v5894 = vadd.f32 %v5871, %v5888
    %v5895 = vadd.f32 %v5872, %v5888
    %v5896 = vadd.f32 %v5873, %v5888
    %v5897 = vadd.f32 %v5874, %v5888
    %v5898 = vadd.f32 %v5875, %v5888
    %v5899 = vadd.f32 %v5876, %v5888
    %v5900 = vadd.f32 %v5877, %v5888
    %v5901 = vadd.f32 %v5878, %v5888
    %v5902 = vadd.f32 %v5879, %v5888
    %v5903 = vadd.f32 %v5880, %v5888
    %v5904 = vadd.f32 %v5881, %v5888
    %v5905 = vadd.f32 %v5882, %v5888
    %vm5906 = vcmp.gt.f32.partialorder %v5890, 0.0
    %vm5907 = vcmp.gt.f32.partialorder %v5891, 0.0
    %vm5908 = vcmp.gt.f32.partialorder %v5892, 0.0
    %vm5909 = vcmp.gt.f32.partialorder %v5893, 0.0
    %vm5910 = vcmp.gt.f32.partialorder %v5894, 0.0
    %vm5911 = vcmp.gt.f32.partialorder %v5895, 0.0
    %vm5912 = vcmp.gt.f32.partialorder %v5896, 0.0
    %vm5913 = vcmp.gt.f32.partialorder %v5897, 0.0
    %vm5914 = vcmp.gt.f32.partialorder %v5898, 0.0
    %vm5915 = vcmp.gt.f32.partialorder %v5899, 0.0
    %vm5916 = vcmp.gt.f32.partialorder %v5900, 0.0
    %vm5917 = vcmp.gt.f32.partialorder %v5901, 0.0
    %vm5918 = vcmp.gt.f32.partialorder %v5902, 0.0
    %vm5919 = vcmp.gt.f32.partialorder %v5903, 0.0
    %vm5920 = vcmp.gt.f32.partialorder %v5904, 0.0
    %vm5921 = vcmp.gt.f32.partialorder %v5905, 0.0
    %v5922 = vmul.f32 %v5890, 1.442695
    %v5923 = vpow.pop %v5922
    %v5924 = vmul.f32 %v5891, 1.442695
    %v5925 = vpow.pop %v5924
    %v5926 = vmul.f32 %v5892, 1.442695
    %v5927 = vpow.pop %v5926
    %v5928 = vmul.f32 %v5893, 1.442695
    %v5929 = vpow.pop %v5928
    %v5930 = vmul.f32 %v5894, 1.442695
    %v5931 = vpow.pop %v5930
    %v5932 = vmul.f32 %v5895, 1.442695
    %v5933 = vpow.pop %v5932
    %v5934 = vmul.f32 %v5896, 1.442695
    %v5935 = vpow.pop %v5934
    %v5936 = vmul.f32 %v5897, 1.442695
    %v5937 = vpow.pop %v5936
    %v5938 = vmul.f32 %v5898, 1.442695
    %v5939 = vpow.pop %v5938
    %v5940 = vmul.f32 %v5899, 1.442695
    %v5941 = vpow.pop %v5940
    %v5942 = vmul.f32 %v5900, 1.442695
    %v5943 = vpow.pop %v5942
    %v5944 = vmul.f32 %v5901, 1.442695
    %v5945 = vpow.pop %v5944
    %v5946 = vmul.f32 %v5902, 1.442695
    %v5947 = vpow.pop %v5946
    %v5948 = vmul.f32 %v5903, 1.442695
    %v5949 = vpow.pop %v5948
    %v5950 = vmul.f32 %v5904, 1.442695
    %v5951 = vpow.pop %v5950
    %v5952 = vmul.f32 %v5905, 1.442695
    %v5953 = vpow.pop %v5952
    %v5954 = vsub.f32 %v5923, 1.0
    %v5955 = vsub.f32 %v5925, 1.0
    %v5956 = vsub.f32 %v5927, 1.0
    %v5957 = vsub.f32 %v5929, 1.0
    %v5958 = vsub.f32 %v5931, 1.0
    %v5959 = vsub.f32 %v5933, 1.0
    %v5960 = vsub.f32 %v5935, 1.0
    %v5961 = vsub.f32 %v5937, 1.0
    %v5962 = vsub.f32 %v5939, 1.0
    %v5963 = vsub.f32 %v5941, 1.0
    %v5964 = vsub.f32 %v5943, 1.0
    %v5965 = vsub.f32 %v5945, 1.0
    %v5966 = vsub.f32 %v5947, 1.0
    %v5967 = vsub.f32 %v5949, 1.0
    %v5968 = vsub.f32 %v5951, 1.0
    %v5969 = vsub.f32 %v5953, 1.0
    %v5970 = vsel %vm5906, %v5890, %v5954
    %v5971 = vsel %vm5907, %v5891, %v5955
    %v5972 = vsel %vm5908, %v5892, %v5956
    %v5973 = vsel %vm5909, %v5893, %v5957
    %v5974 = vsel %vm5910, %v5894, %v5958
    %v5975 = vsel %vm5911, %v5895, %v5959
    %v5976 = vsel %vm5912, %v5896, %v5960
    %v5977 = vsel %vm5913, %v5897, %v5961
    %v5978 = vsel %vm5914, %v5898, %v5962
    %v5979 = vsel %vm5915, %v5899, %v5963
    %v5980 = vsel %vm5916, %v5900, %v5964
    %v5981 = vsel %vm5917, %v5901, %v5965
    %v5982 = vsel %vm5918, %v5902, %v5966
    %v5983 = vsel %vm5919, %v5903, %v5967
    %v5984 = vsel %vm5920, %v5904, %v5968
    %v5985 = vsel %vm5921, %v5905, %v5969
    %v5986 = vld [vmem:[#allocation6] sm:$0xff]
    %v5987 = vld [vmem:[#allocation6 + $0x8] sm:$0xff]
    %v5988 = vld [vmem:[#allocation6 + $0x10] sm:$0xff]
    %v5989 = vld [vmem:[#allocation6 + $0x18] sm:$0xff]
    %v5990 = vld [vmem:[#allocation6 + $0x20] sm:$0xff]
    %v5991 = vld [vmem:[#allocation6 + $0x28] sm:$0xff]
    %v5992 = vld [vmem:[#allocation6 + $0x30] sm:$0xff]
    %v5993 = vld [vmem:[#allocation6 + $0x38] sm:$0xff]
    %v5994 = vpack.c.bf16 %v5971, %v5970
    %v5995 = vpack.c.bf16 %v5973, %v5972
    %v5996 = vpack.c.bf16 %v5975, %v5974
    %v5997 = vpack.c.bf16 %v5977, %v5976
    %v5998 = vpack.c.bf16 %v5979, %v5978
    %v5999 = vpack.c.bf16 %v5981, %v5980
    %v6000 = vpack.c.bf16 %v5983, %v5982
    %v6001 = vpack.c.bf16 %v5985, %v5984
    %v6002 = vunpack.c.l.bf16 %v5994
    %v6003 = vunpack.c.h.bf16 %v5994
    %v6004 = vunpack.c.l.bf16 %v5995
    %v6005 = vunpack.c.h.bf16 %v5995
    %v6006 = vunpack.c.l.bf16 %v5996
    %v6007 = vunpack.c.h.bf16 %v5996
    %v6008 = vunpack.c.l.bf16 %v5997
    %v6009 = vunpack.c.h.bf16 %v5997
    %v6010 = vunpack.c.l.bf16 %v5998
    %v6011 = vunpack.c.h.bf16 %v5998
    %v6012 = vunpack.c.l.bf16 %v5999
    %v6013 = vunpack.c.h.bf16 %v5999
    %v6014 = vunpack.c.l.bf16 %v6000
    %v6015 = vunpack.c.h.bf16 %v6000
    %v6016 = vunpack.c.l.bf16 %v6001
    %v6017 = vunpack.c.h.bf16 %v6001
    %v6018 = vsub.f32 %v5970, %v6002
    %v6019 = vsub.f32 %v5971, %v6003
    %v6020 = vsub.f32 %v5972, %v6004
    %v6021 = vsub.f32 %v5973, %v6005
    %v6022 = vsub.f32 %v5974, %v6006
    %v6023 = vsub.f32 %v5975, %v6007
    %v6024 = vsub.f32 %v5976, %v6008
    %v6025 = vsub.f32 %v5977, %v6009
    %v6026 = vsub.f32 %v5978, %v6010
    %v6027 = vsub.f32 %v5979, %v6011
    %v6028 = vsub.f32 %v5980, %v6012
    %v6029 = vsub.f32 %v5981, %v6013
    %v6030 = vsub.f32 %v5982, %v6014
    %v6031 = vsub.f32 %v5983, %v6015
    %v6032 = vsub.f32 %v5984, %v6016
    %v6033 = vsub.f32 %v5985, %v6017
    %v6034 = vpack.c.bf16 %v6019, %v6018
    %v6035 = vpack.c.bf16 %v6021, %v6020
    %v6036 = vpack.c.bf16 %v6023, %v6022
    %v6037 = vpack.c.bf16 %v6025, %v6024
    %v6038 = vpack.c.bf16 %v6027, %v6026
    %v6039 = vpack.c.bf16 %v6029, %v6028
    %v6040 = vpack.c.bf16 %v6031, %v6030
    %v6041 = vpack.c.bf16 %v6033, %v6032
    %v6042 = vpack.c.bf16 %v5987, %v5986
    %v6043 = vpack.c.bf16 %v5989, %v5988
    %v6044 = vpack.c.bf16 %v5991, %v5990
    %v6045 = vpack.c.bf16 %v5993, %v5992
    %v6046 = vunpack.c.l.bf16 %v6042
    %v6047 = vunpack.c.h.bf16 %v6042
    %v6048 = vunpack.c.l.bf16 %v6043
    %v6049 = vunpack.c.h.bf16 %v6043
    %v6050 = vunpack.c.l.bf16 %v6044
    %v6051 = vunpack.c.h.bf16 %v6044
    %v6052 = vunpack.c.l.bf16 %v6045
    %v6053 = vunpack.c.h.bf16 %v6045
    %v6054 = vsub.f32 %v5986, %v6046
    %v6055 = vsub.f32 %v5987, %v6047
    %v6056 = vsub.f32 %v5988, %v6048
    %v6057 = vsub.f32 %v5989, %v6049
    %v6058 = vsub.f32 %v5990, %v6050
    %v6059 = vsub.f32 %v5991, %v6051
    %v6060 = vsub.f32 %v5992, %v6052
    %v6061 = vsub.f32 %v5993, %v6053
    %v6062 = vpack.c.bf16 %v6055, %v6054
    %v6063 = vpack.c.bf16 %v6057, %v6056
    %v6064 = vpack.c.bf16 %v6059, %v6058
    %v6065 = vpack.c.bf16 %v6061, %v6060
    %v6067 = vsel %vm710, %v5994, 0
    %v6070 = vsel %vm710, %v5995, 0
    %v6073 = vsel %vm710, %v5996, 0
    %v6076 = vsel %vm710, %v5997, 0
    %v6079 = vsel %vm710, %v5998, 0
    %v6082 = vsel %vm710, %v5999, 0
    %v6085 = vsel %vm710, %v6000, 0
    %v6088 = vsel %vm710, %v6001, 0
    %6090 = vmatprep.subr.bf16.mxu0 0
    %6091 = vmatpush1.bf16.msra.mxu0 %v6062
    %6092 = vmatprep.subr.bf16.mxu0 0
    %6093 = vmatpush1.bf16.msra.mxu0 %v6063
    %6094 = vmatprep.subr.bf16.mxu0 0
    %6095 = vmatpush1.bf16.msra.mxu0 %v6064
    %6096 = vmatprep.subr.bf16.mxu0 0
    %6097 = vmatpush1.bf16.msra.mxu0 %v6065
    %6098 = vmatprep.subr.bf16.mxu0 0
    %6099 = vmatpush1.bf16.msra.mxu0 0
    %6100 = vmatprep.subr.bf16.mxu0 0
    %6101 = vmatpush1.bf16.msra.mxu0 0
    %6102 = vmatprep.subr.bf16.mxu0 0
    %6103 = vmatpush1.bf16.msra.mxu0 0
    %6104 = vmatprep.subr.bf16.mxu0 0
    %6105 = vmatpush1.bf16.msra.mxu0 0
    %6106 = vmatprep.subr.bf16.mxu0 0
    %6107 = vmatpush1.bf16.msra.mxu0 0
    %6108 = vmatprep.subr.bf16.mxu0 0
    %6109 = vmatpush1.bf16.msra.mxu0 0
    %6110 = vmatprep.subr.bf16.mxu0 0
    %6111 = vmatpush1.bf16.msra.mxu0 0
    %6112 = vmatprep.subr.bf16.mxu0 0
    %6113 = vmatpush1.bf16.msra.mxu0 0
    %6114 = vmatprep.subr.bf16.mxu0 0
    %6115 = vmatpush1.bf16.msra.mxu0 0
    %6116 = vmatprep.subr.bf16.mxu0 0
    %6117 = vmatpush1.bf16.msra.mxu0 0
    %6118 = vmatprep.subr.bf16.mxu0 0
    %6119 = vmatpush1.bf16.msra.mxu0 0
    %6120 = vmatprep.subr.bf16.mxu0 0
    %6121 = vmatpush1.bf16.msra.mxu0 0
    %6122 = vmatprep.mubr.bf16.mxu0 0
    %6123 = vmatmul.mubr.bf16.gmra.mrb[0].mxu0 %v6067
    %v6124 = vpop.f32.mrb[0].mxu0
    %v6125 = vadd.f32 0.0, %v6124
    %v6126 = vpop.f32.mrb[0].mxu0
    %v6127 = vpop.f32.mrb[0].mxu0
    %v6128 = vadd.f32 0.0, %v6127
    %v6129 = vpop.f32.mrb[0].mxu0
    %6130 = vmatprep.mubr.bf16.mxu0 0
    %6131 = vmatmul.mubr.bf16.gmra.mrb[0].mxu0 %v6070
    %v6132 = vpop.f32.mrb[0].mxu0
    %v6133 = vadd.f32 0.0, %v6132
    %v6134 = vpop.f32.mrb[0].mxu0
    %v6135 = vpop.f32.mrb[0].mxu0
    %v6136 = vadd.f32 0.0, %v6135
    %v6137 = vpop.f32.mrb[0].mxu0
    %6138 = vmatprep.mubr.bf16.mxu0 0
    %6139 = vmatmul.mubr.bf16.gmra.mrb[0].mxu0 %v6073
    %v6140 = vpop.f32.mrb[0].mxu0
    %v6141 = vadd.f32 0.0, %v6140
    %v6142 = vpop.f32.mrb[0].mxu0
    %v6143 = vpop.f32.mrb[0].mxu0
    %v6144 = vadd.f32 0.0, %v6143
    %v6145 = vpop.f32.mrb[0].mxu0
    %6146 = vmatprep.mubr.bf16.mxu0 0
    %6147 = vmatmul.mubr.bf16.gmra.mrb[0].mxu0 %v6076
    %v6148 = vpop.f32.mrb[0].mxu0
    %v6149 = vadd.f32 0.0, %v6148
    %v6150 = vpop.f32.mrb[0].mxu0
    %v6151 = vpop.f32.mrb[0].mxu0
    %v6152 = vadd.f32 0.0, %v6151
    %v6153 = vpop.f32.mrb[0].mxu0
    %6154 = vmatprep.mubr.bf16.mxu0 0
    %6155 = vmatmul.mubr.bf16.gmra.mrb[0].mxu0 %v6079
    %v6156 = vpop.f32.mrb[0].mxu0
    %v6157 = vadd.f32 0.0, %v6156
    %v6158 = vpop.f32.mrb[0].mxu0
    %v6159 = vpop.f32.mrb[0].mxu0
    %v6160 = vadd.f32 0.0, %v6159
    %v6161 = vpop.f32.mrb[0].mxu0
    %6162 = vmatprep.mubr.bf16.mxu0 0
    %6163 = vmatmul.mubr.bf16.gmra.mrb[0].mxu0 %v6082
    %v6164 = vpop.f32.mrb[0].mxu0
    %v6165 = vadd.f32 0.0, %v6164
    %v6166 = vpop.f32.mrb[0].mxu0
    %v6167 = vpop.f32.mrb[0].mxu0
    %v6168 = vadd.f32 0.0, %v6167
    %v6169 = vpop.f32.mrb[0].mxu0
    %6170 = vmatprep.mubr.bf16.mxu0 0
    %6171 = vmatmul.mubr.bf16.gmra.mrb[0].mxu0 %v6085
    %v6172 = vpop.f32.mrb[0].mxu0
    %v6173 = vadd.f32 0.0, %v6172
    %v6174 = vpop.f32.mrb[0].mxu0
    %v6175 = vpop.f32.mrb[0].mxu0
    %v6176 = vadd.f32 0.0, %v6175
    %v6177 = vpop.f32.mrb[0].mxu0
    %6178 = vmatprep.mubr.bf16.mxu0 0
    %6179 = vmatmul.mubr.bf16.gmra.mrb[0].mxu0 %v6088
    %v6180 = vpop.f32.mrb[0].mxu0
    %v6181 = vadd.f32 0.0, %v6180
    %v6182 = vpop.f32.mrb[0].mxu0
    %v6183 = vpop.f32.mrb[0].mxu0
    %v6184 = vadd.f32 0.0, %v6183
    %v6185 = vpop.f32.mrb[0].mxu0
    %6186 = vdwg.mxu0
    %6187 = vmatprep.subr.bf16.mxu0 0
    %6188 = vmatpush1.bf16.msra.mxu0 %v6042
    %6189 = vmatprep.subr.bf16.mxu0 0
    %6190 = vmatpush1.bf16.msra.mxu0 %v6043
    %6191 = vmatprep.subr.bf16.mxu0 0
    %6192 = vmatpush1.bf16.msra.mxu0 %v6044
    %6193 = vmatprep.subr.bf16.mxu0 0
    %6194 = vmatpush1.bf16.msra.mxu0 %v6045
    %6195 = vmatprep.subr.bf16.mxu0 0
    %6196 = vmatpush1.bf16.msra.mxu0 0
    %6197 = vmatprep.subr.bf16.mxu0 0
    %6198 = vmatpush1.bf16.msra.mxu0 0
    %6199 = vmatprep.subr.bf16.mxu0 0
    %6200 = vmatpush1.bf16.msra.mxu0 0
    %6201 = vmatprep.subr.bf16.mxu0 0
    %6202 = vmatpush1.bf16.msra.mxu0 0
    %6203 = vmatprep.subr.bf16.mxu0 0
    %6204 = vmatpush1.bf16.msra.mxu0 0
    %6205 = vmatprep.subr.bf16.mxu0 0
    %6206 = vmatpush1.bf16.msra.mxu0 0
    %6207 = vmatprep.subr.bf16.mxu0 0
    %6208 = vmatpush1.bf16.msra.mxu0 0
    %6209 = vmatprep.subr.bf16.mxu0 0
    %6210 = vmatpush1.bf16.msra.mxu0 0
    %6211 = vmatprep.subr.bf16.mxu0 0
    %6212 = vmatpush1.bf16.msra.mxu0 0
    %6213 = vmatprep.subr.bf16.mxu0 0
    %6214 = vmatpush1.bf16.msra.mxu0 0
    %6215 = vmatprep.subr.bf16.mxu0 0
    %6216 = vmatpush1.bf16.msra.mxu0 0
    %6217 = vmatprep.subr.bf16.mxu0 0
    %6218 = vmatpush1.bf16.msra.mxu0 0
    %6219 = vmatprep.mubr.bf16.mxu0 0
    %6220 = vmatmul.mubr.bf16.gmra.mrb[0].mxu0 %v6067
    %v6221 = vpop.f32.mrb[0].mxu0
    %v6222 = vadd.f32 %v6125, %v6221
    %v6223 = vpop.f32.mrb[0].mxu0
    %v6224 = vpop.f32.mrb[0].mxu0
    %v6225 = vadd.f32 %v6128, %v6224
    %v6226 = vpop.f32.mrb[0].mxu0
    %6227 = vmatprep.mubr.bf16.mxu0 0
    %6228 = vmatmul.mubr.bf16.gmra.mrb[0].mxu0 %v6070
    %v6229 = vpop.f32.mrb[0].mxu0
    %v6230 = vadd.f32 %v6133, %v6229
    %v6231 = vpop.f32.mrb[0].mxu0
    %v6232 = vpop.f32.mrb[0].mxu0
    %v6233 = vadd.f32 %v6136, %v6232
    %v6234 = vpop.f32.mrb[0].mxu0
    %6235 = vmatprep.mubr.bf16.mxu0 0
    %6236 = vmatmul.mubr.bf16.gmra.mrb[0].mxu0 %v6073
    %v6237 = vpop.f32.mrb[0].mxu0
    %v6238 = vadd.f32 %v6141, %v6237
    %v6239 = vpop.f32.mrb[0].mxu0
    %v6240 = vpop.f32.mrb[0].mxu0
    %v6241 = vadd.f32 %v6144, %v6240
    %v6242 = vpop.f32.mrb[0].mxu0
    %6243 = vmatprep.mubr.bf16.mxu0 0
    %6244 = vmatmul.mubr.bf16.gmra.mrb[0].mxu0 %v6076
    %v6245 = vpop.f32.mrb[0].mxu0
    %v6246 = vadd.f32 %v6149, %v6245
    %v6247 = vpop.f32.mrb[0].mxu0
    %v6248 = vpop.f32.mrb[0].mxu0
    %v6249 = vadd.f32 %v6152, %v6248
    %v6250 = vpop.f32.mrb[0].mxu0
    %6251 = vmatprep.mubr.bf16.mxu0 0
    %6252 = vmatmul.mubr.bf16.gmra.mrb[0].mxu0 %v6079
    %v6253 = vpop.f32.mrb[0].mxu0
    %v6254 = vadd.f32 %v6157, %v6253
    %v6255 = vpop.f32.mrb[0].mxu0
    %v6256 = vpop.f32.mrb[0].mxu0
    %v6257 = vadd.f32 %v6160, %v6256
    %v6258 = vpop.f32.mrb[0].mxu0
    %6259 = vmatprep.mubr.bf16.mxu0 0
    %6260 = vmatmul.mubr.bf16.gmra.mrb[0].mxu0 %v6082
    %v6261 = vpop.f32.mrb[0].mxu0
    %v6262 = vadd.f32 %v6165, %v6261
    %v6263 = vpop.f32.mrb[0].mxu0
    %v6264 = vpop.f32.mrb[0].mxu0
    %v6265 = vadd.f32 %v6168, %v6264
    %v6266 = vpop.f32.mrb[0].mxu0
    %6267 = vmatprep.mubr.bf16.mxu0 0
    %6268 = vmatmul.mubr.bf16.gmra.mrb[0].mxu0 %v6085
    %v6269 = vpop.f32.mrb[0].mxu0
    %v6270 = vadd.f32 %v6173, %v6269
    %v6271 = vpop.f32.mrb[0].mxu0
    %v6272 = vpop.f32.mrb[0].mxu0
    %v6273 = vadd.f32 %v6176, %v6272
    %v6274 = vpop.f32.mrb[0].mxu0
    %6275 = vmatprep.mubr.bf16.mxu0 0
    %6276 = vmatmul.mubr.bf16.gmra.mrb[0].mxu0 %v6088
    %v6277 = vpop.f32.mrb[0].mxu0
    %v6278 = vadd.f32 %v6181, %v6277
    %v6279 = vpop.f32.mrb[0].mxu0
    %v6280 = vpop.f32.mrb[0].mxu0
    %v6281 = vadd.f32 %v6184, %v6280
    %v6282 = vpop.f32.mrb[0].mxu0
    %6283 = vdwg.mxu0
    %v6285 = vsel %vm710, %v6034, 0
    %v6288 = vsel %vm710, %v6035, 0
    %v6291 = vsel %vm710, %v6036, 0
    %v6294 = vsel %vm710, %v6037, 0
    %v6297 = vsel %vm710, %v6038, 0
    %v6300 = vsel %vm710, %v6039, 0
    %v6303 = vsel %vm710, %v6040, 0
    %v6306 = vsel %vm710, %v6041, 0
    %6308 = vmatprep.subr.bf16.mxu0 0
    %6309 = vmatpush1.bf16.msra.mxu0 %v6042
    %6310 = vmatprep.subr.bf16.mxu0 0
    %6311 = vmatpush1.bf16.msra.mxu0 %v6043
    %6312 = vmatprep.subr.bf16.mxu0 0
    %6313 = vmatpush1.bf16.msra.mxu0 %v6044
    %6314 = vmatprep.subr.bf16.mxu0 0
    %6315 = vmatpush1.bf16.msra.mxu0 %v6045
    %6316 = vmatprep.subr.bf16.mxu0 0
    %6317 = vmatpush1.bf16.msra.mxu0 0
    %6318 = vmatprep.subr.bf16.mxu0 0
    %6319 = vmatpush1.bf16.msra.mxu0 0
    %6320 = vmatprep.subr.bf16.mxu0 0
    %6321 = vmatpush1.bf16.msra.mxu0 0
    %6322 = vmatprep.subr.bf16.mxu0 0
    %6323 = vmatpush1.bf16.msra.mxu0 0
    %6324 = vmatprep.subr.bf16.mxu0 0
    %6325 = vmatpush1.bf16.msra.mxu0 0
    %6326 = vmatprep.subr.bf16.mxu0 0
    %6327 = vmatpush1.bf16.msra.mxu0 0
    %6328 = vmatprep.subr.bf16.mxu0 0
    %6329 = vmatpush1.bf16.msra.mxu0 0
    %6330 = vmatprep.subr.bf16.mxu0 0
    %6331 = vmatpush1.bf16.msra.mxu0 0
    %6332 = vmatprep.subr.bf16.mxu0 0
    %6333 = vmatpush1.bf16.msra.mxu0 0
    %6334 = vmatprep.subr.bf16.mxu0 0
    %6335 = vmatpush1.bf16.msra.mxu0 0
    %6336 = vmatprep.subr.bf16.mxu0 0
    %6337 = vmatpush1.bf16.msra.mxu0 0
    %6338 = vmatprep.subr.bf16.mxu0 0
    %6339 = vmatpush1.bf16.msra.mxu0 0
    %6340 = vmatprep.mubr.bf16.mxu0 0
    %6341 = vmatmul.mubr.bf16.gmra.mrb[0].mxu0 %v6285
    %v6342 = vpop.f32.mrb[0].mxu0
    %v6343 = vadd.f32 0.0, %v6342
    %v6344 = vpop.f32.mrb[0].mxu0
    %v6345 = vpop.f32.mrb[0].mxu0
    %v6346 = vadd.f32 0.0, %v6345
    %v6347 = vpop.f32.mrb[0].mxu0
    %6348 = vmatprep.mubr.bf16.mxu0 0
    %6349 = vmatmul.mubr.bf16.gmra.mrb[0].mxu0 %v6288
    %v6350 = vpop.f32.mrb[0].mxu0
    %v6351 = vadd.f32 0.0, %v6350
    %v6352 = vpop.f32.mrb[0].mxu0
    %v6353 = vpop.f32.mrb[0].mxu0
    %v6354 = vadd.f32 0.0, %v6353
    %v6355 = vpop.f32.mrb[0].mxu0
    %6356 = vmatprep.mubr.bf16.mxu0 0
    %6357 = vmatmul.mubr.bf16.gmra.mrb[0].mxu0 %v6291
    %v6358 = vpop.f32.mrb[0].mxu0
    %v6359 = vadd.f32 0.0, %v6358
    %v6360 = vpop.f32.mrb[0].mxu0
    %v6361 = vpop.f32.mrb[0].mxu0
    %v6362 = vadd.f32 0.0, %v6361
    %v6363 = vpop.f32.mrb[0].mxu0
    %6364 = vmatprep.mubr.bf16.mxu0 0
    %6365 = vmatmul.mubr.bf16.gmra.mrb[0].mxu0 %v6294
    %v6366 = vpop.f32.mrb[0].mxu0
    %v6367 = vadd.f32 0.0, %v6366
    %v6368 = vpop.f32.mrb[0].mxu0
    %v6369 = vpop.f32.mrb[0].mxu0
    %v6370 = vadd.f32 0.0, %v6369
    %v6371 = vpop.f32.mrb[0].mxu0
    %6372 = vmatprep.mubr.bf16.mxu0 0
    %6373 = vmatmul.mubr.bf16.gmra.mrb[0].mxu0 %v6297
    %v6374 = vpop.f32.mrb[0].mxu0
    %v6375 = vadd.f32 0.0, %v6374
    %v6376 = vpop.f32.mrb[0].mxu0
    %v6377 = vpop.f32.mrb[0].mxu0
    %v6378 = vadd.f32 0.0, %v6377
    %v6379 = vpop.f32.mrb[0].mxu0
    %6380 = vmatprep.mubr.bf16.mxu0 0
    %6381 = vmatmul.mubr.bf16.gmra.mrb[0].mxu0 %v6300
    %v6382 = vpop.f32.mrb[0].mxu0
    %v6383 = vadd.f32 0.0, %v6382
    %v6384 = vpop.f32.mrb[0].mxu0
    %v6385 = vpop.f32.mrb[0].mxu0
    %v6386 = vadd.f32 0.0, %v6385
    %v6387 = vpop.f32.mrb[0].mxu0
    %6388 = vmatprep.mubr.bf16.mxu0 0
    %6389 = vmatmul.mubr.bf16.gmra.mrb[0].mxu0 %v6303
    %v6390 = vpop.f32.mrb[0].mxu0
    %v6391 = vadd.f32 0.0, %v6390
    %v6392 = vpop.f32.mrb[0].mxu0
    %v6393 = vpop.f32.mrb[0].mxu0
    %v6394 = vadd.f32 0.0, %v6393
    %v6395 = vpop.f32.mrb[0].mxu0
    %6396 = vmatprep.mubr.bf16.mxu0 0
    %6397 = vmatmul.mubr.bf16.gmra.mrb[0].mxu0 %v6306
    %v6398 = vpop.f32.mrb[0].mxu0
    %v6399 = vadd.f32 0.0, %v6398
    %v6400 = vpop.f32.mrb[0].mxu0
    %v6401 = vpop.f32.mrb[0].mxu0
    %v6402 = vadd.f32 0.0, %v6401
    %v6403 = vpop.f32.mrb[0].mxu0
    %6404 = vdwg.mxu0
    %v6405 = vadd.f32 %v6222, %v6343
    %v6406 = vadd.f32 %v6225, %v6346
    %v6407 = vadd.f32 %v6230, %v6351
    %v6408 = vadd.f32 %v6233, %v6354
    %v6409 = vadd.f32 %v6238, %v6359
    %v6410 = vadd.f32 %v6241, %v6362
    %v6411 = vadd.f32 %v6246, %v6367
    %v6412 = vadd.f32 %v6249, %v6370
    %v6413 = vadd.f32 %v6254, %v6375
    %v6414 = vadd.f32 %v6257, %v6378
    %v6415 = vadd.f32 %v6262, %v6383
    %v6416 = vadd.f32 %v6265, %v6386
    %v6417 = vadd.f32 %v6270, %v6391
    %v6418 = vadd.f32 %v6273, %v6394
    %v6419 = vadd.f32 %v6278, %v6399
    %v6420 = vadd.f32 %v6281, %v6402
    %v6421 = vld [vmem:[%s6] sm:$0xff]
    %v6422 = vpack.c.bf16 %v6421, %v6421
    %v6423 = vunpack.c.l.bf16 %v6422
    %v6424 = vsub.f32 %v6421, %v6423
    %v6425 = vpack.c.bf16 %v6424, %v6424
    %v6426 = vpack.c.bf16 %v6406, %v6405
    %v6427 = vpack.c.bf16 %v6408, %v6407
    %v6428 = vpack.c.bf16 %v6410, %v6409
    %v6429 = vpack.c.bf16 %v6412, %v6411
    %v6430 = vpack.c.bf16 %v6414, %v6413
    %v6431 = vpack.c.bf16 %v6416, %v6415
    %v6432 = vpack.c.bf16 %v6418, %v6417
    %v6433 = vpack.c.bf16 %v6420, %v6419
    %v6434 = vunpack.c.l.bf16 %v6426
    %v6435 = vunpack.c.h.bf16 %v6426
    %v6436 = vunpack.c.l.bf16 %v6427
    %v6437 = vunpack.c.h.bf16 %v6427
    %v6438 = vunpack.c.l.bf16 %v6428
    %v6439 = vunpack.c.h.bf16 %v6428
    %v6440 = vunpack.c.l.bf16 %v6429
    %v6441 = vunpack.c.h.bf16 %v6429
    %v6442 = vunpack.c.l.bf16 %v6430
    %v6443 = vunpack.c.h.bf16 %v6430
    %v6444 = vunpack.c.l.bf16 %v6431
    %v6445 = vunpack.c.h.bf16 %v6431
    %v6446 = vunpack.c.l.bf16 %v6432
    %v6447 = vunpack.c.h.bf16 %v6432
    %v6448 = vunpack.c.l.bf16 %v6433
    %v6449 = vunpack.c.h.bf16 %v6433
    %v6450 = vsub.f32 %v6405, %v6434
    %v6451 = vsub.f32 %v6406, %v6435
    %v6452 = vsub.f32 %v6407, %v6436
    %v6453 = vsub.f32 %v6408, %v6437
    %v6454 = vsub.f32 %v6409, %v6438
    %v6455 = vsub.f32 %v6410, %v6439
    %v6456 = vsub.f32 %v6411, %v6440
    %v6457 = vsub.f32 %v6412, %v6441
    %v6458 = vsub.f32 %v6413, %v6442
    %v6459 = vsub.f32 %v6414, %v6443
    %v6460 = vsub.f32 %v6415, %v6444
    %v6461 = vsub.f32 %v6416, %v6445
    %v6462 = vsub.f32 %v6417, %v6446
    %v6463 = vsub.f32 %v6418, %v6447
    %v6464 = vsub.f32 %v6419, %v6448
    %v6465 = vsub.f32 %v6420, %v6449
    %v6466 = vpack.c.bf16 %v6451, %v6450
    %v6467 = vpack.c.bf16 %v6453, %v6452
    %v6468 = vpack.c.bf16 %v6455, %v6454
    %v6469 = vpack.c.bf16 %v6457, %v6456
    %v6470 = vpack.c.bf16 %v6459, %v6458
    %v6471 = vpack.c.bf16 %v6461, %v6460
    %v6472 = vpack.c.bf16 %v6463, %v6462
    %v6473 = vpack.c.bf16 %v6465, %v6464
    %6474 = vmatprep.subr.bf16.mxu0 0
    %6475 = vmatpush1.bf16.xpose.msra.mxu0 %v6466
    %6476 = vmatprep.subr.bf16.mxu0 0
    %6477 = vmatpush1.bf16.xpose.msra.mxu0 %v6467
    %6478 = vmatprep.subr.bf16.mxu0 0
    %6479 = vmatpush1.bf16.xpose.msra.mxu0 %v6468
    %6480 = vmatprep.subr.bf16.mxu0 0
    %6481 = vmatpush1.bf16.xpose.msra.mxu0 %v6469
    %6482 = vmatprep.subr.bf16.mxu0 0
    %6483 = vmatpush1.bf16.xpose.msra.mxu0 %v6470
    %6484 = vmatprep.subr.bf16.mxu0 0
    %6485 = vmatpush1.bf16.xpose.msra.mxu0 %v6471
    %6486 = vmatprep.subr.bf16.mxu0 0
    %6487 = vmatpush1.bf16.xpose.msra.mxu0 %v6472
    %6488 = vmatprep.subr.bf16.mxu0 0
    %6489 = vmatpush1.bf16.xpose.msra.mxu0 %v6473
    %6490 = vmatprep.subr.bf16.mxu0 0
    %6491 = vmatpush1.bf16.xpose.msra.mxu0 0
    %6492 = vmatprep.subr.bf16.mxu0 0
    %6493 = vmatpush1.bf16.xpose.msra.mxu0 0
    %6494 = vmatprep.subr.bf16.mxu0 0
    %6495 = vmatpush1.bf16.xpose.msra.mxu0 0
    %6496 = vmatprep.subr.bf16.mxu0 0
    %6497 = vmatpush1.bf16.xpose.msra.mxu0 0
    %6498 = vmatprep.subr.bf16.mxu0 0
    %6499 = vmatpush1.bf16.xpose.msra.mxu0 0
    %6500 = vmatprep.subr.bf16.mxu0 0
    %6501 = vmatpush1.bf16.xpose.msra.mxu0 0
    %6502 = vmatprep.subr.bf16.mxu0 0
    %6503 = vmatpush1.bf16.xpose.msra.mxu0 0
    %6504 = vmatprep.subr.bf16.mxu0 0
    %6505 = vmatpush1.bf16.xpose.msra.mxu0 0
    %6506 = vmatprep.mubr.bf16.mxu0 0
    %6507 = vmatmul.mubr.bf16.gmra.mrb[0].mxu0 %v6422
    %v6508 = vpop.f32.mrb[0].mxu0
    %v6509 = vadd.f32 0.0, %v6508
    %v6510 = vpop.f32.mrb[0].mxu0
    %v6511 = vpop.f32.mrb[0].mxu0
    %v6512 = vpop.f32.mrb[0].mxu0
    %6513 = vdwg.mxu0
    %6514 = vmatprep.subr.bf16.mxu0 0
    %6515 = vmatpush1.bf16.xpose.msra.mxu0 %v6426
    %6516 = vmatprep.subr.bf16.mxu0 0
    %6517 = vmatpush1.bf16.xpose.msra.mxu0 %v6427
    %6518 = vmatprep.subr.bf16.mxu0 0
    %6519 = vmatpush1.bf16.xpose.msra.mxu0 %v6428
    %6520 = vmatprep.subr.bf16.mxu0 0
    %6521 = vmatpush1.bf16.xpose.msra.mxu0 %v6429
    %6522 = vmatprep.subr.bf16.mxu0 0
    %6523 = vmatpush1.bf16.xpose.msra.mxu0 %v6430
    %6524 = vmatprep.subr.bf16.mxu0 0
    %6525 = vmatpush1.bf16.xpose.msra.mxu0 %v6431
    %6526 = vmatprep.subr.bf16.mxu0 0
    %6527 = vmatpush1.bf16.xpose.msra.mxu0 %v6432
    %6528 = vmatprep.subr.bf16.mxu0 0
    %6529 = vmatpush1.bf16.xpose.msra.mxu0 %v6433
    %6530 = vmatprep.subr.bf16.mxu0 0
    %6531 = vmatpush1.bf16.xpose.msra.mxu0 0
    %6532 = vmatprep.subr.bf16.mxu0 0
    %6533 = vmatpush1.bf16.xpose.msra.mxu0 0
    %6534 = vmatprep.subr.bf16.mxu0 0
    %6535 = vmatpush1.bf16.xpose.msra.mxu0 0
    %6536 = vmatprep.subr.bf16.mxu0 0
    %6537 = vmatpush1.bf16.xpose.msra.mxu0 0
    %6538 = vmatprep.subr.bf16.mxu0 0
    %6539 = vmatpush1.bf16.xpose.msra.mxu0 0
    %6540 = vmatprep.subr.bf16.mxu0 0
    %6541 = vmatpush1.bf16.xpose.msra.mxu0 0
    %6542 = vmatprep.subr.bf16.mxu0 0
    %6543 = vmatpush1.bf16.xpose.msra.mxu0 0
    %6544 = vmatprep.subr.bf16.mxu0 0
    %6545 = vmatpush1.bf16.xpose.msra.mxu0 0
    %6546 = vmatprep.mubr.bf16.mxu0 0
    %6547 = vmatmul.mubr.bf16.gmra.mrb[0].mxu0 %v6422
    %v6548 = vpop.f32.mrb[0].mxu0
    %v6549 = vadd.f32 %v6509, %v6548
    %v6550 = vpop.f32.mrb[0].mxu0
    %v6551 = vpop.f32.mrb[0].mxu0
    %v6552 = vpop.f32.mrb[0].mxu0
    %6553 = vdwg.mxu0
    %6554 = vmatprep.subr.bf16.mxu0 0
    %6555 = vmatpush1.bf16.xpose.msra.mxu0 %v6426
    %6556 = vmatprep.subr.bf16.mxu0 0
    %6557 = vmatpush1.bf16.xpose.msra.mxu0 %v6427
    %6558 = vmatprep.subr.bf16.mxu0 0
    %6559 = vmatpush1.bf16.xpose.msra.mxu0 %v6428
    %6560 = vmatprep.subr.bf16.mxu0 0
    %6561 = vmatpush1.bf16.xpose.msra.mxu0 %v6429
    %6562 = vmatprep.subr.bf16.mxu0 0
    %6563 = vmatpush1.bf16.xpose.msra.mxu0 %v6430
    %6564 = vmatprep.subr.bf16.mxu0 0
    %6565 = vmatpush1.bf16.xpose.msra.mxu0 %v6431
    %6566 = vmatprep.subr.bf16.mxu0 0
    %6567 = vmatpush1.bf16.xpose.msra.mxu0 %v6432
    %6568 = vmatprep.subr.bf16.mxu0 0
    %6569 = vmatpush1.bf16.xpose.msra.mxu0 %v6433
    %6570 = vmatprep.subr.bf16.mxu0 0
    %6571 = vmatpush1.bf16.xpose.msra.mxu0 0
    %6572 = vmatprep.subr.bf16.mxu0 0
    %6573 = vmatpush1.bf16.xpose.msra.mxu0 0
    %6574 = vmatprep.subr.bf16.mxu0 0
    %6575 = vmatpush1.bf16.xpose.msra.mxu0 0
    %6576 = vmatprep.subr.bf16.mxu0 0
    %6577 = vmatpush1.bf16.xpose.msra.mxu0 0
    %6578 = vmatprep.subr.bf16.mxu0 0
    %6579 = vmatpush1.bf16.xpose.msra.mxu0 0
    %6580 = vmatprep.subr.bf16.mxu0 0
    %6581 = vmatpush1.bf16.xpose.msra.mxu0 0
    %6582 = vmatprep.subr.bf16.mxu0 0
    %6583 = vmatpush1.bf16.xpose.msra.mxu0 0
    %6584 = vmatprep.subr.bf16.mxu0 0
    %6585 = vmatpush1.bf16.xpose.msra.mxu0 0
    %6586 = vmatprep.mubr.bf16.mxu0 0
    %6587 = vmatmul.mubr.bf16.gmra.mrb[0].mxu0 %v6425
    %v6588 = vpop.f32.mrb[0].mxu0
    %v6589 = vadd.f32 0.0, %v6588
    %v6590 = vpop.f32.mrb[0].mxu0
    %v6591 = vpop.f32.mrb[0].mxu0
    %v6592 = vpop.f32.mrb[0].mxu0
    %6593 = vdwg.mxu0
    %v6594 = vadd.f32 %v6549, %v6589
    %6596 = vset.pattern.permute.xlu0 127
    %6597 = vperm.xlu0 %6596, %v6405
    %v6598 = vpop.permute.xlu0 %6597
    %6601 = vset.pattern.permute.xlu0 127
    %6602 = vperm.xlu0 %6601, %v6406
    %v6603 = vpop.permute.xlu0 %6602
    %6606 = vset.pattern.permute.xlu0 127
    %6607 = vperm.xlu0 %6606, %v6407
    %v6608 = vpop.permute.xlu0 %6607
    %6611 = vset.pattern.permute.xlu0 127
    %6612 = vperm.xlu0 %6611, %v6408
    %v6613 = vpop.permute.xlu0 %6612
    %6616 = vset.pattern.permute.xlu0 127
    %6617 = vperm.xlu0 %6616, %v6409
    %v6618 = vpop.permute.xlu0 %6617
    %6621 = vset.pattern.permute.xlu0 127
    %6622 = vperm.xlu0 %6621, %v6410
    %v6623 = vpop.permute.xlu0 %6622
    %6626 = vset.pattern.permute.xlu0 127
    %6627 = vperm.xlu0 %6626, %v6411
    %v6628 = vpop.permute.xlu0 %6627
    %6631 = vset.pattern.permute.xlu0 127
    %6632 = vperm.xlu0 %6631, %v6412
    %v6633 = vpop.permute.xlu0 %6632
    %6636 = vset.pattern.permute.xlu0 127
    %6637 = vperm.xlu0 %6636, %v6413
    %v6638 = vpop.permute.xlu0 %6637
    %6641 = vset.pattern.permute.xlu0 127
    %6642 = vperm.xlu0 %6641, %v6414
    %v6643 = vpop.permute.xlu0 %6642
    %6646 = vset.pattern.permute.xlu0 127
    %6647 = vperm.xlu0 %6646, %v6415
    %v6648 = vpop.permute.xlu0 %6647
    %6651 = vset.pattern.permute.xlu0 127
    %6652 = vperm.xlu0 %6651, %v6416
    %v6653 = vpop.permute.xlu0 %6652
    %6656 = vset.pattern.permute.xlu0 127
    %6657 = vperm.xlu0 %6656, %v6417
    %v6658 = vpop.permute.xlu0 %6657
    %6661 = vset.pattern.permute.xlu0 127
    %6662 = vperm.xlu0 %6661, %v6418
    %v6663 = vpop.permute.xlu0 %6662
    %6666 = vset.pattern.permute.xlu0 127
    %6667 = vperm.xlu0 %6666, %v6419
    %v6668 = vpop.permute.xlu0 %6667
    %6671 = vset.pattern.permute.xlu0 127
    %6672 = vperm.xlu0 %6671, %v6420
    %v6673 = vpop.permute.xlu0 %6672
    %v6675 = vlaneseq
    %v6676 = vshrl.u32 %v6675, 7
    %v6677 = vsub.s32 0, %v6676
    %v6678 = vrot.slane %v6594, %v6677
    %v6679 = vadd.f32 %v6598, %v6678
    %v6680 = vadd.f32 %v6603, %v6678
    %v6681 = vadd.f32 %v6608, %v6678
    %v6682 = vadd.f32 %v6613, %v6678
    %v6683 = vadd.f32 %v6618, %v6678
    %v6684 = vadd.f32 %v6623, %v6678
    %v6685 = vadd.f32 %v6628, %v6678
    %v6686 = vadd.f32 %v6633, %v6678
    %v6687 = vadd.f32 %v6638, %v6678
    %v6688 = vadd.f32 %v6643, %v6678
    %v6689 = vadd.f32 %v6648, %v6678
    %v6690 = vadd.f32 %v6653, %v6678
    %v6691 = vadd.f32 %v6658, %v6678
    %v6692 = vadd.f32 %v6663, %v6678
    %v6693 = vadd.f32 %v6668, %v6678
    %v6694 = vadd.f32 %v6673, %v6678
    %vm6695 = vcmp.gt.f32.partialorder %v6679, 0.0
    %vm6696 = vcmp.gt.f32.partialorder %v6680, 0.0
    %vm6697 = vcmp.gt.f32.partialorder %v6681, 0.0
    %vm6698 = vcmp.gt.f32.partialorder %v6682, 0.0
    %vm6699 = vcmp.gt.f32.partialorder %v6683, 0.0
    %vm6700 = vcmp.gt.f32.partialorder %v6684, 0.0
    %vm6701 = vcmp.gt.f32.partialorder %v6685, 0.0
    %vm6702 = vcmp.gt.f32.partialorder %v6686, 0.0
    %vm6703 = vcmp.gt.f32.partialorder %v6687, 0.0
    %vm6704 = vcmp.gt.f32.partialorder %v6688, 0.0
    %vm6705 = vcmp.gt.f32.partialorder %v6689, 0.0
    %vm6706 = vcmp.gt.f32.partialorder %v6690, 0.0
    %vm6707 = vcmp.gt.f32.partialorder %v6691, 0.0
    %vm6708 = vcmp.gt.f32.partialorder %v6692, 0.0
    %vm6709 = vcmp.gt.f32.partialorder %v6693, 0.0
    %vm6710 = vcmp.gt.f32.partialorder %v6694, 0.0
    %v6711 = vmul.f32 %v6679, 0.2
    %v6712 = vmul.f32 %v6680, 0.2
    %v6713 = vmul.f32 %v6681, 0.2
    %v6714 = vmul.f32 %v6682, 0.2
    %v6715 = vmul.f32 %v6683, 0.2
    %v6716 = vmul.f32 %v6684, 0.2
    %v6717 = vmul.f32 %v6685, 0.2
    %v6718 = vmul.f32 %v6686, 0.2
    %v6719 = vmul.f32 %v6687, 0.2
    %v6720 = vmul.f32 %v6688, 0.2
    %v6721 = vmul.f32 %v6689, 0.2
    %v6722 = vmul.f32 %v6690, 0.2
    %v6723 = vmul.f32 %v6691, 0.2
    %v6724 = vmul.f32 %v6692, 0.2
    %v6725 = vmul.f32 %v6693, 0.2
    %v6726 = vmul.f32 %v6694, 0.2
    %v6727 = vsel %vm6695, %v6679, %v6711
    %v6728 = vsel %vm6696, %v6680, %v6712
    %v6729 = vsel %vm6697, %v6681, %v6713
    %v6730 = vsel %vm6698, %v6682, %v6714
    %v6731 = vsel %vm6699, %v6683, %v6715
    %v6732 = vsel %vm6700, %v6684, %v6716
    %v6733 = vsel %vm6701, %v6685, %v6717
    %v6734 = vsel %vm6702, %v6686, %v6718
    %v6735 = vsel %vm6703, %v6687, %v6719
    %v6736 = vsel %vm6704, %v6688, %v6720
    %v6737 = vsel %vm6705, %v6689, %v6721
    %v6738 = vsel %vm6706, %v6690, %v6722
    %v6739 = vsel %vm6707, %v6691, %v6723
    %v6740 = vsel %vm6708, %v6692, %v6724
    %v6741 = vsel %vm6709, %v6693, %v6725
    %v6742 = vsel %vm6710, %v6694, %v6726
    %v6743 = vld [vmem:[%s1] sm:$0xff]
    %v6744 = vld [vmem:[%s1 + $0x8] sm:$0xff]
    %v6745 = vld [vmem:[%s1 + $0x10] sm:$0xff]
    %v6746 = vld [vmem:[%s1 + $0x18] sm:$0xff]
    %v6747 = vld [vmem:[%s1 + $0x20] sm:$0xff]
    %v6748 = vld [vmem:[%s1 + $0x28] sm:$0xff]
    %v6749 = vld [vmem:[%s1 + $0x30] sm:$0xff]
    %v6750 = vld [vmem:[%s1 + $0x38] sm:$0xff]
    %v6751 = vld [vmem:[%s1 + $0x40] sm:$0xff]
    %v6752 = vld [vmem:[%s1 + $0x48] sm:$0xff]
    %v6753 = vld [vmem:[%s1 + $0x50] sm:$0xff]
    %v6754 = vld [vmem:[%s1 + $0x58] sm:$0xff]
    %v6755 = vld [vmem:[%s1 + $0x60] sm:$0xff]
    %v6756 = vld [vmem:[%s1 + $0x68] sm:$0xff]
    %v6757 = vld [vmem:[%s1 + $0x70] sm:$0xff]
    %v6758 = vld [vmem:[%s1 + $0x78] sm:$0xff]
    %v6759 = vadd.f32 %v6727, %v6743
    %v6760 = vadd.f32 %v6728, %v6744
    %v6761 = vadd.f32 %v6729, %v6745
    %v6762 = vadd.f32 %v6730, %v6746
    %v6763 = vadd.f32 %v6731, %v6747
    %v6764 = vadd.f32 %v6732, %v6748
    %v6765 = vadd.f32 %v6733, %v6749
    %v6766 = vadd.f32 %v6734, %v6750
    %v6767 = vadd.f32 %v6735, %v6751
    %v6768 = vadd.f32 %v6736, %v6752
    %v6769 = vadd.f32 %v6737, %v6753
    %v6770 = vadd.f32 %v6738, %v6754
    %v6771 = vadd.f32 %v6739, %v6755
    %v6772 = vadd.f32 %v6740, %v6756
    %v6773 = vadd.f32 %v6741, %v6757
    %v6774 = vadd.f32 %v6742, %v6758
    %6775 = vmax.xlane.f32.xlu0 %v6759
    %v6776 = vpop.xlane.xlu0 %6775
    %6777 = vmax.xlane.f32.xlu0 %v6760
    %v6778 = vpop.xlane.xlu0 %6777
    %6779 = vmax.xlane.f32.xlu0 %v6761
    %v6780 = vpop.xlane.xlu0 %6779
    %6781 = vmax.xlane.f32.xlu0 %v6762
    %v6782 = vpop.xlane.xlu0 %6781
    %6783 = vmax.xlane.f32.xlu0 %v6763
    %v6784 = vpop.xlane.xlu0 %6783
    %6785 = vmax.xlane.f32.xlu0 %v6764
    %v6786 = vpop.xlane.xlu0 %6785
    %6787 = vmax.xlane.f32.xlu0 %v6765
    %v6788 = vpop.xlane.xlu0 %6787
    %6789 = vmax.xlane.f32.xlu0 %v6766
    %v6790 = vpop.xlane.xlu0 %6789
    %6791 = vmax.xlane.f32.xlu0 %v6767
    %v6792 = vpop.xlane.xlu0 %6791
    %6793 = vmax.xlane.f32.xlu0 %v6768
    %v6794 = vpop.xlane.xlu0 %6793
    %6795 = vmax.xlane.f32.xlu0 %v6769
    %v6796 = vpop.xlane.xlu0 %6795
    %6797 = vmax.xlane.f32.xlu0 %v6770
    %v6798 = vpop.xlane.xlu0 %6797
    %6799 = vmax.xlane.f32.xlu0 %v6771
    %v6800 = vpop.xlane.xlu0 %6799
    %6801 = vmax.xlane.f32.xlu0 %v6772
    %v6802 = vpop.xlane.xlu0 %6801
    %6803 = vmax.xlane.f32.xlu0 %v6773
    %v6804 = vpop.xlane.xlu0 %6803
    %6805 = vmax.xlane.f32.xlu0 %v6774
    %v6806 = vpop.xlane.xlu0 %6805
    %v6807 = vsub.f32 %v6759, %v6776
    %v6808 = vsub.f32 %v6760, %v6778
    %v6809 = vsub.f32 %v6761, %v6780
    %v6810 = vsub.f32 %v6762, %v6782
    %v6811 = vsub.f32 %v6763, %v6784
    %v6812 = vsub.f32 %v6764, %v6786
    %v6813 = vsub.f32 %v6765, %v6788
    %v6814 = vsub.f32 %v6766, %v6790
    %v6815 = vsub.f32 %v6767, %v6792
    %v6816 = vsub.f32 %v6768, %v6794
    %v6817 = vsub.f32 %v6769, %v6796
    %v6818 = vsub.f32 %v6770, %v6798
    %v6819 = vsub.f32 %v6771, %v6800
    %v6820 = vsub.f32 %v6772, %v6802
    %v6821 = vsub.f32 %v6773, %v6804
    %v6822 = vsub.f32 %v6774, %v6806
    %v6823 = vmul.f32 %v6807, 1.442695
    %v6824 = vpow.pop %v6823
    %v6825 = vmul.f32 %v6808, 1.442695
    %v6826 = vpow.pop %v6825
    %v6827 = vmul.f32 %v6809, 1.442695
    %v6828 = vpow.pop %v6827
    %v6829 = vmul.f32 %v6810, 1.442695
    %v6830 = vpow.pop %v6829
    %v6831 = vmul.f32 %v6811, 1.442695
    %v6832 = vpow.pop %v6831
    %v6833 = vmul.f32 %v6812, 1.442695
    %v6834 = vpow.pop %v6833
    %v6835 = vmul.f32 %v6813, 1.442695
    %v6836 = vpow.pop %v6835
    %v6837 = vmul.f32 %v6814, 1.442695
    %v6838 = vpow.pop %v6837
    %v6839 = vmul.f32 %v6815, 1.442695
    %v6840 = vpow.pop %v6839
    %v6841 = vmul.f32 %v6816, 1.442695
    %v6842 = vpow.pop %v6841
    %v6843 = vmul.f32 %v6817, 1.442695
    %v6844 = vpow.pop %v6843
    %v6845 = vmul.f32 %v6818, 1.442695
    %v6846 = vpow.pop %v6845
    %v6847 = vmul.f32 %v6819, 1.442695
    %v6848 = vpow.pop %v6847
    %v6849 = vmul.f32 %v6820, 1.442695
    %v6850 = vpow.pop %v6849
    %v6851 = vmul.f32 %v6821, 1.442695
    %v6852 = vpow.pop %v6851
    %v6853 = vmul.f32 %v6822, 1.442695
    %v6854 = vpow.pop %v6853
    %6855 = vadd.xlane.f32.xlu0 %v6824
    %v6856 = vpop.xlane.xlu0 %6855
    %6857 = vadd.xlane.f32.xlu0 %v6826
    %v6858 = vpop.xlane.xlu0 %6857
    %6859 = vadd.xlane.f32.xlu0 %v6828
    %v6860 = vpop.xlane.xlu0 %6859
    %6861 = vadd.xlane.f32.xlu0 %v6830
    %v6862 = vpop.xlane.xlu0 %6861
    %6863 = vadd.xlane.f32.xlu0 %v6832
    %v6864 = vpop.xlane.xlu0 %6863
    %6865 = vadd.xlane.f32.xlu0 %v6834
    %v6866 = vpop.xlane.xlu0 %6865
    %6867 = vadd.xlane.f32.xlu0 %v6836
    %v6868 = vpop.xlane.xlu0 %6867
    %6869 = vadd.xlane.f32.xlu0 %v6838
    %v6870 = vpop.xlane.xlu0 %6869
    %6871 = vadd.xlane.f32.xlu0 %v6840
    %v6872 = vpop.xlane.xlu0 %6871
    %6873 = vadd.xlane.f32.xlu0 %v6842
    %v6874 = vpop.xlane.xlu0 %6873
    %6875 = vadd.xlane.f32.xlu0 %v6844
    %v6876 = vpop.xlane.xlu0 %6875
    %6877 = vadd.xlane.f32.xlu0 %v6846
    %v6878 = vpop.xlane.xlu0 %6877
    %6879 = vadd.xlane.f32.xlu0 %v6848
    %v6880 = vpop.xlane.xlu0 %6879
    %6881 = vadd.xlane.f32.xlu0 %v6850
    %v6882 = vpop.xlane.xlu0 %6881
    %6883 = vadd.xlane.f32.xlu0 %v6852
    %v6884 = vpop.xlane.xlu0 %6883
    %6885 = vadd.xlane.f32.xlu0 %v6854
    %v6886 = vpop.xlane.xlu0 %6885
    %v6887 = vrcp.pop %v6856
    %v6888 = vrcp.pop %v6858
    %v6889 = vrcp.pop %v6860
    %v6890 = vrcp.pop %v6862
    %v6891 = vrcp.pop %v6864
    %v6892 = vrcp.pop %v6866
    %v6893 = vrcp.pop %v6868
    %v6894 = vrcp.pop %v6870
    %v6895 = vrcp.pop %v6872
    %v6896 = vrcp.pop %v6874
    %v6897 = vrcp.pop %v6876
    %v6898 = vrcp.pop %v6878
    %v6899 = vrcp.pop %v6880
    %v6900 = vrcp.pop %v6882
    %v6901 = vrcp.pop %v6884
    %v6902 = vrcp.pop %v6886
    %v6903 = vmul.f32 %v6856, %v6887
    %v6904 = vmul.f32 %v6858, %v6888
    %v6905 = vmul.f32 %v6860, %v6889
    %v6906 = vmul.f32 %v6862, %v6890
    %v6907 = vmul.f32 %v6864, %v6891
    %v6908 = vmul.f32 %v6866, %v6892
    %v6909 = vmul.f32 %v6868, %v6893
    %v6910 = vmul.f32 %v6870, %v6894
    %v6911 = vmul.f32 %v6872, %v6895
    %v6912 = vmul.f32 %v6874, %v6896
    %v6913 = vmul.f32 %v6876, %v6897
    %v6914 = vmul.f32 %v6878, %v6898
    %v6915 = vmul.f32 %v6880, %v6899
    %v6916 = vmul.f32 %v6882, %v6900
    %v6917 = vmul.f32 %v6884, %v6901
    %v6918 = vmul.f32 %v6886, %v6902
    %v6919 = vsub.f32 2.0, %v6903
    %v6920 = vsub.f32 2.0, %v6904
    %v6921 = vsub.f32 2.0, %v6905
    %v6922 = vsub.f32 2.0, %v6906
    %v6923 = vsub.f32 2.0, %v6907
    %v6924 = vsub.f32 2.0, %v6908
    %v6925 = vsub.f32 2.0, %v6909
    %v6926 = vsub.f32 2.0, %v6910
    %v6927 = vsub.f32 2.0, %v6911
    %v6928 = vsub.f32 2.0, %v6912
    %v6929 = vsub.f32 2.0, %v6913
    %v6930 = vsub.f32 2.0, %v6914
    %v6931 = vsub.f32 2.0, %v6915
    %v6932 = vsub.f32 2.0, %v6916
    %v6933 = vsub.f32 2.0, %v6917
    %v6934 = vsub.f32 2.0, %v6918
    %v6935 = vmul.f32 %v6887, %v6919
    %v6936 = vmul.f32 %v6888, %v6920
    %v6937 = vmul.f32 %v6889, %v6921
    %v6938 = vmul.f32 %v6890, %v6922
    %v6939 = vmul.f32 %v6891, %v6923
    %v6940 = vmul.f32 %v6892, %v6924
    %v6941 = vmul.f32 %v6893, %v6925
    %v6942 = vmul.f32 %v6894, %v6926
    %v6943 = vmul.f32 %v6895, %v6927
    %v6944 = vmul.f32 %v6896, %v6928
    %v6945 = vmul.f32 %v6897, %v6929
    %v6946 = vmul.f32 %v6898, %v6930
    %v6947 = vmul.f32 %v6899, %v6931
    %v6948 = vmul.f32 %v6900, %v6932
    %v6949 = vmul.f32 %v6901, %v6933
    %v6950 = vmul.f32 %v6902, %v6934
    %v6951 = vmul.f32 %v6824, %v6935
    %v6952 = vmul.f32 %v6826, %v6936
    %v6953 = vmul.f32 %v6828, %v6937
    %v6954 = vmul.f32 %v6830, %v6938
    %v6955 = vmul.f32 %v6832, %v6939
    %v6956 = vmul.f32 %v6834, %v6940
    %v6957 = vmul.f32 %v6836, %v6941
    %v6958 = vmul.f32 %v6838, %v6942
    %v6959 = vmul.f32 %v6840, %v6943
    %v6960 = vmul.f32 %v6842, %v6944
    %v6961 = vmul.f32 %v6844, %v6945
    %v6962 = vmul.f32 %v6846, %v6946
    %v6963 = vmul.f32 %v6848, %v6947
    %v6964 = vmul.f32 %v6850, %v6948
    %v6965 = vmul.f32 %v6852, %v6949
    %v6966 = vmul.f32 %v6854, %v6950
    %v6967 = vpack.c.bf16 %v6952, %v6951
    %v6968 = vpack.c.bf16 %v6954, %v6953
    %v6969 = vpack.c.bf16 %v6956, %v6955
    %v6970 = vpack.c.bf16 %v6958, %v6957
    %v6971 = vpack.c.bf16 %v6960, %v6959
    %v6972 = vpack.c.bf16 %v6962, %v6961
    %v6973 = vpack.c.bf16 %v6964, %v6963
    %v6974 = vpack.c.bf16 %v6966, %v6965
    %v6975 = vunpack.c.l.bf16 %v6967
    %v6976 = vunpack.c.h.bf16 %v6967
    %v6977 = vunpack.c.l.bf16 %v6968
    %v6978 = vunpack.c.h.bf16 %v6968
    %v6979 = vunpack.c.l.bf16 %v6969
    %v6980 = vunpack.c.h.bf16 %v6969
    %v6981 = vunpack.c.l.bf16 %v6970
    %v6982 = vunpack.c.h.bf16 %v6970
    %v6983 = vunpack.c.l.bf16 %v6971
    %v6984 = vunpack.c.h.bf16 %v6971
    %v6985 = vunpack.c.l.bf16 %v6972
    %v6986 = vunpack.c.h.bf16 %v6972
    %v6987 = vunpack.c.l.bf16 %v6973
    %v6988 = vunpack.c.h.bf16 %v6973
    %v6989 = vunpack.c.l.bf16 %v6974
    %v6990 = vunpack.c.h.bf16 %v6974
    %v6991 = vsub.f32 %v6951, %v6975
    %v6992 = vsub.f32 %v6952, %v6976
    %v6993 = vsub.f32 %v6953, %v6977
    %v6994 = vsub.f32 %v6954, %v6978
    %v6995 = vsub.f32 %v6955, %v6979
    %v6996 = vsub.f32 %v6956, %v6980
    %v6997 = vsub.f32 %v6957, %v6981
    %v6998 = vsub.f32 %v6958, %v6982
    %v6999 = vsub.f32 %v6959, %v6983
    %v7000 = vsub.f32 %v6960, %v6984
    %v7001 = vsub.f32 %v6961, %v6985
    %v7002 = vsub.f32 %v6962, %v6986
    %v7003 = vsub.f32 %v6963, %v6987
    %v7004 = vsub.f32 %v6964, %v6988
    %v7005 = vsub.f32 %v6965, %v6989
    %v7006 = vsub.f32 %v6966, %v6990
    %v7007 = vpack.c.bf16 %v6992, %v6991
    %v7008 = vpack.c.bf16 %v6994, %v6993
    %v7009 = vpack.c.bf16 %v6996, %v6995
    %v7010 = vpack.c.bf16 %v6998, %v6997
    %v7011 = vpack.c.bf16 %v7000, %v6999
    %v7012 = vpack.c.bf16 %v7002, %v7001
    %v7013 = vpack.c.bf16 %v7004, %v7003
    %v7014 = vpack.c.bf16 %v7006, %v7005
    %7015 = vmatprep.subr.bf16.mxu0 0
    %7016 = vmatpush1.bf16.msra.mxu0 %v6466
    %7017 = vmatprep.subr.bf16.mxu0 0
    %7018 = vmatpush1.bf16.msra.mxu0 %v6467
    %7019 = vmatprep.subr.bf16.mxu0 0
    %7020 = vmatpush1.bf16.msra.mxu0 %v6468
    %7021 = vmatprep.subr.bf16.mxu0 0
    %7022 = vmatpush1.bf16.msra.mxu0 %v6469
    %7023 = vmatprep.subr.bf16.mxu0 0
    %7024 = vmatpush1.bf16.msra.mxu0 %v6470
    %7025 = vmatprep.subr.bf16.mxu0 0
    %7026 = vmatpush1.bf16.msra.mxu0 %v6471
    %7027 = vmatprep.subr.bf16.mxu0 0
    %7028 = vmatpush1.bf16.msra.mxu0 %v6472
    %7029 = vmatprep.subr.bf16.mxu0 0
    %7030 = vmatpush1.bf16.msra.mxu0 %v6473
    %7031 = vmatprep.subr.bf16.mxu0 0
    %7032 = vmatpush1.bf16.msra.mxu0 0
    %7033 = vmatprep.subr.bf16.mxu0 0
    %7034 = vmatpush1.bf16.msra.mxu0 0
    %7035 = vmatprep.subr.bf16.mxu0 0
    %7036 = vmatpush1.bf16.msra.mxu0 0
    %7037 = vmatprep.subr.bf16.mxu0 0
    %7038 = vmatpush1.bf16.msra.mxu0 0
    %7039 = vmatprep.subr.bf16.mxu0 0
    %7040 = vmatpush1.bf16.msra.mxu0 0
    %7041 = vmatprep.subr.bf16.mxu0 0
    %7042 = vmatpush1.bf16.msra.mxu0 0
    %7043 = vmatprep.subr.bf16.mxu0 0
    %7044 = vmatpush1.bf16.msra.mxu0 0
    %7045 = vmatprep.subr.bf16.mxu0 0
    %7046 = vmatpush1.bf16.msra.mxu0 0
    %7047 = vmatprep.mubr.bf16.mxu0 0
    %7048 = vmatmul.mubr.bf16.gmra.mrb[0].mxu0 %v6967
    %v7049 = vpop.f32.mrb[0].mxu0
    %v7050 = vadd.f32 0.0, %v7049
    %v7051 = vpop.f32.mrb[0].mxu0
    %v7052 = vpop.f32.mrb[0].mxu0
    %v7053 = vadd.f32 0.0, %v7052
    %v7054 = vpop.f32.mrb[0].mxu0
    %7055 = vmatprep.mubr.bf16.mxu0 0
    %7056 = vmatmul.mubr.bf16.gmra.mrb[0].mxu0 %v6968
    %v7057 = vpop.f32.mrb[0].mxu0
    %v7058 = vadd.f32 0.0, %v7057
    %v7059 = vpop.f32.mrb[0].mxu0
    %v7060 = vpop.f32.mrb[0].mxu0
    %v7061 = vadd.f32 0.0, %v7060
    %v7062 = vpop.f32.mrb[0].mxu0
    %7063 = vmatprep.mubr.bf16.mxu0 0
    %7064 = vmatmul.mubr.bf16.gmra.mrb[0].mxu0 %v6969
    %v7065 = vpop.f32.mrb[0].mxu0
    %v7066 = vadd.f32 0.0, %v7065
    %v7067 = vpop.f32.mrb[0].mxu0
    %v7068 = vpop.f32.mrb[0].mxu0
    %v7069 = vadd.f32 0.0, %v7068
    %v7070 = vpop.f32.mrb[0].mxu0
    %7071 = vmatprep.mubr.bf16.mxu0 0
    %7072 = vmatmul.mubr.bf16.gmra.mrb[0].mxu0 %v6970
    %v7073 = vpop.f32.mrb[0].mxu0
    %v7074 = vadd.f32 0.0, %v7073
    %v7075 = vpop.f32.mrb[0].mxu0
    %v7076 = vpop.f32.mrb[0].mxu0
    %v7077 = vadd.f32 0.0, %v7076
    %v7078 = vpop.f32.mrb[0].mxu0
    %7079 = vmatprep.mubr.bf16.mxu0 0
    %7080 = vmatmul.mubr.bf16.gmra.mrb[0].mxu0 %v6971
    %v7081 = vpop.f32.mrb[0].mxu0
    %v7082 = vadd.f32 0.0, %v7081
    %v7083 = vpop.f32.mrb[0].mxu0
    %v7084 = vpop.f32.mrb[0].mxu0
    %v7085 = vadd.f32 0.0, %v7084
    %v7086 = vpop.f32.mrb[0].mxu0
    %7087 = vmatprep.mubr.bf16.mxu0 0
    %7088 = vmatmul.mubr.bf16.gmra.mrb[0].mxu0 %v6972
    %v7089 = vpop.f32.mrb[0].mxu0
    %v7090 = vadd.f32 0.0, %v7089
    %v7091 = vpop.f32.mrb[0].mxu0
    %v7092 = vpop.f32.mrb[0].mxu0
    %v7093 = vadd.f32 0.0, %v7092
    %v7094 = vpop.f32.mrb[0].mxu0
    %7095 = vmatprep.mubr.bf16.mxu0 0
    %7096 = vmatmul.mubr.bf16.gmra.mrb[0].mxu0 %v6973
    %v7097 = vpop.f32.mrb[0].mxu0
    %v7098 = vadd.f32 0.0, %v7097
    %v7099 = vpop.f32.mrb[0].mxu0
    %v7100 = vpop.f32.mrb[0].mxu0
    %v7101 = vadd.f32 0.0, %v7100
    %v7102 = vpop.f32.mrb[0].mxu0
    %7103 = vmatprep.mubr.bf16.mxu0 0
    %7104 = vmatmul.mubr.bf16.gmra.mrb[0].mxu0 %v6974
    %v7105 = vpop.f32.mrb[0].mxu0
    %v7106 = vadd.f32 0.0, %v7105
    %v7107 = vpop.f32.mrb[0].mxu0
    %v7108 = vpop.f32.mrb[0].mxu0
    %v7109 = vadd.f32 0.0, %v7108
    %v7110 = vpop.f32.mrb[0].mxu0
    %7111 = vdwg.mxu0
    %7112 = vmatprep.subr.bf16.mxu0 0
    %7113 = vmatpush1.bf16.msra.mxu0 %v6426
    %7114 = vmatprep.subr.bf16.mxu0 0
    %7115 = vmatpush1.bf16.msra.mxu0 %v6427
    %7116 = vmatprep.subr.bf16.mxu0 0
    %7117 = vmatpush1.bf16.msra.mxu0 %v6428
    %7118 = vmatprep.subr.bf16.mxu0 0
    %7119 = vmatpush1.bf16.msra.mxu0 %v6429
    %7120 = vmatprep.subr.bf16.mxu0 0
    %7121 = vmatpush1.bf16.msra.mxu0 %v6430
    %7122 = vmatprep.subr.bf16.mxu0 0
    %7123 = vmatpush1.bf16.msra.mxu0 %v6431
    %7124 = vmatprep.subr.bf16.mxu0 0
    %7125 = vmatpush1.bf16.msra.mxu0 %v6432
    %7126 = vmatprep.subr.bf16.mxu0 0
    %7127 = vmatpush1.bf16.msra.mxu0 %v6433
    %7128 = vmatprep.subr.bf16.mxu0 0
    %7129 = vmatpush1.bf16.msra.mxu0 0
    %7130 = vmatprep.subr.bf16.mxu0 0
    %7131 = vmatpush1.bf16.msra.mxu0 0
    %7132 = vmatprep.subr.bf16.mxu0 0
    %7133 = vmatpush1.bf16.msra.mxu0 0
    %7134 = vmatprep.subr.bf16.mxu0 0
    %7135 = vmatpush1.bf16.msra.mxu0 0
    %7136 = vmatprep.subr.bf16.mxu0 0
    %7137 = vmatpush1.bf16.msra.mxu0 0
    %7138 = vmatprep.subr.bf16.mxu0 0
    %7139 = vmatpush1.bf16.msra.mxu0 0
    %7140 = vmatprep.subr.bf16.mxu0 0
    %7141 = vmatpush1.bf16.msra.mxu0 0
    %7142 = vmatprep.subr.bf16.mxu0 0
    %7143 = vmatpush1.bf16.msra.mxu0 0
    %7144 = vmatprep.mubr.bf16.mxu0 0
    %7145 = vmatmul.mubr.bf16.gmra.mrb[0].mxu0 %v6967
    %v7146 = vpop.f32.mrb[0].mxu0
    %v7147 = vadd.f32 %v7050, %v7146
    %v7148 = vpop.f32.mrb[0].mxu0
    %v7149 = vpop.f32.mrb[0].mxu0
    %v7150 = vadd.f32 %v7053, %v7149
    %v7151 = vpop.f32.mrb[0].mxu0
    %7152 = vmatprep.mubr.bf16.mxu0 0
    %7153 = vmatmul.mubr.bf16.gmra.mrb[0].mxu0 %v6968
    %v7154 = vpop.f32.mrb[0].mxu0
    %v7155 = vadd.f32 %v7058, %v7154
    %v7156 = vpop.f32.mrb[0].mxu0
    %v7157 = vpop.f32.mrb[0].mxu0
    %v7158 = vadd.f32 %v7061, %v7157
    %v7159 = vpop.f32.mrb[0].mxu0
    %7160 = vmatprep.mubr.bf16.mxu0 0
    %7161 = vmatmul.mubr.bf16.gmra.mrb[0].mxu0 %v6969
    %v7162 = vpop.f32.mrb[0].mxu0
    %v7163 = vadd.f32 %v7066, %v7162
    %v7164 = vpop.f32.mrb[0].mxu0
    %v7165 = vpop.f32.mrb[0].mxu0
    %v7166 = vadd.f32 %v7069, %v7165
    %v7167 = vpop.f32.mrb[0].mxu0
    %7168 = vmatprep.mubr.bf16.mxu0 0
    %7169 = vmatmul.mubr.bf16.gmra.mrb[0].mxu0 %v6970
    %v7170 = vpop.f32.mrb[0].mxu0
    %v7171 = vadd.f32 %v7074, %v7170
    %v7172 = vpop.f32.mrb[0].mxu0
    %v7173 = vpop.f32.mrb[0].mxu0
    %v7174 = vadd.f32 %v7077, %v7173
    %v7175 = vpop.f32.mrb[0].mxu0
    %7176 = vmatprep.mubr.bf16.mxu0 0
    %7177 = vmatmul.mubr.bf16.gmra.mrb[0].mxu0 %v6971
    %v7178 = vpop.f32.mrb[0].mxu0
    %v7179 = vadd.f32 %v7082, %v7178
    %v7180 = vpop.f32.mrb[0].mxu0
    %v7181 = vpop.f32.mrb[0].mxu0
    %v7182 = vadd.f32 %v7085, %v7181
    %v7183 = vpop.f32.mrb[0].mxu0
    %7184 = vmatprep.mubr.bf16.mxu0 0
    %7185 = vmatmul.mubr.bf16.gmra.mrb[0].mxu0 %v6972
    %v7186 = vpop.f32.mrb[0].mxu0
    %v7187 = vadd.f32 %v7090, %v7186
    %v7188 = vpop.f32.mrb[0].mxu0
    %v7189 = vpop.f32.mrb[0].mxu0
    %v7190 = vadd.f32 %v7093, %v7189
    %v7191 = vpop.f32.mrb[0].mxu0
    %7192 = vmatprep.mubr.bf16.mxu0 0
    %7193 = vmatmul.mubr.bf16.gmra.mrb[0].mxu0 %v6973
    %v7194 = vpop.f32.mrb[0].mxu0
    %v7195 = vadd.f32 %v7098, %v7194
    %v7196 = vpop.f32.mrb[0].mxu0
    %v7197 = vpop.f32.mrb[0].mxu0
    %v7198 = vadd.f32 %v7101, %v7197
    %v7199 = vpop.f32.mrb[0].mxu0
    %7200 = vmatprep.mubr.bf16.mxu0 0
    %7201 = vmatmul.mubr.bf16.gmra.mrb[0].mxu0 %v6974
    %v7202 = vpop.f32.mrb[0].mxu0
    %v7203 = vadd.f32 %v7106, %v7202
    %v7204 = vpop.f32.mrb[0].mxu0
    %v7205 = vpop.f32.mrb[0].mxu0
    %v7206 = vadd.f32 %v7109, %v7205
    %v7207 = vpop.f32.mrb[0].mxu0
    %7208 = vdwg.mxu0
    %7209 = vmatprep.subr.bf16.mxu0 0
    %7210 = vmatpush1.bf16.msra.mxu0 %v6426
    %7211 = vmatprep.subr.bf16.mxu0 0
    %7212 = vmatpush1.bf16.msra.mxu0 %v6427
    %7213 = vmatprep.subr.bf16.mxu0 0
    %7214 = vmatpush1.bf16.msra.mxu0 %v6428
    %7215 = vmatprep.subr.bf16.mxu0 0
    %7216 = vmatpush1.bf16.msra.mxu0 %v6429
    %7217 = vmatprep.subr.bf16.mxu0 0
    %7218 = vmatpush1.bf16.msra.mxu0 %v6430
    %7219 = vmatprep.subr.bf16.mxu0 0
    %7220 = vmatpush1.bf16.msra.mxu0 %v6431
    %7221 = vmatprep.subr.bf16.mxu0 0
    %7222 = vmatpush1.bf16.msra.mxu0 %v6432
    %7223 = vmatprep.subr.bf16.mxu0 0
    %7224 = vmatpush1.bf16.msra.mxu0 %v6433
    %7225 = vmatprep.subr.bf16.mxu0 0
    %7226 = vmatpush1.bf16.msra.mxu0 0
    %7227 = vmatprep.subr.bf16.mxu0 0
    %7228 = vmatpush1.bf16.msra.mxu0 0
    %7229 = vmatprep.subr.bf16.mxu0 0
    %7230 = vmatpush1.bf16.msra.mxu0 0
    %7231 = vmatprep.subr.bf16.mxu0 0
    %7232 = vmatpush1.bf16.msra.mxu0 0
    %7233 = vmatprep.subr.bf16.mxu0 0
    %7234 = vmatpush1.bf16.msra.mxu0 0
    %7235 = vmatprep.subr.bf16.mxu0 0
    %7236 = vmatpush1.bf16.msra.mxu0 0
    %7237 = vmatprep.subr.bf16.mxu0 0
    %7238 = vmatpush1.bf16.msra.mxu0 0
    %7239 = vmatprep.subr.bf16.mxu0 0
    %7240 = vmatpush1.bf16.msra.mxu0 0
    %7241 = vmatprep.mubr.bf16.mxu0 0
    %7242 = vmatmul.mubr.bf16.gmra.mrb[0].mxu0 %v7007
    %v7243 = vpop.f32.mrb[0].mxu0
    %v7244 = vadd.f32 0.0, %v7243
    %v7245 = vpop.f32.mrb[0].mxu0
    %v7246 = vpop.f32.mrb[0].mxu0
    %v7247 = vadd.f32 0.0, %v7246
    %v7248 = vpop.f32.mrb[0].mxu0
    %7249 = vmatprep.mubr.bf16.mxu0 0
    %7250 = vmatmul.mubr.bf16.gmra.mrb[0].mxu0 %v7008
    %v7251 = vpop.f32.mrb[0].mxu0
    %v7252 = vadd.f32 0.0, %v7251
    %v7253 = vpop.f32.mrb[0].mxu0
    %v7254 = vpop.f32.mrb[0].mxu0
    %v7255 = vadd.f32 0.0, %v7254
    %v7256 = vpop.f32.mrb[0].mxu0
    %7257 = vmatprep.mubr.bf16.mxu0 0
    %7258 = vmatmul.mubr.bf16.gmra.mrb[0].mxu0 %v7009
    %v7259 = vpop.f32.mrb[0].mxu0
    %v7260 = vadd.f32 0.0, %v7259
    %v7261 = vpop.f32.mrb[0].mxu0
    %v7262 = vpop.f32.mrb[0].mxu0
    %v7263 = vadd.f32 0.0, %v7262
    %v7264 = vpop.f32.mrb[0].mxu0
    %7265 = vmatprep.mubr.bf16.mxu0 0
    %7266 = vmatmul.mubr.bf16.gmra.mrb[0].mxu0 %v7010
    %v7267 = vpop.f32.mrb[0].mxu0
    %v7268 = vadd.f32 0.0, %v7267
    %v7269 = vpop.f32.mrb[0].mxu0
    %v7270 = vpop.f32.mrb[0].mxu0
    %v7271 = vadd.f32 0.0, %v7270
    %v7272 = vpop.f32.mrb[0].mxu0
    %7273 = vmatprep.mubr.bf16.mxu0 0
    %7274 = vmatmul.mubr.bf16.gmra.mrb[0].mxu0 %v7011
    %v7275 = vpop.f32.mrb[0].mxu0
    %v7276 = vadd.f32 0.0, %v7275
    %v7277 = vpop.f32.mrb[0].mxu0
    %v7278 = vpop.f32.mrb[0].mxu0
    %v7279 = vadd.f32 0.0, %v7278
    %v7280 = vpop.f32.mrb[0].mxu0
    %7281 = vmatprep.mubr.bf16.mxu0 0
    %7282 = vmatmul.mubr.bf16.gmra.mrb[0].mxu0 %v7012
    %v7283 = vpop.f32.mrb[0].mxu0
    %v7284 = vadd.f32 0.0, %v7283
    %v7285 = vpop.f32.mrb[0].mxu0
    %v7286 = vpop.f32.mrb[0].mxu0
    %v7287 = vadd.f32 0.0, %v7286
    %v7288 = vpop.f32.mrb[0].mxu0
    %7289 = vmatprep.mubr.bf16.mxu0 0
    %7290 = vmatmul.mubr.bf16.gmra.mrb[0].mxu0 %v7013
    %v7291 = vpop.f32.mrb[0].mxu0
    %v7292 = vadd.f32 0.0, %v7291
    %v7293 = vpop.f32.mrb[0].mxu0
    %v7294 = vpop.f32.mrb[0].mxu0
    %v7295 = vadd.f32 0.0, %v7294
    %v7296 = vpop.f32.mrb[0].mxu0
    %7297 = vmatprep.mubr.bf16.mxu0 0
    %7298 = vmatmul.mubr.bf16.gmra.mrb[0].mxu0 %v7014
    %v7299 = vpop.f32.mrb[0].mxu0
    %v7300 = vadd.f32 0.0, %v7299
    %v7301 = vpop.f32.mrb[0].mxu0
    %v7302 = vpop.f32.mrb[0].mxu0
    %v7303 = vadd.f32 0.0, %v7302
    %v7304 = vpop.f32.mrb[0].mxu0
    %7305 = vdwg.mxu0
    %v7306 = vadd.f32 %v7147, %v7244
    %v7307 = vadd.f32 %v7150, %v7247
    %v7308 = vadd.f32 %v7155, %v7252
    %v7309 = vadd.f32 %v7158, %v7255
    %v7310 = vadd.f32 %v7163, %v7260
    %v7311 = vadd.f32 %v7166, %v7263
    %v7312 = vadd.f32 %v7171, %v7268
    %v7313 = vadd.f32 %v7174, %v7271
    %v7314 = vadd.f32 %v7179, %v7276
    %v7315 = vadd.f32 %v7182, %v7279
    %v7316 = vadd.f32 %v7187, %v7284
    %v7317 = vadd.f32 %v7190, %v7287
    %v7318 = vadd.f32 %v7195, %v7292
    %v7319 = vadd.f32 %v7198, %v7295
    %v7320 = vadd.f32 %v7203, %v7300
    %v7321 = vadd.f32 %v7206, %v7303
    %v7322 = vld [vmem:[%s7] sm:$0x1]
    %v7324 = vlaneseq
    %v7325 = vshrl.u32 %v7324, 7
    %v7326 = vsub.s32 0, %v7325
    %v7327 = vrot.slane %v7322, %v7326
    %v7329 = vadd.f32 %v7306, %v7327
    %v7330 = vadd.f32 %v7307, %v7327
    %v7331 = vadd.f32 %v7308, %v7327
    %v7332 = vadd.f32 %v7309, %v7327
    %v7333 = vadd.f32 %v7310, %v7327
    %v7334 = vadd.f32 %v7311, %v7327
    %v7335 = vadd.f32 %v7312, %v7327
    %v7336 = vadd.f32 %v7313, %v7327
    %v7337 = vadd.f32 %v7314, %v7327
    %v7338 = vadd.f32 %v7315, %v7327
    %v7339 = vadd.f32 %v7316, %v7327
    %v7340 = vadd.f32 %v7317, %v7327
    %v7341 = vadd.f32 %v7318, %v7327
    %v7342 = vadd.f32 %v7319, %v7327
    %v7343 = vadd.f32 %v7320, %v7327
    %v7344 = vadd.f32 %v7321, %v7327
    %v7345 = vlaneseq
    %v7346 = vand.u32 %v7345, 127
    %vm7347 = vcmp.lt.s32.totalorder %v7346, 8
    %v7348 = vsel %vm7347, %v7329, -1e+30
    %v7349 = vsel %vm7347, %v7330, -1e+30
    %v7350 = vsel %vm7347, %v7331, -1e+30
    %v7351 = vsel %vm7347, %v7332, -1e+30
    %v7352 = vsel %vm7347, %v7333, -1e+30
    %v7353 = vsel %vm7347, %v7334, -1e+30
    %v7354 = vsel %vm7347, %v7335, -1e+30
    %v7355 = vsel %vm7347, %v7336, -1e+30
    %v7356 = vsel %vm7347, %v7337, -1e+30
    %v7357 = vsel %vm7347, %v7338, -1e+30
    %v7358 = vsel %vm7347, %v7339, -1e+30
    %v7359 = vsel %vm7347, %v7340, -1e+30
    %v7360 = vsel %vm7347, %v7341, -1e+30
    %v7361 = vsel %vm7347, %v7342, -1e+30
    %v7362 = vsel %vm7347, %v7343, -1e+30
    %v7363 = vsel %vm7347, %v7344, -1e+30
    %7364 = vmax.xlane.f32.xlu0 %v7348
    %v7365 = vpop.xlane.xlu0 %7364
    %7366 = vmax.xlane.f32.xlu0 %v7349
    %v7367 = vpop.xlane.xlu0 %7366
    %7368 = vmax.xlane.f32.xlu0 %v7350
    %v7369 = vpop.xlane.xlu0 %7368
    %7370 = vmax.xlane.f32.xlu0 %v7351
    %v7371 = vpop.xlane.xlu0 %7370
    %7372 = vmax.xlane.f32.xlu0 %v7352
    %v7373 = vpop.xlane.xlu0 %7372
    %7374 = vmax.xlane.f32.xlu0 %v7353
    %v7375 = vpop.xlane.xlu0 %7374
    %7376 = vmax.xlane.f32.xlu0 %v7354
    %v7377 = vpop.xlane.xlu0 %7376
    %7378 = vmax.xlane.f32.xlu0 %v7355
    %v7379 = vpop.xlane.xlu0 %7378
    %7380 = vmax.xlane.f32.xlu0 %v7356
    %v7381 = vpop.xlane.xlu0 %7380
    %7382 = vmax.xlane.f32.xlu0 %v7357
    %v7383 = vpop.xlane.xlu0 %7382
    %7384 = vmax.xlane.f32.xlu0 %v7358
    %v7385 = vpop.xlane.xlu0 %7384
    %7386 = vmax.xlane.f32.xlu0 %v7359
    %v7387 = vpop.xlane.xlu0 %7386
    %7388 = vmax.xlane.f32.xlu0 %v7360
    %v7389 = vpop.xlane.xlu0 %7388
    %7390 = vmax.xlane.f32.xlu0 %v7361
    %v7391 = vpop.xlane.xlu0 %7390
    %7392 = vmax.xlane.f32.xlu0 %v7362
    %v7393 = vpop.xlane.xlu0 %7392
    %7394 = vmax.xlane.f32.xlu0 %v7363
    %v7395 = vpop.xlane.xlu0 %7394
    %v7396 = vsub.f32 %v7348, %v7365
    %v7397 = vsub.f32 %v7349, %v7367
    %v7398 = vsub.f32 %v7350, %v7369
    %v7399 = vsub.f32 %v7351, %v7371
    %v7400 = vsub.f32 %v7352, %v7373
    %v7401 = vsub.f32 %v7353, %v7375
    %v7402 = vsub.f32 %v7354, %v7377
    %v7403 = vsub.f32 %v7355, %v7379
    %v7404 = vsub.f32 %v7356, %v7381
    %v7405 = vsub.f32 %v7357, %v7383
    %v7406 = vsub.f32 %v7358, %v7385
    %v7407 = vsub.f32 %v7359, %v7387
    %v7408 = vsub.f32 %v7360, %v7389
    %v7409 = vsub.f32 %v7361, %v7391
    %v7410 = vsub.f32 %v7362, %v7393
    %v7411 = vsub.f32 %v7363, %v7395
    %v7412 = vmul.f32 %v7396, 1.442695
    %v7413 = vpow.pop %v7412
    %v7414 = vmul.f32 %v7397, 1.442695
    %v7415 = vpow.pop %v7414
    %v7416 = vmul.f32 %v7398, 1.442695
    %v7417 = vpow.pop %v7416
    %v7418 = vmul.f32 %v7399, 1.442695
    %v7419 = vpow.pop %v7418
    %v7420 = vmul.f32 %v7400, 1.442695
    %v7421 = vpow.pop %v7420
    %v7422 = vmul.f32 %v7401, 1.442695
    %v7423 = vpow.pop %v7422
    %v7424 = vmul.f32 %v7402, 1.442695
    %v7425 = vpow.pop %v7424
    %v7426 = vmul.f32 %v7403, 1.442695
    %v7427 = vpow.pop %v7426
    %v7428 = vmul.f32 %v7404, 1.442695
    %v7429 = vpow.pop %v7428
    %v7430 = vmul.f32 %v7405, 1.442695
    %v7431 = vpow.pop %v7430
    %v7432 = vmul.f32 %v7406, 1.442695
    %v7433 = vpow.pop %v7432
    %v7434 = vmul.f32 %v7407, 1.442695
    %v7435 = vpow.pop %v7434
    %v7436 = vmul.f32 %v7408, 1.442695
    %v7437 = vpow.pop %v7436
    %v7438 = vmul.f32 %v7409, 1.442695
    %v7439 = vpow.pop %v7438
    %v7440 = vmul.f32 %v7410, 1.442695
    %v7441 = vpow.pop %v7440
    %v7442 = vmul.f32 %v7411, 1.442695
    %v7443 = vpow.pop %v7442
    %7444 = vadd.xlane.f32.xlu0 %v7413
    %v7445 = vpop.xlane.xlu0 %7444
    %7446 = vadd.xlane.f32.xlu0 %v7415
    %v7447 = vpop.xlane.xlu0 %7446
    %7448 = vadd.xlane.f32.xlu0 %v7417
    %v7449 = vpop.xlane.xlu0 %7448
    %7450 = vadd.xlane.f32.xlu0 %v7419
    %v7451 = vpop.xlane.xlu0 %7450
    %7452 = vadd.xlane.f32.xlu0 %v7421
    %v7453 = vpop.xlane.xlu0 %7452
    %7454 = vadd.xlane.f32.xlu0 %v7423
    %v7455 = vpop.xlane.xlu0 %7454
    %7456 = vadd.xlane.f32.xlu0 %v7425
    %v7457 = vpop.xlane.xlu0 %7456
    %7458 = vadd.xlane.f32.xlu0 %v7427
    %v7459 = vpop.xlane.xlu0 %7458
    %7460 = vadd.xlane.f32.xlu0 %v7429
    %v7461 = vpop.xlane.xlu0 %7460
    %7462 = vadd.xlane.f32.xlu0 %v7431
    %v7463 = vpop.xlane.xlu0 %7462
    %7464 = vadd.xlane.f32.xlu0 %v7433
    %v7465 = vpop.xlane.xlu0 %7464
    %7466 = vadd.xlane.f32.xlu0 %v7435
    %v7467 = vpop.xlane.xlu0 %7466
    %7468 = vadd.xlane.f32.xlu0 %v7437
    %v7469 = vpop.xlane.xlu0 %7468
    %7470 = vadd.xlane.f32.xlu0 %v7439
    %v7471 = vpop.xlane.xlu0 %7470
    %7472 = vadd.xlane.f32.xlu0 %v7441
    %v7473 = vpop.xlane.xlu0 %7472
    %7474 = vadd.xlane.f32.xlu0 %v7443
    %v7475 = vpop.xlane.xlu0 %7474
    %v7476 = vlog2.pop %v7445
    %v7477 = vmul.f32 %v7476, 0.6931472
    %v7478 = vlog2.pop %v7447
    %v7479 = vmul.f32 %v7478, 0.6931472
    %v7480 = vlog2.pop %v7449
    %v7481 = vmul.f32 %v7480, 0.6931472
    %v7482 = vlog2.pop %v7451
    %v7483 = vmul.f32 %v7482, 0.6931472
    %v7484 = vlog2.pop %v7453
    %v7485 = vmul.f32 %v7484, 0.6931472
    %v7486 = vlog2.pop %v7455
    %v7487 = vmul.f32 %v7486, 0.6931472
    %v7488 = vlog2.pop %v7457
    %v7489 = vmul.f32 %v7488, 0.6931472
    %v7490 = vlog2.pop %v7459
    %v7491 = vmul.f32 %v7490, 0.6931472
    %v7492 = vlog2.pop %v7461
    %v7493 = vmul.f32 %v7492, 0.6931472
    %v7494 = vlog2.pop %v7463
    %v7495 = vmul.f32 %v7494, 0.6931472
    %v7496 = vlog2.pop %v7465
    %v7497 = vmul.f32 %v7496, 0.6931472
    %v7498 = vlog2.pop %v7467
    %v7499 = vmul.f32 %v7498, 0.6931472
    %v7500 = vlog2.pop %v7469
    %v7501 = vmul.f32 %v7500, 0.6931472
    %v7502 = vlog2.pop %v7471
    %v7503 = vmul.f32 %v7502, 0.6931472
    %v7504 = vlog2.pop %v7473
    %v7505 = vmul.f32 %v7504, 0.6931472
    %v7506 = vlog2.pop %v7475
    %v7507 = vmul.f32 %v7506, 0.6931472
    %v7508 = vadd.f32 %v7477, %v7365
    %v7509 = vadd.f32 %v7479, %v7367
    %v7510 = vadd.f32 %v7481, %v7369
    %v7511 = vadd.f32 %v7483, %v7371
    %v7512 = vadd.f32 %v7485, %v7373
    %v7513 = vadd.f32 %v7487, %v7375
    %v7514 = vadd.f32 %v7489, %v7377
    %v7515 = vadd.f32 %v7491, %v7379
    %v7516 = vadd.f32 %v7493, %v7381
    %v7517 = vadd.f32 %v7495, %v7383
    %v7518 = vadd.f32 %v7497, %v7385
    %v7519 = vadd.f32 %v7499, %v7387
    %v7520 = vadd.f32 %v7501, %v7389
    %v7521 = vadd.f32 %v7503, %v7391
    %v7522 = vadd.f32 %v7505, %v7393
    %v7523 = vadd.f32 %v7507, %v7395
    %v7524 = vsub.f32 %v7329, %v7508
    %v7525 = vsub.f32 %v7330, %v7509
    %v7526 = vsub.f32 %v7331, %v7510
    %v7527 = vsub.f32 %v7332, %v7511
    %v7528 = vsub.f32 %v7333, %v7512
    %v7529 = vsub.f32 %v7334, %v7513
    %v7530 = vsub.f32 %v7335, %v7514
    %v7531 = vsub.f32 %v7336, %v7515
    %v7532 = vsub.f32 %v7337, %v7516
    %v7533 = vsub.f32 %v7338, %v7517
    %v7534 = vsub.f32 %v7339, %v7518
    %v7535 = vsub.f32 %v7340, %v7519
    %v7536 = vsub.f32 %v7341, %v7520
    %v7537 = vsub.f32 %v7342, %v7521
    %v7538 = vsub.f32 %v7343, %v7522
    %v7539 = vsub.f32 %v7344, %v7523
    %v7540 = vsel %vm7347, %v7524, 0.0
    %v7541 = vsel %vm7347, %v7525, 0.0
    %v7542 = vsel %vm7347, %v7526, 0.0
    %v7543 = vsel %vm7347, %v7527, 0.0
    %v7544 = vsel %vm7347, %v7528, 0.0
    %v7545 = vsel %vm7347, %v7529, 0.0
    %v7546 = vsel %vm7347, %v7530, 0.0
    %v7547 = vsel %vm7347, %v7531, 0.0
    %v7548 = vsel %vm7347, %v7532, 0.0
    %v7549 = vsel %vm7347, %v7533, 0.0
    %v7550 = vsel %vm7347, %v7534, 0.0
    %v7551 = vsel %vm7347, %v7535, 0.0
    %v7552 = vsel %vm7347, %v7536, 0.0
    %v7553 = vsel %vm7347, %v7537, 0.0
    %v7554 = vsel %vm7347, %v7538, 0.0
    %v7555 = vsel %vm7347, %v7539, 0.0
    %7556 = vst [vmem:[#allocation9] sm:$0xff] %v7540
    %7557 = vst [vmem:[#allocation9 + $0x8] sm:$0xff] %v7541
    %7558 = vst [vmem:[#allocation9 + $0x10] sm:$0xff] %v7542
    %7559 = vst [vmem:[#allocation9 + $0x18] sm:$0xff] %v7543
    %7560 = vst [vmem:[#allocation9 + $0x20] sm:$0xff] %v7544
    %7561 = vst [vmem:[#allocation9 + $0x28] sm:$0xff] %v7545
    %7562 = vst [vmem:[#allocation9 + $0x30] sm:$0xff] %v7546
    %7563 = vst [vmem:[#allocation9 + $0x38] sm:$0xff] %v7547
    %7564 = vst [vmem:[#allocation9 + $0x40] sm:$0xff] %v7548
    %7565 = vst [vmem:[#allocation9 + $0x48] sm:$0xff] %v7549
    %7566 = vst [vmem:[#allocation9 + $0x50] sm:$0xff] %v7550
    %7567 = vst [vmem:[#allocation9 + $0x58] sm:$0xff] %v7551
    %7568 = vst [vmem:[#allocation9 + $0x60] sm:$0xff] %v7552
    %7569 = vst [vmem:[#allocation9 + $0x68] sm:$0xff] %v7553
    %7570 = vst [vmem:[#allocation9 + $0x70] sm:$0xff] %v7554
    %7571 = vst [vmem:[#allocation9 + $0x78] sm:$0xff] %v7555
    // Predicated region
    $region38: #{tpu_custom_call.1} parent=1 // pred_check
      _
    $region39: #{tpu_custom_call.1} parent=1 // pred_check_branch
      %7573 = sbr.rel (0) target = $region41
    $region40: #{tpu_custom_call.1} parent=1 // pred_region
      %s7575 = ssub.s32 2048, 2048
      %7576 = vsyncadd [#allocation8], %s7575
      %s7577 = sshll.u32 [#allocation9], 4
      %s7578 = int_to_ptr.vmem [resolvable:$true] %s7577
      %7583 = dma.vmem_to_hbm [thread:$0]  %s7578, 2048, %s8, [#allocation8], 128, 128, 8
    $region41: #{tpu_custom_call.1} parent=1 // pred_fallthru
      _
    // Predicated region
    $region42: #{tpu_custom_call.1} parent=1 // pred_check
      _
    $region43: #{tpu_custom_call.1} parent=1 // pred_check_branch
      %7585 = sbr.rel (0) target = $region45
    $region44: #{tpu_custom_call.1} parent=1 // pred_region
      %7586 = dma.done [#allocation8], 2048
    $region45: #{tpu_custom_call.1} parent=1 // pred_fallthru
      _
    %7587 = vsyncpa [#allocation7], 1
    %7588 = vsyncpa [#allocation8], 1

</llo_original>
